<compile_context>
chip_gen: v6e
topology: v6e:2x2x1
jax: 0.10.0
libtpu: 0.0.40
codegen_flags: <defaults>
</compile_context>

<pallas_src>
import numpy as np
import jax
import jax.numpy as jnp
from jax import lax
from jax.experimental import pallas as pl
from jax.experimental.pallas import tpu as pltpu

# ------------------------- model hyper-parameters -------------------------
N_COLORS = 3
N0 = 8          # args.n_init
NR = 8          # args.n_feats
DEPTH = 3       # args.n_blocks
UPSCALE = [2]   # args.upscale
KPROJ, STRIDE, PAD = 6, 2, 2   # projection conv params for scale 2

LANE = 128


def _pad_to_lane(n):
    return ((n + LANE - 1) // LANE) * LANE


# --------------------- host-side (numpy) weight re-packing ---------------------
def _sel_matrix_np(W):
    """sel[dx, xi, xo] = 1 iff xi == xo + dx - 1 (3-tap band structure, pad 1)."""
    sel = np.zeros((3, W, W), np.float32)
    for dx in range(3):
        for xo in range(W):
            xi = xo + dx - 1
            if 0 <= xi < W:
                sel[dx, xi, xo] = 1.0
    return sel


def band_3x3_np(w_lr, W):
    """LR-grid 3x3 s1 p1 conv (3,3,Cin,Cout) -> fused banded matrix (3*P_in, P_out),
    rows ordered (dy, x_in, cin); zero-padded to lane multiples of 128."""
    w_lr = np.asarray(w_lr, np.float32)
    Cin, Cout = w_lr.shape[2], w_lr.shape[3]
    B = np.einsum('kio,dkcf->dicof', _sel_matrix_np(W), w_lr)   # (3, W, Cin, W, Cout)
    B = B.reshape(3, W * Cin, W * Cout)
    P_in, P_out = _pad_to_lane(W * Cin), _pad_to_lane(W * Cout)
    out = np.zeros((3, P_in, P_out), np.float32)
    out[:, :W * Cin, :W * Cout] = B
    return out.reshape(3 * P_in, P_out)


def band_1x1_np(w, W):
    """1x1 conv weight (Cin, Cout) -> block-diagonal (P_in, P_out), lane-padded."""
    w = np.asarray(w, np.float32)
    Cin, Cout = w.shape
    B = np.einsum('io,cf->icof', np.eye(W, dtype=np.float32), w).reshape(W * Cin, W * Cout)
    P_in, P_out = _pad_to_lane(W * Cin), _pad_to_lane(W * Cout)
    out = np.zeros((P_in, P_out), np.float32)
    out[:W * Cin, :W * Cout] = B
    return out


def bias_row_np(b, W):
    """Per-channel bias -> (1, P_out) lane row matching the (x, c) interleaved layout."""
    b = np.asarray(b, np.float32)
    row = np.tile(b, (W,))
    out = np.zeros((1, _pad_to_lane(row.shape[0])), np.float32)
    out[0, :row.shape[0]] = row
    return out


def up_weight_lr_np(wt):
    """ConvTranspose2d weight (Cin, Cout, 6, 6), stride 2, pad 2
       -> LR-grid 3x3 conv (3,3,Cin,4*Cout) producing HR polyphase channels
          (poly index = a*2*Cout + b*Cout + co)."""
    wt = np.asarray(wt, np.float32)
    Cin, Cout = wt.shape[0], wt.shape[1]
    w = wt.reshape(Cin, Cout, 3, 2, 3, 2)            # (ci, co, mh, a, mw, b); kh = 2*mh + a
    w = w[:, :, ::-1, :, ::-1, :]                    # dy = 2 - mh, dx = 2 - mw
    w = np.transpose(w, (2, 4, 0, 3, 5, 1))          # (dy, dx, ci, a, b, co)
    return np.ascontiguousarray(w).reshape(3, 3, Cin, 4 * Cout)


def down_weight_lr_np(wc):
    """Conv2d weight HWIO (6,6,Cin,Cout), stride 2, pad 2 on the HR grid
       -> LR-grid 3x3 conv (3,3,4*Cin,Cout) consuming HR polyphase channels."""
    wc = np.asarray(wc, np.float32)
    Cin, Cout = wc.shape[2], wc.shape[3]
    w = wc.reshape(3, 2, 3, 2, Cin, Cout)            # (dy, a, dx, b, ci, co); kh = 2*dy + a
    w = np.transpose(w, (0, 2, 1, 3, 4, 5))          # (dy, dx, a, b, ci, co)
    return np.ascontiguousarray(w).reshape(3, 3, 4 * Cin, Cout)


def hr3x3_weight_lr_np(wr):
    """Conv2d 3x3 s1 p1 on the HR grid, HWIO (3,3,Cin,Cout)
       -> LR-grid 3x3 conv (3,3,4*Cin,4*Cout) on polyphase channels."""
    wr = np.asarray(wr, np.float32)
    Cin, Cout = wr.shape[2], wr.shape[3]
    out = np.zeros((3, 3, 2, 2, Cin, 2, 2, Cout), np.float32)   # (dy,dx,a',b',ci,a,b,co)
    for dy in range(3):
        for a in range(2):
            for ap in range(2):
                dh = 2 * dy + ap - a - 1
                if not 0 <= dh <= 2:
                    continue
                for dx in range(3):
                    for b in range(2):
                        for bp in range(2):
                            dw = 2 * dx + bp - b - 1
                            if not 0 <= dw <= 2:
                                continue
                            out[dy, dx, ap, bp, :, a, b, :] = wr[dh, dw]
    return out.reshape(3, 3, 4 * Cin, 4 * Cout)


def pack_reconstruction_np(wr, br, W):
    """Reconstruction 3x3 on HR concat(h_list) -> single fused matrix whose row order
       matches concat([roll_up(hcat), hcat, roll_dn(hcat)]) with hcat = concat(h_t)."""
    wr = np.asarray(wr, np.float32)
    P_hr = _pad_to_lane(W * 4 * NR)
    P_out = _pad_to_lane(W * 4 * wr.shape[3])
    per_t = []
    for t in range(DEPTH):
        w_t = hr3x3_weight_lr_np(wr[:, :, t * NR:(t + 1) * NR, :])
        per_t.append(band_3x3_np(w_t, W).reshape(3, P_hr, P_out))
    w_rec = np.concatenate(
        [np.concatenate([per_t[t][d] for t in range(DEPTH)], axis=0) for d in range(3)],
        axis=0)                                                  # (3*DEPTH*P_hr, P_out)
    b_rec = bias_row_np(np.tile(np.asarray(br, np.float32), (4,)), W)
    return w_rec, b_rec


def pack_params(params, W):
    """Pack all DBPN weights for stage width W (host-side, once).  Returns a flat
    tuple alternating (bf16 packed weight, f32 bias row) in kernel consumption order."""
    wb = []

    def emit(wmat, brow):
        wb.append(jnp.asarray(wmat, jnp.bfloat16))
        wb.append(jnp.asarray(brow, jnp.float32))

    def add3(w_lr, b_vec):
        emit(band_3x3_np(w_lr, W), bias_row_np(b_vec, W))

    def add1(wmat, b_vec):
        emit(band_1x1_np(wmat, W), bias_row_np(b_vec, W))

    def add_up(p):      # ConvTranspose2d projection: LR -> HR polyphase
        wt, b = p
        add3(up_weight_lr_np(wt), np.tile(np.asarray(b, np.float32), (4,)))

    def add_down(p):    # Conv2d projection: HR polyphase -> LR
        wc, b = p
        add3(down_weight_lr_np(wc), np.asarray(b, np.float32))

    (w0, b0), (w1, b1) = params["initial"]
    add3(np.asarray(w0, np.float32), b0)                                    # 3x3 n_colors->n0
    add1(np.asarray(w1, np.float32).reshape(w1.shape[2], w1.shape[3]), b1)  # 1x1 n0->nr

    for i in range(DEPTH - 1):
        pu, pd = params["up"][i], params["down"][i]
        add_up(pu["conv1"]); add_down(pu["conv2"]); add_up(pu["conv3"])
        add_down(pd["conv1"]); add_up(pd["conv2"]); add_down(pd["conv3"])

    pu = params["up"][DEPTH - 1]
    wbn, bbn = pu["bottleneck"]
    add1(np.asarray(wbn, np.float32).reshape(wbn.shape[2], wbn.shape[3]), bbn)
    add_up(pu["conv1"]); add_down(pu["conv2"]); add_up(pu["conv3"])

    wr, br = params["reconstruction"]
    emit(*pack_reconstruction_np(wr, br, W))
    return tuple(wb)


# ------------------------------- fused Pallas kernel -------------------------------
def make_dbpn_kernel(img_h):
    """Fused DBPN forward.  A block may stack several images along sublanes;
    `img_h` is the per-image row count (used for the roll boundary masks)."""

    def kernel(*refs):
        x_ref, out_ref = refs[0], refs[-1]
        wrefs = refs[1:-1]
        cursor = [0]

        def nref():
            r = wrefs[cursor[0]]
            cursor[0] += 1
            return r

        rows = x_ref.shape[0]
        r_in_img = lax.broadcasted_iota(jnp.int32, (rows, 1), 0) % img_h
        keep_top = (r_in_img != 0).astype(jnp.float32)          # zero first row of each image
        keep_bot = (r_in_img != img_h - 1).astype(jnp.float32)  # zero last  row of each image

        def mm(a, w_ref):
            return jnp.dot(a.astype(jnp.bfloat16), w_ref[...],
                           preferred_element_type=jnp.float32)

        def conv3(v, relu=True):
            w_ref, b_ref = nref(), nref()
            # y-shifts via XLU roll + VPU mask (replaces shift matmuls);
            # x-shifts/boundaries are folded into the banded weight matrix.
            vu = pltpu.roll(v, 1, axis=0) * keep_top          # row y <- row y-1
            vd = pltpu.roll(v, rows - 1, axis=0) * keep_bot   # row y <- row y+1
            kin = jnp.concatenate([vu, v, vd], axis=1)        # 128-aligned lane concat
            acc = mm(kin, w_ref) + b_ref[...]
            return jnp.maximum(acc, 0.0) if relu else acc

        def conv1(v, relu=True):
            w_ref, b_ref = nref(), nref()
            acc = mm(v, w_ref) + b_ref[...]
            return jnp.maximum(acc, 0.0) if relu else acc

        def back_projection(v, bottleneck):
            if bottleneck:
                v = conv1(v)
            a0 = conv3(v)          # conv_1 (+ReLU)
            b0 = conv3(a0)         # conv_2 (+ReLU)
            a1 = conv3(b0 - v)     # conv_3 (+ReLU) on the residual
            return a0 + a1

        # -------- DBPN forward (single scale), fully VMEM/vreg resident --------
        x = x_ref[...]
        l = conv3(x)               # initial 3x3 + ReLU   (n_colors -> n0)
        l = conv1(l)               # initial 1x1 + ReLU   (n0 -> nr)

        h_list = []
        for _ in range(DEPTH - 1):
            h = back_projection(l, bottleneck=False)   # up-projection block
            h_list.append(h)
            l = back_projection(h, bottleneck=False)   # down-projection block
        h_list.append(back_projection(l, bottleneck=True))   # last up block (bottleneck)

        hcat = jnp.concatenate(h_list, axis=1)         # (rows, DEPTH * W * 4 * NR)
        out_ref[...] = conv3(hcat, relu=False)         # reconstruction 3x3, no ReLU

    return kernel


# ----------------------------- pallas_call wrapper (per scale) -----------------------------
def _dbpn_stage(wb, x_nchw, imgs_per_prog):
    N, C, H, W = x_nchw.shape
    pc_x = _pad_to_lane(W * C)
    pc_out = _pad_to_lane(W * 4 * C)
    rows_per_prog = imgs_per_prog * H
    num_progs = N // imgs_per_prog

    # NCHW -> (N*H, W*C) slab with (x, c) interleaved lanes, zero-padded to 128 lanes.
    x2d = jnp.transpose(x_nchw, (0, 2, 3, 1)).reshape(N * H, W * C)
    x2d = jnp.pad(x2d, ((0, 0), (0, pc_x - W * C)))

    in_specs = [pl.BlockSpec((rows_per_prog, pc_x), lambda n: (n, 0))]
    for a in wb:   # weights/biases: full block, constant index map -> VMEM-resident
        in_specs.append(pl.BlockSpec(a.shape, lambda n: (0, 0)))
    out_specs = pl.BlockSpec((rows_per_prog, pc_out), lambda n: (n, 0))

    flops = 2 * N * H * sum(int(w.shape[0]) * int(w.shape[1]) for w in wb[0::2])
    bytes_accessed = int(x2d.size * x2d.dtype.itemsize + N * H * pc_out * 4
                         + sum(int(a.size) * a.dtype.itemsize for a in wb))
    cost = pl.CostEstimate(flops=flops, transcendentals=0, bytes_accessed=bytes_accessed)

    out2d = pl.pallas_call(
        make_dbpn_kernel(H),
        out_shape=jax.ShapeDtypeStruct((N * H, pc_out), jnp.float32),
        grid=(num_progs,),
        in_specs=in_specs,
        out_specs=out_specs,
        compiler_params=pltpu.CompilerParams(
            dimension_semantics=("parallel",),
            vmem_limit_bytes=32 * 1024 * 1024),
        cost_estimate=cost,
    )(x2d, *wb)

    # polyphase (N*H, W*4*C) -> HR NCHW (N, C, 2H, 2W)
    y = out2d[:, :W * 4 * C].reshape(N, H, W, 2, 2, C)           # (n, yo, xo, a, b, co)
    y = jnp.transpose(y, (0, 5, 1, 3, 2, 4)).reshape(N, C, 2 * H, 2 * W)
    return y


_dbpn_stage_jit = jax.jit(_dbpn_stage, static_argnums=(2,))


def make_dbpn_forward(params, width):
    """Pack weights once (host-side numpy, cached per stage width) and return forward()."""
    try:
        kind = jax.devices()[0].device_kind.lower()
    except Exception:
        kind = ""
    two_tensorcores = ("v7" in kind) or ("7x" in kind)

    stage_wb = []
    w_cur = width
    for s in UPSCALE:               # packing keyed on the stage's input width
        stage_wb.append(pack_params(params, w_cur))
        w_cur *= s

    def forward(x_nchw):
        outs = []
        cur = x_nchw
        for wb in stage_wb:
            n = cur.shape[0]
            # v7x (2 TC/chip): one image per program so both cores are busy;
            # v5e/v6e (1 TC): keep the whole batch in one program (M = N*H rows).
            ipp = 1 if (two_tensorcores and n > 1) else n
            cur = _dbpn_stage_jit(wb, cur, ipp)
            outs.append(cur)
        return outs

    return forward


# ----------------------- pure-JAX reference (for validation) -----------------------
def conv2d_ref(x, w_hwio, b, stride, padding, relu):
    out = lax.conv_general_dilated(
        x, w_hwio, window_strides=(stride, stride),
        padding=[(padding, padding)] * 2,
        dimension_numbers=("NHWC", "HWIO", "NHWC"),
        precision=lax.Precision.HIGHEST) + b
    return jnp.maximum(out, 0.0) if relu else out


def conv_transpose2d_ref(x, w_t, b, stride, padding, relu):
    kh = w_t.shape[2]
    w_eff = jnp.transpose(w_t[:, :, ::-1, ::-1], (2, 3, 0, 1))
    out = lax.conv_general_dilated(
        x, w_eff, window_strides=(1, 1),
        padding=[(kh - 1 - padding, kh - 1 - padding)] * 2,
        lhs_dilation=(stride, stride),
        dimension_numbers=("NHWC", "HWIO", "NHWC"),
        precision=lax.Precision.HIGHEST) + b
    return jnp.maximum(out, 0.0) if relu else out


def back_projection_ref(p, x, up):
    if p["bottleneck"] is not None:
        wb_, bb_ = p["bottleneck"]
        x = conv2d_ref(x, wb_, bb_, 1, 0, True)

    def proj(pc, inp, is_up):
        w, b = pc
        if is_up:
            return conv_transpose2d_ref(inp, w, b, STRIDE, PAD, True)
        return conv2d_ref(inp, w, b, STRIDE, PAD, True)

    a0 = proj(p["conv1"], x, up)
    b0 = proj(p["conv2"], a0, not up)
    a1 = proj(p["conv3"], b0 - x, up)
    return a0 + a1


def dbpn_forward_ref(params, x_nchw):
    x = jnp.transpose(x_nchw, (0, 2, 3, 1))   # NCHW -> NHWC
    outputs = []
    for _ in UPSCALE:
        (w0, b0), (w1, b1) = params["initial"]
        l = conv2d_ref(x, w0, b0, 1, 1, True)
        l = conv2d_ref(l, w1, b1, 1, 0, True)
        h_list = []
        for i in range(DEPTH - 1):
            h = back_projection_ref(params["up"][i], l, True)
            h_list.append(h)
            l = back_projection_ref(params["down"][i], h, False)
        h_list.append(back_projection_ref(params["up"][DEPTH - 1], l, True))
        cat = jnp.concatenate(h_list, axis=-1)
        wr, br = params["reconstruction"]
        y = conv2d_ref(cat, wr, br, 1, 1, False)
        outputs.append(jnp.transpose(y, (0, 3, 1, 2)))
        x = y
    return outputs


# ---------------------------------- parameter init ----------------------------------
def init_params(key):
    kit = iter(list(jax.random.split(key, 64)))

    def nk():
        return next(kit)

    def conv_p(cin, cout, k):
        fan_in = cin * k * k
        w = jax.random.normal(nk(), (k, k, cin, cout), jnp.float32) * np.sqrt(2.0 / fan_in)
        bound = 1.0 / np.sqrt(fan_in)
        b = jax.random.uniform(nk(), (cout,), jnp.float32, -bound, bound)
        return (w, b)

    def convt_p(cin, cout, k):
        # PyTorch ConvTranspose2d weight layout (Cin, Cout, kh, kw)
        fan_in = cout * k * k
        w = jax.random.normal(nk(), (cin, cout, k, k), jnp.float32) * np.sqrt(2.0 / fan_in)
        bound = 1.0 / np.sqrt(cin * k * k)
        b = jax.random.uniform(nk(), (cout,), jnp.float32, -bound, bound)
        return (w, b)

    def bp_params(up, bottleneck):
        p = {"bottleneck": conv_p(NR, NR, 1) if bottleneck else None}
        inter = NR
        if up:
            p["conv1"] = convt_p(inter, NR, KPROJ)
            p["conv2"] = conv_p(NR, inter, KPROJ)
            p["conv3"] = convt_p(inter, NR, KPROJ)
        else:
            p["conv1"] = conv_p(inter, NR, KPROJ)
            p["conv2"] = convt_p(NR, inter, KPROJ)
            p["conv3"] = conv_p(inter, NR, KPROJ)
        return p

    params = {
        "initial": [conv_p(N_COLORS, N0, 3), conv_p(N0, NR, 1)],
        "up": [bp_params(True, i > 1) for i in range(DEPTH)],
        "down": [bp_params(False, i > 1) for i in range(DEPTH - 1)],
        "reconstruction": conv_p(DEPTH * NR, N_COLORS, 3),
    }
    return params


# ---------------------------------------- main ----------------------------------------
if __name__ == "__main__":
    key = jax.random.PRNGKey(0)
    kp, kx = jax.random.split(key)
    params = init_params(kp)
    x = jax.random.normal(kx, (2, N_COLORS, 8, 8), jnp.float32)   # NCHW input (LR 8x8)

    forward = make_dbpn_forward(params, width=x.shape[-1])        # pack once, host-side
    outs = jax.block_until_ready(forward(x))

    assert isinstance(outs, list) and len(outs) == len(UPSCALE)
    assert outs[0].shape == (2, N_COLORS, 8 * UPSCALE[0], 8 * UPSCALE[0])
    assert bool(jnp.all(jnp.isfinite(outs[0])))

    # cross-check against a pure-JAX (lax.conv, f32 HIGHEST precision) reference
    ref = dbpn_forward_ref(params, x)
    got = np.asarray(outs[0])
    exp = np.asarray(ref[0])
    rel_l2 = float(np.linalg.norm(got - exp) / (np.linalg.norm(exp) + 1e-12))
    assert rel_l2 < 3e-2, f"relative L2 error {rel_l2:.4f} too high"
    # elementwise tolerance re-characterized for bf16 MXU operands vs f32 reference
    np.testing.assert_allclose(got, exp, rtol=8e-2, atol=8e-2)

    print("KERNEL_OK")
</pallas_src>

<mosaic_0001>
module attributes {stable_mosaic.version = 11 : i64} {
  func.func @kernel(%arg0: i32, %arg1: memref<16x128xf32, #tpu.memory_space<vmem>>, %arg2: memref<384x128xbf16, #tpu.memory_space<vmem>>, %arg3: memref<1x128xf32, #tpu.memory_space<vmem>>, %arg4: memref<128x128xbf16, #tpu.memory_space<vmem>>, %arg5: memref<1x128xf32, #tpu.memory_space<vmem>>, %arg6: memref<384x256xbf16, #tpu.memory_space<vmem>>, %arg7: memref<1x256xf32, #tpu.memory_space<vmem>>, %arg8: memref<768x128xbf16, #tpu.memory_space<vmem>>, %arg9: memref<1x128xf32, #tpu.memory_space<vmem>>, %arg10: memref<384x256xbf16, #tpu.memory_space<vmem>>, %arg11: memref<1x256xf32, #tpu.memory_space<vmem>>, %arg12: memref<768x128xbf16, #tpu.memory_space<vmem>>, %arg13: memref<1x128xf32, #tpu.memory_space<vmem>>, %arg14: memref<384x256xbf16, #tpu.memory_space<vmem>>, %arg15: memref<1x256xf32, #tpu.memory_space<vmem>>, %arg16: memref<768x128xbf16, #tpu.memory_space<vmem>>, %arg17: memref<1x128xf32, #tpu.memory_space<vmem>>, %arg18: memref<384x256xbf16, #tpu.memory_space<vmem>>, %arg19: memref<1x256xf32, #tpu.memory_space<vmem>>, %arg20: memref<768x128xbf16, #tpu.memory_space<vmem>>, %arg21: memref<1x128xf32, #tpu.memory_space<vmem>>, %arg22: memref<384x256xbf16, #tpu.memory_space<vmem>>, %arg23: memref<1x256xf32, #tpu.memory_space<vmem>>, %arg24: memref<768x128xbf16, #tpu.memory_space<vmem>>, %arg25: memref<1x128xf32, #tpu.memory_space<vmem>>, %arg26: memref<384x256xbf16, #tpu.memory_space<vmem>>, %arg27: memref<1x256xf32, #tpu.memory_space<vmem>>, %arg28: memref<768x128xbf16, #tpu.memory_space<vmem>>, %arg29: memref<1x128xf32, #tpu.memory_space<vmem>>, %arg30: memref<128x128xbf16, #tpu.memory_space<vmem>>, %arg31: memref<1x128xf32, #tpu.memory_space<vmem>>, %arg32: memref<384x256xbf16, #tpu.memory_space<vmem>>, %arg33: memref<1x256xf32, #tpu.memory_space<vmem>>, %arg34: memref<768x128xbf16, #tpu.memory_space<vmem>>, %arg35: memref<1x128xf32, #tpu.memory_space<vmem>>, %arg36: memref<384x256xbf16, #tpu.memory_space<vmem>>, %arg37: memref<1x256xf32, #tpu.memory_space<vmem>>, %arg38: memref<2304x128xbf16, #tpu.memory_space<vmem>>, %arg39: memref<1x128xf32, #tpu.memory_space<vmem>>, %arg40: memref<16x128xf32, #tpu.memory_space<vmem>>) attributes {dimension_semantics = [#tpu.dimension_semantics<parallel>], iteration_bounds = array<i64: 1>, scalar_prefetch = 0 : i64, scratch_operands = 0 : i64, tpu.core_type = #tpu.core_type<tc>, window_params = [{transform_indices = @transform_0, window_bounds = array<i64: 16, 128>}, {pipeline_mode = #tpu.pipeline_mode<synchronous>, transform_indices = @transform_1, window_bounds = array<i64: 384, 128>}, {pipeline_mode = #tpu.pipeline_mode<synchronous>, transform_indices = @transform_2, window_bounds = array<i64: 1, 128>}, {pipeline_mode = #tpu.pipeline_mode<synchronous>, transform_indices = @transform_3, window_bounds = array<i64: 128, 128>}, {pipeline_mode = #tpu.pipeline_mode<synchronous>, transform_indices = @transform_4, window_bounds = array<i64: 1, 128>}, {pipeline_mode = #tpu.pipeline_mode<synchronous>, transform_indices = @transform_5, window_bounds = array<i64: 384, 256>}, {pipeline_mode = #tpu.pipeline_mode<synchronous>, transform_indices = @transform_6, window_bounds = array<i64: 1, 256>}, {pipeline_mode = #tpu.pipeline_mode<synchronous>, transform_indices = @transform_7, window_bounds = array<i64: 768, 128>}, {pipeline_mode = #tpu.pipeline_mode<synchronous>, transform_indices = @transform_8, window_bounds = array<i64: 1, 128>}, {pipeline_mode = #tpu.pipeline_mode<synchronous>, transform_indices = @transform_9, window_bounds = array<i64: 384, 256>}, {pipeline_mode = #tpu.pipeline_mode<synchronous>, transform_indices = @transform_10, window_bounds = array<i64: 1, 256>}, {pipeline_mode = #tpu.pipeline_mode<synchronous>, transform_indices = @transform_11, window_bounds = array<i64: 768, 128>}, {pipeline_mode = #tpu.pipeline_mode<synchronous>, transform_indices = @transform_12, window_bounds = array<i64: 1, 128>}, {pipeline_mode = #tpu.pipeline_mode<synchronous>, transform_indices = @transform_13, window_bounds = array<i64: 384, 256>}, {pipeline_mode = #tpu.pipeline_mode<synchronous>, transform_indices = @transform_14, window_bounds = array<i64: 1, 256>}, {pipeline_mode = #tpu.pipeline_mode<synchronous>, transform_indices = @transform_15, window_bounds = array<i64: 768, 128>}, {pipeline_mode = #tpu.pipeline_mode<synchronous>, transform_indices = @transform_16, window_bounds = array<i64: 1, 128>}, {pipeline_mode = #tpu.pipeline_mode<synchronous>, transform_indices = @transform_17, window_bounds = array<i64: 384, 256>}, {pipeline_mode = #tpu.pipeline_mode<synchronous>, transform_indices = @transform_18, window_bounds = array<i64: 1, 256>}, {pipeline_mode = #tpu.pipeline_mode<synchronous>, transform_indices = @transform_19, window_bounds = array<i64: 768, 128>}, {pipeline_mode = #tpu.pipeline_mode<synchronous>, transform_indices = @transform_20, window_bounds = array<i64: 1, 128>}, {pipeline_mode = #tpu.pipeline_mode<synchronous>, transform_indices = @transform_21, window_bounds = array<i64: 384, 256>}, {pipeline_mode = #tpu.pipeline_mode<synchronous>, transform_indices = @transform_22, window_bounds = array<i64: 1, 256>}, {pipeline_mode = #tpu.pipeline_mode<synchronous>, transform_indices = @transform_23, window_bounds = array<i64: 768, 128>}, {pipeline_mode = #tpu.pipeline_mode<synchronous>, transform_indices = @transform_24, window_bounds = array<i64: 1, 128>}, {pipeline_mode = #tpu.pipeline_mode<synchronous>, transform_indices = @transform_25, window_bounds = array<i64: 384, 256>}, {pipeline_mode = #tpu.pipeline_mode<synchronous>, transform_indices = @transform_26, window_bounds = array<i64: 1, 256>}, {pipeline_mode = #tpu.pipeline_mode<synchronous>, transform_indices = @transform_27, window_bounds = array<i64: 768, 128>}, {pipeline_mode = #tpu.pipeline_mode<synchronous>, transform_indices = @transform_28, window_bounds = array<i64: 1, 128>}, {pipeline_mode = #tpu.pipeline_mode<synchronous>, transform_indices = @transform_29, window_bounds = array<i64: 128, 128>}, {pipeline_mode = #tpu.pipeline_mode<synchronous>, transform_indices = @transform_30, window_bounds = array<i64: 1, 128>}, {pipeline_mode = #tpu.pipeline_mode<synchronous>, transform_indices = @transform_31, window_bounds = array<i64: 384, 256>}, {pipeline_mode = #tpu.pipeline_mode<synchronous>, transform_indices = @transform_32, window_bounds = array<i64: 1, 256>}, {pipeline_mode = #tpu.pipeline_mode<synchronous>, transform_indices = @transform_33, window_bounds = array<i64: 768, 128>}, {pipeline_mode = #tpu.pipeline_mode<synchronous>, transform_indices = @transform_34, window_bounds = array<i64: 1, 128>}, {pipeline_mode = #tpu.pipeline_mode<synchronous>, transform_indices = @transform_35, window_bounds = array<i64: 384, 256>}, {pipeline_mode = #tpu.pipeline_mode<synchronous>, transform_indices = @transform_36, window_bounds = array<i64: 1, 256>}, {pipeline_mode = #tpu.pipeline_mode<synchronous>, transform_indices = @transform_37, window_bounds = array<i64: 2304, 128>}, {pipeline_mode = #tpu.pipeline_mode<synchronous>, transform_indices = @transform_38, window_bounds = array<i64: 1, 128>}, {transform_indices = @transform_39, window_bounds = array<i64: 16, 128>}]} {
    %0 = tpu.iota {dimensions = array<i32: 0>} : vector<16x1xi32>
    %c8_i32 = arith.constant 8 : i32
    %c0_i32 = arith.constant 0 : i32
    %1 = arith.cmpi eq, %c8_i32, %c0_i32 : i32
    %c1_i32 = arith.constant 1 : i32
    %2 = arith.select %1, %c1_i32, %c8_i32 : i32
    %3 = vector.broadcast %2 : i32 to vector<16x1xi32>
    %4 = arith.remsi %0, %3 : vector<16x1xi32>
    %c0_i32_0 = arith.constant 0 : i32
    %5 = vector.broadcast %c0_i32_0 : i32 to vector<16x1xi32>
    %6 = arith.cmpi ne, %4, %5 : vector<16x1xi32>
    %c0_i32_1 = arith.constant 0 : i32
    %7 = vector.broadcast %c0_i32_1 : i32 to vector<16x1xi32>
    %8 = arith.cmpi slt, %4, %7 : vector<16x1xi32>
    %c0_i32_2 = arith.constant 0 : i32
    %9 = arith.cmpi slt, %2, %c0_i32_2 : i32
    %10 = vector.broadcast %9 : i1 to vector<16x1xi1>
    %11 = vector.broadcast %10 : vector<16x1xi1> to vector<16x1xi1>
    %12 = arith.xori %8, %11 : vector<16x1xi1>
    %13 = arith.andi %12, %6 : vector<16x1xi1>
    %14 = vector.broadcast %2 : i32 to vector<16x1xi32>
    %15 = arith.addi %4, %14 : vector<16x1xi32>
    %16 = arith.select %13, %15, %4 : vector<16x1xi1>, vector<16x1xi32>
    %c0_i32_3 = arith.constant 0 : i32
    %17 = vector.broadcast %c0_i32_3 : i32 to vector<16x1xi32>
    %18 = arith.cmpi ne, %16, %17 : vector<16x1xi32>
    %19 = arith.extui %18 : vector<16x1xi1> to vector<16x1xi32>
    %20 = arith.sitofp %19 : vector<16x1xi32> to vector<16x1xf32>
    %c7_i32 = arith.constant 7 : i32
    %21 = vector.broadcast %c7_i32 : i32 to vector<16x1xi32>
    %22 = arith.cmpi ne, %16, %21 : vector<16x1xi32>
    %23 = arith.extui %22 : vector<16x1xi1> to vector<16x1xi32>
    %24 = arith.sitofp %23 : vector<16x1xi32> to vector<16x1xf32>
    %c0 = arith.constant 0 : index
    %c0_4 = arith.constant 0 : index
    %25 = vector.load %arg1[%c0, %c0_4] : memref<16x128xf32, #tpu.memory_space<vmem>>, vector<16x128xf32>
    %c1_i32_5 = arith.constant 1 : i32
    %26 = tpu.dynamic_rotate %25 by %c1_i32_5 dim 0 : vector<16x128xf32>, i32 -> vector<16x128xf32>
    %27 = vector.broadcast %20 : vector<16x1xf32> to vector<16x128xf32>
    %28 = arith.mulf %26, %27 : vector<16x128xf32>
    %c15_i32 = arith.constant 15 : i32
    %29 = tpu.dynamic_rotate %25 by %c15_i32 dim 0 : vector<16x128xf32>, i32 -> vector<16x128xf32>
    %30 = vector.broadcast %24 : vector<16x1xf32> to vector<16x128xf32>
    %31 = arith.mulf %29, %30 : vector<16x128xf32>
    %32 = tpu.concatenate %28, %25, %31 in 1 : vector<16x128xf32>, vector<16x128xf32>, vector<16x128xf32> -> vector<16x384xf32>
    %33 = arith.truncf %32 : vector<16x384xf32> to vector<16x384xbf16>
    %c0_6 = arith.constant 0 : index
    %c0_7 = arith.constant 0 : index
    %34 = vector.load %arg2[%c0_6, %c0_7] : memref<384x128xbf16, #tpu.memory_space<vmem>>, vector<384x128xbf16>
    %cst = arith.constant dense<0.000000e+00> : vector<16x128xf32>
    %35 = tpu.matmul %33, %34, %cst {dimension_numbers = #tpu.dot_dimension_numbers<[1], [0], [0], [1], [0, 0, 1, 1], [], []>} : vector<16x384xbf16>, vector<384x128xbf16>, vector<16x128xf32> -> vector<16x128xf32>
    %c0_8 = arith.constant 0 : index
    %c0_9 = arith.constant 0 : index
    %36 = vector.load %arg3[%c0_8, %c0_9] : memref<1x128xf32, #tpu.memory_space<vmem>>, vector<1x128xf32>
    %37 = vector.broadcast %36 : vector<1x128xf32> to vector<16x128xf32>
    %38 = arith.addf %35, %37 : vector<16x128xf32>
    %cst_10 = arith.constant 0.000000e+00 : f32
    %39 = vector.broadcast %cst_10 : f32 to vector<16x128xf32>
    %40 = arith.maximumf %38, %39 : vector<16x128xf32>
    %41 = arith.truncf %40 : vector<16x128xf32> to vector<16x128xbf16>
    %c0_11 = arith.constant 0 : index
    %c0_12 = arith.constant 0 : index
    %42 = vector.load %arg4[%c0_11, %c0_12] : memref<128x128xbf16, #tpu.memory_space<vmem>>, vector<128x128xbf16>
    %cst_13 = arith.constant dense<0.000000e+00> : vector<16x128xf32>
    %43 = tpu.matmul %41, %42, %cst_13 {dimension_numbers = #tpu.dot_dimension_numbers<[1], [0], [0], [1], [0, 0, 1, 1], [], []>} : vector<16x128xbf16>, vector<128x128xbf16>, vector<16x128xf32> -> vector<16x128xf32>
    %c0_14 = arith.constant 0 : index
    %c0_15 = arith.constant 0 : index
    %44 = vector.load %arg5[%c0_14, %c0_15] : memref<1x128xf32, #tpu.memory_space<vmem>>, vector<1x128xf32>
    %45 = vector.broadcast %44 : vector<1x128xf32> to vector<16x128xf32>
    %46 = arith.addf %43, %45 : vector<16x128xf32>
    %cst_16 = arith.constant 0.000000e+00 : f32
    %47 = vector.broadcast %cst_16 : f32 to vector<16x128xf32>
    %48 = arith.maximumf %46, %47 : vector<16x128xf32>
    %c1_i32_17 = arith.constant 1 : i32
    %49 = tpu.dynamic_rotate %48 by %c1_i32_17 dim 0 : vector<16x128xf32>, i32 -> vector<16x128xf32>
    %50 = vector.broadcast %20 : vector<16x1xf32> to vector<16x128xf32>
    %51 = arith.mulf %49, %50 : vector<16x128xf32>
    %c15_i32_18 = arith.constant 15 : i32
    %52 = tpu.dynamic_rotate %48 by %c15_i32_18 dim 0 : vector<16x128xf32>, i32 -> vector<16x128xf32>
    %53 = vector.broadcast %24 : vector<16x1xf32> to vector<16x128xf32>
    %54 = arith.mulf %52, %53 : vector<16x128xf32>
    %55 = tpu.concatenate %51, %48, %54 in 1 : vector<16x128xf32>, vector<16x128xf32>, vector<16x128xf32> -> vector<16x384xf32>
    %56 = arith.truncf %55 : vector<16x384xf32> to vector<16x384xbf16>
    %c0_19 = arith.constant 0 : index
    %c0_20 = arith.constant 0 : index
    %57 = vector.load %arg6[%c0_19, %c0_20] : memref<384x256xbf16, #tpu.memory_space<vmem>>, vector<384x256xbf16>
    %cst_21 = arith.constant dense<0.000000e+00> : vector<16x256xf32>
    %58 = tpu.matmul %56, %57, %cst_21 {dimension_numbers = #tpu.dot_dimension_numbers<[1], [0], [0], [1], [0, 0, 1, 1], [], []>} : vector<16x384xbf16>, vector<384x256xbf16>, vector<16x256xf32> -> vector<16x256xf32>
    %c0_22 = arith.constant 0 : index
    %c0_23 = arith.constant 0 : index
    %59 = vector.load %arg7[%c0_22, %c0_23] : memref<1x256xf32, #tpu.memory_space<vmem>>, vector<1x256xf32>
    %60 = vector.broadcast %59 : vector<1x256xf32> to vector<16x256xf32>
    %61 = arith.addf %58, %60 : vector<16x256xf32>
    %cst_24 = arith.constant 0.000000e+00 : f32
    %62 = vector.broadcast %cst_24 : f32 to vector<16x256xf32>
    %63 = arith.maximumf %61, %62 : vector<16x256xf32>
    %c1_i32_25 = arith.constant 1 : i32
    %64 = tpu.dynamic_rotate %63 by %c1_i32_25 dim 0 : vector<16x256xf32>, i32 -> vector<16x256xf32>
    %65 = vector.broadcast %20 : vector<16x1xf32> to vector<16x256xf32>
    %66 = arith.mulf %64, %65 : vector<16x256xf32>
    %c15_i32_26 = arith.constant 15 : i32
    %67 = tpu.dynamic_rotate %63 by %c15_i32_26 dim 0 : vector<16x256xf32>, i32 -> vector<16x256xf32>
    %68 = vector.broadcast %24 : vector<16x1xf32> to vector<16x256xf32>
    %69 = arith.mulf %67, %68 : vector<16x256xf32>
    %70 = tpu.concatenate %66, %63, %69 in 1 : vector<16x256xf32>, vector<16x256xf32>, vector<16x256xf32> -> vector<16x768xf32>
    %71 = arith.truncf %70 : vector<16x768xf32> to vector<16x768xbf16>
    %c0_27 = arith.constant 0 : index
    %c0_28 = arith.constant 0 : index
    %72 = vector.load %arg8[%c0_27, %c0_28] : memref<768x128xbf16, #tpu.memory_space<vmem>>, vector<768x128xbf16>
    %cst_29 = arith.constant dense<0.000000e+00> : vector<16x128xf32>
    %73 = tpu.matmul %71, %72, %cst_29 {dimension_numbers = #tpu.dot_dimension_numbers<[1], [0], [0], [1], [0, 0, 1, 1], [], []>} : vector<16x768xbf16>, vector<768x128xbf16>, vector<16x128xf32> -> vector<16x128xf32>
    %c0_30 = arith.constant 0 : index
    %c0_31 = arith.constant 0 : index
    %74 = vector.load %arg9[%c0_30, %c0_31] : memref<1x128xf32, #tpu.memory_space<vmem>>, vector<1x128xf32>
    %75 = vector.broadcast %74 : vector<1x128xf32> to vector<16x128xf32>
    %76 = arith.addf %73, %75 : vector<16x128xf32>
    %cst_32 = arith.constant 0.000000e+00 : f32
    %77 = vector.broadcast %cst_32 : f32 to vector<16x128xf32>
    %78 = arith.maximumf %76, %77 : vector<16x128xf32>
    %79 = arith.subf %78, %48 : vector<16x128xf32>
    %c1_i32_33 = arith.constant 1 : i32
    %80 = tpu.dynamic_rotate %79 by %c1_i32_33 dim 0 : vector<16x128xf32>, i32 -> vector<16x128xf32>
    %81 = vector.broadcast %20 : vector<16x1xf32> to vector<16x128xf32>
    %82 = arith.mulf %80, %81 : vector<16x128xf32>
    %c15_i32_34 = arith.constant 15 : i32
    %83 = tpu.dynamic_rotate %79 by %c15_i32_34 dim 0 : vector<16x128xf32>, i32 -> vector<16x128xf32>
    %84 = vector.broadcast %24 : vector<16x1xf32> to vector<16x128xf32>
    %85 = arith.mulf %83, %84 : vector<16x128xf32>
    %86 = tpu.concatenate %82, %79, %85 in 1 : vector<16x128xf32>, vector<16x128xf32>, vector<16x128xf32> -> vector<16x384xf32>
    %87 = arith.truncf %86 : vector<16x384xf32> to vector<16x384xbf16>
    %c0_35 = arith.constant 0 : index
    %c0_36 = arith.constant 0 : index
    %88 = vector.load %arg10[%c0_35, %c0_36] : memref<384x256xbf16, #tpu.memory_space<vmem>>, vector<384x256xbf16>
    %cst_37 = arith.constant dense<0.000000e+00> : vector<16x256xf32>
    %89 = tpu.matmul %87, %88, %cst_37 {dimension_numbers = #tpu.dot_dimension_numbers<[1], [0], [0], [1], [0, 0, 1, 1], [], []>} : vector<16x384xbf16>, vector<384x256xbf16>, vector<16x256xf32> -> vector<16x256xf32>
    %c0_38 = arith.constant 0 : index
    %c0_39 = arith.constant 0 : index
    %90 = vector.load %arg11[%c0_38, %c0_39] : memref<1x256xf32, #tpu.memory_space<vmem>>, vector<1x256xf32>
    %91 = vector.broadcast %90 : vector<1x256xf32> to vector<16x256xf32>
    %92 = arith.addf %89, %91 : vector<16x256xf32>
    %cst_40 = arith.constant 0.000000e+00 : f32
    %93 = vector.broadcast %cst_40 : f32 to vector<16x256xf32>
    %94 = arith.maximumf %92, %93 : vector<16x256xf32>
    %95 = arith.addf %63, %94 : vector<16x256xf32>
    %c1_i32_41 = arith.constant 1 : i32
    %96 = tpu.dynamic_rotate %95 by %c1_i32_41 dim 0 : vector<16x256xf32>, i32 -> vector<16x256xf32>
    %97 = vector.broadcast %20 : vector<16x1xf32> to vector<16x256xf32>
    %98 = arith.mulf %96, %97 : vector<16x256xf32>
    %c15_i32_42 = arith.constant 15 : i32
    %99 = tpu.dynamic_rotate %95 by %c15_i32_42 dim 0 : vector<16x256xf32>, i32 -> vector<16x256xf32>
    %100 = vector.broadcast %24 : vector<16x1xf32> to vector<16x256xf32>
    %101 = arith.mulf %99, %100 : vector<16x256xf32>
    %102 = tpu.concatenate %98, %95, %101 in 1 : vector<16x256xf32>, vector<16x256xf32>, vector<16x256xf32> -> vector<16x768xf32>
    %103 = arith.truncf %102 : vector<16x768xf32> to vector<16x768xbf16>
    %c0_43 = arith.constant 0 : index
    %c0_44 = arith.constant 0 : index
    %104 = vector.load %arg12[%c0_43, %c0_44] : memref<768x128xbf16, #tpu.memory_space<vmem>>, vector<768x128xbf16>
    %cst_45 = arith.constant dense<0.000000e+00> : vector<16x128xf32>
    %105 = tpu.matmul %103, %104, %cst_45 {dimension_numbers = #tpu.dot_dimension_numbers<[1], [0], [0], [1], [0, 0, 1, 1], [], []>} : vector<16x768xbf16>, vector<768x128xbf16>, vector<16x128xf32> -> vector<16x128xf32>
    %c0_46 = arith.constant 0 : index
    %c0_47 = arith.constant 0 : index
    %106 = vector.load %arg13[%c0_46, %c0_47] : memref<1x128xf32, #tpu.memory_space<vmem>>, vector<1x128xf32>
    %107 = vector.broadcast %106 : vector<1x128xf32> to vector<16x128xf32>
    %108 = arith.addf %105, %107 : vector<16x128xf32>
    %cst_48 = arith.constant 0.000000e+00 : f32
    %109 = vector.broadcast %cst_48 : f32 to vector<16x128xf32>
    %110 = arith.maximumf %108, %109 : vector<16x128xf32>
    %c1_i32_49 = arith.constant 1 : i32
    %111 = tpu.dynamic_rotate %110 by %c1_i32_49 dim 0 : vector<16x128xf32>, i32 -> vector<16x128xf32>
    %112 = vector.broadcast %20 : vector<16x1xf32> to vector<16x128xf32>
    %113 = arith.mulf %111, %112 : vector<16x128xf32>
    %c15_i32_50 = arith.constant 15 : i32
    %114 = tpu.dynamic_rotate %110 by %c15_i32_50 dim 0 : vector<16x128xf32>, i32 -> vector<16x128xf32>
    %115 = vector.broadcast %24 : vector<16x1xf32> to vector<16x128xf32>
    %116 = arith.mulf %114, %115 : vector<16x128xf32>
    %117 = tpu.concatenate %113, %110, %116 in 1 : vector<16x128xf32>, vector<16x128xf32>, vector<16x128xf32> -> vector<16x384xf32>
    %118 = arith.truncf %117 : vector<16x384xf32> to vector<16x384xbf16>
    %c0_51 = arith.constant 0 : index
    %c0_52 = arith.constant 0 : index
    %119 = vector.load %arg14[%c0_51, %c0_52] : memref<384x256xbf16, #tpu.memory_space<vmem>>, vector<384x256xbf16>
    %cst_53 = arith.constant dense<0.000000e+00> : vector<16x256xf32>
    %120 = tpu.matmul %118, %119, %cst_53 {dimension_numbers = #tpu.dot_dimension_numbers<[1], [0], [0], [1], [0, 0, 1, 1], [], []>} : vector<16x384xbf16>, vector<384x256xbf16>, vector<16x256xf32> -> vector<16x256xf32>
    %c0_54 = arith.constant 0 : index
    %c0_55 = arith.constant 0 : index
    %121 = vector.load %arg15[%c0_54, %c0_55] : memref<1x256xf32, #tpu.memory_space<vmem>>, vector<1x256xf32>
    %122 = vector.broadcast %121 : vector<1x256xf32> to vector<16x256xf32>
    %123 = arith.addf %120, %122 : vector<16x256xf32>
    %cst_56 = arith.constant 0.000000e+00 : f32
    %124 = vector.broadcast %cst_56 : f32 to vector<16x256xf32>
    %125 = arith.maximumf %123, %124 : vector<16x256xf32>
    %126 = arith.subf %125, %95 : vector<16x256xf32>
    %c1_i32_57 = arith.constant 1 : i32
    %127 = tpu.dynamic_rotate %126 by %c1_i32_57 dim 0 : vector<16x256xf32>, i32 -> vector<16x256xf32>
    %128 = vector.broadcast %20 : vector<16x1xf32> to vector<16x256xf32>
    %129 = arith.mulf %127, %128 : vector<16x256xf32>
    %c15_i32_58 = arith.constant 15 : i32
    %130 = tpu.dynamic_rotate %126 by %c15_i32_58 dim 0 : vector<16x256xf32>, i32 -> vector<16x256xf32>
    %131 = vector.broadcast %24 : vector<16x1xf32> to vector<16x256xf32>
    %132 = arith.mulf %130, %131 : vector<16x256xf32>
    %133 = tpu.concatenate %129, %126, %132 in 1 : vector<16x256xf32>, vector<16x256xf32>, vector<16x256xf32> -> vector<16x768xf32>
    %134 = arith.truncf %133 : vector<16x768xf32> to vector<16x768xbf16>
    %c0_59 = arith.constant 0 : index
    %c0_60 = arith.constant 0 : index
    %135 = vector.load %arg16[%c0_59, %c0_60] : memref<768x128xbf16, #tpu.memory_space<vmem>>, vector<768x128xbf16>
    %cst_61 = arith.constant dense<0.000000e+00> : vector<16x128xf32>
    %136 = tpu.matmul %134, %135, %cst_61 {dimension_numbers = #tpu.dot_dimension_numbers<[1], [0], [0], [1], [0, 0, 1, 1], [], []>} : vector<16x768xbf16>, vector<768x128xbf16>, vector<16x128xf32> -> vector<16x128xf32>
    %c0_62 = arith.constant 0 : index
    %c0_63 = arith.constant 0 : index
    %137 = vector.load %arg17[%c0_62, %c0_63] : memref<1x128xf32, #tpu.memory_space<vmem>>, vector<1x128xf32>
    %138 = vector.broadcast %137 : vector<1x128xf32> to vector<16x128xf32>
    %139 = arith.addf %136, %138 : vector<16x128xf32>
    %cst_64 = arith.constant 0.000000e+00 : f32
    %140 = vector.broadcast %cst_64 : f32 to vector<16x128xf32>
    %141 = arith.maximumf %139, %140 : vector<16x128xf32>
    %142 = arith.addf %110, %141 : vector<16x128xf32>
    %c1_i32_65 = arith.constant 1 : i32
    %143 = tpu.dynamic_rotate %142 by %c1_i32_65 dim 0 : vector<16x128xf32>, i32 -> vector<16x128xf32>
    %144 = vector.broadcast %20 : vector<16x1xf32> to vector<16x128xf32>
    %145 = arith.mulf %143, %144 : vector<16x128xf32>
    %c15_i32_66 = arith.constant 15 : i32
    %146 = tpu.dynamic_rotate %142 by %c15_i32_66 dim 0 : vector<16x128xf32>, i32 -> vector<16x128xf32>
    %147 = vector.broadcast %24 : vector<16x1xf32> to vector<16x128xf32>
    %148 = arith.mulf %146, %147 : vector<16x128xf32>
    %149 = tpu.concatenate %145, %142, %148 in 1 : vector<16x128xf32>, vector<16x128xf32>, vector<16x128xf32> -> vector<16x384xf32>
    %150 = arith.truncf %149 : vector<16x384xf32> to vector<16x384xbf16>
    %c0_67 = arith.constant 0 : index
    %c0_68 = arith.constant 0 : index
    %151 = vector.load %arg18[%c0_67, %c0_68] : memref<384x256xbf16, #tpu.memory_space<vmem>>, vector<384x256xbf16>
    %cst_69 = arith.constant dense<0.000000e+00> : vector<16x256xf32>
    %152 = tpu.matmul %150, %151, %cst_69 {dimension_numbers = #tpu.dot_dimension_numbers<[1], [0], [0], [1], [0, 0, 1, 1], [], []>} : vector<16x384xbf16>, vector<384x256xbf16>, vector<16x256xf32> -> vector<16x256xf32>
    %c0_70 = arith.constant 0 : index
    %c0_71 = arith.constant 0 : index
    %153 = vector.load %arg19[%c0_70, %c0_71] : memref<1x256xf32, #tpu.memory_space<vmem>>, vector<1x256xf32>
    %154 = vector.broadcast %153 : vector<1x256xf32> to vector<16x256xf32>
    %155 = arith.addf %152, %154 : vector<16x256xf32>
    %cst_72 = arith.constant 0.000000e+00 : f32
    %156 = vector.broadcast %cst_72 : f32 to vector<16x256xf32>
    %157 = arith.maximumf %155, %156 : vector<16x256xf32>
    %c1_i32_73 = arith.constant 1 : i32
    %158 = tpu.dynamic_rotate %157 by %c1_i32_73 dim 0 : vector<16x256xf32>, i32 -> vector<16x256xf32>
    %159 = vector.broadcast %20 : vector<16x1xf32> to vector<16x256xf32>
    %160 = arith.mulf %158, %159 : vector<16x256xf32>
    %c15_i32_74 = arith.constant 15 : i32
    %161 = tpu.dynamic_rotate %157 by %c15_i32_74 dim 0 : vector<16x256xf32>, i32 -> vector<16x256xf32>
    %162 = vector.broadcast %24 : vector<16x1xf32> to vector<16x256xf32>
    %163 = arith.mulf %161, %162 : vector<16x256xf32>
    %164 = tpu.concatenate %160, %157, %163 in 1 : vector<16x256xf32>, vector<16x256xf32>, vector<16x256xf32> -> vector<16x768xf32>
    %165 = arith.truncf %164 : vector<16x768xf32> to vector<16x768xbf16>
    %c0_75 = arith.constant 0 : index
    %c0_76 = arith.constant 0 : index
    %166 = vector.load %arg20[%c0_75, %c0_76] : memref<768x128xbf16, #tpu.memory_space<vmem>>, vector<768x128xbf16>
    %cst_77 = arith.constant dense<0.000000e+00> : vector<16x128xf32>
    %167 = tpu.matmul %165, %166, %cst_77 {dimension_numbers = #tpu.dot_dimension_numbers<[1], [0], [0], [1], [0, 0, 1, 1], [], []>} : vector<16x768xbf16>, vector<768x128xbf16>, vector<16x128xf32> -> vector<16x128xf32>
    %c0_78 = arith.constant 0 : index
    %c0_79 = arith.constant 0 : index
    %168 = vector.load %arg21[%c0_78, %c0_79] : memref<1x128xf32, #tpu.memory_space<vmem>>, vector<1x128xf32>
    %169 = vector.broadcast %168 : vector<1x128xf32> to vector<16x128xf32>
    %170 = arith.addf %167, %169 : vector<16x128xf32>
    %cst_80 = arith.constant 0.000000e+00 : f32
    %171 = vector.broadcast %cst_80 : f32 to vector<16x128xf32>
    %172 = arith.maximumf %170, %171 : vector<16x128xf32>
    %173 = arith.subf %172, %142 : vector<16x128xf32>
    %c1_i32_81 = arith.constant 1 : i32
    %174 = tpu.dynamic_rotate %173 by %c1_i32_81 dim 0 : vector<16x128xf32>, i32 -> vector<16x128xf32>
    %175 = vector.broadcast %20 : vector<16x1xf32> to vector<16x128xf32>
    %176 = arith.mulf %174, %175 : vector<16x128xf32>
    %c15_i32_82 = arith.constant 15 : i32
    %177 = tpu.dynamic_rotate %173 by %c15_i32_82 dim 0 : vector<16x128xf32>, i32 -> vector<16x128xf32>
    %178 = vector.broadcast %24 : vector<16x1xf32> to vector<16x128xf32>
    %179 = arith.mulf %177, %178 : vector<16x128xf32>
    %180 = tpu.concatenate %176, %173, %179 in 1 : vector<16x128xf32>, vector<16x128xf32>, vector<16x128xf32> -> vector<16x384xf32>
    %181 = arith.truncf %180 : vector<16x384xf32> to vector<16x384xbf16>
    %c0_83 = arith.constant 0 : index
    %c0_84 = arith.constant 0 : index
    %182 = vector.load %arg22[%c0_83, %c0_84] : memref<384x256xbf16, #tpu.memory_space<vmem>>, vector<384x256xbf16>
    %cst_85 = arith.constant dense<0.000000e+00> : vector<16x256xf32>
    %183 = tpu.matmul %181, %182, %cst_85 {dimension_numbers = #tpu.dot_dimension_numbers<[1], [0], [0], [1], [0, 0, 1, 1], [], []>} : vector<16x384xbf16>, vector<384x256xbf16>, vector<16x256xf32> -> vector<16x256xf32>
    %c0_86 = arith.constant 0 : index
    %c0_87 = arith.constant 0 : index
    %184 = vector.load %arg23[%c0_86, %c0_87] : memref<1x256xf32, #tpu.memory_space<vmem>>, vector<1x256xf32>
    %185 = vector.broadcast %184 : vector<1x256xf32> to vector<16x256xf32>
    %186 = arith.addf %183, %185 : vector<16x256xf32>
    %cst_88 = arith.constant 0.000000e+00 : f32
    %187 = vector.broadcast %cst_88 : f32 to vector<16x256xf32>
    %188 = arith.maximumf %186, %187 : vector<16x256xf32>
    %189 = arith.addf %157, %188 : vector<16x256xf32>
    %c1_i32_89 = arith.constant 1 : i32
    %190 = tpu.dynamic_rotate %189 by %c1_i32_89 dim 0 : vector<16x256xf32>, i32 -> vector<16x256xf32>
    %191 = vector.broadcast %20 : vector<16x1xf32> to vector<16x256xf32>
    %192 = arith.mulf %190, %191 : vector<16x256xf32>
    %c15_i32_90 = arith.constant 15 : i32
    %193 = tpu.dynamic_rotate %189 by %c15_i32_90 dim 0 : vector<16x256xf32>, i32 -> vector<16x256xf32>
    %194 = vector.broadcast %24 : vector<16x1xf32> to vector<16x256xf32>
    %195 = arith.mulf %193, %194 : vector<16x256xf32>
    %196 = tpu.concatenate %192, %189, %195 in 1 : vector<16x256xf32>, vector<16x256xf32>, vector<16x256xf32> -> vector<16x768xf32>
    %197 = arith.truncf %196 : vector<16x768xf32> to vector<16x768xbf16>
    %c0_91 = arith.constant 0 : index
    %c0_92 = arith.constant 0 : index
    %198 = vector.load %arg24[%c0_91, %c0_92] : memref<768x128xbf16, #tpu.memory_space<vmem>>, vector<768x128xbf16>
    %cst_93 = arith.constant dense<0.000000e+00> : vector<16x128xf32>
    %199 = tpu.matmul %197, %198, %cst_93 {dimension_numbers = #tpu.dot_dimension_numbers<[1], [0], [0], [1], [0, 0, 1, 1], [], []>} : vector<16x768xbf16>, vector<768x128xbf16>, vector<16x128xf32> -> vector<16x128xf32>
    %c0_94 = arith.constant 0 : index
    %c0_95 = arith.constant 0 : index
    %200 = vector.load %arg25[%c0_94, %c0_95] : memref<1x128xf32, #tpu.memory_space<vmem>>, vector<1x128xf32>
    %201 = vector.broadcast %200 : vector<1x128xf32> to vector<16x128xf32>
    %202 = arith.addf %199, %201 : vector<16x128xf32>
    %cst_96 = arith.constant 0.000000e+00 : f32
    %203 = vector.broadcast %cst_96 : f32 to vector<16x128xf32>
    %204 = arith.maximumf %202, %203 : vector<16x128xf32>
    %c1_i32_97 = arith.constant 1 : i32
    %205 = tpu.dynamic_rotate %204 by %c1_i32_97 dim 0 : vector<16x128xf32>, i32 -> vector<16x128xf32>
    %206 = vector.broadcast %20 : vector<16x1xf32> to vector<16x128xf32>
    %207 = arith.mulf %205, %206 : vector<16x128xf32>
    %c15_i32_98 = arith.constant 15 : i32
    %208 = tpu.dynamic_rotate %204 by %c15_i32_98 dim 0 : vector<16x128xf32>, i32 -> vector<16x128xf32>
    %209 = vector.broadcast %24 : vector<16x1xf32> to vector<16x128xf32>
    %210 = arith.mulf %208, %209 : vector<16x128xf32>
    %211 = tpu.concatenate %207, %204, %210 in 1 : vector<16x128xf32>, vector<16x128xf32>, vector<16x128xf32> -> vector<16x384xf32>
    %212 = arith.truncf %211 : vector<16x384xf32> to vector<16x384xbf16>
    %c0_99 = arith.constant 0 : index
    %c0_100 = arith.constant 0 : index
    %213 = vector.load %arg26[%c0_99, %c0_100] : memref<384x256xbf16, #tpu.memory_space<vmem>>, vector<384x256xbf16>
    %cst_101 = arith.constant dense<0.000000e+00> : vector<16x256xf32>
    %214 = tpu.matmul %212, %213, %cst_101 {dimension_numbers = #tpu.dot_dimension_numbers<[1], [0], [0], [1], [0, 0, 1, 1], [], []>} : vector<16x384xbf16>, vector<384x256xbf16>, vector<16x256xf32> -> vector<16x256xf32>
    %c0_102 = arith.constant 0 : index
    %c0_103 = arith.constant 0 : index
    %215 = vector.load %arg27[%c0_102, %c0_103] : memref<1x256xf32, #tpu.memory_space<vmem>>, vector<1x256xf32>
    %216 = vector.broadcast %215 : vector<1x256xf32> to vector<16x256xf32>
    %217 = arith.addf %214, %216 : vector<16x256xf32>
    %cst_104 = arith.constant 0.000000e+00 : f32
    %218 = vector.broadcast %cst_104 : f32 to vector<16x256xf32>
    %219 = arith.maximumf %217, %218 : vector<16x256xf32>
    %220 = arith.subf %219, %189 : vector<16x256xf32>
    %c1_i32_105 = arith.constant 1 : i32
    %221 = tpu.dynamic_rotate %220 by %c1_i32_105 dim 0 : vector<16x256xf32>, i32 -> vector<16x256xf32>
    %222 = vector.broadcast %20 : vector<16x1xf32> to vector<16x256xf32>
    %223 = arith.mulf %221, %222 : vector<16x256xf32>
    %c15_i32_106 = arith.constant 15 : i32
    %224 = tpu.dynamic_rotate %220 by %c15_i32_106 dim 0 : vector<16x256xf32>, i32 -> vector<16x256xf32>
    %225 = vector.broadcast %24 : vector<16x1xf32> to vector<16x256xf32>
    %226 = arith.mulf %224, %225 : vector<16x256xf32>
    %227 = tpu.concatenate %223, %220, %226 in 1 : vector<16x256xf32>, vector<16x256xf32>, vector<16x256xf32> -> vector<16x768xf32>
    %228 = arith.truncf %227 : vector<16x768xf32> to vector<16x768xbf16>
    %c0_107 = arith.constant 0 : index
    %c0_108 = arith.constant 0 : index
    %229 = vector.load %arg28[%c0_107, %c0_108] : memref<768x128xbf16, #tpu.memory_space<vmem>>, vector<768x128xbf16>
    %cst_109 = arith.constant dense<0.000000e+00> : vector<16x128xf32>
    %230 = tpu.matmul %228, %229, %cst_109 {dimension_numbers = #tpu.dot_dimension_numbers<[1], [0], [0], [1], [0, 0, 1, 1], [], []>} : vector<16x768xbf16>, vector<768x128xbf16>, vector<16x128xf32> -> vector<16x128xf32>
    %c0_110 = arith.constant 0 : index
    %c0_111 = arith.constant 0 : index
    %231 = vector.load %arg29[%c0_110, %c0_111] : memref<1x128xf32, #tpu.memory_space<vmem>>, vector<1x128xf32>
    %232 = vector.broadcast %231 : vector<1x128xf32> to vector<16x128xf32>
    %233 = arith.addf %230, %232 : vector<16x128xf32>
    %cst_112 = arith.constant 0.000000e+00 : f32
    %234 = vector.broadcast %cst_112 : f32 to vector<16x128xf32>
    %235 = arith.maximumf %233, %234 : vector<16x128xf32>
    %236 = arith.addf %204, %235 : vector<16x128xf32>
    %237 = arith.truncf %236 : vector<16x128xf32> to vector<16x128xbf16>
    %c0_113 = arith.constant 0 : index
    %c0_114 = arith.constant 0 : index
    %238 = vector.load %arg30[%c0_113, %c0_114] : memref<128x128xbf16, #tpu.memory_space<vmem>>, vector<128x128xbf16>
    %cst_115 = arith.constant dense<0.000000e+00> : vector<16x128xf32>
    %239 = tpu.matmul %237, %238, %cst_115 {dimension_numbers = #tpu.dot_dimension_numbers<[1], [0], [0], [1], [0, 0, 1, 1], [], []>} : vector<16x128xbf16>, vector<128x128xbf16>, vector<16x128xf32> -> vector<16x128xf32>
    %c0_116 = arith.constant 0 : index
    %c0_117 = arith.constant 0 : index
    %240 = vector.load %arg31[%c0_116, %c0_117] : memref<1x128xf32, #tpu.memory_space<vmem>>, vector<1x128xf32>
    %241 = vector.broadcast %240 : vector<1x128xf32> to vector<16x128xf32>
    %242 = arith.addf %239, %241 : vector<16x128xf32>
    %cst_118 = arith.constant 0.000000e+00 : f32
    %243 = vector.broadcast %cst_118 : f32 to vector<16x128xf32>
    %244 = arith.maximumf %242, %243 : vector<16x128xf32>
    %c1_i32_119 = arith.constant 1 : i32
    %245 = tpu.dynamic_rotate %244 by %c1_i32_119 dim 0 : vector<16x128xf32>, i32 -> vector<16x128xf32>
    %246 = vector.broadcast %20 : vector<16x1xf32> to vector<16x128xf32>
    %247 = arith.mulf %245, %246 : vector<16x128xf32>
    %c15_i32_120 = arith.constant 15 : i32
    %248 = tpu.dynamic_rotate %244 by %c15_i32_120 dim 0 : vector<16x128xf32>, i32 -> vector<16x128xf32>
    %249 = vector.broadcast %24 : vector<16x1xf32> to vector<16x128xf32>
    %250 = arith.mulf %248, %249 : vector<16x128xf32>
    %251 = tpu.concatenate %247, %244, %250 in 1 : vector<16x128xf32>, vector<16x128xf32>, vector<16x128xf32> -> vector<16x384xf32>
    %252 = arith.truncf %251 : vector<16x384xf32> to vector<16x384xbf16>
    %c0_121 = arith.constant 0 : index
    %c0_122 = arith.constant 0 : index
    %253 = vector.load %arg32[%c0_121, %c0_122] : memref<384x256xbf16, #tpu.memory_space<vmem>>, vector<384x256xbf16>
    %cst_123 = arith.constant dense<0.000000e+00> : vector<16x256xf32>
    %254 = tpu.matmul %252, %253, %cst_123 {dimension_numbers = #tpu.dot_dimension_numbers<[1], [0], [0], [1], [0, 0, 1, 1], [], []>} : vector<16x384xbf16>, vector<384x256xbf16>, vector<16x256xf32> -> vector<16x256xf32>
    %c0_124 = arith.constant 0 : index
    %c0_125 = arith.constant 0 : index
    %255 = vector.load %arg33[%c0_124, %c0_125] : memref<1x256xf32, #tpu.memory_space<vmem>>, vector<1x256xf32>
    %256 = vector.broadcast %255 : vector<1x256xf32> to vector<16x256xf32>
    %257 = arith.addf %254, %256 : vector<16x256xf32>
    %cst_126 = arith.constant 0.000000e+00 : f32
    %258 = vector.broadcast %cst_126 : f32 to vector<16x256xf32>
    %259 = arith.maximumf %257, %258 : vector<16x256xf32>
    %c1_i32_127 = arith.constant 1 : i32
    %260 = tpu.dynamic_rotate %259 by %c1_i32_127 dim 0 : vector<16x256xf32>, i32 -> vector<16x256xf32>
    %261 = vector.broadcast %20 : vector<16x1xf32> to vector<16x256xf32>
    %262 = arith.mulf %260, %261 : vector<16x256xf32>
    %c15_i32_128 = arith.constant 15 : i32
    %263 = tpu.dynamic_rotate %259 by %c15_i32_128 dim 0 : vector<16x256xf32>, i32 -> vector<16x256xf32>
    %264 = vector.broadcast %24 : vector<16x1xf32> to vector<16x256xf32>
    %265 = arith.mulf %263, %264 : vector<16x256xf32>
    %266 = tpu.concatenate %262, %259, %265 in 1 : vector<16x256xf32>, vector<16x256xf32>, vector<16x256xf32> -> vector<16x768xf32>
    %267 = arith.truncf %266 : vector<16x768xf32> to vector<16x768xbf16>
    %c0_129 = arith.constant 0 : index
    %c0_130 = arith.constant 0 : index
    %268 = vector.load %arg34[%c0_129, %c0_130] : memref<768x128xbf16, #tpu.memory_space<vmem>>, vector<768x128xbf16>
    %cst_131 = arith.constant dense<0.000000e+00> : vector<16x128xf32>
    %269 = tpu.matmul %267, %268, %cst_131 {dimension_numbers = #tpu.dot_dimension_numbers<[1], [0], [0], [1], [0, 0, 1, 1], [], []>} : vector<16x768xbf16>, vector<768x128xbf16>, vector<16x128xf32> -> vector<16x128xf32>
    %c0_132 = arith.constant 0 : index
    %c0_133 = arith.constant 0 : index
    %270 = vector.load %arg35[%c0_132, %c0_133] : memref<1x128xf32, #tpu.memory_space<vmem>>, vector<1x128xf32>
    %271 = vector.broadcast %270 : vector<1x128xf32> to vector<16x128xf32>
    %272 = arith.addf %269, %271 : vector<16x128xf32>
    %cst_134 = arith.constant 0.000000e+00 : f32
    %273 = vector.broadcast %cst_134 : f32 to vector<16x128xf32>
    %274 = arith.maximumf %272, %273 : vector<16x128xf32>
    %275 = arith.subf %274, %244 : vector<16x128xf32>
    %c1_i32_135 = arith.constant 1 : i32
    %276 = tpu.dynamic_rotate %275 by %c1_i32_135 dim 0 : vector<16x128xf32>, i32 -> vector<16x128xf32>
    %277 = vector.broadcast %20 : vector<16x1xf32> to vector<16x128xf32>
    %278 = arith.mulf %276, %277 : vector<16x128xf32>
    %c15_i32_136 = arith.constant 15 : i32
    %279 = tpu.dynamic_rotate %275 by %c15_i32_136 dim 0 : vector<16x128xf32>, i32 -> vector<16x128xf32>
    %280 = vector.broadcast %24 : vector<16x1xf32> to vector<16x128xf32>
    %281 = arith.mulf %279, %280 : vector<16x128xf32>
    %282 = tpu.concatenate %278, %275, %281 in 1 : vector<16x128xf32>, vector<16x128xf32>, vector<16x128xf32> -> vector<16x384xf32>
    %283 = arith.truncf %282 : vector<16x384xf32> to vector<16x384xbf16>
    %c0_137 = arith.constant 0 : index
    %c0_138 = arith.constant 0 : index
    %284 = vector.load %arg36[%c0_137, %c0_138] : memref<384x256xbf16, #tpu.memory_space<vmem>>, vector<384x256xbf16>
    %cst_139 = arith.constant dense<0.000000e+00> : vector<16x256xf32>
    %285 = tpu.matmul %283, %284, %cst_139 {dimension_numbers = #tpu.dot_dimension_numbers<[1], [0], [0], [1], [0, 0, 1, 1], [], []>} : vector<16x384xbf16>, vector<384x256xbf16>, vector<16x256xf32> -> vector<16x256xf32>
    %c0_140 = arith.constant 0 : index
    %c0_141 = arith.constant 0 : index
    %286 = vector.load %arg37[%c0_140, %c0_141] : memref<1x256xf32, #tpu.memory_space<vmem>>, vector<1x256xf32>
    %287 = vector.broadcast %286 : vector<1x256xf32> to vector<16x256xf32>
    %288 = arith.addf %285, %287 : vector<16x256xf32>
    %cst_142 = arith.constant 0.000000e+00 : f32
    %289 = vector.broadcast %cst_142 : f32 to vector<16x256xf32>
    %290 = arith.maximumf %288, %289 : vector<16x256xf32>
    %291 = arith.addf %259, %290 : vector<16x256xf32>
    %292 = tpu.concatenate %95, %189, %291 in 1 : vector<16x256xf32>, vector<16x256xf32>, vector<16x256xf32> -> vector<16x768xf32>
    %c1_i32_143 = arith.constant 1 : i32
    %293 = tpu.dynamic_rotate %292 by %c1_i32_143 dim 0 : vector<16x768xf32>, i32 -> vector<16x768xf32>
    %294 = vector.broadcast %20 : vector<16x1xf32> to vector<16x768xf32>
    %295 = arith.mulf %293, %294 : vector<16x768xf32>
    %c15_i32_144 = arith.constant 15 : i32
    %296 = tpu.dynamic_rotate %292 by %c15_i32_144 dim 0 : vector<16x768xf32>, i32 -> vector<16x768xf32>
    %297 = vector.broadcast %24 : vector<16x1xf32> to vector<16x768xf32>
    %298 = arith.mulf %296, %297 : vector<16x768xf32>
    %299 = tpu.concatenate %295, %292, %298 in 1 : vector<16x768xf32>, vector<16x768xf32>, vector<16x768xf32> -> vector<16x2304xf32>
    %300 = arith.truncf %299 : vector<16x2304xf32> to vector<16x2304xbf16>
    %c0_145 = arith.constant 0 : index
    %c0_146 = arith.constant 0 : index
    %301 = vector.load %arg38[%c0_145, %c0_146] : memref<2304x128xbf16, #tpu.memory_space<vmem>>, vector<2304x128xbf16>
    %cst_147 = arith.constant dense<0.000000e+00> : vector<16x128xf32>
    %302 = tpu.matmul %300, %301, %cst_147 {dimension_numbers = #tpu.dot_dimension_numbers<[1], [0], [0], [1], [0, 0, 1, 1], [], []>} : vector<16x2304xbf16>, vector<2304x128xbf16>, vector<16x128xf32> -> vector<16x128xf32>
    %c0_148 = arith.constant 0 : index
    %c0_149 = arith.constant 0 : index
    %303 = vector.load %arg39[%c0_148, %c0_149] : memref<1x128xf32, #tpu.memory_space<vmem>>, vector<1x128xf32>
    %304 = vector.broadcast %303 : vector<1x128xf32> to vector<16x128xf32>
    %305 = arith.addf %302, %304 : vector<16x128xf32>
    %c0_150 = arith.constant 0 : index
    %c0_151 = arith.constant 0 : index
    %306 = vector.load %arg40[%c0_150, %c0_151] : memref<16x128xf32, #tpu.memory_space<vmem>>, vector<16x128xf32>
    tpu.vector_store %arg40[%c0_150, %c0_151], %305 {strides = array<i32>} : memref<16x128xf32, #tpu.memory_space<vmem>>, vector<16x128xf32>,
    return
  }
  func.func @transform_0(%arg0: i32) -> (i32, i32) {
    %c0_i32 = arith.constant 0 : i32
    %c0_i32_0 = arith.constant 0 : i32
    return %arg0, %c0_i32 : i32, i32
  }
  func.func @transform_1(%arg0: i32) -> (i32, i32) {
    %c0_i32 = arith.constant 0 : i32
    %c0_i32_0 = arith.constant 0 : i32
    %c0_i32_1 = arith.constant 0 : i32
    return %c0_i32, %c0_i32_0 : i32, i32
  }
  func.func @transform_2(%arg0: i32) -> (i32, i32) {
    %c0_i32 = arith.constant 0 : i32
    %c0_i32_0 = arith.constant 0 : i32
    %c0_i32_1 = arith.constant 0 : i32
    return %c0_i32, %c0_i32_0 : i32, i32
  }
  func.func @transform_3(%arg0: i32) -> (i32, i32) {
    %c0_i32 = arith.constant 0 : i32
    %c0_i32_0 = arith.constant 0 : i32
    %c0_i32_1 = arith.constant 0 : i32
    return %c0_i32, %c0_i32_0 : i32, i32
  }
  func.func @transform_4(%arg0: i32) -> (i32, i32) {
    %c0_i32 = arith.constant 0 : i32
    %c0_i32_0 = arith.constant 0 : i32
    %c0_i32_1 = arith.constant 0 : i32
    return %c0_i32, %c0_i32_0 : i32, i32
  }
  func.func @transform_5(%arg0: i32) -> (i32, i32) {
    %c0_i32 = arith.constant 0 : i32
    %c0_i32_0 = arith.constant 0 : i32
    %c0_i32_1 = arith.constant 0 : i32
    return %c0_i32, %c0_i32_0 : i32, i32
  }
  func.func @transform_6(%arg0: i32) -> (i32, i32) {
    %c0_i32 = arith.constant 0 : i32
    %c0_i32_0 = arith.constant 0 : i32
    %c0_i32_1 = arith.constant 0 : i32
    return %c0_i32, %c0_i32_0 : i32, i32
  }
  func.func @transform_7(%arg0: i32) -> (i32, i32) {
    %c0_i32 = arith.constant 0 : i32
    %c0_i32_0 = arith.constant 0 : i32
    %c0_i32_1 = arith.constant 0 : i32
    return %c0_i32, %c0_i32_0 : i32, i32
  }
  func.func @transform_8(%arg0: i32) -> (i32, i32) {
    %c0_i32 = arith.constant 0 : i32
    %c0_i32_0 = arith.constant 0 : i32
    %c0_i32_1 = arith.constant 0 : i32
    return %c0_i32, %c0_i32_0 : i32, i32
  }
  func.func @transform_9(%arg0: i32) -> (i32, i32) {
    %c0_i32 = arith.constant 0 : i32
    %c0_i32_0 = arith.constant 0 : i32
    %c0_i32_1 = arith.constant 0 : i32
    return %c0_i32, %c0_i32_0 : i32, i32
  }
  func.func @transform_10(%arg0: i32) -> (i32, i32) {
    %c0_i32 = arith.constant 0 : i32
    %c0_i32_0 = arith.constant 0 : i32
    %c0_i32_1 = arith.constant 0 : i32
    return %c0_i32, %c0_i32_0 : i32, i32
  }
  func.func @transform_11(%arg0: i32) -> (i32, i32) {
    %c0_i32 = arith.constant 0 : i32
    %c0_i32_0 = arith.constant 0 : i32
    %c0_i32_1 = arith.constant 0 : i32
    return %c0_i32, %c0_i32_0 : i32, i32
  }
  func.func @transform_12(%arg0: i32) -> (i32, i32) {
    %c0_i32 = arith.constant 0 : i32
    %c0_i32_0 = arith.constant 0 : i32
    %c0_i32_1 = arith.constant 0 : i32
    return %c0_i32, %c0_i32_0 : i32, i32
  }
  func.func @transform_13(%arg0: i32) -> (i32, i32) {
    %c0_i32 = arith.constant 0 : i32
    %c0_i32_0 = arith.constant 0 : i32
    %c0_i32_1 = arith.constant 0 : i32
    return %c0_i32, %c0_i32_0 : i32, i32
  }
  func.func @transform_14(%arg0: i32) -> (i32, i32) {
    %c0_i32 = arith.constant 0 : i32
    %c0_i32_0 = arith.constant 0 : i32
    %c0_i32_1 = arith.constant 0 : i32
    return %c0_i32, %c0_i32_0 : i32, i32
  }
  func.func @transform_15(%arg0: i32) -> (i32, i32) {
    %c0_i32 = arith.constant 0 : i32
    %c0_i32_0 = arith.constant 0 : i32
    %c0_i32_1 = arith.constant 0 : i32
    return %c0_i32, %c0_i32_0 : i32, i32
  }
  func.func @transform_16(%arg0: i32) -> (i32, i32) {
    %c0_i32 = arith.constant 0 : i32
    %c0_i32_0 = arith.constant 0 : i32
    %c0_i32_1 = arith.constant 0 : i32
    return %c0_i32, %c0_i32_0 : i32, i32
  }
  func.func @transform_17(%arg0: i32) -> (i32, i32) {
    %c0_i32 = arith.constant 0 : i32
    %c0_i32_0 = arith.constant 0 : i32
    %c0_i32_1 = arith.constant 0 : i32
    return %c0_i32, %c0_i32_0 : i32, i32
  }
  func.func @transform_18(%arg0: i32) -> (i32, i32) {
    %c0_i32 = arith.constant 0 : i32
    %c0_i32_0 = arith.constant 0 : i32
    %c0_i32_1 = arith.constant 0 : i32
    return %c0_i32, %c0_i32_0 : i32, i32
  }
  func.func @transform_19(%arg0: i32) -> (i32, i32) {
    %c0_i32 = arith.constant 0 : i32
    %c0_i32_0 = arith.constant 0 : i32
    %c0_i32_1 = arith.constant 0 : i32
    return %c0_i32, %c0_i32_0 : i32, i32
  }
  func.func @transform_20(%arg0: i32) -> (i32, i32) {
    %c0_i32 = arith.constant 0 : i32
    %c0_i32_0 = arith.constant 0 : i32
    %c0_i32_1 = arith.constant 0 : i32
    return %c0_i32, %c0_i32_0 : i32, i32
  }
  func.func @transform_21(%arg0: i32) -> (i32, i32) {
    %c0_i32 = arith.constant 0 : i32
    %c0_i32_0 = arith.constant 0 : i32
    %c0_i32_1 = arith.constant 0 : i32
    return %c0_i32, %c0_i32_0 : i32, i32
  }
  func.func @transform_22(%arg0: i32) -> (i32, i32) {
    %c0_i32 = arith.constant 0 : i32
    %c0_i32_0 = arith.constant 0 : i32
    %c0_i32_1 = arith.constant 0 : i32
    return %c0_i32, %c0_i32_0 : i32, i32
  }
  func.func @transform_23(%arg0: i32) -> (i32, i32) {
    %c0_i32 = arith.constant 0 : i32
    %c0_i32_0 = arith.constant 0 : i32
    %c0_i32_1 = arith.constant 0 : i32
    return %c0_i32, %c0_i32_0 : i32, i32
  }
  func.func @transform_24(%arg0: i32) -> (i32, i32) {
    %c0_i32 = arith.constant 0 : i32
    %c0_i32_0 = arith.constant 0 : i32
    %c0_i32_1 = arith.constant 0 : i32
    return %c0_i32, %c0_i32_0 : i32, i32
  }
  func.func @transform_25(%arg0: i32) -> (i32, i32) {
    %c0_i32 = arith.constant 0 : i32
    %c0_i32_0 = arith.constant 0 : i32
    %c0_i32_1 = arith.constant 0 : i32
    return %c0_i32, %c0_i32_0 : i32, i32
  }
  func.func @transform_26(%arg0: i32) -> (i32, i32) {
    %c0_i32 = arith.constant 0 : i32
    %c0_i32_0 = arith.constant 0 : i32
    %c0_i32_1 = arith.constant 0 : i32
    return %c0_i32, %c0_i32_0 : i32, i32
  }
  func.func @transform_27(%arg0: i32) -> (i32, i32) {
    %c0_i32 = arith.constant 0 : i32
    %c0_i32_0 = arith.constant 0 : i32
    %c0_i32_1 = arith.constant 0 : i32
    return %c0_i32, %c0_i32_0 : i32, i32
  }
  func.func @transform_28(%arg0: i32) -> (i32, i32) {
    %c0_i32 = arith.constant 0 : i32
    %c0_i32_0 = arith.constant 0 : i32
    %c0_i32_1 = arith.constant 0 : i32
    return %c0_i32, %c0_i32_0 : i32, i32
  }
  func.func @transform_29(%arg0: i32) -> (i32, i32) {
    %c0_i32 = arith.constant 0 : i32
    %c0_i32_0 = arith.constant 0 : i32
    %c0_i32_1 = arith.constant 0 : i32
    return %c0_i32, %c0_i32_0 : i32, i32
  }
  func.func @transform_30(%arg0: i32) -> (i32, i32) {
    %c0_i32 = arith.constant 0 : i32
    %c0_i32_0 = arith.constant 0 : i32
    %c0_i32_1 = arith.constant 0 : i32
    return %c0_i32, %c0_i32_0 : i32, i32
  }
  func.func @transform_31(%arg0: i32) -> (i32, i32) {
    %c0_i32 = arith.constant 0 : i32
    %c0_i32_0 = arith.constant 0 : i32
    %c0_i32_1 = arith.constant 0 : i32
    return %c0_i32, %c0_i32_0 : i32, i32
  }
  func.func @transform_32(%arg0: i32) -> (i32, i32) {
    %c0_i32 = arith.constant 0 : i32
    %c0_i32_0 = arith.constant 0 : i32
    %c0_i32_1 = arith.constant 0 : i32
    return %c0_i32, %c0_i32_0 : i32, i32
  }
  func.func @transform_33(%arg0: i32) -> (i32, i32) {
    %c0_i32 = arith.constant 0 : i32
    %c0_i32_0 = arith.constant 0 : i32
    %c0_i32_1 = arith.constant 0 : i32
    return %c0_i32, %c0_i32_0 : i32, i32
  }
  func.func @transform_34(%arg0: i32) -> (i32, i32) {
    %c0_i32 = arith.constant 0 : i32
    %c0_i32_0 = arith.constant 0 : i32
    %c0_i32_1 = arith.constant 0 : i32
    return %c0_i32, %c0_i32_0 : i32, i32
  }
  func.func @transform_35(%arg0: i32) -> (i32, i32) {
    %c0_i32 = arith.constant 0 : i32
    %c0_i32_0 = arith.constant 0 : i32
    %c0_i32_1 = arith.constant 0 : i32
    return %c0_i32, %c0_i32_0 : i32, i32
  }
  func.func @transform_36(%arg0: i32) -> (i32, i32) {
    %c0_i32 = arith.constant 0 : i32
    %c0_i32_0 = arith.constant 0 : i32
    %c0_i32_1 = arith.constant 0 : i32
    return %c0_i32, %c0_i32_0 : i32, i32
  }
  func.func @transform_37(%arg0: i32) -> (i32, i32) {
    %c0_i32 = arith.constant 0 : i32
    %c0_i32_0 = arith.constant 0 : i32
    %c0_i32_1 = arith.constant 0 : i32
    return %c0_i32, %c0_i32_0 : i32, i32
  }
  func.func @transform_38(%arg0: i32) -> (i32, i32) {
    %c0_i32 = arith.constant 0 : i32
    %c0_i32_0 = arith.constant 0 : i32
    %c0_i32_1 = arith.constant 0 : i32
    return %c0_i32, %c0_i32_0 : i32, i32
  }
  func.func @transform_39(%arg0: i32) -> (i32, i32) {
    %c0_i32 = arith.constant 0 : i32
    %c0_i32_0 = arith.constant 0 : i32
    return %arg0, %c0_i32 : i32, i32
  }
}

</mosaic_0001>

<llo_original>
// kernel: _dbpn_stage.1
$region0: #{_dbpn_stage.1}
  #allocation0 [shape = 'u32[]', space=smem, size = 0x4, offset = 0x4, fixed_abs, tag = 'smem constant byte address 0x4 - core index']
  #allocation1 [shape = 'u32[144,128]{1,0:T(1,128)}', space=vmem, size = 0x12000, scoped, tag = 'internal scratch']
  %s0 = inlined_call_operand.smem [shape: u32[40], index: -1, kind: input, shape index: {}]
  %s1 = sld [smem:[%s0]]
  %s2 = scalar_lea.smem %s0, 1
  %s3 = sld [smem:[%s2]]
  %s4 = scalar_lea.smem %s0, 2
  %s5 = sld [smem:[%s4]]
  %s6 = scalar_lea.smem %s0, 3
  %s7 = sld [smem:[%s6]]
  %s8 = scalar_lea.smem %s0, 4
  %s9 = sld [smem:[%s8]]
  %s10 = scalar_lea.smem %s0, 5
  %s11 = sld [smem:[%s10]]
  %s12 = scalar_lea.smem %s0, 6
  %s13 = sld [smem:[%s12]]
  %s14 = scalar_lea.smem %s0, 7
  %s15 = sld [smem:[%s14]]
  %s16 = scalar_lea.smem %s0, 8
  %s17 = sld [smem:[%s16]]
  %s18 = scalar_lea.smem %s0, 9
  %s19 = sld [smem:[%s18]]
  %s20 = scalar_lea.smem %s0, 10
  %s21 = sld [smem:[%s20]]
  %s22 = scalar_lea.smem %s0, 11
  %s23 = sld [smem:[%s22]]
  %s24 = scalar_lea.smem %s0, 12
  %s25 = sld [smem:[%s24]]
  %s26 = scalar_lea.smem %s0, 13
  %s27 = sld [smem:[%s26]]
  %s28 = scalar_lea.smem %s0, 14
  %s29 = sld [smem:[%s28]]
  %s30 = scalar_lea.smem %s0, 15
  %s31 = sld [smem:[%s30]]
  %s32 = scalar_lea.smem %s0, 16
  %s33 = sld [smem:[%s32]]
  %s34 = scalar_lea.smem %s0, 17
  %s35 = sld [smem:[%s34]]
  %s36 = scalar_lea.smem %s0, 18
  %s37 = sld [smem:[%s36]]
  %s38 = scalar_lea.smem %s0, 19
  %s39 = sld [smem:[%s38]]
  %s40 = scalar_lea.smem %s0, 20
  %s41 = sld [smem:[%s40]]
  %s42 = scalar_lea.smem %s0, 21
  %s43 = sld [smem:[%s42]]
  %s44 = scalar_lea.smem %s0, 22
  %s45 = sld [smem:[%s44]]
  %s46 = scalar_lea.smem %s0, 23
  %s47 = sld [smem:[%s46]]
  %s48 = scalar_lea.smem %s0, 24
  %s49 = sld [smem:[%s48]]
  %s50 = scalar_lea.smem %s0, 25
  %s51 = sld [smem:[%s50]]
  %s52 = scalar_lea.smem %s0, 26
  %s53 = sld [smem:[%s52]]
  %s54 = scalar_lea.smem %s0, 27
  %s55 = sld [smem:[%s54]]
  %s56 = scalar_lea.smem %s0, 28
  %s57 = sld [smem:[%s56]]
  %s58 = scalar_lea.smem %s0, 29
  %s59 = sld [smem:[%s58]]
  %s60 = scalar_lea.smem %s0, 30
  %s61 = sld [smem:[%s60]]
  %s62 = scalar_lea.smem %s0, 31
  %s63 = sld [smem:[%s62]]
  %s64 = scalar_lea.smem %s0, 32
  %s65 = sld [smem:[%s64]]
  %s66 = scalar_lea.smem %s0, 33
  %s67 = sld [smem:[%s66]]
  %s68 = scalar_lea.smem %s0, 34
  %s69 = sld [smem:[%s68]]
  %s70 = scalar_lea.smem %s0, 35
  %s71 = sld [smem:[%s70]]
  %s72 = scalar_lea.smem %s0, 36
  %s73 = sld [smem:[%s72]]
  %s74 = scalar_lea.smem %s0, 37
  %s75 = sld [smem:[%s74]]
  %s76 = scalar_lea.smem %s0, 38
  %s77 = sld [smem:[%s76]]
  %s78 = scalar_lea.smem %s0, 39
  %s79 = sld [smem:[%s78]]
  %s80 = sld [smem:[#allocation0]]
  $region294: #{_dbpn_stage.1} parent=0
    _
  %s82 = ssub.s32 1, %s80
  %s83 = scalar_select 0, %s82, %s80
  $region1: #{_dbpn_stage.1} parent=0
    #allocation2 [shape = 'u8[512]{0}', space=vmem, size = 0x400, scoped, tag = 'input window, operand 2, single buffered']
    #allocation3 [shape = 's32[1]{0}', space=sflag, size = 0x4, scoped, tag = 'scoped memory for _dbpn_stage.1']
    #allocation4 [shape = 'u8[32768]{0}', space=vmem, size = 0x8000, scoped, tag = 'input window, operand 3, single buffered']
    #allocation5 [shape = 's32[1]{0}', space=sflag, size = 0x4, scoped, tag = 'scoped memory for _dbpn_stage.1']
    #allocation6 [shape = 'u8[512]{0}', space=vmem, size = 0x400, scoped, tag = 'input window, operand 4, single buffered']
    #allocation7 [shape = 'u8[196608]{0}', space=vmem, size = 0x30000, scoped, tag = 'input window, operand 5, single buffered']
    #allocation8 [shape = 's32[1]{0}', space=sflag, size = 0x4, scoped, tag = 'scoped memory for _dbpn_stage.1']
    #allocation9 [shape = 'u8[1024]{0}', space=vmem, size = 0x400, scoped, tag = 'input window, operand 6, single buffered']
    #allocation10 [shape = 'u8[196608]{0}', space=vmem, size = 0x30000, scoped, tag = 'input window, operand 7, single buffered']
    #allocation11 [shape = 's32[1]{0}', space=sflag, size = 0x4, scoped, tag = 'scoped memory for _dbpn_stage.1']
    #allocation12 [shape = 'u8[512]{0}', space=vmem, size = 0x400, scoped, tag = 'input window, operand 8, single buffered']
    #allocation13 [shape = 'u8[196608]{0}', space=vmem, size = 0x30000, scoped, tag = 'input window, operand 9, single buffered']
    #allocation14 [shape = 's32[1]{0}', space=sflag, size = 0x4, scoped, tag = 'scoped memory for _dbpn_stage.1']
    #allocation15 [shape = 'u8[196608]{0}', space=vmem, size = 0x30000, scoped, tag = 'input window, operand 11, single buffered']
    #allocation16 [shape = 'u8[512]{0}', space=vmem, size = 0x400, scoped, tag = 'input window, operand 12, single buffered']
    #allocation17 [shape = 's32[1]{0}', space=sflag, size = 0x4, scoped, tag = 'scoped memory for _dbpn_stage.1']
    #allocation18 [shape = 'u8[196608]{0}', space=vmem, size = 0x30000, scoped, tag = 'input window, operand 13, single buffered']
    #allocation19 [shape = 'u8[196608]{0}', space=vmem, size = 0x30000, scoped, tag = 'input window, operand 15, single buffered']
    #allocation20 [shape = 's32[1]{0}', space=sflag, size = 0x4, scoped, tag = 'scoped memory for _dbpn_stage.1']
    #allocation21 [shape = 'u8[512]{0}', space=vmem, size = 0x400, scoped, tag = 'input window, operand 16, single buffered']
    #allocation22 [shape = 'u8[196608]{0}', space=vmem, size = 0x30000, scoped, tag = 'input window, operand 17, single buffered']
    #allocation23 [shape = 's32[1]{0}', space=sflag, size = 0x4, scoped, tag = 'scoped memory for _dbpn_stage.1']
    #allocation24 [shape = 'u8[196608]{0}', space=vmem, size = 0x30000, scoped, tag = 'input window, operand 19, single buffered']
    #allocation25 [shape = 'u8[512]{0}', space=vmem, size = 0x400, scoped, tag = 'input window, operand 20, single buffered']
    #allocation26 [shape = 's32[1]{0}', space=sflag, size = 0x4, scoped, tag = 'scoped memory for _dbpn_stage.1']
    #allocation27 [shape = 'u8[196608]{0}', space=vmem, size = 0x30000, scoped, tag = 'input window, operand 21, single buffered']
    #allocation28 [shape = 'u8[196608]{0}', space=vmem, size = 0x30000, scoped, tag = 'input window, operand 23, single buffered']
    #allocation29 [shape = 's32[1]{0}', space=sflag, size = 0x4, scoped, tag = 'scoped memory for _dbpn_stage.1']
    #allocation30 [shape = 'u8[512]{0}', space=vmem, size = 0x400, scoped, tag = 'input window, operand 24, single buffered']
    #allocation31 [shape = 'u8[196608]{0}', space=vmem, size = 0x30000, scoped, tag = 'input window, operand 25, single buffered']
    #allocation32 [shape = 's32[1]{0}', space=sflag, size = 0x4, scoped, tag = 'scoped memory for _dbpn_stage.1']
    #allocation33 [shape = 'u8[1024]{0}', space=vmem, size = 0x400, scoped, tag = 'input window, operand 26, single buffered']
    #allocation34 [shape = 'u8[196608]{0}', space=vmem, size = 0x30000, scoped, tag = 'input window, operand 27, single buffered']
    #allocation35 [shape = 's32[1]{0}', space=sflag, size = 0x4, scoped, tag = 'scoped memory for _dbpn_stage.1']
    #allocation36 [shape = 'u8[512]{0}', space=vmem, size = 0x400, scoped, tag = 'input window, operand 28, single buffered']
    #allocation37 [shape = 'u8[512]{0}', space=vmem, size = 0x400, scoped, tag = 'input window, operand 30, single buffered']
    #allocation38 [shape = 's32[1]{0}', space=sflag, size = 0x4, scoped, tag = 'scoped memory for _dbpn_stage.1']
    #allocation39 [shape = 'u8[196608]{0}', space=vmem, size = 0x30000, scoped, tag = 'input window, operand 31, single buffered']
    #allocation40 [shape = 'u8[1024]{0}', space=vmem, size = 0x400, scoped, tag = 'input window, operand 32, single buffered']
    #allocation41 [shape = 's32[1]{0}', space=sflag, size = 0x4, scoped, tag = 'scoped memory for _dbpn_stage.1']
    #allocation42 [shape = 'u8[196608]{0}', space=vmem, size = 0x30000, scoped, tag = 'input window, operand 33, single buffered']
    #allocation43 [shape = 'u8[512]{0}', space=vmem, size = 0x400, scoped, tag = 'input window, operand 34, single buffered']
    #allocation44 [shape = 's32[1]{0}', space=sflag, size = 0x4, scoped, tag = 'scoped memory for _dbpn_stage.1']
    #allocation45 [shape = 'u8[196608]{0}', space=vmem, size = 0x30000, scoped, tag = 'input window, operand 35, single buffered']
    #allocation46 [shape = 'u8[1024]{0}', space=vmem, size = 0x400, scoped, tag = 'input window, operand 36, single buffered']
    #allocation47 [shape = 's32[1]{0}', space=sflag, size = 0x4, scoped, tag = 'scoped memory for _dbpn_stage.1']
    #allocation48 [shape = 'u8[589824]{0}', space=vmem, size = 0x90000, scoped, tag = 'input window, operand 37, single buffered']
    #allocation49 [shape = 'u8[512]{0}', space=vmem, size = 0x400, scoped, tag = 'input window, operand 38, single buffered']
    #allocation50 [shape = 's32[1]{0}', space=sflag, size = 0x4, scoped, tag = 'scoped memory for _dbpn_stage.1']
    %84 = vsyncpa [#allocation3], 0
    %85 = vsyncpa [#allocation5], 0
    %86 = vsyncpa [#allocation8], 0
    %87 = vsyncpa [#allocation11], 0
    %88 = vsyncpa [#allocation14], 0
    %89 = vsyncpa [#allocation17], 0
    %90 = vsyncpa [#allocation20], 0
    %91 = vsyncpa [#allocation23], 0
    %92 = vsyncpa [#allocation26], 0
    %93 = vsyncpa [#allocation29], 0
    %94 = vsyncpa [#allocation32], 0
    %95 = vsyncpa [#allocation35], 0
    %96 = vsyncpa [#allocation38], 0
    %97 = vsyncpa [#allocation41], 0
    %98 = vsyncpa [#allocation44], 0
    %99 = vsyncpa [#allocation47], 0
    %100 = vsyncpa [#allocation50], 0
    // Predicated region
    $region2: #{_dbpn_stage.1} parent=1 // pred_check
      _
    $region3: #{_dbpn_stage.1} parent=1 // pred_check_branch
      %102 = sbr.rel (0) target = $region5
    $region4: #{_dbpn_stage.1} parent=1 // pred_region
      _
    $region5: #{_dbpn_stage.1} parent=1 // pred_fallthru
      _
    // Predicated region
    $region6: #{_dbpn_stage.1} parent=1 // pred_check
      _
    $region7: #{_dbpn_stage.1} parent=1 // pred_check_branch
      %104 = sbr.rel (0) target = $region9
    $region8: #{_dbpn_stage.1} parent=1 // pred_region
      _
    $region9: #{_dbpn_stage.1} parent=1 // pred_fallthru
      _
    // Predicated region
    $region10: #{_dbpn_stage.1} parent=1 // pred_check
      _
    $region11: #{_dbpn_stage.1} parent=1 // pred_check_branch
      %106 = sbr.rel (0) target = $region13
    $region12: #{_dbpn_stage.1} parent=1 // pred_region
      %s108 = ssub.s32 16, 16
      %109 = vsyncadd [#allocation3], %s108
      %s111 = sshll.u32 [#allocation2], 4
      %s112 = int_to_ptr.vmem [resolvable:$true] %s111
      %114 = dma.hbm_to_vmem [thread:$0]  %s5, 16, %s112, [#allocation3]
    $region13: #{_dbpn_stage.1} parent=1 // pred_fallthru
      _
    // Predicated region
    $region14: #{_dbpn_stage.1} parent=1 // pred_check
      _
    $region15: #{_dbpn_stage.1} parent=1 // pred_check_branch
      %116 = sbr.rel (0) target = $region17
    $region16: #{_dbpn_stage.1} parent=1 // pred_region
      %s118 = ssub.s32 1024, 1024
      %119 = vsyncadd [#allocation5], %s118
      %s120 = sshll.u32 [#allocation4], 4
      %s121 = int_to_ptr.vmem [resolvable:$true] %s120
      %126 = dma.hbm_to_vmem [thread:$0]  %s7, 1024, %s121, [#allocation5], 64, 64, 4
    $region17: #{_dbpn_stage.1} parent=1 // pred_fallthru
      _
    // Predicated region
    $region18: #{_dbpn_stage.1} parent=1 // pred_check
      _
    $region19: #{_dbpn_stage.1} parent=1 // pred_check_branch
      %128 = sbr.rel (0) target = $region21
    $region20: #{_dbpn_stage.1} parent=1 // pred_region
      %s130 = ssub.s32 16, 16
      %131 = vsyncadd [#allocation5], %s130
      %s133 = sshll.u32 [#allocation6], 4
      %s134 = int_to_ptr.vmem [resolvable:$true] %s133
      %136 = dma.hbm_to_vmem [thread:$0]  %s9, 16, %s134, [#allocation5]
    $region21: #{_dbpn_stage.1} parent=1 // pred_fallthru
      _
    // Predicated region
    $region22: #{_dbpn_stage.1} parent=1 // pred_check
      _
    $region23: #{_dbpn_stage.1} parent=1 // pred_check_branch
      %138 = sbr.rel (0) target = $region25
    $region24: #{_dbpn_stage.1} parent=1 // pred_region
      %s140 = ssub.s32 6144, 6144
      %141 = vsyncadd [#allocation8], %s140
      %s142 = sshll.u32 [#allocation7], 4
      %s143 = int_to_ptr.vmem [resolvable:$true] %s142
      %148 = dma.hbm_to_vmem [thread:$0]  %s11, 6144, %s143, [#allocation8], 128, 128, 8
    $region25: #{_dbpn_stage.1} parent=1 // pred_fallthru
      _
    // Predicated region
    $region26: #{_dbpn_stage.1} parent=1 // pred_check
      _
    $region27: #{_dbpn_stage.1} parent=1 // pred_check_branch
      %150 = sbr.rel (0) target = $region29
    $region28: #{_dbpn_stage.1} parent=1 // pred_region
      %s152 = ssub.s32 32, 32
      %153 = vsyncadd [#allocation8], %s152
      %s155 = sshll.u32 [#allocation9], 4
      %s156 = int_to_ptr.vmem [resolvable:$true] %s155
      %158 = dma.hbm_to_vmem [thread:$0]  %s13, 32, %s156, [#allocation8]
    $region29: #{_dbpn_stage.1} parent=1 // pred_fallthru
      _
    // Predicated region
    $region30: #{_dbpn_stage.1} parent=1 // pred_check
      _
    $region31: #{_dbpn_stage.1} parent=1 // pred_check_branch
      %160 = sbr.rel (0) target = $region33
    $region32: #{_dbpn_stage.1} parent=1 // pred_region
      %s162 = ssub.s32 6144, 6144
      %163 = vsyncadd [#allocation11], %s162
      %s164 = sshll.u32 [#allocation10], 4
      %s165 = int_to_ptr.vmem [resolvable:$true] %s164
      %170 = dma.hbm_to_vmem [thread:$0]  %s15, 6144, %s165, [#allocation11], 64, 64, 4
    $region33: #{_dbpn_stage.1} parent=1 // pred_fallthru
      _
    // Predicated region
    $region34: #{_dbpn_stage.1} parent=1 // pred_check
      _
    $region35: #{_dbpn_stage.1} parent=1 // pred_check_branch
      %172 = sbr.rel (0) target = $region37
    $region36: #{_dbpn_stage.1} parent=1 // pred_region
      %s174 = ssub.s32 16, 16
      %175 = vsyncadd [#allocation11], %s174
      %s177 = sshll.u32 [#allocation12], 4
      %s178 = int_to_ptr.vmem [resolvable:$true] %s177
      %180 = dma.hbm_to_vmem [thread:$0]  %s17, 16, %s178, [#allocation11]
    $region37: #{_dbpn_stage.1} parent=1 // pred_fallthru
      _
    // Predicated region
    $region38: #{_dbpn_stage.1} parent=1 // pred_check
      _
    $region39: #{_dbpn_stage.1} parent=1 // pred_check_branch
      %182 = sbr.rel (0) target = $region41
    $region40: #{_dbpn_stage.1} parent=1 // pred_region
      %s184 = ssub.s32 6144, 6144
      %185 = vsyncadd [#allocation14], %s184
      %s186 = sshll.u32 [#allocation13], 4
      %s187 = int_to_ptr.vmem [resolvable:$true] %s186
      %192 = dma.hbm_to_vmem [thread:$0]  %s19, 6144, %s187, [#allocation14], 128, 128, 8
    $region41: #{_dbpn_stage.1} parent=1 // pred_fallthru
      _
    // Predicated region
    $region42: #{_dbpn_stage.1} parent=1 // pred_check
      _
    $region43: #{_dbpn_stage.1} parent=1 // pred_check_branch
      %194 = sbr.rel (0) target = $region45
    $region44: #{_dbpn_stage.1} parent=1 // pred_region
      _
    $region45: #{_dbpn_stage.1} parent=1 // pred_fallthru
      _
    // Predicated region
    $region46: #{_dbpn_stage.1} parent=1 // pred_check
      _
    $region47: #{_dbpn_stage.1} parent=1 // pred_check_branch
      %196 = sbr.rel (0) target = $region49
    $region48: #{_dbpn_stage.1} parent=1 // pred_region
      %s198 = ssub.s32 6144, 6144
      %199 = vsyncadd [#allocation14], %s198
      %s200 = sshll.u32 [#allocation15], 4
      %s201 = int_to_ptr.vmem [resolvable:$true] %s200
      %206 = dma.hbm_to_vmem [thread:$0]  %s23, 6144, %s201, [#allocation14], 64, 64, 4
    $region49: #{_dbpn_stage.1} parent=1 // pred_fallthru
      _
    // Predicated region
    $region50: #{_dbpn_stage.1} parent=1 // pred_check
      _
    $region51: #{_dbpn_stage.1} parent=1 // pred_check_branch
      %208 = sbr.rel (0) target = $region53
    $region52: #{_dbpn_stage.1} parent=1 // pred_region
      %s210 = ssub.s32 16, 16
      %211 = vsyncadd [#allocation17], %s210
      %s213 = sshll.u32 [#allocation16], 4
      %s214 = int_to_ptr.vmem [resolvable:$true] %s213
      %216 = dma.hbm_to_vmem [thread:$0]  %s25, 16, %s214, [#allocation17]
    $region53: #{_dbpn_stage.1} parent=1 // pred_fallthru
      _
    // Predicated region
    $region54: #{_dbpn_stage.1} parent=1 // pred_check
      _
    $region55: #{_dbpn_stage.1} parent=1 // pred_check_branch
      %218 = sbr.rel (0) target = $region57
    $region56: #{_dbpn_stage.1} parent=1 // pred_region
      %s220 = ssub.s32 6144, 6144
      %221 = vsyncadd [#allocation17], %s220
      %s222 = sshll.u32 [#allocation18], 4
      %s223 = int_to_ptr.vmem [resolvable:$true] %s222
      %228 = dma.hbm_to_vmem [thread:$0]  %s27, 6144, %s223, [#allocation17], 128, 128, 8
    $region57: #{_dbpn_stage.1} parent=1 // pred_fallthru
      _
    // Predicated region
    $region58: #{_dbpn_stage.1} parent=1 // pred_check
      _
    $region59: #{_dbpn_stage.1} parent=1 // pred_check_branch
      %230 = sbr.rel (0) target = $region61
    $region60: #{_dbpn_stage.1} parent=1 // pred_region
      _
    $region61: #{_dbpn_stage.1} parent=1 // pred_fallthru
      _
    // Predicated region
    $region62: #{_dbpn_stage.1} parent=1 // pred_check
      _
    $region63: #{_dbpn_stage.1} parent=1 // pred_check_branch
      %232 = sbr.rel (0) target = $region65
    $region64: #{_dbpn_stage.1} parent=1 // pred_region
      %s234 = ssub.s32 6144, 6144
      %235 = vsyncadd [#allocation20], %s234
      %s236 = sshll.u32 [#allocation19], 4
      %s237 = int_to_ptr.vmem [resolvable:$true] %s236
      %242 = dma.hbm_to_vmem [thread:$0]  %s31, 6144, %s237, [#allocation20], 64, 64, 4
    $region65: #{_dbpn_stage.1} parent=1 // pred_fallthru
      _
    // Predicated region
    $region66: #{_dbpn_stage.1} parent=1 // pred_check
      _
    $region67: #{_dbpn_stage.1} parent=1 // pred_check_branch
      %244 = sbr.rel (0) target = $region69
    $region68: #{_dbpn_stage.1} parent=1 // pred_region
      %s246 = ssub.s32 16, 16
      %247 = vsyncadd [#allocation20], %s246
      %s249 = sshll.u32 [#allocation21], 4
      %s250 = int_to_ptr.vmem [resolvable:$true] %s249
      %252 = dma.hbm_to_vmem [thread:$0]  %s33, 16, %s250, [#allocation20]
    $region69: #{_dbpn_stage.1} parent=1 // pred_fallthru
      _
    // Predicated region
    $region70: #{_dbpn_stage.1} parent=1 // pred_check
      _
    $region71: #{_dbpn_stage.1} parent=1 // pred_check_branch
      %254 = sbr.rel (0) target = $region73
    $region72: #{_dbpn_stage.1} parent=1 // pred_region
      %s256 = ssub.s32 6144, 6144
      %257 = vsyncadd [#allocation23], %s256
      %s258 = sshll.u32 [#allocation22], 4
      %s259 = int_to_ptr.vmem [resolvable:$true] %s258
      %264 = dma.hbm_to_vmem [thread:$0]  %s35, 6144, %s259, [#allocation23], 128, 128, 8
    $region73: #{_dbpn_stage.1} parent=1 // pred_fallthru
      _
    // Predicated region
    $region74: #{_dbpn_stage.1} parent=1 // pred_check
      _
    $region75: #{_dbpn_stage.1} parent=1 // pred_check_branch
      %266 = sbr.rel (0) target = $region77
    $region76: #{_dbpn_stage.1} parent=1 // pred_region
      _
    $region77: #{_dbpn_stage.1} parent=1 // pred_fallthru
      _
    // Predicated region
    $region78: #{_dbpn_stage.1} parent=1 // pred_check
      _
    $region79: #{_dbpn_stage.1} parent=1 // pred_check_branch
      %268 = sbr.rel (0) target = $region81
    $region80: #{_dbpn_stage.1} parent=1 // pred_region
      %s270 = ssub.s32 6144, 6144
      %271 = vsyncadd [#allocation23], %s270
      %s272 = sshll.u32 [#allocation24], 4
      %s273 = int_to_ptr.vmem [resolvable:$true] %s272
      %278 = dma.hbm_to_vmem [thread:$0]  %s39, 6144, %s273, [#allocation23], 64, 64, 4
    $region81: #{_dbpn_stage.1} parent=1 // pred_fallthru
      _
    // Predicated region
    $region82: #{_dbpn_stage.1} parent=1 // pred_check
      _
    $region83: #{_dbpn_stage.1} parent=1 // pred_check_branch
      %280 = sbr.rel (0) target = $region85
    $region84: #{_dbpn_stage.1} parent=1 // pred_region
      %s282 = ssub.s32 16, 16
      %283 = vsyncadd [#allocation26], %s282
      %s285 = sshll.u32 [#allocation25], 4
      %s286 = int_to_ptr.vmem [resolvable:$true] %s285
      %288 = dma.hbm_to_vmem [thread:$0]  %s41, 16, %s286, [#allocation26]
    $region85: #{_dbpn_stage.1} parent=1 // pred_fallthru
      _
    // Predicated region
    $region86: #{_dbpn_stage.1} parent=1 // pred_check
      _
    $region87: #{_dbpn_stage.1} parent=1 // pred_check_branch
      %290 = sbr.rel (0) target = $region89
    $region88: #{_dbpn_stage.1} parent=1 // pred_region
      %s292 = ssub.s32 6144, 6144
      %293 = vsyncadd [#allocation26], %s292
      %s294 = sshll.u32 [#allocation27], 4
      %s295 = int_to_ptr.vmem [resolvable:$true] %s294
      %300 = dma.hbm_to_vmem [thread:$0]  %s43, 6144, %s295, [#allocation26], 128, 128, 8
    $region89: #{_dbpn_stage.1} parent=1 // pred_fallthru
      _
    // Predicated region
    $region90: #{_dbpn_stage.1} parent=1 // pred_check
      _
    $region91: #{_dbpn_stage.1} parent=1 // pred_check_branch
      %302 = sbr.rel (0) target = $region93
    $region92: #{_dbpn_stage.1} parent=1 // pred_region
      _
    $region93: #{_dbpn_stage.1} parent=1 // pred_fallthru
      _
    // Predicated region
    $region94: #{_dbpn_stage.1} parent=1 // pred_check
      _
    $region95: #{_dbpn_stage.1} parent=1 // pred_check_branch
      %304 = sbr.rel (0) target = $region97
    $region96: #{_dbpn_stage.1} parent=1 // pred_region
      %s306 = ssub.s32 6144, 6144
      %307 = vsyncadd [#allocation29], %s306
      %s308 = sshll.u32 [#allocation28], 4
      %s309 = int_to_ptr.vmem [resolvable:$true] %s308
      %314 = dma.hbm_to_vmem [thread:$0]  %s47, 6144, %s309, [#allocation29], 64, 64, 4
    $region97: #{_dbpn_stage.1} parent=1 // pred_fallthru
      _
    // Predicated region
    $region98: #{_dbpn_stage.1} parent=1 // pred_check
      _
    $region99: #{_dbpn_stage.1} parent=1 // pred_check_branch
      %316 = sbr.rel (0) target = $region101
    $region100: #{_dbpn_stage.1} parent=1 // pred_region
      %s318 = ssub.s32 16, 16
      %319 = vsyncadd [#allocation29], %s318
      %s321 = sshll.u32 [#allocation30], 4
      %s322 = int_to_ptr.vmem [resolvable:$true] %s321
      %324 = dma.hbm_to_vmem [thread:$0]  %s49, 16, %s322, [#allocation29]
    $region101: #{_dbpn_stage.1} parent=1 // pred_fallthru
      _
    // Predicated region
    $region102: #{_dbpn_stage.1} parent=1 // pred_check
      _
    $region103: #{_dbpn_stage.1} parent=1 // pred_check_branch
      %326 = sbr.rel (0) target = $region105
    $region104: #{_dbpn_stage.1} parent=1 // pred_region
      %s328 = ssub.s32 6144, 6144
      %329 = vsyncadd [#allocation32], %s328
      %s330 = sshll.u32 [#allocation31], 4
      %s331 = int_to_ptr.vmem [resolvable:$true] %s330
      %336 = dma.hbm_to_vmem [thread:$0]  %s51, 6144, %s331, [#allocation32], 128, 128, 8
    $region105: #{_dbpn_stage.1} parent=1 // pred_fallthru
      _
    // Predicated region
    $region106: #{_dbpn_stage.1} parent=1 // pred_check
      _
    $region107: #{_dbpn_stage.1} parent=1 // pred_check_branch
      %338 = sbr.rel (0) target = $region109
    $region108: #{_dbpn_stage.1} parent=1 // pred_region
      %s340 = ssub.s32 32, 32
      %341 = vsyncadd [#allocation32], %s340
      %s343 = sshll.u32 [#allocation33], 4
      %s344 = int_to_ptr.vmem [resolvable:$true] %s343
      %346 = dma.hbm_to_vmem [thread:$0]  %s53, 32, %s344, [#allocation32]
    $region109: #{_dbpn_stage.1} parent=1 // pred_fallthru
      _
    // Predicated region
    $region110: #{_dbpn_stage.1} parent=1 // pred_check
      _
    $region111: #{_dbpn_stage.1} parent=1 // pred_check_branch
      %348 = sbr.rel (0) target = $region113
    $region112: #{_dbpn_stage.1} parent=1 // pred_region
      %s350 = ssub.s32 6144, 6144
      %351 = vsyncadd [#allocation35], %s350
      %s352 = sshll.u32 [#allocation34], 4
      %s353 = int_to_ptr.vmem [resolvable:$true] %s352
      %358 = dma.hbm_to_vmem [thread:$0]  %s55, 6144, %s353, [#allocation35], 64, 64, 4
    $region113: #{_dbpn_stage.1} parent=1 // pred_fallthru
      _
    // Predicated region
    $region114: #{_dbpn_stage.1} parent=1 // pred_check
      _
    $region115: #{_dbpn_stage.1} parent=1 // pred_check_branch
      %360 = sbr.rel (0) target = $region117
    $region116: #{_dbpn_stage.1} parent=1 // pred_region
      %s362 = ssub.s32 16, 16
      %363 = vsyncadd [#allocation35], %s362
      %s365 = sshll.u32 [#allocation36], 4
      %s366 = int_to_ptr.vmem [resolvable:$true] %s365
      %368 = dma.hbm_to_vmem [thread:$0]  %s57, 16, %s366, [#allocation35]
    $region117: #{_dbpn_stage.1} parent=1 // pred_fallthru
      _
    // Predicated region
    $region118: #{_dbpn_stage.1} parent=1 // pred_check
      _
    $region119: #{_dbpn_stage.1} parent=1 // pred_check_branch
      %370 = sbr.rel (0) target = $region121
    $region120: #{_dbpn_stage.1} parent=1 // pred_region
      _
    $region121: #{_dbpn_stage.1} parent=1 // pred_fallthru
      _
    // Predicated region
    $region122: #{_dbpn_stage.1} parent=1 // pred_check
      _
    $region123: #{_dbpn_stage.1} parent=1 // pred_check_branch
      %372 = sbr.rel (0) target = $region125
    $region124: #{_dbpn_stage.1} parent=1 // pred_region
      %s374 = ssub.s32 16, 16
      %375 = vsyncadd [#allocation38], %s374
      %s377 = sshll.u32 [#allocation37], 4
      %s378 = int_to_ptr.vmem [resolvable:$true] %s377
      %380 = dma.hbm_to_vmem [thread:$0]  %s61, 16, %s378, [#allocation38]
    $region125: #{_dbpn_stage.1} parent=1 // pred_fallthru
      _
    // Predicated region
    $region126: #{_dbpn_stage.1} parent=1 // pred_check
      _
    $region127: #{_dbpn_stage.1} parent=1 // pred_check_branch
      %382 = sbr.rel (0) target = $region129
    $region128: #{_dbpn_stage.1} parent=1 // pred_region
      %s384 = ssub.s32 6144, 6144
      %385 = vsyncadd [#allocation38], %s384
      %s386 = sshll.u32 [#allocation39], 4
      %s387 = int_to_ptr.vmem [resolvable:$true] %s386
      %392 = dma.hbm_to_vmem [thread:$0]  %s63, 6144, %s387, [#allocation38], 128, 128, 8
    $region129: #{_dbpn_stage.1} parent=1 // pred_fallthru
      _
    // Predicated region
    $region130: #{_dbpn_stage.1} parent=1 // pred_check
      _
    $region131: #{_dbpn_stage.1} parent=1 // pred_check_branch
      %394 = sbr.rel (0) target = $region133
    $region132: #{_dbpn_stage.1} parent=1 // pred_region
      %s396 = ssub.s32 32, 32
      %397 = vsyncadd [#allocation41], %s396
      %s399 = sshll.u32 [#allocation40], 4
      %s400 = int_to_ptr.vmem [resolvable:$true] %s399
      %402 = dma.hbm_to_vmem [thread:$0]  %s65, 32, %s400, [#allocation41]
    $region133: #{_dbpn_stage.1} parent=1 // pred_fallthru
      _
    // Predicated region
    $region134: #{_dbpn_stage.1} parent=1 // pred_check
      _
    $region135: #{_dbpn_stage.1} parent=1 // pred_check_branch
      %404 = sbr.rel (0) target = $region137
    $region136: #{_dbpn_stage.1} parent=1 // pred_region
      %s406 = ssub.s32 6144, 6144
      %407 = vsyncadd [#allocation41], %s406
      %s408 = sshll.u32 [#allocation42], 4
      %s409 = int_to_ptr.vmem [resolvable:$true] %s408
      %414 = dma.hbm_to_vmem [thread:$0]  %s67, 6144, %s409, [#allocation41], 64, 64, 4
    $region137: #{_dbpn_stage.1} parent=1 // pred_fallthru
      _
    // Predicated region
    $region138: #{_dbpn_stage.1} parent=1 // pred_check
      _
    $region139: #{_dbpn_stage.1} parent=1 // pred_check_branch
      %416 = sbr.rel (0) target = $region141
    $region140: #{_dbpn_stage.1} parent=1 // pred_region
      %s418 = ssub.s32 16, 16
      %419 = vsyncadd [#allocation44], %s418
      %s421 = sshll.u32 [#allocation43], 4
      %s422 = int_to_ptr.vmem [resolvable:$true] %s421
      %424 = dma.hbm_to_vmem [thread:$0]  %s69, 16, %s422, [#allocation44]
    $region141: #{_dbpn_stage.1} parent=1 // pred_fallthru
      _
    // Predicated region
    $region142: #{_dbpn_stage.1} parent=1 // pred_check
      _
    $region143: #{_dbpn_stage.1} parent=1 // pred_check_branch
      %426 = sbr.rel (0) target = $region145
    $region144: #{_dbpn_stage.1} parent=1 // pred_region
      %s428 = ssub.s32 6144, 6144
      %429 = vsyncadd [#allocation44], %s428
      %s430 = sshll.u32 [#allocation45], 4
      %s431 = int_to_ptr.vmem [resolvable:$true] %s430
      %436 = dma.hbm_to_vmem [thread:$0]  %s71, 6144, %s431, [#allocation44], 128, 128, 8
    $region145: #{_dbpn_stage.1} parent=1 // pred_fallthru
      _
    // Predicated region
    $region146: #{_dbpn_stage.1} parent=1 // pred_check
      _
    $region147: #{_dbpn_stage.1} parent=1 // pred_check_branch
      %438 = sbr.rel (0) target = $region149
    $region148: #{_dbpn_stage.1} parent=1 // pred_region
      %s440 = ssub.s32 32, 32
      %441 = vsyncadd [#allocation47], %s440
      %s443 = sshll.u32 [#allocation46], 4
      %s444 = int_to_ptr.vmem [resolvable:$true] %s443
      %446 = dma.hbm_to_vmem [thread:$0]  %s73, 32, %s444, [#allocation47]
    $region149: #{_dbpn_stage.1} parent=1 // pred_fallthru
      _
    // Predicated region
    $region150: #{_dbpn_stage.1} parent=1 // pred_check
      _
    $region151: #{_dbpn_stage.1} parent=1 // pred_check_branch
      %448 = sbr.rel (0) target = $region153
    $region152: #{_dbpn_stage.1} parent=1 // pred_region
      %s450 = ssub.s32 18432, 18432
      %451 = vsyncadd [#allocation47], %s450
      %s452 = sshll.u32 [#allocation48], 4
      %s453 = int_to_ptr.vmem [resolvable:$true] %s452
      %458 = dma.hbm_to_vmem [thread:$0]  %s75, 18432, %s453, [#allocation47], 64, 64, 4
    $region153: #{_dbpn_stage.1} parent=1 // pred_fallthru
      _
    // Predicated region
    $region154: #{_dbpn_stage.1} parent=1 // pred_check
      _
    $region155: #{_dbpn_stage.1} parent=1 // pred_check_branch
      %460 = sbr.rel (0) target = $region157
    $region156: #{_dbpn_stage.1} parent=1 // pred_region
      %s462 = ssub.s32 16, 16
      %463 = vsyncadd [#allocation50], %s462
      %s465 = sshll.u32 [#allocation49], 4
      %s466 = int_to_ptr.vmem [resolvable:$true] %s465
      %468 = dma.hbm_to_vmem [thread:$0]  %s77, 16, %s466, [#allocation50]
    $region157: #{_dbpn_stage.1} parent=1 // pred_fallthru
      _
    // Predicated region
    $region158: #{_dbpn_stage.1} parent=1 // pred_check
      _
    $region159: #{_dbpn_stage.1} parent=1 // pred_check_branch
      %470 = sbr.rel (0) target = $region161
    $region160: #{_dbpn_stage.1} parent=1 // pred_region
      %471 = dma.done [#allocation3], 16
    $region161: #{_dbpn_stage.1} parent=1 // pred_fallthru
      _
    // Predicated region
    $region162: #{_dbpn_stage.1} parent=1 // pred_check
      _
    $region163: #{_dbpn_stage.1} parent=1 // pred_check_branch
      %473 = sbr.rel (0) target = $region165
    $region164: #{_dbpn_stage.1} parent=1 // pred_region
      %474 = dma.done [#allocation5], 1024
    $region165: #{_dbpn_stage.1} parent=1 // pred_fallthru
      _
    // Predicated region
    $region166: #{_dbpn_stage.1} parent=1 // pred_check
      _
    $region167: #{_dbpn_stage.1} parent=1 // pred_check_branch
      %476 = sbr.rel (0) target = $region169
    $region168: #{_dbpn_stage.1} parent=1 // pred_region
      %477 = dma.done [#allocation5], 16
    $region169: #{_dbpn_stage.1} parent=1 // pred_fallthru
      _
    // Predicated region
    $region170: #{_dbpn_stage.1} parent=1 // pred_check
      _
    $region171: #{_dbpn_stage.1} parent=1 // pred_check_branch
      %479 = sbr.rel (0) target = $region173
    $region172: #{_dbpn_stage.1} parent=1 // pred_region
      %480 = dma.done [#allocation8], 6144
    $region173: #{_dbpn_stage.1} parent=1 // pred_fallthru
      _
    // Predicated region
    $region174: #{_dbpn_stage.1} parent=1 // pred_check
      _
    $region175: #{_dbpn_stage.1} parent=1 // pred_check_branch
      %482 = sbr.rel (0) target = $region177
    $region176: #{_dbpn_stage.1} parent=1 // pred_region
      %483 = dma.done [#allocation8], 32
    $region177: #{_dbpn_stage.1} parent=1 // pred_fallthru
      _
    // Predicated region
    $region178: #{_dbpn_stage.1} parent=1 // pred_check
      _
    $region179: #{_dbpn_stage.1} parent=1 // pred_check_branch
      %485 = sbr.rel (0) target = $region181
    $region180: #{_dbpn_stage.1} parent=1 // pred_region
      %486 = dma.done [#allocation11], 6144
    $region181: #{_dbpn_stage.1} parent=1 // pred_fallthru
      _
    // Predicated region
    $region182: #{_dbpn_stage.1} parent=1 // pred_check
      _
    $region183: #{_dbpn_stage.1} parent=1 // pred_check_branch
      %488 = sbr.rel (0) target = $region185
    $region184: #{_dbpn_stage.1} parent=1 // pred_region
      %489 = dma.done [#allocation11], 16
    $region185: #{_dbpn_stage.1} parent=1 // pred_fallthru
      _
    // Predicated region
    $region186: #{_dbpn_stage.1} parent=1 // pred_check
      _
    $region187: #{_dbpn_stage.1} parent=1 // pred_check_branch
      %491 = sbr.rel (0) target = $region189
    $region188: #{_dbpn_stage.1} parent=1 // pred_region
      %492 = dma.done [#allocation14], 6144
    $region189: #{_dbpn_stage.1} parent=1 // pred_fallthru
      _
    // Predicated region
    $region190: #{_dbpn_stage.1} parent=1 // pred_check
      _
    $region191: #{_dbpn_stage.1} parent=1 // pred_check_branch
      %494 = sbr.rel (0) target = $region193
    $region192: #{_dbpn_stage.1} parent=1 // pred_region
      %495 = dma.done [#allocation14], 6144
    $region193: #{_dbpn_stage.1} parent=1 // pred_fallthru
      _
    // Predicated region
    $region194: #{_dbpn_stage.1} parent=1 // pred_check
      _
    $region195: #{_dbpn_stage.1} parent=1 // pred_check_branch
      %497 = sbr.rel (0) target = $region197
    $region196: #{_dbpn_stage.1} parent=1 // pred_region
      %498 = dma.done [#allocation17], 16
    $region197: #{_dbpn_stage.1} parent=1 // pred_fallthru
      _
    // Predicated region
    $region198: #{_dbpn_stage.1} parent=1 // pred_check
      _
    $region199: #{_dbpn_stage.1} parent=1 // pred_check_branch
      %500 = sbr.rel (0) target = $region201
    $region200: #{_dbpn_stage.1} parent=1 // pred_region
      %501 = dma.done [#allocation17], 6144
    $region201: #{_dbpn_stage.1} parent=1 // pred_fallthru
      _
    // Predicated region
    $region202: #{_dbpn_stage.1} parent=1 // pred_check
      _
    $region203: #{_dbpn_stage.1} parent=1 // pred_check_branch
      %503 = sbr.rel (0) target = $region205
    $region204: #{_dbpn_stage.1} parent=1 // pred_region
      %504 = dma.done [#allocation20], 6144
    $region205: #{_dbpn_stage.1} parent=1 // pred_fallthru
      _
    // Predicated region
    $region206: #{_dbpn_stage.1} parent=1 // pred_check
      _
    $region207: #{_dbpn_stage.1} parent=1 // pred_check_branch
      %506 = sbr.rel (0) target = $region209
    $region208: #{_dbpn_stage.1} parent=1 // pred_region
      %507 = dma.done [#allocation20], 16
    $region209: #{_dbpn_stage.1} parent=1 // pred_fallthru
      _
    // Predicated region
    $region210: #{_dbpn_stage.1} parent=1 // pred_check
      _
    $region211: #{_dbpn_stage.1} parent=1 // pred_check_branch
      %509 = sbr.rel (0) target = $region213
    $region212: #{_dbpn_stage.1} parent=1 // pred_region
      %510 = dma.done [#allocation23], 6144
    $region213: #{_dbpn_stage.1} parent=1 // pred_fallthru
      _
    // Predicated region
    $region214: #{_dbpn_stage.1} parent=1 // pred_check
      _
    $region215: #{_dbpn_stage.1} parent=1 // pred_check_branch
      %512 = sbr.rel (0) target = $region217
    $region216: #{_dbpn_stage.1} parent=1 // pred_region
      %513 = dma.done [#allocation23], 6144
    $region217: #{_dbpn_stage.1} parent=1 // pred_fallthru
      _
    // Predicated region
    $region218: #{_dbpn_stage.1} parent=1 // pred_check
      _
    $region219: #{_dbpn_stage.1} parent=1 // pred_check_branch
      %515 = sbr.rel (0) target = $region221
    $region220: #{_dbpn_stage.1} parent=1 // pred_region
      %516 = dma.done [#allocation26], 16
    $region221: #{_dbpn_stage.1} parent=1 // pred_fallthru
      _
    // Predicated region
    $region222: #{_dbpn_stage.1} parent=1 // pred_check
      _
    $region223: #{_dbpn_stage.1} parent=1 // pred_check_branch
      %518 = sbr.rel (0) target = $region225
    $region224: #{_dbpn_stage.1} parent=1 // pred_region
      %519 = dma.done [#allocation26], 6144
    $region225: #{_dbpn_stage.1} parent=1 // pred_fallthru
      _
    // Predicated region
    $region226: #{_dbpn_stage.1} parent=1 // pred_check
      _
    $region227: #{_dbpn_stage.1} parent=1 // pred_check_branch
      %521 = sbr.rel (0) target = $region229
    $region228: #{_dbpn_stage.1} parent=1 // pred_region
      %522 = dma.done [#allocation29], 6144
    $region229: #{_dbpn_stage.1} parent=1 // pred_fallthru
      _
    // Predicated region
    $region230: #{_dbpn_stage.1} parent=1 // pred_check
      _
    $region231: #{_dbpn_stage.1} parent=1 // pred_check_branch
      %524 = sbr.rel (0) target = $region233
    $region232: #{_dbpn_stage.1} parent=1 // pred_region
      %525 = dma.done [#allocation29], 16
    $region233: #{_dbpn_stage.1} parent=1 // pred_fallthru
      _
    // Predicated region
    $region234: #{_dbpn_stage.1} parent=1 // pred_check
      _
    $region235: #{_dbpn_stage.1} parent=1 // pred_check_branch
      %527 = sbr.rel (0) target = $region237
    $region236: #{_dbpn_stage.1} parent=1 // pred_region
      %528 = dma.done [#allocation32], 6144
    $region237: #{_dbpn_stage.1} parent=1 // pred_fallthru
      _
    // Predicated region
    $region238: #{_dbpn_stage.1} parent=1 // pred_check
      _
    $region239: #{_dbpn_stage.1} parent=1 // pred_check_branch
      %530 = sbr.rel (0) target = $region241
    $region240: #{_dbpn_stage.1} parent=1 // pred_region
      %531 = dma.done [#allocation32], 32
    $region241: #{_dbpn_stage.1} parent=1 // pred_fallthru
      _
    // Predicated region
    $region242: #{_dbpn_stage.1} parent=1 // pred_check
      _
    $region243: #{_dbpn_stage.1} parent=1 // pred_check_branch
      %533 = sbr.rel (0) target = $region245
    $region244: #{_dbpn_stage.1} parent=1 // pred_region
      %534 = dma.done [#allocation35], 6144
    $region245: #{_dbpn_stage.1} parent=1 // pred_fallthru
      _
    // Predicated region
    $region246: #{_dbpn_stage.1} parent=1 // pred_check
      _
    $region247: #{_dbpn_stage.1} parent=1 // pred_check_branch
      %536 = sbr.rel (0) target = $region249
    $region248: #{_dbpn_stage.1} parent=1 // pred_region
      %537 = dma.done [#allocation35], 16
    $region249: #{_dbpn_stage.1} parent=1 // pred_fallthru
      _
    // Predicated region
    $region250: #{_dbpn_stage.1} parent=1 // pred_check
      _
    $region251: #{_dbpn_stage.1} parent=1 // pred_check_branch
      %539 = sbr.rel (0) target = $region253
    $region252: #{_dbpn_stage.1} parent=1 // pred_region
      %540 = dma.done [#allocation38], 16
    $region253: #{_dbpn_stage.1} parent=1 // pred_fallthru
      _
    // Predicated region
    $region254: #{_dbpn_stage.1} parent=1 // pred_check
      _
    $region255: #{_dbpn_stage.1} parent=1 // pred_check_branch
      %542 = sbr.rel (0) target = $region257
    $region256: #{_dbpn_stage.1} parent=1 // pred_region
      %543 = dma.done [#allocation38], 6144
    $region257: #{_dbpn_stage.1} parent=1 // pred_fallthru
      _
    // Predicated region
    $region258: #{_dbpn_stage.1} parent=1 // pred_check
      _
    $region259: #{_dbpn_stage.1} parent=1 // pred_check_branch
      %545 = sbr.rel (0) target = $region261
    $region260: #{_dbpn_stage.1} parent=1 // pred_region
      %546 = dma.done [#allocation41], 32
    $region261: #{_dbpn_stage.1} parent=1 // pred_fallthru
      _
    // Predicated region
    $region262: #{_dbpn_stage.1} parent=1 // pred_check
      _
    $region263: #{_dbpn_stage.1} parent=1 // pred_check_branch
      %548 = sbr.rel (0) target = $region265
    $region264: #{_dbpn_stage.1} parent=1 // pred_region
      %549 = dma.done [#allocation41], 6144
    $region265: #{_dbpn_stage.1} parent=1 // pred_fallthru
      _
    // Predicated region
    $region266: #{_dbpn_stage.1} parent=1 // pred_check
      _
    $region267: #{_dbpn_stage.1} parent=1 // pred_check_branch
      %551 = sbr.rel (0) target = $region269
    $region268: #{_dbpn_stage.1} parent=1 // pred_region
      %552 = dma.done [#allocation44], 16
    $region269: #{_dbpn_stage.1} parent=1 // pred_fallthru
      _
    // Predicated region
    $region270: #{_dbpn_stage.1} parent=1 // pred_check
      _
    $region271: #{_dbpn_stage.1} parent=1 // pred_check_branch
      %554 = sbr.rel (0) target = $region273
    $region272: #{_dbpn_stage.1} parent=1 // pred_region
      %555 = dma.done [#allocation44], 6144
    $region273: #{_dbpn_stage.1} parent=1 // pred_fallthru
      _
    // Predicated region
    $region274: #{_dbpn_stage.1} parent=1 // pred_check
      _
    $region275: #{_dbpn_stage.1} parent=1 // pred_check_branch
      %557 = sbr.rel (0) target = $region277
    $region276: #{_dbpn_stage.1} parent=1 // pred_region
      %558 = dma.done [#allocation47], 32
    $region277: #{_dbpn_stage.1} parent=1 // pred_fallthru
      _
    // Predicated region
    $region278: #{_dbpn_stage.1} parent=1 // pred_check
      _
    $region279: #{_dbpn_stage.1} parent=1 // pred_check_branch
      %560 = sbr.rel (0) target = $region281
    $region280: #{_dbpn_stage.1} parent=1 // pred_region
      %561 = dma.done [#allocation47], 18432
    $region281: #{_dbpn_stage.1} parent=1 // pred_fallthru
      _
    // Predicated region
    $region282: #{_dbpn_stage.1} parent=1 // pred_check
      _
    $region283: #{_dbpn_stage.1} parent=1 // pred_check_branch
      %563 = sbr.rel (0) target = $region285
    $region284: #{_dbpn_stage.1} parent=1 // pred_region
      %564 = dma.done [#allocation50], 16
    $region285: #{_dbpn_stage.1} parent=1 // pred_fallthru
      _
    %v566 = vlaneseq
    %v567 = vshrl.u32 %v566, 7
    %v568 = vadd.s32 %v567, 8
    %vm569 = vcmp.lt.s32.totalorder %v567, 0
    %v570 = vsub.s32 0, %v567
    %v571 = vsel %vm569, %v570, %v567
    %v572 = vshrl.u32 %v571, 3
    %v573 = vand.u32 %v571, 7
    %v574 = vsub.s32 0, %v573
    %v575 = vsel %vm569, %v574, %v573
    %vm576 = vcmp.lt.s32.totalorder %v568, 0
    %v577 = vsub.s32 0, %v568
    %v578 = vsel %vm576, %v577, %v568
    %v579 = vshrl.u32 %v578, 3
    %v580 = vand.u32 %v578, 7
    %v581 = vsub.s32 0, %v580
    %v582 = vsel %vm576, %v581, %v580
    %vm583 = vcmp.ne.s32.totalorder %v575, 0
    %vm584 = vcmp.ne.s32.totalorder %v582, 0
    %vm585 = vcmp.lt.s32.totalorder %v575, 0
    %vm586 = vcmp.lt.s32.totalorder %v582, 0
    %vm587 = vmand %vm585, %vm583
    %vm588 = vmand %vm586, %vm584
    %v589 = vadd.s32 %v575, 8
    %v590 = vadd.s32 %v582, 8
    %v591 = vsel %vm587, %v589, %v575
    %v592 = vsel %vm588, %v590, %v582
    %vm593 = vcmp.ne.s32.totalorder %v591, 0
    %vm594 = vcmp.ne.s32.totalorder %v592, 0
    %v595 = vsel %vm593, 1, 0
    %v596 = vsel %vm594, 1, 0
    %v597 = vcvt.s32.f32 %v595
    %v598 = vcvt.s32.f32 %v596
    %vm599 = vcmp.ne.s32.totalorder %v591, 7
    %vm600 = vcmp.ne.s32.totalorder %v592, 7
    %v601 = vsel %vm599, 1, 0
    %v602 = vsel %vm600, 1, 0
    %v603 = vcvt.s32.f32 %v601
    %v604 = vcvt.s32.f32 %v602
    %v605 = vld [vmem:[%s1] sm:$0xff]
    %v606 = vld [vmem:[%s1 + $0x8] sm:$0xff]
    %v607 = vrot.slane %v605, 7
    %v608 = vrot.slane %v606, 7
    %vm609 = vcmp.lt.s32.totalorder %v567, 1
    %v610 = vsel %vm609, %v607, %v608
    %v611 = vsel %vm609, %v608, %v607
    %v612 = vmul.f32 %v611, %v597
    %v613 = vmul.f32 %v610, %v598
    %v614 = vrot.slane %v605, 1
    %v615 = vrot.slane %v606, 1
    %vm616 = vcmp.lt.s32.totalorder %v567, 7
    %v617 = vsel %vm616, %v614, %v615
    %v618 = vsel %vm616, %v615, %v614
    %v619 = vmul.f32 %v617, %v603
    %v620 = vmul.f32 %v618, %v604
    %v621 = vpack.c.bf16 %v613, %v612
    %v622 = vpack.c.bf16 %v606, %v605
    %v623 = vpack.c.bf16 %v620, %v619
    %v624 = vld [vmem:[%s3] sm:$0xf]
    %v625 = vld [vmem:[%s3 + $0x4] sm:$0xf]
    %v626 = vld [vmem:[%s3 + $0x8] sm:$0xf]
    %v627 = vld [vmem:[%s3 + $0xc] sm:$0xf]
    %v628 = vld [vmem:[%s3 + $0x10] sm:$0xf]
    %v629 = vld [vmem:[%s3 + $0x14] sm:$0xf]
    %v630 = vld [vmem:[%s3 + $0x18] sm:$0xf]
    %v631 = vld [vmem:[%s3 + $0x1c] sm:$0xf]
    %v632 = vld [vmem:[%s3 + $0x20] sm:$0xf]
    %v633 = vld [vmem:[%s3 + $0x24] sm:$0xf]
    %v634 = vld [vmem:[%s3 + $0x28] sm:$0xf]
    %v635 = vld [vmem:[%s3 + $0x2c] sm:$0xf]
    %v636 = vld [vmem:[%s3 + $0x30] sm:$0xf]
    %v637 = vld [vmem:[%s3 + $0x34] sm:$0xf]
    %v638 = vld [vmem:[%s3 + $0x38] sm:$0xf]
    %v639 = vld [vmem:[%s3 + $0x3c] sm:$0xf]
    %v640 = vld [vmem:[%s3 + $0x40] sm:$0xf]
    %v641 = vld [vmem:[%s3 + $0x44] sm:$0xf]
    %v642 = vld [vmem:[%s3 + $0x48] sm:$0xf]
    %v643 = vld [vmem:[%s3 + $0x4c] sm:$0xf]
    %v644 = vld [vmem:[%s3 + $0x50] sm:$0xf]
    %v645 = vld [vmem:[%s3 + $0x54] sm:$0xf]
    %v646 = vld [vmem:[%s3 + $0x58] sm:$0xf]
    %v647 = vld [vmem:[%s3 + $0x5c] sm:$0xf]
    %v648 = vld [vmem:[%s3 + $0x60] sm:$0xf]
    %v649 = vld [vmem:[%s3 + $0x64] sm:$0xf]
    %v650 = vld [vmem:[%s3 + $0x68] sm:$0xf]
    %v651 = vld [vmem:[%s3 + $0x6c] sm:$0xf]
    %v652 = vld [vmem:[%s3 + $0x70] sm:$0xf]
    %v653 = vld [vmem:[%s3 + $0x74] sm:$0xf]
    %v654 = vld [vmem:[%s3 + $0x78] sm:$0xf]
    %v655 = vld [vmem:[%s3 + $0x7c] sm:$0xf]
    %v656 = vld [vmem:[%s3 + $0x80] sm:$0xf]
    %v657 = vld [vmem:[%s3 + $0x84] sm:$0xf]
    %v658 = vld [vmem:[%s3 + $0x88] sm:$0xf]
    %v659 = vld [vmem:[%s3 + $0x8c] sm:$0xf]
    %v660 = vld [vmem:[%s3 + $0x90] sm:$0xf]
    %v661 = vld [vmem:[%s3 + $0x94] sm:$0xf]
    %v662 = vld [vmem:[%s3 + $0x98] sm:$0xf]
    %v663 = vld [vmem:[%s3 + $0x9c] sm:$0xf]
    %v664 = vld [vmem:[%s3 + $0xa0] sm:$0xf]
    %v665 = vld [vmem:[%s3 + $0xa4] sm:$0xf]
    %v666 = vld [vmem:[%s3 + $0xa8] sm:$0xf]
    %v667 = vld [vmem:[%s3 + $0xac] sm:$0xf]
    %v668 = vld [vmem:[%s3 + $0xb0] sm:$0xf]
    %v669 = vld [vmem:[%s3 + $0xb4] sm:$0xf]
    %v670 = vld [vmem:[%s3 + $0xb8] sm:$0xf]
    %v671 = vld [vmem:[%s3 + $0xbc] sm:$0xf]
    %v672 = vld [vmem:[#allocation2] sm:$0x1]
    %v674 = vlaneseq
    %v675 = vshrl.u32 %v674, 7
    %v676 = vsub.s32 0, %v675
    %v677 = vrot.slane %v672, %v676
    %v727 = vunpack.c.l.b16 %v624
    %v728 = vunpack.c.l.b16 %v625
    %v729 = vunpack.c.l.b16 %v626
    %v730 = vunpack.c.l.b16 %v627
    %v731 = vunpack.c.l.b16 %v628
    %v732 = vunpack.c.l.b16 %v629
    %v733 = vunpack.c.l.b16 %v630
    %v734 = vunpack.c.l.b16 %v631
    %v735 = vunpack.c.l.b16 %v632
    %v736 = vunpack.c.l.b16 %v633
    %v737 = vunpack.c.l.b16 %v634
    %v738 = vunpack.c.l.b16 %v635
    %v739 = vunpack.c.l.b16 %v636
    %v740 = vunpack.c.l.b16 %v637
    %v741 = vunpack.c.l.b16 %v638
    %v742 = vunpack.c.l.b16 %v639
    %v743 = vunpack.c.l.b16 %v640
    %v744 = vunpack.c.l.b16 %v641
    %v745 = vunpack.c.l.b16 %v642
    %v746 = vunpack.c.l.b16 %v643
    %v747 = vunpack.c.l.b16 %v644
    %v748 = vunpack.c.l.b16 %v645
    %v749 = vunpack.c.l.b16 %v646
    %v750 = vunpack.c.l.b16 %v647
    %v751 = vunpack.c.l.b16 %v648
    %v752 = vunpack.c.l.b16 %v649
    %v753 = vunpack.c.l.b16 %v650
    %v754 = vunpack.c.l.b16 %v651
    %v755 = vunpack.c.l.b16 %v652
    %v756 = vunpack.c.l.b16 %v653
    %v757 = vunpack.c.l.b16 %v654
    %v758 = vunpack.c.l.b16 %v655
    %v759 = vunpack.c.l.b16 %v656
    %v760 = vunpack.c.l.b16 %v657
    %v761 = vunpack.c.l.b16 %v658
    %v762 = vunpack.c.l.b16 %v659
    %v763 = vunpack.c.l.b16 %v660
    %v764 = vunpack.c.l.b16 %v661
    %v765 = vunpack.c.l.b16 %v662
    %v766 = vunpack.c.l.b16 %v663
    %v767 = vunpack.c.l.b16 %v664
    %v768 = vunpack.c.l.b16 %v665
    %v769 = vunpack.c.l.b16 %v666
    %v770 = vunpack.c.l.b16 %v667
    %v771 = vunpack.c.l.b16 %v668
    %v772 = vunpack.c.l.b16 %v669
    %v773 = vunpack.c.l.b16 %v670
    %v774 = vunpack.c.l.b16 %v671
    %v775 = vpack.c.b16 %v728, %v727
    %v776 = vpack.c.b16 %v730, %v729
    %v777 = vpack.c.b16 %v732, %v731
    %v778 = vpack.c.b16 %v734, %v733
    %v779 = vpack.c.b16 %v736, %v735
    %v780 = vpack.c.b16 %v738, %v737
    %v781 = vpack.c.b16 %v740, %v739
    %v782 = vpack.c.b16 %v742, %v741
    %v783 = vpack.c.b16 %v744, %v743
    %v784 = vpack.c.b16 %v746, %v745
    %v785 = vpack.c.b16 %v748, %v747
    %v786 = vpack.c.b16 %v750, %v749
    %v787 = vpack.c.b16 %v752, %v751
    %v788 = vpack.c.b16 %v754, %v753
    %v789 = vpack.c.b16 %v756, %v755
    %v790 = vpack.c.b16 %v758, %v757
    %v791 = vpack.c.b16 %v760, %v759
    %v792 = vpack.c.b16 %v762, %v761
    %v793 = vpack.c.b16 %v764, %v763
    %v794 = vpack.c.b16 %v766, %v765
    %v795 = vpack.c.b16 %v768, %v767
    %v796 = vpack.c.b16 %v770, %v769
    %v797 = vpack.c.b16 %v772, %v771
    %v798 = vpack.c.b16 %v774, %v773
    %823 = vmatprep.subr.bf16.mxu0 0
    %824 = vmatpush1.bf16.msra.mxu0 %v782
    %825 = vmatprep.subr.bf16.mxu0 0
    %826 = vmatpush1.bf16.msra.mxu0 %v781
    %827 = vmatprep.subr.bf16.mxu0 0
    %828 = vmatpush1.bf16.msra.mxu0 %v780
    %829 = vmatprep.subr.bf16.mxu0 0
    %830 = vmatpush1.bf16.msra.mxu0 %v779
    %831 = vmatprep.subr.bf16.mxu0 0
    %832 = vmatpush1.bf16.msra.mxu0 %v778
    %833 = vmatprep.subr.bf16.mxu0 0
    %834 = vmatpush1.bf16.msra.mxu0 %v777
    %835 = vmatprep.subr.bf16.mxu0 0
    %836 = vmatpush1.bf16.msra.mxu0 %v776
    %837 = vmatprep.subr.bf16.mxu0 0
    %838 = vmatpush1.bf16.msra.mxu0 %v775
    %839 = vmatprep.subr.bf16.mxu0 0
    %840 = vmatpush2.bf16.msra.mxu0 %v790
    %841 = vmatprep.subr.bf16.mxu0 0
    %842 = vmatpush2.bf16.msra.mxu0 %v789
    %843 = vmatprep.subr.bf16.mxu0 0
    %844 = vmatpush2.bf16.msra.mxu0 %v788
    %845 = vmatprep.subr.bf16.mxu0 0
    %846 = vmatpush2.bf16.msra.mxu0 %v787
    %847 = vmatprep.subr.bf16.mxu0 0
    %848 = vmatpush2.bf16.msra.mxu0 %v786
    %849 = vmatprep.subr.bf16.mxu0 0
    %850 = vmatpush2.bf16.msra.mxu0 %v785
    %851 = vmatprep.subr.bf16.mxu0 0
    %852 = vmatpush2.bf16.msra.mxu0 %v784
    %853 = vmatprep.subr.bf16.mxu0 0
    %854 = vmatpush2.bf16.msra.mxu0 %v783
    %855 = vmatprep.mubr.bf16.mxu0 %v622
    %856 = vmatmul.mubr.bf16.gmra.mxu0 %v621
    %v857 = vpop.f32.mrf.mxu0
    %v858 = vadd.f32 %v677, %v857
    %v859 = vpop.f32.mrf.mxu0
    %v860 = vpop.f32.mrf.mxu0
    %v861 = vadd.f32 %v677, %v860
    %v862 = vpop.f32.mrf.mxu0
    %863 = vdwg.mxu0
    %864 = vmatprep.subr.bf16.mxu0 0
    %865 = vmatpush1.bf16.msra.mxu0 %v798
    %866 = vmatprep.subr.bf16.mxu0 0
    %867 = vmatpush1.bf16.msra.mxu0 %v797
    %868 = vmatprep.subr.bf16.mxu0 0
    %869 = vmatpush1.bf16.msra.mxu0 %v796
    %870 = vmatprep.subr.bf16.mxu0 0
    %871 = vmatpush1.bf16.msra.mxu0 %v795
    %872 = vmatprep.subr.bf16.mxu0 0
    %873 = vmatpush1.bf16.msra.mxu0 %v794
    %874 = vmatprep.subr.bf16.mxu0 0
    %875 = vmatpush1.bf16.msra.mxu0 %v793
    %876 = vmatprep.subr.bf16.mxu0 0
    %877 = vmatpush1.bf16.msra.mxu0 %v792
    %878 = vmatprep.subr.bf16.mxu0 0
    %879 = vmatpush1.bf16.msra.mxu0 %v791
    %880 = vmatprep.subr.bf16.mxu0 0
    %881 = vmatpush2.bf16.msra.mxu0 0
    %882 = vmatprep.subr.bf16.mxu0 0
    %883 = vmatpush2.bf16.msra.mxu0 0
    %884 = vmatprep.subr.bf16.mxu0 0
    %885 = vmatpush2.bf16.msra.mxu0 0
    %886 = vmatprep.subr.bf16.mxu0 0
    %887 = vmatpush2.bf16.msra.mxu0 0
    %888 = vmatprep.subr.bf16.mxu0 0
    %889 = vmatpush2.bf16.msra.mxu0 0
    %890 = vmatprep.subr.bf16.mxu0 0
    %891 = vmatpush2.bf16.msra.mxu0 0
    %892 = vmatprep.subr.bf16.mxu0 0
    %893 = vmatpush2.bf16.msra.mxu0 0
    %894 = vmatprep.subr.bf16.mxu0 0
    %895 = vmatpush2.bf16.msra.mxu0 0
    %896 = vmatprep.mubr.bf16.mxu0 0
    %897 = vmatmul.mubr.bf16.gmra.mxu0 %v623
    %v898 = vpop.f32.mrf.mxu0
    %v899 = vadd.f32 %v858, %v898
    %v900 = vpop.f32.mrf.mxu0
    %v901 = vpop.f32.mrf.mxu0
    %v902 = vadd.f32 %v861, %v901
    %v903 = vpop.f32.mrf.mxu0
    %904 = vdwg.mxu0
    %v905 = vmax.f32 %v899, 0.0
    %v906 = vmax.f32 %v902, 0.0
    %v907 = vpack.c.bf16 %v906, %v905
    %v908 = vld [vmem:[#allocation4] sm:$0xf]
    %v909 = vld [vmem:[#allocation4 + $0x4] sm:$0xf]
    %v910 = vld [vmem:[#allocation4 + $0x8] sm:$0xf]
    %v911 = vld [vmem:[#allocation4 + $0xc] sm:$0xf]
    %v912 = vld [vmem:[#allocation4 + $0x10] sm:$0xf]
    %v913 = vld [vmem:[#allocation4 + $0x14] sm:$0xf]
    %v914 = vld [vmem:[#allocation4 + $0x18] sm:$0xf]
    %v915 = vld [vmem:[#allocation4 + $0x1c] sm:$0xf]
    %v916 = vld [vmem:[#allocation4 + $0x20] sm:$0xf]
    %v917 = vld [vmem:[#allocation4 + $0x24] sm:$0xf]
    %v918 = vld [vmem:[#allocation4 + $0x28] sm:$0xf]
    %v919 = vld [vmem:[#allocation4 + $0x2c] sm:$0xf]
    %v920 = vld [vmem:[#allocation4 + $0x30] sm:$0xf]
    %v921 = vld [vmem:[#allocation4 + $0x34] sm:$0xf]
    %v922 = vld [vmem:[#allocation4 + $0x38] sm:$0xf]
    %v923 = vld [vmem:[#allocation4 + $0x3c] sm:$0xf]
    %v924 = vld [vmem:[#allocation6] sm:$0x1]
    %v926 = vlaneseq
    %v927 = vshrl.u32 %v926, 7
    %v928 = vsub.s32 0, %v927
    %v929 = vrot.slane %v924, %v928
    %v947 = vunpack.c.l.b16 %v908
    %v948 = vunpack.c.l.b16 %v909
    %v949 = vunpack.c.l.b16 %v910
    %v950 = vunpack.c.l.b16 %v911
    %v951 = vunpack.c.l.b16 %v912
    %v952 = vunpack.c.l.b16 %v913
    %v953 = vunpack.c.l.b16 %v914
    %v954 = vunpack.c.l.b16 %v915
    %v955 = vunpack.c.l.b16 %v916
    %v956 = vunpack.c.l.b16 %v917
    %v957 = vunpack.c.l.b16 %v918
    %v958 = vunpack.c.l.b16 %v919
    %v959 = vunpack.c.l.b16 %v920
    %v960 = vunpack.c.l.b16 %v921
    %v961 = vunpack.c.l.b16 %v922
    %v962 = vunpack.c.l.b16 %v923
    %v963 = vpack.c.b16 %v948, %v947
    %v964 = vpack.c.b16 %v950, %v949
    %v965 = vpack.c.b16 %v952, %v951
    %v966 = vpack.c.b16 %v954, %v953
    %v967 = vpack.c.b16 %v956, %v955
    %v968 = vpack.c.b16 %v958, %v957
    %v969 = vpack.c.b16 %v960, %v959
    %v970 = vpack.c.b16 %v962, %v961
    %979 = vmatprep.subr.bf16.mxu0 0
    %980 = vmatpush1.bf16.msra.mxu0 %v970
    %981 = vmatprep.subr.bf16.mxu0 0
    %982 = vmatpush1.bf16.msra.mxu0 %v969
    %983 = vmatprep.subr.bf16.mxu0 0
    %984 = vmatpush1.bf16.msra.mxu0 %v968
    %985 = vmatprep.subr.bf16.mxu0 0
    %986 = vmatpush1.bf16.msra.mxu0 %v967
    %987 = vmatprep.subr.bf16.mxu0 0
    %988 = vmatpush1.bf16.msra.mxu0 %v966
    %989 = vmatprep.subr.bf16.mxu0 0
    %990 = vmatpush1.bf16.msra.mxu0 %v965
    %991 = vmatprep.subr.bf16.mxu0 0
    %992 = vmatpush1.bf16.msra.mxu0 %v964
    %993 = vmatprep.subr.bf16.mxu0 0
    %994 = vmatpush1.bf16.msra.mxu0 %v963
    %995 = vmatprep.subr.bf16.mxu0 0
    %996 = vmatpush2.bf16.msra.mxu0 0
    %997 = vmatprep.subr.bf16.mxu0 0
    %998 = vmatpush2.bf16.msra.mxu0 0
    %999 = vmatprep.subr.bf16.mxu0 0
    %1000 = vmatpush2.bf16.msra.mxu0 0
    %1001 = vmatprep.subr.bf16.mxu0 0
    %1002 = vmatpush2.bf16.msra.mxu0 0
    %1003 = vmatprep.subr.bf16.mxu0 0
    %1004 = vmatpush2.bf16.msra.mxu0 0
    %1005 = vmatprep.subr.bf16.mxu0 0
    %1006 = vmatpush2.bf16.msra.mxu0 0
    %1007 = vmatprep.subr.bf16.mxu0 0
    %1008 = vmatpush2.bf16.msra.mxu0 0
    %1009 = vmatprep.subr.bf16.mxu0 0
    %1010 = vmatpush2.bf16.msra.mxu0 0
    %1011 = vmatprep.mubr.bf16.mxu0 0
    %1012 = vmatmul.mubr.bf16.gmra.mxu0 %v907
    %v1013 = vpop.f32.mrf.mxu0
    %v1014 = vadd.f32 %v929, %v1013
    %v1015 = vpop.f32.mrf.mxu0
    %v1016 = vpop.f32.mrf.mxu0
    %v1017 = vadd.f32 %v929, %v1016
    %v1018 = vpop.f32.mrf.mxu0
    %1019 = vdwg.mxu0
    %v1020 = vmax.f32 %v1014, 0.0
    %v1021 = vmax.f32 %v1017, 0.0
    %v1022 = vrot.slane %v1020, 7
    %v1023 = vrot.slane %v1021, 7
    %v1024 = vsel %vm609, %v1022, %v1023
    %v1025 = vsel %vm609, %v1023, %v1022
    %v1026 = vmul.f32 %v1025, %v597
    %v1027 = vmul.f32 %v1024, %v598
    %v1028 = vrot.slane %v1020, 1
    %v1029 = vrot.slane %v1021, 1
    %v1030 = vsel %vm616, %v1028, %v1029
    %v1031 = vsel %vm616, %v1029, %v1028
    %v1032 = vmul.f32 %v1030, %v603
    %v1033 = vmul.f32 %v1031, %v604
    %v1034 = vpack.c.bf16 %v1027, %v1026
    %v1035 = vpack.c.bf16 %v1021, %v1020
    %v1036 = vpack.c.bf16 %v1033, %v1032
    %v1037 = vld [vmem:[#allocation7] sm:$0xff]
    %v1038 = vld [vmem:[#allocation7 + $0x8] sm:$0xff]
    %v1039 = vld [vmem:[#allocation7 + $0x10] sm:$0xff]
    %v1040 = vld [vmem:[#allocation7 + $0x18] sm:$0xff]
    %v1041 = vld [vmem:[#allocation7 + $0x20] sm:$0xff]
    %v1042 = vld [vmem:[#allocation7 + $0x28] sm:$0xff]
    %v1043 = vld [vmem:[#allocation7 + $0x30] sm:$0xff]
    %v1044 = vld [vmem:[#allocation7 + $0x38] sm:$0xff]
    %v1045 = vld [vmem:[#allocation7 + $0x40] sm:$0xff]
    %v1046 = vld [vmem:[#allocation7 + $0x48] sm:$0xff]
    %v1047 = vld [vmem:[#allocation7 + $0x50] sm:$0xff]
    %v1048 = vld [vmem:[#allocation7 + $0x58] sm:$0xff]
    %v1049 = vld [vmem:[#allocation7 + $0x60] sm:$0xff]
    %v1050 = vld [vmem:[#allocation7 + $0x68] sm:$0xff]
    %v1051 = vld [vmem:[#allocation7 + $0x70] sm:$0xff]
    %v1052 = vld [vmem:[#allocation7 + $0x78] sm:$0xff]
    %v1053 = vld [vmem:[#allocation7 + $0x80] sm:$0xff]
    %v1054 = vld [vmem:[#allocation7 + $0x88] sm:$0xff]
    %v1055 = vld [vmem:[#allocation7 + $0x90] sm:$0xff]
    %v1056 = vld [vmem:[#allocation7 + $0x98] sm:$0xff]
    %v1057 = vld [vmem:[#allocation7 + $0xa0] sm:$0xff]
    %v1058 = vld [vmem:[#allocation7 + $0xa8] sm:$0xff]
    %v1059 = vld [vmem:[#allocation7 + $0xb0] sm:$0xff]
    %v1060 = vld [vmem:[#allocation7 + $0xb8] sm:$0xff]
    %v1061 = vld [vmem:[#allocation7 + $0xc0] sm:$0xff]
    %v1062 = vld [vmem:[#allocation7 + $0xc8] sm:$0xff]
    %v1063 = vld [vmem:[#allocation7 + $0xd0] sm:$0xff]
    %v1064 = vld [vmem:[#allocation7 + $0xd8] sm:$0xff]
    %v1065 = vld [vmem:[#allocation7 + $0xe0] sm:$0xff]
    %v1066 = vld [vmem:[#allocation7 + $0xe8] sm:$0xff]
    %v1067 = vld [vmem:[#allocation7 + $0xf0] sm:$0xff]
    %v1068 = vld [vmem:[#allocation7 + $0xf8] sm:$0xff]
    %v1069 = vld [vmem:[#allocation7 + $0x100] sm:$0xff]
    %v1070 = vld [vmem:[#allocation7 + $0x108] sm:$0xff]
    %v1071 = vld [vmem:[#allocation7 + $0x110] sm:$0xff]
    %v1072 = vld [vmem:[#allocation7 + $0x118] sm:$0xff]
    %v1073 = vld [vmem:[#allocation7 + $0x120] sm:$0xff]
    %v1074 = vld [vmem:[#allocation7 + $0x128] sm:$0xff]
    %v1075 = vld [vmem:[#allocation7 + $0x130] sm:$0xff]
    %v1076 = vld [vmem:[#allocation7 + $0x138] sm:$0xff]
    %v1077 = vld [vmem:[#allocation7 + $0x140] sm:$0xff]
    %v1078 = vld [vmem:[#allocation7 + $0x148] sm:$0xff]
    %v1079 = vld [vmem:[#allocation7 + $0x150] sm:$0xff]
    %v1080 = vld [vmem:[#allocation7 + $0x158] sm:$0xff]
    %v1081 = vld [vmem:[#allocation7 + $0x160] sm:$0xff]
    %v1082 = vld [vmem:[#allocation7 + $0x168] sm:$0xff]
    %v1083 = vld [vmem:[#allocation7 + $0x170] sm:$0xff]
    %v1084 = vld [vmem:[#allocation7 + $0x178] sm:$0xff]
    %v1085 = vld [vmem:[#allocation9] sm:$0x3]
    %v1087 = vlaneseq
    %v1088 = vshrl.u32 %v1087, 7
    %v1089 = vsub.s32 0, %v1088
    %v1090 = vrot.slane %v1085, %v1089
    %v1091 = vlaneseq
    %v1092 = vshrl.u32 %v1091, 7
    %v1093 = vsub.s32 1, %v1092
    %v1094 = vrot.slane %v1085, %v1093
    %v1145 = vunpack.c.l.b16 %v1037
    %v1146 = vunpack.c.h.b16 %v1037
    %v1147 = vunpack.c.l.b16 %v1038
    %v1148 = vunpack.c.h.b16 %v1038
    %v1149 = vunpack.c.l.b16 %v1039
    %v1150 = vunpack.c.h.b16 %v1039
    %v1151 = vunpack.c.l.b16 %v1040
    %v1152 = vunpack.c.h.b16 %v1040
    %v1153 = vunpack.c.l.b16 %v1041
    %v1154 = vunpack.c.h.b16 %v1041
    %v1155 = vunpack.c.l.b16 %v1042
    %v1156 = vunpack.c.h.b16 %v1042
    %v1157 = vunpack.c.l.b16 %v1043
    %v1158 = vunpack.c.h.b16 %v1043
    %v1159 = vunpack.c.l.b16 %v1044
    %v1160 = vunpack.c.h.b16 %v1044
    %v1161 = vunpack.c.l.b16 %v1045
    %v1162 = vunpack.c.h.b16 %v1045
    %v1163 = vunpack.c.l.b16 %v1046
    %v1164 = vunpack.c.h.b16 %v1046
    %v1165 = vunpack.c.l.b16 %v1047
    %v1166 = vunpack.c.h.b16 %v1047
    %v1167 = vunpack.c.l.b16 %v1048
    %v1168 = vunpack.c.h.b16 %v1048
    %v1169 = vunpack.c.l.b16 %v1049
    %v1170 = vunpack.c.h.b16 %v1049
    %v1171 = vunpack.c.l.b16 %v1050
    %v1172 = vunpack.c.h.b16 %v1050
    %v1173 = vunpack.c.l.b16 %v1051
    %v1174 = vunpack.c.h.b16 %v1051
    %v1175 = vunpack.c.l.b16 %v1052
    %v1176 = vunpack.c.h.b16 %v1052
    %v1177 = vunpack.c.l.b16 %v1053
    %v1178 = vunpack.c.h.b16 %v1053
    %v1179 = vunpack.c.l.b16 %v1054
    %v1180 = vunpack.c.h.b16 %v1054
    %v1181 = vunpack.c.l.b16 %v1055
    %v1182 = vunpack.c.h.b16 %v1055
    %v1183 = vunpack.c.l.b16 %v1056
    %v1184 = vunpack.c.h.b16 %v1056
    %v1185 = vunpack.c.l.b16 %v1057
    %v1186 = vunpack.c.h.b16 %v1057
    %v1187 = vunpack.c.l.b16 %v1058
    %v1188 = vunpack.c.h.b16 %v1058
    %v1189 = vunpack.c.l.b16 %v1059
    %v1190 = vunpack.c.h.b16 %v1059
    %v1191 = vunpack.c.l.b16 %v1060
    %v1192 = vunpack.c.h.b16 %v1060
    %v1193 = vunpack.c.l.b16 %v1061
    %v1194 = vunpack.c.h.b16 %v1061
    %v1195 = vunpack.c.l.b16 %v1062
    %v1196 = vunpack.c.h.b16 %v1062
    %v1197 = vunpack.c.l.b16 %v1063
    %v1198 = vunpack.c.h.b16 %v1063
    %v1199 = vunpack.c.l.b16 %v1064
    %v1200 = vunpack.c.h.b16 %v1064
    %v1201 = vunpack.c.l.b16 %v1065
    %v1202 = vunpack.c.h.b16 %v1065
    %v1203 = vunpack.c.l.b16 %v1066
    %v1204 = vunpack.c.h.b16 %v1066
    %v1205 = vunpack.c.l.b16 %v1067
    %v1206 = vunpack.c.h.b16 %v1067
    %v1207 = vunpack.c.l.b16 %v1068
    %v1208 = vunpack.c.h.b16 %v1068
    %v1209 = vunpack.c.l.b16 %v1069
    %v1210 = vunpack.c.h.b16 %v1069
    %v1211 = vunpack.c.l.b16 %v1070
    %v1212 = vunpack.c.h.b16 %v1070
    %v1213 = vunpack.c.l.b16 %v1071
    %v1214 = vunpack.c.h.b16 %v1071
    %v1215 = vunpack.c.l.b16 %v1072
    %v1216 = vunpack.c.h.b16 %v1072
    %v1217 = vunpack.c.l.b16 %v1073
    %v1218 = vunpack.c.h.b16 %v1073
    %v1219 = vunpack.c.l.b16 %v1074
    %v1220 = vunpack.c.h.b16 %v1074
    %v1221 = vunpack.c.l.b16 %v1075
    %v1222 = vunpack.c.h.b16 %v1075
    %v1223 = vunpack.c.l.b16 %v1076
    %v1224 = vunpack.c.h.b16 %v1076
    %v1225 = vunpack.c.l.b16 %v1077
    %v1226 = vunpack.c.h.b16 %v1077
    %v1227 = vunpack.c.l.b16 %v1078
    %v1228 = vunpack.c.h.b16 %v1078
    %v1229 = vunpack.c.l.b16 %v1079
    %v1230 = vunpack.c.h.b16 %v1079
    %v1231 = vunpack.c.l.b16 %v1080
    %v1232 = vunpack.c.h.b16 %v1080
    %v1233 = vunpack.c.l.b16 %v1081
    %v1234 = vunpack.c.h.b16 %v1081
    %v1235 = vunpack.c.l.b16 %v1082
    %v1236 = vunpack.c.h.b16 %v1082
    %v1237 = vunpack.c.l.b16 %v1083
    %v1238 = vunpack.c.h.b16 %v1083
    %v1239 = vunpack.c.l.b16 %v1084
    %v1240 = vunpack.c.h.b16 %v1084
    %v1241 = vpack.c.b16 %v1147, %v1145
    %v1242 = vpack.c.b16 %v1148, %v1146
    %v1243 = vpack.c.b16 %v1151, %v1149
    %v1244 = vpack.c.b16 %v1152, %v1150
    %v1245 = vpack.c.b16 %v1155, %v1153
    %v1246 = vpack.c.b16 %v1156, %v1154
    %v1247 = vpack.c.b16 %v1159, %v1157
    %v1248 = vpack.c.b16 %v1160, %v1158
    %v1249 = vpack.c.b16 %v1163, %v1161
    %v1250 = vpack.c.b16 %v1164, %v1162
    %v1251 = vpack.c.b16 %v1167, %v1165
    %v1252 = vpack.c.b16 %v1168, %v1166
    %v1253 = vpack.c.b16 %v1171, %v1169
    %v1254 = vpack.c.b16 %v1172, %v1170
    %v1255 = vpack.c.b16 %v1175, %v1173
    %v1256 = vpack.c.b16 %v1176, %v1174
    %v1257 = vpack.c.b16 %v1179, %v1177
    %v1258 = vpack.c.b16 %v1180, %v1178
    %v1259 = vpack.c.b16 %v1183, %v1181
    %v1260 = vpack.c.b16 %v1184, %v1182
    %v1261 = vpack.c.b16 %v1187, %v1185
    %v1262 = vpack.c.b16 %v1188, %v1186
    %v1263 = vpack.c.b16 %v1191, %v1189
    %v1264 = vpack.c.b16 %v1192, %v1190
    %v1265 = vpack.c.b16 %v1195, %v1193
    %v1266 = vpack.c.b16 %v1196, %v1194
    %v1267 = vpack.c.b16 %v1199, %v1197
    %v1268 = vpack.c.b16 %v1200, %v1198
    %v1269 = vpack.c.b16 %v1203, %v1201
    %v1270 = vpack.c.b16 %v1204, %v1202
    %v1271 = vpack.c.b16 %v1207, %v1205
    %v1272 = vpack.c.b16 %v1208, %v1206
    %v1273 = vpack.c.b16 %v1211, %v1209
    %v1274 = vpack.c.b16 %v1212, %v1210
    %v1275 = vpack.c.b16 %v1215, %v1213
    %v1276 = vpack.c.b16 %v1216, %v1214
    %v1277 = vpack.c.b16 %v1219, %v1217
    %v1278 = vpack.c.b16 %v1220, %v1218
    %v1279 = vpack.c.b16 %v1223, %v1221
    %v1280 = vpack.c.b16 %v1224, %v1222
    %v1281 = vpack.c.b16 %v1227, %v1225
    %v1282 = vpack.c.b16 %v1228, %v1226
    %v1283 = vpack.c.b16 %v1231, %v1229
    %v1284 = vpack.c.b16 %v1232, %v1230
    %v1285 = vpack.c.b16 %v1235, %v1233
    %v1286 = vpack.c.b16 %v1236, %v1234
    %v1287 = vpack.c.b16 %v1239, %v1237
    %v1288 = vpack.c.b16 %v1240, %v1238
    %1337 = vmatprep.subr.bf16.mxu0 %v1256
    %1338 = vmatpush1.bf16.msra.mxu0 %v1255
    %1339 = vmatprep.subr.bf16.mxu0 %v1254
    %1340 = vmatpush1.bf16.msra.mxu0 %v1253
    %1341 = vmatprep.subr.bf16.mxu0 %v1252
    %1342 = vmatpush1.bf16.msra.mxu0 %v1251
    %1343 = vmatprep.subr.bf16.mxu0 %v1250
    %1344 = vmatpush1.bf16.msra.mxu0 %v1249
    %1345 = vmatprep.subr.bf16.mxu0 %v1248
    %1346 = vmatpush1.bf16.msra.mxu0 %v1247
    %1347 = vmatprep.subr.bf16.mxu0 %v1246
    %1348 = vmatpush1.bf16.msra.mxu0 %v1245
    %1349 = vmatprep.subr.bf16.mxu0 %v1244
    %1350 = vmatpush1.bf16.msra.mxu0 %v1243
    %1351 = vmatprep.subr.bf16.mxu0 %v1242
    %1352 = vmatpush1.bf16.msra.mxu0 %v1241
    %1353 = vmatprep.subr.bf16.mxu0 %v1272
    %1354 = vmatpush2.bf16.msra.mxu0 %v1271
    %1355 = vmatprep.subr.bf16.mxu0 %v1270
    %1356 = vmatpush2.bf16.msra.mxu0 %v1269
    %1357 = vmatprep.subr.bf16.mxu0 %v1268
    %1358 = vmatpush2.bf16.msra.mxu0 %v1267
    %1359 = vmatprep.subr.bf16.mxu0 %v1266
    %1360 = vmatpush2.bf16.msra.mxu0 %v1265
    %1361 = vmatprep.subr.bf16.mxu0 %v1264
    %1362 = vmatpush2.bf16.msra.mxu0 %v1263
    %1363 = vmatprep.subr.bf16.mxu0 %v1262
    %1364 = vmatpush2.bf16.msra.mxu0 %v1261
    %1365 = vmatprep.subr.bf16.mxu0 %v1260
    %1366 = vmatpush2.bf16.msra.mxu0 %v1259
    %1367 = vmatprep.subr.bf16.mxu0 %v1258
    %1368 = vmatpush2.bf16.msra.mxu0 %v1257
    %1369 = vmatprep.mubr.bf16.mxu0 %v1035
    %1370 = vmatmul.mubr.bf16.gmra.mxu0 %v1034
    %v1371 = vpop.f32.mrf.mxu0
    %v1372 = vadd.f32 %v1090, %v1371
    %v1373 = vpop.f32.mrf.mxu0
    %v1374 = vadd.f32 %v1094, %v1373
    %v1375 = vpop.f32.mrf.mxu0
    %v1376 = vadd.f32 %v1090, %v1375
    %v1377 = vpop.f32.mrf.mxu0
    %v1378 = vadd.f32 %v1094, %v1377
    %1379 = vdwg.mxu0
    %1380 = vmatprep.subr.bf16.mxu0 %v1288
    %1381 = vmatpush1.bf16.msra.mxu0 %v1287
    %1382 = vmatprep.subr.bf16.mxu0 %v1286
    %1383 = vmatpush1.bf16.msra.mxu0 %v1285
    %1384 = vmatprep.subr.bf16.mxu0 %v1284
    %1385 = vmatpush1.bf16.msra.mxu0 %v1283
    %1386 = vmatprep.subr.bf16.mxu0 %v1282
    %1387 = vmatpush1.bf16.msra.mxu0 %v1281
    %1388 = vmatprep.subr.bf16.mxu0 %v1280
    %1389 = vmatpush1.bf16.msra.mxu0 %v1279
    %1390 = vmatprep.subr.bf16.mxu0 %v1278
    %1391 = vmatpush1.bf16.msra.mxu0 %v1277
    %1392 = vmatprep.subr.bf16.mxu0 %v1276
    %1393 = vmatpush1.bf16.msra.mxu0 %v1275
    %1394 = vmatprep.subr.bf16.mxu0 %v1274
    %1395 = vmatpush1.bf16.msra.mxu0 %v1273
    %1396 = vmatprep.subr.bf16.mxu0 0
    %1397 = vmatpush2.bf16.msra.mxu0 0
    %1398 = vmatprep.subr.bf16.mxu0 0
    %1399 = vmatpush2.bf16.msra.mxu0 0
    %1400 = vmatprep.subr.bf16.mxu0 0
    %1401 = vmatpush2.bf16.msra.mxu0 0
    %1402 = vmatprep.subr.bf16.mxu0 0
    %1403 = vmatpush2.bf16.msra.mxu0 0
    %1404 = vmatprep.subr.bf16.mxu0 0
    %1405 = vmatpush2.bf16.msra.mxu0 0
    %1406 = vmatprep.subr.bf16.mxu0 0
    %1407 = vmatpush2.bf16.msra.mxu0 0
    %1408 = vmatprep.subr.bf16.mxu0 0
    %1409 = vmatpush2.bf16.msra.mxu0 0
    %1410 = vmatprep.subr.bf16.mxu0 0
    %1411 = vmatpush2.bf16.msra.mxu0 0
    %1412 = vmatprep.mubr.bf16.mxu0 0
    %1413 = vmatmul.mubr.bf16.gmra.mxu0 %v1036
    %v1414 = vpop.f32.mrf.mxu0
    %v1415 = vadd.f32 %v1372, %v1414
    %v1416 = vpop.f32.mrf.mxu0
    %v1417 = vadd.f32 %v1374, %v1416
    %v1418 = vpop.f32.mrf.mxu0
    %v1419 = vadd.f32 %v1376, %v1418
    %v1420 = vpop.f32.mrf.mxu0
    %v1421 = vadd.f32 %v1378, %v1420
    %1422 = vdwg.mxu0
    %v1423 = vmax.f32 %v1415, 0.0
    %v1424 = vmax.f32 %v1417, 0.0
    %v1425 = vmax.f32 %v1419, 0.0
    %v1426 = vmax.f32 %v1421, 0.0
    %v1427 = vrot.slane %v1423, 7
    %v1428 = vrot.slane %v1424, 7
    %v1429 = vrot.slane %v1425, 7
    %v1430 = vrot.slane %v1426, 7
    %v1431 = vsel %vm609, %v1427, %v1429
    %v1432 = vsel %vm609, %v1428, %v1430
    %v1433 = vsel %vm609, %v1429, %v1427
    %v1434 = vsel %vm609, %v1430, %v1428
    %v1435 = vmul.f32 %v1433, %v597
    %v1436 = vmul.f32 %v1434, %v597
    %v1437 = vmul.f32 %v1431, %v598
    %v1438 = vmul.f32 %v1432, %v598
    %v1439 = vrot.slane %v1423, 1
    %v1440 = vrot.slane %v1424, 1
    %v1441 = vrot.slane %v1425, 1
    %v1442 = vrot.slane %v1426, 1
    %v1443 = vsel %vm616, %v1439, %v1441
    %v1444 = vsel %vm616, %v1440, %v1442
    %v1445 = vsel %vm616, %v1441, %v1439
    %v1446 = vsel %vm616, %v1442, %v1440
    %v1447 = vmul.f32 %v1443, %v603
    %v1448 = vmul.f32 %v1444, %v603
    %v1449 = vmul.f32 %v1445, %v604
    %v1450 = vmul.f32 %v1446, %v604
    %v1451 = vpack.c.bf16 %v1437, %v1435
    %v1452 = vpack.c.bf16 %v1438, %v1436
    %v1453 = vpack.c.bf16 %v1425, %v1423
    %v1454 = vpack.c.bf16 %v1426, %v1424
    %v1455 = vpack.c.bf16 %v1449, %v1447
    %v1456 = vpack.c.bf16 %v1450, %v1448
    %v1457 = vld [vmem:[#allocation10] sm:$0xf]
    %v1458 = vld [vmem:[#allocation10 + $0x4] sm:$0xf]
    %v1459 = vld [vmem:[#allocation10 + $0x8] sm:$0xf]
    %v1460 = vld [vmem:[#allocation10 + $0xc] sm:$0xf]
    %v1461 = vld [vmem:[#allocation10 + $0x10] sm:$0xf]
    %v1462 = vld [vmem:[#allocation10 + $0x14] sm:$0xf]
    %v1463 = vld [vmem:[#allocation10 + $0x18] sm:$0xf]
    %v1464 = vld [vmem:[#allocation10 + $0x1c] sm:$0xf]
    %v1465 = vld [vmem:[#allocation10 + $0x20] sm:$0xf]
    %v1466 = vld [vmem:[#allocation10 + $0x24] sm:$0xf]
    %v1467 = vld [vmem:[#allocation10 + $0x28] sm:$0xf]
    %v1468 = vld [vmem:[#allocation10 + $0x2c] sm:$0xf]
    %v1469 = vld [vmem:[#allocation10 + $0x30] sm:$0xf]
    %v1470 = vld [vmem:[#allocation10 + $0x34] sm:$0xf]
    %v1471 = vld [vmem:[#allocation10 + $0x38] sm:$0xf]
    %v1472 = vld [vmem:[#allocation10 + $0x3c] sm:$0xf]
    %v1473 = vld [vmem:[#allocation10 + $0x40] sm:$0xf]
    %v1474 = vld [vmem:[#allocation10 + $0x44] sm:$0xf]
    %v1475 = vld [vmem:[#allocation10 + $0x48] sm:$0xf]
    %v1476 = vld [vmem:[#allocation10 + $0x4c] sm:$0xf]
    %v1477 = vld [vmem:[#allocation10 + $0x50] sm:$0xf]
    %v1478 = vld [vmem:[#allocation10 + $0x54] sm:$0xf]
    %v1479 = vld [vmem:[#allocation10 + $0x58] sm:$0xf]
    %v1480 = vld [vmem:[#allocation10 + $0x5c] sm:$0xf]
    %v1481 = vld [vmem:[#allocation10 + $0x60] sm:$0xf]
    %v1482 = vld [vmem:[#allocation10 + $0x64] sm:$0xf]
    %v1483 = vld [vmem:[#allocation10 + $0x68] sm:$0xf]
    %v1484 = vld [vmem:[#allocation10 + $0x6c] sm:$0xf]
    %v1485 = vld [vmem:[#allocation10 + $0x70] sm:$0xf]
    %v1486 = vld [vmem:[#allocation10 + $0x74] sm:$0xf]
    %v1487 = vld [vmem:[#allocation10 + $0x78] sm:$0xf]
    %v1488 = vld [vmem:[#allocation10 + $0x7c] sm:$0xf]
    %v1489 = vld [vmem:[#allocation10 + $0x80] sm:$0xf]
    %v1490 = vld [vmem:[#allocation10 + $0x84] sm:$0xf]
    %v1491 = vld [vmem:[#allocation10 + $0x88] sm:$0xf]
    %v1492 = vld [vmem:[#allocation10 + $0x8c] sm:$0xf]
    %v1493 = vld [vmem:[#allocation10 + $0x90] sm:$0xf]
    %v1494 = vld [vmem:[#allocation10 + $0x94] sm:$0xf]
    %v1495 = vld [vmem:[#allocation10 + $0x98] sm:$0xf]
    %v1496 = vld [vmem:[#allocation10 + $0x9c] sm:$0xf]
    %v1497 = vld [vmem:[#allocation10 + $0xa0] sm:$0xf]
    %v1498 = vld [vmem:[#allocation10 + $0xa4] sm:$0xf]
    %v1499 = vld [vmem:[#allocation10 + $0xa8] sm:$0xf]
    %v1500 = vld [vmem:[#allocation10 + $0xac] sm:$0xf]
    %v1501 = vld [vmem:[#allocation10 + $0xb0] sm:$0xf]
    %v1502 = vld [vmem:[#allocation10 + $0xb4] sm:$0xf]
    %v1503 = vld [vmem:[#allocation10 + $0xb8] sm:$0xf]
    %v1504 = vld [vmem:[#allocation10 + $0xbc] sm:$0xf]
    %v1505 = vld [vmem:[#allocation10 + $0xc0] sm:$0xf]
    %v1506 = vld [vmem:[#allocation10 + $0xc4] sm:$0xf]
    %v1507 = vld [vmem:[#allocation10 + $0xc8] sm:$0xf]
    %v1508 = vld [vmem:[#allocation10 + $0xcc] sm:$0xf]
    %v1509 = vld [vmem:[#allocation10 + $0xd0] sm:$0xf]
    %v1510 = vld [vmem:[#allocation10 + $0xd4] sm:$0xf]
    %v1511 = vld [vmem:[#allocation10 + $0xd8] sm:$0xf]
    %v1512 = vld [vmem:[#allocation10 + $0xdc] sm:$0xf]
    %v1513 = vld [vmem:[#allocation10 + $0xe0] sm:$0xf]
    %v1514 = vld [vmem:[#allocation10 + $0xe4] sm:$0xf]
    %v1515 = vld [vmem:[#allocation10 + $0xe8] sm:$0xf]
    %v1516 = vld [vmem:[#allocation10 + $0xec] sm:$0xf]
    %v1517 = vld [vmem:[#allocation10 + $0xf0] sm:$0xf]
    %v1518 = vld [vmem:[#allocation10 + $0xf4] sm:$0xf]
    %v1519 = vld [vmem:[#allocation10 + $0xf8] sm:$0xf]
    %v1520 = vld [vmem:[#allocation10 + $0xfc] sm:$0xf]
    %v1521 = vld [vmem:[#allocation10 + $0x100] sm:$0xf]
    %v1522 = vld [vmem:[#allocation10 + $0x104] sm:$0xf]
    %v1523 = vld [vmem:[#allocation10 + $0x108] sm:$0xf]
    %v1524 = vld [vmem:[#allocation10 + $0x10c] sm:$0xf]
    %v1525 = vld [vmem:[#allocation10 + $0x110] sm:$0xf]
    %v1526 = vld [vmem:[#allocation10 + $0x114] sm:$0xf]
    %v1527 = vld [vmem:[#allocation10 + $0x118] sm:$0xf]
    %v1528 = vld [vmem:[#allocation10 + $0x11c] sm:$0xf]
    %v1529 = vld [vmem:[#allocation10 + $0x120] sm:$0xf]
    %v1530 = vld [vmem:[#allocation10 + $0x124] sm:$0xf]
    %v1531 = vld [vmem:[#allocation10 + $0x128] sm:$0xf]
    %v1532 = vld [vmem:[#allocation10 + $0x12c] sm:$0xf]
    %v1533 = vld [vmem:[#allocation10 + $0x130] sm:$0xf]
    %v1534 = vld [vmem:[#allocation10 + $0x134] sm:$0xf]
    %v1535 = vld [vmem:[#allocation10 + $0x138] sm:$0xf]
    %v1536 = vld [vmem:[#allocation10 + $0x13c] sm:$0xf]
    %v1537 = vld [vmem:[#allocation10 + $0x140] sm:$0xf]
    %v1538 = vld [vmem:[#allocation10 + $0x144] sm:$0xf]
    %v1539 = vld [vmem:[#allocation10 + $0x148] sm:$0xf]
    %v1540 = vld [vmem:[#allocation10 + $0x14c] sm:$0xf]
    %v1541 = vld [vmem:[#allocation10 + $0x150] sm:$0xf]
    %v1542 = vld [vmem:[#allocation10 + $0x154] sm:$0xf]
    %v1543 = vld [vmem:[#allocation10 + $0x158] sm:$0xf]
    %v1544 = vld [vmem:[#allocation10 + $0x15c] sm:$0xf]
    %v1545 = vld [vmem:[#allocation10 + $0x160] sm:$0xf]
    %v1546 = vld [vmem:[#allocation10 + $0x164] sm:$0xf]
    %v1547 = vld [vmem:[#allocation10 + $0x168] sm:$0xf]
    %v1548 = vld [vmem:[#allocation10 + $0x16c] sm:$0xf]
    %v1549 = vld [vmem:[#allocation10 + $0x170] sm:$0xf]
    %v1550 = vld [vmem:[#allocation10 + $0x174] sm:$0xf]
    %v1551 = vld [vmem:[#allocation10 + $0x178] sm:$0xf]
    %v1552 = vld [vmem:[#allocation10 + $0x17c] sm:$0xf]
    %v1553 = vld [vmem:[#allocation12] sm:$0x1]
    %v1555 = vlaneseq
    %v1556 = vshrl.u32 %v1555, 7
    %v1557 = vsub.s32 0, %v1556
    %v1558 = vrot.slane %v1553, %v1557
    %v1656 = vunpack.c.l.b16 %v1457
    %v1657 = vunpack.c.l.b16 %v1458
    %v1658 = vunpack.c.l.b16 %v1459
    %v1659 = vunpack.c.l.b16 %v1460
    %v1660 = vunpack.c.l.b16 %v1461
    %v1661 = vunpack.c.l.b16 %v1462
    %v1662 = vunpack.c.l.b16 %v1463
    %v1663 = vunpack.c.l.b16 %v1464
    %v1664 = vunpack.c.l.b16 %v1465
    %v1665 = vunpack.c.l.b16 %v1466
    %v1666 = vunpack.c.l.b16 %v1467
    %v1667 = vunpack.c.l.b16 %v1468
    %v1668 = vunpack.c.l.b16 %v1469
    %v1669 = vunpack.c.l.b16 %v1470
    %v1670 = vunpack.c.l.b16 %v1471
    %v1671 = vunpack.c.l.b16 %v1472
    %v1672 = vunpack.c.l.b16 %v1473
    %v1673 = vunpack.c.l.b16 %v1474
    %v1674 = vunpack.c.l.b16 %v1475
    %v1675 = vunpack.c.l.b16 %v1476
    %v1676 = vunpack.c.l.b16 %v1477
    %v1677 = vunpack.c.l.b16 %v1478
    %v1678 = vunpack.c.l.b16 %v1479
    %v1679 = vunpack.c.l.b16 %v1480
    %v1680 = vunpack.c.l.b16 %v1481
    %v1681 = vunpack.c.l.b16 %v1482
    %v1682 = vunpack.c.l.b16 %v1483
    %v1683 = vunpack.c.l.b16 %v1484
    %v1684 = vunpack.c.l.b16 %v1485
    %v1685 = vunpack.c.l.b16 %v1486
    %v1686 = vunpack.c.l.b16 %v1487
    %v1687 = vunpack.c.l.b16 %v1488
    %v1688 = vunpack.c.l.b16 %v1489
    %v1689 = vunpack.c.l.b16 %v1490
    %v1690 = vunpack.c.l.b16 %v1491
    %v1691 = vunpack.c.l.b16 %v1492
    %v1692 = vunpack.c.l.b16 %v1493
    %v1693 = vunpack.c.l.b16 %v1494
    %v1694 = vunpack.c.l.b16 %v1495
    %v1695 = vunpack.c.l.b16 %v1496
    %v1696 = vunpack.c.l.b16 %v1497
    %v1697 = vunpack.c.l.b16 %v1498
    %v1698 = vunpack.c.l.b16 %v1499
    %v1699 = vunpack.c.l.b16 %v1500
    %v1700 = vunpack.c.l.b16 %v1501
    %v1701 = vunpack.c.l.b16 %v1502
    %v1702 = vunpack.c.l.b16 %v1503
    %v1703 = vunpack.c.l.b16 %v1504
    %v1704 = vunpack.c.l.b16 %v1505
    %v1705 = vunpack.c.l.b16 %v1506
    %v1706 = vunpack.c.l.b16 %v1507
    %v1707 = vunpack.c.l.b16 %v1508
    %v1708 = vunpack.c.l.b16 %v1509
    %v1709 = vunpack.c.l.b16 %v1510
    %v1710 = vunpack.c.l.b16 %v1511
    %v1711 = vunpack.c.l.b16 %v1512
    %v1712 = vunpack.c.l.b16 %v1513
    %v1713 = vunpack.c.l.b16 %v1514
    %v1714 = vunpack.c.l.b16 %v1515
    %v1715 = vunpack.c.l.b16 %v1516
    %v1716 = vunpack.c.l.b16 %v1517
    %v1717 = vunpack.c.l.b16 %v1518
    %v1718 = vunpack.c.l.b16 %v1519
    %v1719 = vunpack.c.l.b16 %v1520
    %v1720 = vunpack.c.l.b16 %v1521
    %v1721 = vunpack.c.l.b16 %v1522
    %v1722 = vunpack.c.l.b16 %v1523
    %v1723 = vunpack.c.l.b16 %v1524
    %v1724 = vunpack.c.l.b16 %v1525
    %v1725 = vunpack.c.l.b16 %v1526
    %v1726 = vunpack.c.l.b16 %v1527
    %v1727 = vunpack.c.l.b16 %v1528
    %v1728 = vunpack.c.l.b16 %v1529
    %v1729 = vunpack.c.l.b16 %v1530
    %v1730 = vunpack.c.l.b16 %v1531
    %v1731 = vunpack.c.l.b16 %v1532
    %v1732 = vunpack.c.l.b16 %v1533
    %v1733 = vunpack.c.l.b16 %v1534
    %v1734 = vunpack.c.l.b16 %v1535
    %v1735 = vunpack.c.l.b16 %v1536
    %v1736 = vunpack.c.l.b16 %v1537
    %v1737 = vunpack.c.l.b16 %v1538
    %v1738 = vunpack.c.l.b16 %v1539
    %v1739 = vunpack.c.l.b16 %v1540
    %v1740 = vunpack.c.l.b16 %v1541
    %v1741 = vunpack.c.l.b16 %v1542
    %v1742 = vunpack.c.l.b16 %v1543
    %v1743 = vunpack.c.l.b16 %v1544
    %v1744 = vunpack.c.l.b16 %v1545
    %v1745 = vunpack.c.l.b16 %v1546
    %v1746 = vunpack.c.l.b16 %v1547
    %v1747 = vunpack.c.l.b16 %v1548
    %v1748 = vunpack.c.l.b16 %v1549
    %v1749 = vunpack.c.l.b16 %v1550
    %v1750 = vunpack.c.l.b16 %v1551
    %v1751 = vunpack.c.l.b16 %v1552
    %v1752 = vpack.c.b16 %v1657, %v1656
    %v1753 = vpack.c.b16 %v1659, %v1658
    %v1754 = vpack.c.b16 %v1661, %v1660
    %v1755 = vpack.c.b16 %v1663, %v1662
    %v1756 = vpack.c.b16 %v1665, %v1664
    %v1757 = vpack.c.b16 %v1667, %v1666
    %v1758 = vpack.c.b16 %v1669, %v1668
    %v1759 = vpack.c.b16 %v1671, %v1670
    %v1760 = vpack.c.b16 %v1673, %v1672
    %v1761 = vpack.c.b16 %v1675, %v1674
    %v1762 = vpack.c.b16 %v1677, %v1676
    %v1763 = vpack.c.b16 %v1679, %v1678
    %v1764 = vpack.c.b16 %v1681, %v1680
    %v1765 = vpack.c.b16 %v1683, %v1682
    %v1766 = vpack.c.b16 %v1685, %v1684
    %v1767 = vpack.c.b16 %v1687, %v1686
    %v1768 = vpack.c.b16 %v1689, %v1688
    %v1769 = vpack.c.b16 %v1691, %v1690
    %v1770 = vpack.c.b16 %v1693, %v1692
    %v1771 = vpack.c.b16 %v1695, %v1694
    %v1772 = vpack.c.b16 %v1697, %v1696
    %v1773 = vpack.c.b16 %v1699, %v1698
    %v1774 = vpack.c.b16 %v1701, %v1700
    %v1775 = vpack.c.b16 %v1703, %v1702
    %v1776 = vpack.c.b16 %v1705, %v1704
    %v1777 = vpack.c.b16 %v1707, %v1706
    %v1778 = vpack.c.b16 %v1709, %v1708
    %v1779 = vpack.c.b16 %v1711, %v1710
    %v1780 = vpack.c.b16 %v1713, %v1712
    %v1781 = vpack.c.b16 %v1715, %v1714
    %v1782 = vpack.c.b16 %v1717, %v1716
    %v1783 = vpack.c.b16 %v1719, %v1718
    %v1784 = vpack.c.b16 %v1721, %v1720
    %v1785 = vpack.c.b16 %v1723, %v1722
    %v1786 = vpack.c.b16 %v1725, %v1724
    %v1787 = vpack.c.b16 %v1727, %v1726
    %v1788 = vpack.c.b16 %v1729, %v1728
    %v1789 = vpack.c.b16 %v1731, %v1730
    %v1790 = vpack.c.b16 %v1733, %v1732
    %v1791 = vpack.c.b16 %v1735, %v1734
    %v1792 = vpack.c.b16 %v1737, %v1736
    %v1793 = vpack.c.b16 %v1739, %v1738
    %v1794 = vpack.c.b16 %v1741, %v1740
    %v1795 = vpack.c.b16 %v1743, %v1742
    %v1796 = vpack.c.b16 %v1745, %v1744
    %v1797 = vpack.c.b16 %v1747, %v1746
    %v1798 = vpack.c.b16 %v1749, %v1748
    %v1799 = vpack.c.b16 %v1751, %v1750
    %1848 = vmatprep.subr.bf16.mxu0 0
    %1849 = vmatpush1.bf16.msra.mxu0 %v1759
    %1850 = vmatprep.subr.bf16.mxu0 0
    %1851 = vmatpush1.bf16.msra.mxu0 %v1758
    %1852 = vmatprep.subr.bf16.mxu0 0
    %1853 = vmatpush1.bf16.msra.mxu0 %v1757
    %1854 = vmatprep.subr.bf16.mxu0 0
    %1855 = vmatpush1.bf16.msra.mxu0 %v1756
    %1856 = vmatprep.subr.bf16.mxu0 0
    %1857 = vmatpush1.bf16.msra.mxu0 %v1755
    %1858 = vmatprep.subr.bf16.mxu0 0
    %1859 = vmatpush1.bf16.msra.mxu0 %v1754
    %1860 = vmatprep.subr.bf16.mxu0 0
    %1861 = vmatpush1.bf16.msra.mxu0 %v1753
    %1862 = vmatprep.subr.bf16.mxu0 0
    %1863 = vmatpush1.bf16.msra.mxu0 %v1752
    %1864 = vmatprep.subr.bf16.mxu0 0
    %1865 = vmatpush2.bf16.msra.mxu0 %v1767
    %1866 = vmatprep.subr.bf16.mxu0 0
    %1867 = vmatpush2.bf16.msra.mxu0 %v1766
    %1868 = vmatprep.subr.bf16.mxu0 0
    %1869 = vmatpush2.bf16.msra.mxu0 %v1765
    %1870 = vmatprep.subr.bf16.mxu0 0
    %1871 = vmatpush2.bf16.msra.mxu0 %v1764
    %1872 = vmatprep.subr.bf16.mxu0 0
    %1873 = vmatpush2.bf16.msra.mxu0 %v1763
    %1874 = vmatprep.subr.bf16.mxu0 0
    %1875 = vmatpush2.bf16.msra.mxu0 %v1762
    %1876 = vmatprep.subr.bf16.mxu0 0
    %1877 = vmatpush2.bf16.msra.mxu0 %v1761
    %1878 = vmatprep.subr.bf16.mxu0 0
    %1879 = vmatpush2.bf16.msra.mxu0 %v1760
    %1880 = vmatprep.mubr.bf16.mxu0 %v1452
    %1881 = vmatmul.mubr.bf16.gmra.mxu0 %v1451
    %v1882 = vpop.f32.mrf.mxu0
    %v1883 = vadd.f32 %v1558, %v1882
    %v1884 = vpop.f32.mrf.mxu0
    %v1885 = vpop.f32.mrf.mxu0
    %v1886 = vadd.f32 %v1558, %v1885
    %v1887 = vpop.f32.mrf.mxu0
    %1888 = vdwg.mxu0
    %1889 = vmatprep.subr.bf16.mxu0 0
    %1890 = vmatpush1.bf16.msra.mxu0 %v1775
    %1891 = vmatprep.subr.bf16.mxu0 0
    %1892 = vmatpush1.bf16.msra.mxu0 %v1774
    %1893 = vmatprep.subr.bf16.mxu0 0
    %1894 = vmatpush1.bf16.msra.mxu0 %v1773
    %1895 = vmatprep.subr.bf16.mxu0 0
    %1896 = vmatpush1.bf16.msra.mxu0 %v1772
    %1897 = vmatprep.subr.bf16.mxu0 0
    %1898 = vmatpush1.bf16.msra.mxu0 %v1771
    %1899 = vmatprep.subr.bf16.mxu0 0
    %1900 = vmatpush1.bf16.msra.mxu0 %v1770
    %1901 = vmatprep.subr.bf16.mxu0 0
    %1902 = vmatpush1.bf16.msra.mxu0 %v1769
    %1903 = vmatprep.subr.bf16.mxu0 0
    %1904 = vmatpush1.bf16.msra.mxu0 %v1768
    %1905 = vmatprep.subr.bf16.mxu0 0
    %1906 = vmatpush2.bf16.msra.mxu0 %v1783
    %1907 = vmatprep.subr.bf16.mxu0 0
    %1908 = vmatpush2.bf16.msra.mxu0 %v1782
    %1909 = vmatprep.subr.bf16.mxu0 0
    %1910 = vmatpush2.bf16.msra.mxu0 %v1781
    %1911 = vmatprep.subr.bf16.mxu0 0
    %1912 = vmatpush2.bf16.msra.mxu0 %v1780
    %1913 = vmatprep.subr.bf16.mxu0 0
    %1914 = vmatpush2.bf16.msra.mxu0 %v1779
    %1915 = vmatprep.subr.bf16.mxu0 0
    %1916 = vmatpush2.bf16.msra.mxu0 %v1778
    %1917 = vmatprep.subr.bf16.mxu0 0
    %1918 = vmatpush2.bf16.msra.mxu0 %v1777
    %1919 = vmatprep.subr.bf16.mxu0 0
    %1920 = vmatpush2.bf16.msra.mxu0 %v1776
    %1921 = vmatprep.mubr.bf16.mxu0 %v1454
    %1922 = vmatmul.mubr.bf16.gmra.mxu0 %v1453
    %v1923 = vpop.f32.mrf.mxu0
    %v1924 = vadd.f32 %v1883, %v1923
    %v1925 = vpop.f32.mrf.mxu0
    %v1926 = vpop.f32.mrf.mxu0
    %v1927 = vadd.f32 %v1886, %v1926
    %v1928 = vpop.f32.mrf.mxu0
    %1929 = vdwg.mxu0
    %1930 = vmatprep.subr.bf16.mxu0 0
    %1931 = vmatpush1.bf16.msra.mxu0 %v1791
    %1932 = vmatprep.subr.bf16.mxu0 0
    %1933 = vmatpush1.bf16.msra.mxu0 %v1790
    %1934 = vmatprep.subr.bf16.mxu0 0
    %1935 = vmatpush1.bf16.msra.mxu0 %v1789
    %1936 = vmatprep.subr.bf16.mxu0 0
    %1937 = vmatpush1.bf16.msra.mxu0 %v1788
    %1938 = vmatprep.subr.bf16.mxu0 0
    %1939 = vmatpush1.bf16.msra.mxu0 %v1787
    %1940 = vmatprep.subr.bf16.mxu0 0
    %1941 = vmatpush1.bf16.msra.mxu0 %v1786
    %1942 = vmatprep.subr.bf16.mxu0 0
    %1943 = vmatpush1.bf16.msra.mxu0 %v1785
    %1944 = vmatprep.subr.bf16.mxu0 0
    %1945 = vmatpush1.bf16.msra.mxu0 %v1784
    %1946 = vmatprep.subr.bf16.mxu0 0
    %1947 = vmatpush2.bf16.msra.mxu0 %v1799
    %1948 = vmatprep.subr.bf16.mxu0 0
    %1949 = vmatpush2.bf16.msra.mxu0 %v1798
    %1950 = vmatprep.subr.bf16.mxu0 0
    %1951 = vmatpush2.bf16.msra.mxu0 %v1797
    %1952 = vmatprep.subr.bf16.mxu0 0
    %1953 = vmatpush2.bf16.msra.mxu0 %v1796
    %1954 = vmatprep.subr.bf16.mxu0 0
    %1955 = vmatpush2.bf16.msra.mxu0 %v1795
    %1956 = vmatprep.subr.bf16.mxu0 0
    %1957 = vmatpush2.bf16.msra.mxu0 %v1794
    %1958 = vmatprep.subr.bf16.mxu0 0
    %1959 = vmatpush2.bf16.msra.mxu0 %v1793
    %1960 = vmatprep.subr.bf16.mxu0 0
    %1961 = vmatpush2.bf16.msra.mxu0 %v1792
    %1962 = vmatprep.mubr.bf16.mxu0 %v1456
    %1963 = vmatmul.mubr.bf16.gmra.mxu0 %v1455
    %v1964 = vpop.f32.mrf.mxu0
    %v1965 = vadd.f32 %v1924, %v1964
    %v1966 = vpop.f32.mrf.mxu0
    %v1967 = vpop.f32.mrf.mxu0
    %v1968 = vadd.f32 %v1927, %v1967
    %v1969 = vpop.f32.mrf.mxu0
    %1970 = vdwg.mxu0
    %v1971 = vmax.f32 %v1965, 0.0
    %v1972 = vmax.f32 %v1968, 0.0
    %v1973 = vsub.f32 %v1971, %v1020
    %v1974 = vsub.f32 %v1972, %v1021
    %v1975 = vrot.slane %v1973, 7
    %v1976 = vrot.slane %v1974, 7
    %v1977 = vsel %vm609, %v1975, %v1976
    %v1978 = vsel %vm609, %v1976, %v1975
    %v1979 = vmul.f32 %v1978, %v597
    %v1980 = vmul.f32 %v1977, %v598
    %v1981 = vrot.slane %v1973, 1
    %v1982 = vrot.slane %v1974, 1
    %v1983 = vsel %vm616, %v1981, %v1982
    %v1984 = vsel %vm616, %v1982, %v1981
    %v1985 = vmul.f32 %v1983, %v603
    %v1986 = vmul.f32 %v1984, %v604
    %v1987 = vpack.c.bf16 %v1980, %v1979
    %v1988 = vpack.c.bf16 %v1974, %v1973
    %v1989 = vpack.c.bf16 %v1986, %v1985
    %v1990 = vld [vmem:[#allocation13] sm:$0xff]
    %v1991 = vld [vmem:[#allocation13 + $0x8] sm:$0xff]
    %v1992 = vld [vmem:[#allocation13 + $0x10] sm:$0xff]
    %v1993 = vld [vmem:[#allocation13 + $0x18] sm:$0xff]
    %v1994 = vld [vmem:[#allocation13 + $0x20] sm:$0xff]
    %v1995 = vld [vmem:[#allocation13 + $0x28] sm:$0xff]
    %v1996 = vld [vmem:[#allocation13 + $0x30] sm:$0xff]
    %v1997 = vld [vmem:[#allocation13 + $0x38] sm:$0xff]
    %v1998 = vld [vmem:[#allocation13 + $0x40] sm:$0xff]
    %v1999 = vld [vmem:[#allocation13 + $0x48] sm:$0xff]
    %v2000 = vld [vmem:[#allocation13 + $0x50] sm:$0xff]
    %v2001 = vld [vmem:[#allocation13 + $0x58] sm:$0xff]
    %v2002 = vld [vmem:[#allocation13 + $0x60] sm:$0xff]
    %v2003 = vld [vmem:[#allocation13 + $0x68] sm:$0xff]
    %v2004 = vld [vmem:[#allocation13 + $0x70] sm:$0xff]
    %v2005 = vld [vmem:[#allocation13 + $0x78] sm:$0xff]
    %v2006 = vld [vmem:[#allocation13 + $0x80] sm:$0xff]
    %v2007 = vld [vmem:[#allocation13 + $0x88] sm:$0xff]
    %v2008 = vld [vmem:[#allocation13 + $0x90] sm:$0xff]
    %v2009 = vld [vmem:[#allocation13 + $0x98] sm:$0xff]
    %v2010 = vld [vmem:[#allocation13 + $0xa0] sm:$0xff]
    %v2011 = vld [vmem:[#allocation13 + $0xa8] sm:$0xff]
    %v2012 = vld [vmem:[#allocation13 + $0xb0] sm:$0xff]
    %v2013 = vld [vmem:[#allocation13 + $0xb8] sm:$0xff]
    %v2014 = vld [vmem:[#allocation13 + $0xc0] sm:$0xff]
    %v2015 = vld [vmem:[#allocation13 + $0xc8] sm:$0xff]
    %v2016 = vld [vmem:[#allocation13 + $0xd0] sm:$0xff]
    %v2017 = vld [vmem:[#allocation13 + $0xd8] sm:$0xff]
    %v2018 = vld [vmem:[#allocation13 + $0xe0] sm:$0xff]
    %v2019 = vld [vmem:[#allocation13 + $0xe8] sm:$0xff]
    %v2020 = vld [vmem:[#allocation13 + $0xf0] sm:$0xff]
    %v2021 = vld [vmem:[#allocation13 + $0xf8] sm:$0xff]
    %v2022 = vld [vmem:[#allocation13 + $0x100] sm:$0xff]
    %v2023 = vld [vmem:[#allocation13 + $0x108] sm:$0xff]
    %v2024 = vld [vmem:[#allocation13 + $0x110] sm:$0xff]
    %v2025 = vld [vmem:[#allocation13 + $0x118] sm:$0xff]
    %v2026 = vld [vmem:[#allocation13 + $0x120] sm:$0xff]
    %v2027 = vld [vmem:[#allocation13 + $0x128] sm:$0xff]
    %v2028 = vld [vmem:[#allocation13 + $0x130] sm:$0xff]
    %v2029 = vld [vmem:[#allocation13 + $0x138] sm:$0xff]
    %v2030 = vld [vmem:[#allocation13 + $0x140] sm:$0xff]
    %v2031 = vld [vmem:[#allocation13 + $0x148] sm:$0xff]
    %v2032 = vld [vmem:[#allocation13 + $0x150] sm:$0xff]
    %v2033 = vld [vmem:[#allocation13 + $0x158] sm:$0xff]
    %v2034 = vld [vmem:[#allocation13 + $0x160] sm:$0xff]
    %v2035 = vld [vmem:[#allocation13 + $0x168] sm:$0xff]
    %v2036 = vld [vmem:[#allocation13 + $0x170] sm:$0xff]
    %v2037 = vld [vmem:[#allocation13 + $0x178] sm:$0xff]
    %v2038 = vld [vmem:[%s21] sm:$0x3]
    %v2040 = vlaneseq
    %v2041 = vshrl.u32 %v2040, 7
    %v2042 = vsub.s32 0, %v2041
    %v2043 = vrot.slane %v2038, %v2042
    %v2044 = vlaneseq
    %v2045 = vshrl.u32 %v2044, 7
    %v2046 = vsub.s32 1, %v2045
    %v2047 = vrot.slane %v2038, %v2046
    %v2098 = vunpack.c.l.b16 %v1990
    %v2099 = vunpack.c.h.b16 %v1990
    %v2100 = vunpack.c.l.b16 %v1991
    %v2101 = vunpack.c.h.b16 %v1991
    %v2102 = vunpack.c.l.b16 %v1992
    %v2103 = vunpack.c.h.b16 %v1992
    %v2104 = vunpack.c.l.b16 %v1993
    %v2105 = vunpack.c.h.b16 %v1993
    %v2106 = vunpack.c.l.b16 %v1994
    %v2107 = vunpack.c.h.b16 %v1994
    %v2108 = vunpack.c.l.b16 %v1995
    %v2109 = vunpack.c.h.b16 %v1995
    %v2110 = vunpack.c.l.b16 %v1996
    %v2111 = vunpack.c.h.b16 %v1996
    %v2112 = vunpack.c.l.b16 %v1997
    %v2113 = vunpack.c.h.b16 %v1997
    %v2114 = vunpack.c.l.b16 %v1998
    %v2115 = vunpack.c.h.b16 %v1998
    %v2116 = vunpack.c.l.b16 %v1999
    %v2117 = vunpack.c.h.b16 %v1999
    %v2118 = vunpack.c.l.b16 %v2000
    %v2119 = vunpack.c.h.b16 %v2000
    %v2120 = vunpack.c.l.b16 %v2001
    %v2121 = vunpack.c.h.b16 %v2001
    %v2122 = vunpack.c.l.b16 %v2002
    %v2123 = vunpack.c.h.b16 %v2002
    %v2124 = vunpack.c.l.b16 %v2003
    %v2125 = vunpack.c.h.b16 %v2003
    %v2126 = vunpack.c.l.b16 %v2004
    %v2127 = vunpack.c.h.b16 %v2004
    %v2128 = vunpack.c.l.b16 %v2005
    %v2129 = vunpack.c.h.b16 %v2005
    %v2130 = vunpack.c.l.b16 %v2006
    %v2131 = vunpack.c.h.b16 %v2006
    %v2132 = vunpack.c.l.b16 %v2007
    %v2133 = vunpack.c.h.b16 %v2007
    %v2134 = vunpack.c.l.b16 %v2008
    %v2135 = vunpack.c.h.b16 %v2008
    %v2136 = vunpack.c.l.b16 %v2009
    %v2137 = vunpack.c.h.b16 %v2009
    %v2138 = vunpack.c.l.b16 %v2010
    %v2139 = vunpack.c.h.b16 %v2010
    %v2140 = vunpack.c.l.b16 %v2011
    %v2141 = vunpack.c.h.b16 %v2011
    %v2142 = vunpack.c.l.b16 %v2012
    %v2143 = vunpack.c.h.b16 %v2012
    %v2144 = vunpack.c.l.b16 %v2013
    %v2145 = vunpack.c.h.b16 %v2013
    %v2146 = vunpack.c.l.b16 %v2014
    %v2147 = vunpack.c.h.b16 %v2014
    %v2148 = vunpack.c.l.b16 %v2015
    %v2149 = vunpack.c.h.b16 %v2015
    %v2150 = vunpack.c.l.b16 %v2016
    %v2151 = vunpack.c.h.b16 %v2016
    %v2152 = vunpack.c.l.b16 %v2017
    %v2153 = vunpack.c.h.b16 %v2017
    %v2154 = vunpack.c.l.b16 %v2018
    %v2155 = vunpack.c.h.b16 %v2018
    %v2156 = vunpack.c.l.b16 %v2019
    %v2157 = vunpack.c.h.b16 %v2019
    %v2158 = vunpack.c.l.b16 %v2020
    %v2159 = vunpack.c.h.b16 %v2020
    %v2160 = vunpack.c.l.b16 %v2021
    %v2161 = vunpack.c.h.b16 %v2021
    %v2162 = vunpack.c.l.b16 %v2022
    %v2163 = vunpack.c.h.b16 %v2022
    %v2164 = vunpack.c.l.b16 %v2023
    %v2165 = vunpack.c.h.b16 %v2023
    %v2166 = vunpack.c.l.b16 %v2024
    %v2167 = vunpack.c.h.b16 %v2024
    %v2168 = vunpack.c.l.b16 %v2025
    %v2169 = vunpack.c.h.b16 %v2025
    %v2170 = vunpack.c.l.b16 %v2026
    %v2171 = vunpack.c.h.b16 %v2026
    %v2172 = vunpack.c.l.b16 %v2027
    %v2173 = vunpack.c.h.b16 %v2027
    %v2174 = vunpack.c.l.b16 %v2028
    %v2175 = vunpack.c.h.b16 %v2028
    %v2176 = vunpack.c.l.b16 %v2029
    %v2177 = vunpack.c.h.b16 %v2029
    %v2178 = vunpack.c.l.b16 %v2030
    %v2179 = vunpack.c.h.b16 %v2030
    %v2180 = vunpack.c.l.b16 %v2031
    %v2181 = vunpack.c.h.b16 %v2031
    %v2182 = vunpack.c.l.b16 %v2032
    %v2183 = vunpack.c.h.b16 %v2032
    %v2184 = vunpack.c.l.b16 %v2033
    %v2185 = vunpack.c.h.b16 %v2033
    %v2186 = vunpack.c.l.b16 %v2034
    %v2187 = vunpack.c.h.b16 %v2034
    %v2188 = vunpack.c.l.b16 %v2035
    %v2189 = vunpack.c.h.b16 %v2035
    %v2190 = vunpack.c.l.b16 %v2036
    %v2191 = vunpack.c.h.b16 %v2036
    %v2192 = vunpack.c.l.b16 %v2037
    %v2193 = vunpack.c.h.b16 %v2037
    %v2194 = vpack.c.b16 %v2100, %v2098
    %v2195 = vpack.c.b16 %v2101, %v2099
    %v2196 = vpack.c.b16 %v2104, %v2102
    %v2197 = vpack.c.b16 %v2105, %v2103
    %v2198 = vpack.c.b16 %v2108, %v2106
    %v2199 = vpack.c.b16 %v2109, %v2107
    %v2200 = vpack.c.b16 %v2112, %v2110
    %v2201 = vpack.c.b16 %v2113, %v2111
    %v2202 = vpack.c.b16 %v2116, %v2114
    %v2203 = vpack.c.b16 %v2117, %v2115
    %v2204 = vpack.c.b16 %v2120, %v2118
    %v2205 = vpack.c.b16 %v2121, %v2119
    %v2206 = vpack.c.b16 %v2124, %v2122
    %v2207 = vpack.c.b16 %v2125, %v2123
    %v2208 = vpack.c.b16 %v2128, %v2126
    %v2209 = vpack.c.b16 %v2129, %v2127
    %v2210 = vpack.c.b16 %v2132, %v2130
    %v2211 = vpack.c.b16 %v2133, %v2131
    %v2212 = vpack.c.b16 %v2136, %v2134
    %v2213 = vpack.c.b16 %v2137, %v2135
    %v2214 = vpack.c.b16 %v2140, %v2138
    %v2215 = vpack.c.b16 %v2141, %v2139
    %v2216 = vpack.c.b16 %v2144, %v2142
    %v2217 = vpack.c.b16 %v2145, %v2143
    %v2218 = vpack.c.b16 %v2148, %v2146
    %v2219 = vpack.c.b16 %v2149, %v2147
    %v2220 = vpack.c.b16 %v2152, %v2150
    %v2221 = vpack.c.b16 %v2153, %v2151
    %v2222 = vpack.c.b16 %v2156, %v2154
    %v2223 = vpack.c.b16 %v2157, %v2155
    %v2224 = vpack.c.b16 %v2160, %v2158
    %v2225 = vpack.c.b16 %v2161, %v2159
    %v2226 = vpack.c.b16 %v2164, %v2162
    %v2227 = vpack.c.b16 %v2165, %v2163
    %v2228 = vpack.c.b16 %v2168, %v2166
    %v2229 = vpack.c.b16 %v2169, %v2167
    %v2230 = vpack.c.b16 %v2172, %v2170
    %v2231 = vpack.c.b16 %v2173, %v2171
    %v2232 = vpack.c.b16 %v2176, %v2174
    %v2233 = vpack.c.b16 %v2177, %v2175
    %v2234 = vpack.c.b16 %v2180, %v2178
    %v2235 = vpack.c.b16 %v2181, %v2179
    %v2236 = vpack.c.b16 %v2184, %v2182
    %v2237 = vpack.c.b16 %v2185, %v2183
    %v2238 = vpack.c.b16 %v2188, %v2186
    %v2239 = vpack.c.b16 %v2189, %v2187
    %v2240 = vpack.c.b16 %v2192, %v2190
    %v2241 = vpack.c.b16 %v2193, %v2191
    %2290 = vmatprep.subr.bf16.mxu0 %v2209
    %2291 = vmatpush1.bf16.msra.mxu0 %v2208
    %2292 = vmatprep.subr.bf16.mxu0 %v2207
    %2293 = vmatpush1.bf16.msra.mxu0 %v2206
    %2294 = vmatprep.subr.bf16.mxu0 %v2205
    %2295 = vmatpush1.bf16.msra.mxu0 %v2204
    %2296 = vmatprep.subr.bf16.mxu0 %v2203
    %2297 = vmatpush1.bf16.msra.mxu0 %v2202
    %2298 = vmatprep.subr.bf16.mxu0 %v2201
    %2299 = vmatpush1.bf16.msra.mxu0 %v2200
    %2300 = vmatprep.subr.bf16.mxu0 %v2199
    %2301 = vmatpush1.bf16.msra.mxu0 %v2198
    %2302 = vmatprep.subr.bf16.mxu0 %v2197
    %2303 = vmatpush1.bf16.msra.mxu0 %v2196
    %2304 = vmatprep.subr.bf16.mxu0 %v2195
    %2305 = vmatpush1.bf16.msra.mxu0 %v2194
    %2306 = vmatprep.subr.bf16.mxu0 %v2225
    %2307 = vmatpush2.bf16.msra.mxu0 %v2224
    %2308 = vmatprep.subr.bf16.mxu0 %v2223
    %2309 = vmatpush2.bf16.msra.mxu0 %v2222
    %2310 = vmatprep.subr.bf16.mxu0 %v2221
    %2311 = vmatpush2.bf16.msra.mxu0 %v2220
    %2312 = vmatprep.subr.bf16.mxu0 %v2219
    %2313 = vmatpush2.bf16.msra.mxu0 %v2218
    %2314 = vmatprep.subr.bf16.mxu0 %v2217
    %2315 = vmatpush2.bf16.msra.mxu0 %v2216
    %2316 = vmatprep.subr.bf16.mxu0 %v2215
    %2317 = vmatpush2.bf16.msra.mxu0 %v2214
    %2318 = vmatprep.subr.bf16.mxu0 %v2213
    %2319 = vmatpush2.bf16.msra.mxu0 %v2212
    %2320 = vmatprep.subr.bf16.mxu0 %v2211
    %2321 = vmatpush2.bf16.msra.mxu0 %v2210
    %2322 = vmatprep.mubr.bf16.mxu0 %v1988
    %2323 = vmatmul.mubr.bf16.gmra.mxu0 %v1987
    %v2324 = vpop.f32.mrf.mxu0
    %v2325 = vadd.f32 %v2043, %v2324
    %v2326 = vpop.f32.mrf.mxu0
    %v2327 = vadd.f32 %v2047, %v2326
    %v2328 = vpop.f32.mrf.mxu0
    %v2329 = vadd.f32 %v2043, %v2328
    %v2330 = vpop.f32.mrf.mxu0
    %v2331 = vadd.f32 %v2047, %v2330
    %2332 = vdwg.mxu0
    %2333 = vmatprep.subr.bf16.mxu0 %v2241
    %2334 = vmatpush1.bf16.msra.mxu0 %v2240
    %2335 = vmatprep.subr.bf16.mxu0 %v2239
    %2336 = vmatpush1.bf16.msra.mxu0 %v2238
    %2337 = vmatprep.subr.bf16.mxu0 %v2237
    %2338 = vmatpush1.bf16.msra.mxu0 %v2236
    %2339 = vmatprep.subr.bf16.mxu0 %v2235
    %2340 = vmatpush1.bf16.msra.mxu0 %v2234
    %2341 = vmatprep.subr.bf16.mxu0 %v2233
    %2342 = vmatpush1.bf16.msra.mxu0 %v2232
    %2343 = vmatprep.subr.bf16.mxu0 %v2231
    %2344 = vmatpush1.bf16.msra.mxu0 %v2230
    %2345 = vmatprep.subr.bf16.mxu0 %v2229
    %2346 = vmatpush1.bf16.msra.mxu0 %v2228
    %2347 = vmatprep.subr.bf16.mxu0 %v2227
    %2348 = vmatpush1.bf16.msra.mxu0 %v2226
    %2349 = vmatprep.subr.bf16.mxu0 0
    %2350 = vmatpush2.bf16.msra.mxu0 0
    %2351 = vmatprep.subr.bf16.mxu0 0
    %2352 = vmatpush2.bf16.msra.mxu0 0
    %2353 = vmatprep.subr.bf16.mxu0 0
    %2354 = vmatpush2.bf16.msra.mxu0 0
    %2355 = vmatprep.subr.bf16.mxu0 0
    %2356 = vmatpush2.bf16.msra.mxu0 0
    %2357 = vmatprep.subr.bf16.mxu0 0
    %2358 = vmatpush2.bf16.msra.mxu0 0
    %2359 = vmatprep.subr.bf16.mxu0 0
    %2360 = vmatpush2.bf16.msra.mxu0 0
    %2361 = vmatprep.subr.bf16.mxu0 0
    %2362 = vmatpush2.bf16.msra.mxu0 0
    %2363 = vmatprep.subr.bf16.mxu0 0
    %2364 = vmatpush2.bf16.msra.mxu0 0
    %2365 = vmatprep.mubr.bf16.mxu0 0
    %2366 = vmatmul.mubr.bf16.gmra.mxu0 %v1989
    %v2367 = vpop.f32.mrf.mxu0
    %v2368 = vadd.f32 %v2325, %v2367
    %v2369 = vpop.f32.mrf.mxu0
    %v2370 = vadd.f32 %v2327, %v2369
    %v2371 = vpop.f32.mrf.mxu0
    %v2372 = vadd.f32 %v2329, %v2371
    %v2373 = vpop.f32.mrf.mxu0
    %v2374 = vadd.f32 %v2331, %v2373
    %2375 = vdwg.mxu0
    %v2376 = vmax.f32 %v2368, 0.0
    %v2377 = vmax.f32 %v2370, 0.0
    %v2378 = vmax.f32 %v2372, 0.0
    %v2379 = vmax.f32 %v2374, 0.0
    %v2380 = vadd.f32 %v1423, %v2376
    %v2381 = vadd.f32 %v1424, %v2377
    %v2382 = vadd.f32 %v1425, %v2378
    %v2383 = vadd.f32 %v1426, %v2379
    %v2384 = vrot.slane %v2380, 7
    %v2385 = vrot.slane %v2381, 7
    %v2386 = vrot.slane %v2382, 7
    %v2387 = vrot.slane %v2383, 7
    %v2388 = vsel %vm609, %v2384, %v2386
    %v2389 = vsel %vm609, %v2385, %v2387
    %v2390 = vsel %vm609, %v2386, %v2384
    %v2391 = vsel %vm609, %v2387, %v2385
    %v2392 = vmul.f32 %v2390, %v597
    %v2393 = vmul.f32 %v2391, %v597
    %v2394 = vmul.f32 %v2388, %v598
    %v2395 = vmul.f32 %v2389, %v598
    %v2396 = vrot.slane %v2380, 1
    %v2397 = vrot.slane %v2381, 1
    %v2398 = vrot.slane %v2382, 1
    %v2399 = vrot.slane %v2383, 1
    %v2400 = vsel %vm616, %v2396, %v2398
    %v2401 = vsel %vm616, %v2397, %v2399
    %v2402 = vsel %vm616, %v2398, %v2396
    %v2403 = vsel %vm616, %v2399, %v2397
    %v2404 = vmul.f32 %v2400, %v603
    %v2405 = vmul.f32 %v2401, %v603
    %v2406 = vmul.f32 %v2402, %v604
    %v2407 = vmul.f32 %v2403, %v604
    %v2408 = vpack.c.bf16 %v2394, %v2392
    %v2409 = vpack.c.bf16 %v2395, %v2393
    %v2410 = vpack.c.bf16 %v2382, %v2380
    %v2411 = vpack.c.bf16 %v2383, %v2381
    %v2412 = vpack.c.bf16 %v2406, %v2404
    %v2413 = vpack.c.bf16 %v2407, %v2405
    %v2414 = vld [vmem:[#allocation15] sm:$0xf]
    %v2415 = vld [vmem:[#allocation15 + $0x4] sm:$0xf]
    %v2416 = vld [vmem:[#allocation15 + $0x8] sm:$0xf]
    %v2417 = vld [vmem:[#allocation15 + $0xc] sm:$0xf]
    %v2418 = vld [vmem:[#allocation15 + $0x10] sm:$0xf]
    %v2419 = vld [vmem:[#allocation15 + $0x14] sm:$0xf]
    %v2420 = vld [vmem:[#allocation15 + $0x18] sm:$0xf]
    %v2421 = vld [vmem:[#allocation15 + $0x1c] sm:$0xf]
    %v2422 = vld [vmem:[#allocation15 + $0x20] sm:$0xf]
    %v2423 = vld [vmem:[#allocation15 + $0x24] sm:$0xf]
    %v2424 = vld [vmem:[#allocation15 + $0x28] sm:$0xf]
    %v2425 = vld [vmem:[#allocation15 + $0x2c] sm:$0xf]
    %v2426 = vld [vmem:[#allocation15 + $0x30] sm:$0xf]
    %v2427 = vld [vmem:[#allocation15 + $0x34] sm:$0xf]
    %v2428 = vld [vmem:[#allocation15 + $0x38] sm:$0xf]
    %v2429 = vld [vmem:[#allocation15 + $0x3c] sm:$0xf]
    %v2430 = vld [vmem:[#allocation15 + $0x40] sm:$0xf]
    %v2431 = vld [vmem:[#allocation15 + $0x44] sm:$0xf]
    %v2432 = vld [vmem:[#allocation15 + $0x48] sm:$0xf]
    %v2433 = vld [vmem:[#allocation15 + $0x4c] sm:$0xf]
    %v2434 = vld [vmem:[#allocation15 + $0x50] sm:$0xf]
    %v2435 = vld [vmem:[#allocation15 + $0x54] sm:$0xf]
    %v2436 = vld [vmem:[#allocation15 + $0x58] sm:$0xf]
    %v2437 = vld [vmem:[#allocation15 + $0x5c] sm:$0xf]
    %v2438 = vld [vmem:[#allocation15 + $0x60] sm:$0xf]
    %v2439 = vld [vmem:[#allocation15 + $0x64] sm:$0xf]
    %v2440 = vld [vmem:[#allocation15 + $0x68] sm:$0xf]
    %v2441 = vld [vmem:[#allocation15 + $0x6c] sm:$0xf]
    %v2442 = vld [vmem:[#allocation15 + $0x70] sm:$0xf]
    %v2443 = vld [vmem:[#allocation15 + $0x74] sm:$0xf]
    %v2444 = vld [vmem:[#allocation15 + $0x78] sm:$0xf]
    %v2445 = vld [vmem:[#allocation15 + $0x7c] sm:$0xf]
    %v2446 = vld [vmem:[#allocation15 + $0x80] sm:$0xf]
    %v2447 = vld [vmem:[#allocation15 + $0x84] sm:$0xf]
    %v2448 = vld [vmem:[#allocation15 + $0x88] sm:$0xf]
    %v2449 = vld [vmem:[#allocation15 + $0x8c] sm:$0xf]
    %v2450 = vld [vmem:[#allocation15 + $0x90] sm:$0xf]
    %v2451 = vld [vmem:[#allocation15 + $0x94] sm:$0xf]
    %v2452 = vld [vmem:[#allocation15 + $0x98] sm:$0xf]
    %v2453 = vld [vmem:[#allocation15 + $0x9c] sm:$0xf]
    %v2454 = vld [vmem:[#allocation15 + $0xa0] sm:$0xf]
    %v2455 = vld [vmem:[#allocation15 + $0xa4] sm:$0xf]
    %v2456 = vld [vmem:[#allocation15 + $0xa8] sm:$0xf]
    %v2457 = vld [vmem:[#allocation15 + $0xac] sm:$0xf]
    %v2458 = vld [vmem:[#allocation15 + $0xb0] sm:$0xf]
    %v2459 = vld [vmem:[#allocation15 + $0xb4] sm:$0xf]
    %v2460 = vld [vmem:[#allocation15 + $0xb8] sm:$0xf]
    %v2461 = vld [vmem:[#allocation15 + $0xbc] sm:$0xf]
    %v2462 = vld [vmem:[#allocation15 + $0xc0] sm:$0xf]
    %v2463 = vld [vmem:[#allocation15 + $0xc4] sm:$0xf]
    %v2464 = vld [vmem:[#allocation15 + $0xc8] sm:$0xf]
    %v2465 = vld [vmem:[#allocation15 + $0xcc] sm:$0xf]
    %v2466 = vld [vmem:[#allocation15 + $0xd0] sm:$0xf]
    %v2467 = vld [vmem:[#allocation15 + $0xd4] sm:$0xf]
    %v2468 = vld [vmem:[#allocation15 + $0xd8] sm:$0xf]
    %v2469 = vld [vmem:[#allocation15 + $0xdc] sm:$0xf]
    %v2470 = vld [vmem:[#allocation15 + $0xe0] sm:$0xf]
    %v2471 = vld [vmem:[#allocation15 + $0xe4] sm:$0xf]
    %v2472 = vld [vmem:[#allocation15 + $0xe8] sm:$0xf]
    %v2473 = vld [vmem:[#allocation15 + $0xec] sm:$0xf]
    %v2474 = vld [vmem:[#allocation15 + $0xf0] sm:$0xf]
    %v2475 = vld [vmem:[#allocation15 + $0xf4] sm:$0xf]
    %v2476 = vld [vmem:[#allocation15 + $0xf8] sm:$0xf]
    %v2477 = vld [vmem:[#allocation15 + $0xfc] sm:$0xf]
    %v2478 = vld [vmem:[#allocation15 + $0x100] sm:$0xf]
    %v2479 = vld [vmem:[#allocation15 + $0x104] sm:$0xf]
    %v2480 = vld [vmem:[#allocation15 + $0x108] sm:$0xf]
    %v2481 = vld [vmem:[#allocation15 + $0x10c] sm:$0xf]
    %v2482 = vld [vmem:[#allocation15 + $0x110] sm:$0xf]
    %v2483 = vld [vmem:[#allocation15 + $0x114] sm:$0xf]
    %v2484 = vld [vmem:[#allocation15 + $0x118] sm:$0xf]
    %v2485 = vld [vmem:[#allocation15 + $0x11c] sm:$0xf]
    %v2486 = vld [vmem:[#allocation15 + $0x120] sm:$0xf]
    %v2487 = vld [vmem:[#allocation15 + $0x124] sm:$0xf]
    %v2488 = vld [vmem:[#allocation15 + $0x128] sm:$0xf]
    %v2489 = vld [vmem:[#allocation15 + $0x12c] sm:$0xf]
    %v2490 = vld [vmem:[#allocation15 + $0x130] sm:$0xf]
    %v2491 = vld [vmem:[#allocation15 + $0x134] sm:$0xf]
    %v2492 = vld [vmem:[#allocation15 + $0x138] sm:$0xf]
    %v2493 = vld [vmem:[#allocation15 + $0x13c] sm:$0xf]
    %v2494 = vld [vmem:[#allocation15 + $0x140] sm:$0xf]
    %v2495 = vld [vmem:[#allocation15 + $0x144] sm:$0xf]
    %v2496 = vld [vmem:[#allocation15 + $0x148] sm:$0xf]
    %v2497 = vld [vmem:[#allocation15 + $0x14c] sm:$0xf]
    %v2498 = vld [vmem:[#allocation15 + $0x150] sm:$0xf]
    %v2499 = vld [vmem:[#allocation15 + $0x154] sm:$0xf]
    %v2500 = vld [vmem:[#allocation15 + $0x158] sm:$0xf]
    %v2501 = vld [vmem:[#allocation15 + $0x15c] sm:$0xf]
    %v2502 = vld [vmem:[#allocation15 + $0x160] sm:$0xf]
    %v2503 = vld [vmem:[#allocation15 + $0x164] sm:$0xf]
    %v2504 = vld [vmem:[#allocation15 + $0x168] sm:$0xf]
    %v2505 = vld [vmem:[#allocation15 + $0x16c] sm:$0xf]
    %v2506 = vld [vmem:[#allocation15 + $0x170] sm:$0xf]
    %v2507 = vld [vmem:[#allocation15 + $0x174] sm:$0xf]
    %v2508 = vld [vmem:[#allocation15 + $0x178] sm:$0xf]
    %v2509 = vld [vmem:[#allocation15 + $0x17c] sm:$0xf]
    %v2510 = vld [vmem:[#allocation16] sm:$0x1]
    %v2512 = vlaneseq
    %v2513 = vshrl.u32 %v2512, 7
    %v2514 = vsub.s32 0, %v2513
    %v2515 = vrot.slane %v2510, %v2514
    %v2613 = vunpack.c.l.b16 %v2414
    %v2614 = vunpack.c.l.b16 %v2415
    %v2615 = vunpack.c.l.b16 %v2416
    %v2616 = vunpack.c.l.b16 %v2417
    %v2617 = vunpack.c.l.b16 %v2418
    %v2618 = vunpack.c.l.b16 %v2419
    %v2619 = vunpack.c.l.b16 %v2420
    %v2620 = vunpack.c.l.b16 %v2421
    %v2621 = vunpack.c.l.b16 %v2422
    %v2622 = vunpack.c.l.b16 %v2423
    %v2623 = vunpack.c.l.b16 %v2424
    %v2624 = vunpack.c.l.b16 %v2425
    %v2625 = vunpack.c.l.b16 %v2426
    %v2626 = vunpack.c.l.b16 %v2427
    %v2627 = vunpack.c.l.b16 %v2428
    %v2628 = vunpack.c.l.b16 %v2429
    %v2629 = vunpack.c.l.b16 %v2430
    %v2630 = vunpack.c.l.b16 %v2431
    %v2631 = vunpack.c.l.b16 %v2432
    %v2632 = vunpack.c.l.b16 %v2433
    %v2633 = vunpack.c.l.b16 %v2434
    %v2634 = vunpack.c.l.b16 %v2435
    %v2635 = vunpack.c.l.b16 %v2436
    %v2636 = vunpack.c.l.b16 %v2437
    %v2637 = vunpack.c.l.b16 %v2438
    %v2638 = vunpack.c.l.b16 %v2439
    %v2639 = vunpack.c.l.b16 %v2440
    %v2640 = vunpack.c.l.b16 %v2441
    %v2641 = vunpack.c.l.b16 %v2442
    %v2642 = vunpack.c.l.b16 %v2443
    %v2643 = vunpack.c.l.b16 %v2444
    %v2644 = vunpack.c.l.b16 %v2445
    %v2645 = vunpack.c.l.b16 %v2446
    %v2646 = vunpack.c.l.b16 %v2447
    %v2647 = vunpack.c.l.b16 %v2448
    %v2648 = vunpack.c.l.b16 %v2449
    %v2649 = vunpack.c.l.b16 %v2450
    %v2650 = vunpack.c.l.b16 %v2451
    %v2651 = vunpack.c.l.b16 %v2452
    %v2652 = vunpack.c.l.b16 %v2453
    %v2653 = vunpack.c.l.b16 %v2454
    %v2654 = vunpack.c.l.b16 %v2455
    %v2655 = vunpack.c.l.b16 %v2456
    %v2656 = vunpack.c.l.b16 %v2457
    %v2657 = vunpack.c.l.b16 %v2458
    %v2658 = vunpack.c.l.b16 %v2459
    %v2659 = vunpack.c.l.b16 %v2460
    %v2660 = vunpack.c.l.b16 %v2461
    %v2661 = vunpack.c.l.b16 %v2462
    %v2662 = vunpack.c.l.b16 %v2463
    %v2663 = vunpack.c.l.b16 %v2464
    %v2664 = vunpack.c.l.b16 %v2465
    %v2665 = vunpack.c.l.b16 %v2466
    %v2666 = vunpack.c.l.b16 %v2467
    %v2667 = vunpack.c.l.b16 %v2468
    %v2668 = vunpack.c.l.b16 %v2469
    %v2669 = vunpack.c.l.b16 %v2470
    %v2670 = vunpack.c.l.b16 %v2471
    %v2671 = vunpack.c.l.b16 %v2472
    %v2672 = vunpack.c.l.b16 %v2473
    %v2673 = vunpack.c.l.b16 %v2474
    %v2674 = vunpack.c.l.b16 %v2475
    %v2675 = vunpack.c.l.b16 %v2476
    %v2676 = vunpack.c.l.b16 %v2477
    %v2677 = vunpack.c.l.b16 %v2478
    %v2678 = vunpack.c.l.b16 %v2479
    %v2679 = vunpack.c.l.b16 %v2480
    %v2680 = vunpack.c.l.b16 %v2481
    %v2681 = vunpack.c.l.b16 %v2482
    %v2682 = vunpack.c.l.b16 %v2483
    %v2683 = vunpack.c.l.b16 %v2484
    %v2684 = vunpack.c.l.b16 %v2485
    %v2685 = vunpack.c.l.b16 %v2486
    %v2686 = vunpack.c.l.b16 %v2487
    %v2687 = vunpack.c.l.b16 %v2488
    %v2688 = vunpack.c.l.b16 %v2489
    %v2689 = vunpack.c.l.b16 %v2490
    %v2690 = vunpack.c.l.b16 %v2491
    %v2691 = vunpack.c.l.b16 %v2492
    %v2692 = vunpack.c.l.b16 %v2493
    %v2693 = vunpack.c.l.b16 %v2494
    %v2694 = vunpack.c.l.b16 %v2495
    %v2695 = vunpack.c.l.b16 %v2496
    %v2696 = vunpack.c.l.b16 %v2497
    %v2697 = vunpack.c.l.b16 %v2498
    %v2698 = vunpack.c.l.b16 %v2499
    %v2699 = vunpack.c.l.b16 %v2500
    %v2700 = vunpack.c.l.b16 %v2501
    %v2701 = vunpack.c.l.b16 %v2502
    %v2702 = vunpack.c.l.b16 %v2503
    %v2703 = vunpack.c.l.b16 %v2504
    %v2704 = vunpack.c.l.b16 %v2505
    %v2705 = vunpack.c.l.b16 %v2506
    %v2706 = vunpack.c.l.b16 %v2507
    %v2707 = vunpack.c.l.b16 %v2508
    %v2708 = vunpack.c.l.b16 %v2509
    %v2709 = vpack.c.b16 %v2614, %v2613
    %v2710 = vpack.c.b16 %v2616, %v2615
    %v2711 = vpack.c.b16 %v2618, %v2617
    %v2712 = vpack.c.b16 %v2620, %v2619
    %v2713 = vpack.c.b16 %v2622, %v2621
    %v2714 = vpack.c.b16 %v2624, %v2623
    %v2715 = vpack.c.b16 %v2626, %v2625
    %v2716 = vpack.c.b16 %v2628, %v2627
    %v2717 = vpack.c.b16 %v2630, %v2629
    %v2718 = vpack.c.b16 %v2632, %v2631
    %v2719 = vpack.c.b16 %v2634, %v2633
    %v2720 = vpack.c.b16 %v2636, %v2635
    %v2721 = vpack.c.b16 %v2638, %v2637
    %v2722 = vpack.c.b16 %v2640, %v2639
    %v2723 = vpack.c.b16 %v2642, %v2641
    %v2724 = vpack.c.b16 %v2644, %v2643
    %v2725 = vpack.c.b16 %v2646, %v2645
    %v2726 = vpack.c.b16 %v2648, %v2647
    %v2727 = vpack.c.b16 %v2650, %v2649
    %v2728 = vpack.c.b16 %v2652, %v2651
    %v2729 = vpack.c.b16 %v2654, %v2653
    %v2730 = vpack.c.b16 %v2656, %v2655
    %v2731 = vpack.c.b16 %v2658, %v2657
    %v2732 = vpack.c.b16 %v2660, %v2659
    %v2733 = vpack.c.b16 %v2662, %v2661
    %v2734 = vpack.c.b16 %v2664, %v2663
    %v2735 = vpack.c.b16 %v2666, %v2665
    %v2736 = vpack.c.b16 %v2668, %v2667
    %v2737 = vpack.c.b16 %v2670, %v2669
    %v2738 = vpack.c.b16 %v2672, %v2671
    %v2739 = vpack.c.b16 %v2674, %v2673
    %v2740 = vpack.c.b16 %v2676, %v2675
    %v2741 = vpack.c.b16 %v2678, %v2677
    %v2742 = vpack.c.b16 %v2680, %v2679
    %v2743 = vpack.c.b16 %v2682, %v2681
    %v2744 = vpack.c.b16 %v2684, %v2683
    %v2745 = vpack.c.b16 %v2686, %v2685
    %v2746 = vpack.c.b16 %v2688, %v2687
    %v2747 = vpack.c.b16 %v2690, %v2689
    %v2748 = vpack.c.b16 %v2692, %v2691
    %v2749 = vpack.c.b16 %v2694, %v2693
    %v2750 = vpack.c.b16 %v2696, %v2695
    %v2751 = vpack.c.b16 %v2698, %v2697
    %v2752 = vpack.c.b16 %v2700, %v2699
    %v2753 = vpack.c.b16 %v2702, %v2701
    %v2754 = vpack.c.b16 %v2704, %v2703
    %v2755 = vpack.c.b16 %v2706, %v2705
    %v2756 = vpack.c.b16 %v2708, %v2707
    %2805 = vmatprep.subr.bf16.mxu0 0
    %2806 = vmatpush1.bf16.msra.mxu0 %v2716
    %2807 = vmatprep.subr.bf16.mxu0 0
    %2808 = vmatpush1.bf16.msra.mxu0 %v2715
    %2809 = vmatprep.subr.bf16.mxu0 0
    %2810 = vmatpush1.bf16.msra.mxu0 %v2714
    %2811 = vmatprep.subr.bf16.mxu0 0
    %2812 = vmatpush1.bf16.msra.mxu0 %v2713
    %2813 = vmatprep.subr.bf16.mxu0 0
    %2814 = vmatpush1.bf16.msra.mxu0 %v2712
    %2815 = vmatprep.subr.bf16.mxu0 0
    %2816 = vmatpush1.bf16.msra.mxu0 %v2711
    %2817 = vmatprep.subr.bf16.mxu0 0
    %2818 = vmatpush1.bf16.msra.mxu0 %v2710
    %2819 = vmatprep.subr.bf16.mxu0 0
    %2820 = vmatpush1.bf16.msra.mxu0 %v2709
    %2821 = vmatprep.subr.bf16.mxu0 0
    %2822 = vmatpush2.bf16.msra.mxu0 %v2724
    %2823 = vmatprep.subr.bf16.mxu0 0
    %2824 = vmatpush2.bf16.msra.mxu0 %v2723
    %2825 = vmatprep.subr.bf16.mxu0 0
    %2826 = vmatpush2.bf16.msra.mxu0 %v2722
    %2827 = vmatprep.subr.bf16.mxu0 0
    %2828 = vmatpush2.bf16.msra.mxu0 %v2721
    %2829 = vmatprep.subr.bf16.mxu0 0
    %2830 = vmatpush2.bf16.msra.mxu0 %v2720
    %2831 = vmatprep.subr.bf16.mxu0 0
    %2832 = vmatpush2.bf16.msra.mxu0 %v2719
    %2833 = vmatprep.subr.bf16.mxu0 0
    %2834 = vmatpush2.bf16.msra.mxu0 %v2718
    %2835 = vmatprep.subr.bf16.mxu0 0
    %2836 = vmatpush2.bf16.msra.mxu0 %v2717
    %2837 = vmatprep.mubr.bf16.mxu0 %v2409
    %2838 = vmatmul.mubr.bf16.gmra.mxu0 %v2408
    %v2839 = vpop.f32.mrf.mxu0
    %v2840 = vadd.f32 %v2515, %v2839
    %v2841 = vpop.f32.mrf.mxu0
    %v2842 = vpop.f32.mrf.mxu0
    %v2843 = vadd.f32 %v2515, %v2842
    %v2844 = vpop.f32.mrf.mxu0
    %2845 = vdwg.mxu0
    %2846 = vmatprep.subr.bf16.mxu0 0
    %2847 = vmatpush1.bf16.msra.mxu0 %v2732
    %2848 = vmatprep.subr.bf16.mxu0 0
    %2849 = vmatpush1.bf16.msra.mxu0 %v2731
    %2850 = vmatprep.subr.bf16.mxu0 0
    %2851 = vmatpush1.bf16.msra.mxu0 %v2730
    %2852 = vmatprep.subr.bf16.mxu0 0
    %2853 = vmatpush1.bf16.msra.mxu0 %v2729
    %2854 = vmatprep.subr.bf16.mxu0 0
    %2855 = vmatpush1.bf16.msra.mxu0 %v2728
    %2856 = vmatprep.subr.bf16.mxu0 0
    %2857 = vmatpush1.bf16.msra.mxu0 %v2727
    %2858 = vmatprep.subr.bf16.mxu0 0
    %2859 = vmatpush1.bf16.msra.mxu0 %v2726
    %2860 = vmatprep.subr.bf16.mxu0 0
    %2861 = vmatpush1.bf16.msra.mxu0 %v2725
    %2862 = vmatprep.subr.bf16.mxu0 0
    %2863 = vmatpush2.bf16.msra.mxu0 %v2740
    %2864 = vmatprep.subr.bf16.mxu0 0
    %2865 = vmatpush2.bf16.msra.mxu0 %v2739
    %2866 = vmatprep.subr.bf16.mxu0 0
    %2867 = vmatpush2.bf16.msra.mxu0 %v2738
    %2868 = vmatprep.subr.bf16.mxu0 0
    %2869 = vmatpush2.bf16.msra.mxu0 %v2737
    %2870 = vmatprep.subr.bf16.mxu0 0
    %2871 = vmatpush2.bf16.msra.mxu0 %v2736
    %2872 = vmatprep.subr.bf16.mxu0 0
    %2873 = vmatpush2.bf16.msra.mxu0 %v2735
    %2874 = vmatprep.subr.bf16.mxu0 0
    %2875 = vmatpush2.bf16.msra.mxu0 %v2734
    %2876 = vmatprep.subr.bf16.mxu0 0
    %2877 = vmatpush2.bf16.msra.mxu0 %v2733
    %2878 = vmatprep.mubr.bf16.mxu0 %v2411
    %2879 = vmatmul.mubr.bf16.gmra.mxu0 %v2410
    %v2880 = vpop.f32.mrf.mxu0
    %v2881 = vadd.f32 %v2840, %v2880
    %v2882 = vpop.f32.mrf.mxu0
    %v2883 = vpop.f32.mrf.mxu0
    %v2884 = vadd.f32 %v2843, %v2883
    %v2885 = vpop.f32.mrf.mxu0
    %2886 = vdwg.mxu0
    %2887 = vmatprep.subr.bf16.mxu0 0
    %2888 = vmatpush1.bf16.msra.mxu0 %v2748
    %2889 = vmatprep.subr.bf16.mxu0 0
    %2890 = vmatpush1.bf16.msra.mxu0 %v2747
    %2891 = vmatprep.subr.bf16.mxu0 0
    %2892 = vmatpush1.bf16.msra.mxu0 %v2746
    %2893 = vmatprep.subr.bf16.mxu0 0
    %2894 = vmatpush1.bf16.msra.mxu0 %v2745
    %2895 = vmatprep.subr.bf16.mxu0 0
    %2896 = vmatpush1.bf16.msra.mxu0 %v2744
    %2897 = vmatprep.subr.bf16.mxu0 0
    %2898 = vmatpush1.bf16.msra.mxu0 %v2743
    %2899 = vmatprep.subr.bf16.mxu0 0
    %2900 = vmatpush1.bf16.msra.mxu0 %v2742
    %2901 = vmatprep.subr.bf16.mxu0 0
    %2902 = vmatpush1.bf16.msra.mxu0 %v2741
    %2903 = vmatprep.subr.bf16.mxu0 0
    %2904 = vmatpush2.bf16.msra.mxu0 %v2756
    %2905 = vmatprep.subr.bf16.mxu0 0
    %2906 = vmatpush2.bf16.msra.mxu0 %v2755
    %2907 = vmatprep.subr.bf16.mxu0 0
    %2908 = vmatpush2.bf16.msra.mxu0 %v2754
    %2909 = vmatprep.subr.bf16.mxu0 0
    %2910 = vmatpush2.bf16.msra.mxu0 %v2753
    %2911 = vmatprep.subr.bf16.mxu0 0
    %2912 = vmatpush2.bf16.msra.mxu0 %v2752
    %2913 = vmatprep.subr.bf16.mxu0 0
    %2914 = vmatpush2.bf16.msra.mxu0 %v2751
    %2915 = vmatprep.subr.bf16.mxu0 0
    %2916 = vmatpush2.bf16.msra.mxu0 %v2750
    %2917 = vmatprep.subr.bf16.mxu0 0
    %2918 = vmatpush2.bf16.msra.mxu0 %v2749
    %2919 = vmatprep.mubr.bf16.mxu0 %v2413
    %2920 = vmatmul.mubr.bf16.gmra.mxu0 %v2412
    %v2921 = vpop.f32.mrf.mxu0
    %v2922 = vadd.f32 %v2881, %v2921
    %v2923 = vpop.f32.mrf.mxu0
    %v2924 = vpop.f32.mrf.mxu0
    %v2925 = vadd.f32 %v2884, %v2924
    %v2926 = vpop.f32.mrf.mxu0
    %2927 = vdwg.mxu0
    %v2928 = vmax.f32 %v2922, 0.0
    %v2929 = vmax.f32 %v2925, 0.0
    %v2930 = vrot.slane %v2928, 7
    %v2931 = vrot.slane %v2929, 7
    %v2932 = vsel %vm609, %v2930, %v2931
    %v2933 = vsel %vm609, %v2931, %v2930
    %v2934 = vmul.f32 %v2933, %v597
    %v2935 = vmul.f32 %v2932, %v598
    %v2936 = vrot.slane %v2928, 1
    %v2937 = vrot.slane %v2929, 1
    %v2938 = vsel %vm616, %v2936, %v2937
    %v2939 = vsel %vm616, %v2937, %v2936
    %v2940 = vmul.f32 %v2938, %v603
    %v2941 = vmul.f32 %v2939, %v604
    %v2942 = vpack.c.bf16 %v2935, %v2934
    %v2943 = vpack.c.bf16 %v2929, %v2928
    %v2944 = vpack.c.bf16 %v2941, %v2940
    %v2945 = vld [vmem:[#allocation18] sm:$0xff]
    %v2946 = vld [vmem:[#allocation18 + $0x8] sm:$0xff]
    %v2947 = vld [vmem:[#allocation18 + $0x10] sm:$0xff]
    %v2948 = vld [vmem:[#allocation18 + $0x18] sm:$0xff]
    %v2949 = vld [vmem:[#allocation18 + $0x20] sm:$0xff]
    %v2950 = vld [vmem:[#allocation18 + $0x28] sm:$0xff]
    %v2951 = vld [vmem:[#allocation18 + $0x30] sm:$0xff]
    %v2952 = vld [vmem:[#allocation18 + $0x38] sm:$0xff]
    %v2953 = vld [vmem:[#allocation18 + $0x40] sm:$0xff]
    %v2954 = vld [vmem:[#allocation18 + $0x48] sm:$0xff]
    %v2955 = vld [vmem:[#allocation18 + $0x50] sm:$0xff]
    %v2956 = vld [vmem:[#allocation18 + $0x58] sm:$0xff]
    %v2957 = vld [vmem:[#allocation18 + $0x60] sm:$0xff]
    %v2958 = vld [vmem:[#allocation18 + $0x68] sm:$0xff]
    %v2959 = vld [vmem:[#allocation18 + $0x70] sm:$0xff]
    %v2960 = vld [vmem:[#allocation18 + $0x78] sm:$0xff]
    %v2961 = vld [vmem:[#allocation18 + $0x80] sm:$0xff]
    %v2962 = vld [vmem:[#allocation18 + $0x88] sm:$0xff]
    %v2963 = vld [vmem:[#allocation18 + $0x90] sm:$0xff]
    %v2964 = vld [vmem:[#allocation18 + $0x98] sm:$0xff]
    %v2965 = vld [vmem:[#allocation18 + $0xa0] sm:$0xff]
    %v2966 = vld [vmem:[#allocation18 + $0xa8] sm:$0xff]
    %v2967 = vld [vmem:[#allocation18 + $0xb0] sm:$0xff]
    %v2968 = vld [vmem:[#allocation18 + $0xb8] sm:$0xff]
    %v2969 = vld [vmem:[#allocation18 + $0xc0] sm:$0xff]
    %v2970 = vld [vmem:[#allocation18 + $0xc8] sm:$0xff]
    %v2971 = vld [vmem:[#allocation18 + $0xd0] sm:$0xff]
    %v2972 = vld [vmem:[#allocation18 + $0xd8] sm:$0xff]
    %v2973 = vld [vmem:[#allocation18 + $0xe0] sm:$0xff]
    %v2974 = vld [vmem:[#allocation18 + $0xe8] sm:$0xff]
    %v2975 = vld [vmem:[#allocation18 + $0xf0] sm:$0xff]
    %v2976 = vld [vmem:[#allocation18 + $0xf8] sm:$0xff]
    %v2977 = vld [vmem:[#allocation18 + $0x100] sm:$0xff]
    %v2978 = vld [vmem:[#allocation18 + $0x108] sm:$0xff]
    %v2979 = vld [vmem:[#allocation18 + $0x110] sm:$0xff]
    %v2980 = vld [vmem:[#allocation18 + $0x118] sm:$0xff]
    %v2981 = vld [vmem:[#allocation18 + $0x120] sm:$0xff]
    %v2982 = vld [vmem:[#allocation18 + $0x128] sm:$0xff]
    %v2983 = vld [vmem:[#allocation18 + $0x130] sm:$0xff]
    %v2984 = vld [vmem:[#allocation18 + $0x138] sm:$0xff]
    %v2985 = vld [vmem:[#allocation18 + $0x140] sm:$0xff]
    %v2986 = vld [vmem:[#allocation18 + $0x148] sm:$0xff]
    %v2987 = vld [vmem:[#allocation18 + $0x150] sm:$0xff]
    %v2988 = vld [vmem:[#allocation18 + $0x158] sm:$0xff]
    %v2989 = vld [vmem:[#allocation18 + $0x160] sm:$0xff]
    %v2990 = vld [vmem:[#allocation18 + $0x168] sm:$0xff]
    %v2991 = vld [vmem:[#allocation18 + $0x170] sm:$0xff]
    %v2992 = vld [vmem:[#allocation18 + $0x178] sm:$0xff]
    %v2993 = vld [vmem:[%s29] sm:$0x3]
    %v2995 = vlaneseq
    %v2996 = vshrl.u32 %v2995, 7
    %v2997 = vsub.s32 0, %v2996
    %v2998 = vrot.slane %v2993, %v2997
    %v2999 = vlaneseq
    %v3000 = vshrl.u32 %v2999, 7
    %v3001 = vsub.s32 1, %v3000
    %v3002 = vrot.slane %v2993, %v3001
    %v3053 = vunpack.c.l.b16 %v2945
    %v3054 = vunpack.c.h.b16 %v2945
    %v3055 = vunpack.c.l.b16 %v2946
    %v3056 = vunpack.c.h.b16 %v2946
    %v3057 = vunpack.c.l.b16 %v2947
    %v3058 = vunpack.c.h.b16 %v2947
    %v3059 = vunpack.c.l.b16 %v2948
    %v3060 = vunpack.c.h.b16 %v2948
    %v3061 = vunpack.c.l.b16 %v2949
    %v3062 = vunpack.c.h.b16 %v2949
    %v3063 = vunpack.c.l.b16 %v2950
    %v3064 = vunpack.c.h.b16 %v2950
    %v3065 = vunpack.c.l.b16 %v2951
    %v3066 = vunpack.c.h.b16 %v2951
    %v3067 = vunpack.c.l.b16 %v2952
    %v3068 = vunpack.c.h.b16 %v2952
    %v3069 = vunpack.c.l.b16 %v2953
    %v3070 = vunpack.c.h.b16 %v2953
    %v3071 = vunpack.c.l.b16 %v2954
    %v3072 = vunpack.c.h.b16 %v2954
    %v3073 = vunpack.c.l.b16 %v2955
    %v3074 = vunpack.c.h.b16 %v2955
    %v3075 = vunpack.c.l.b16 %v2956
    %v3076 = vunpack.c.h.b16 %v2956
    %v3077 = vunpack.c.l.b16 %v2957
    %v3078 = vunpack.c.h.b16 %v2957
    %v3079 = vunpack.c.l.b16 %v2958
    %v3080 = vunpack.c.h.b16 %v2958
    %v3081 = vunpack.c.l.b16 %v2959
    %v3082 = vunpack.c.h.b16 %v2959
    %v3083 = vunpack.c.l.b16 %v2960
    %v3084 = vunpack.c.h.b16 %v2960
    %v3085 = vunpack.c.l.b16 %v2961
    %v3086 = vunpack.c.h.b16 %v2961
    %v3087 = vunpack.c.l.b16 %v2962
    %v3088 = vunpack.c.h.b16 %v2962
    %v3089 = vunpack.c.l.b16 %v2963
    %v3090 = vunpack.c.h.b16 %v2963
    %v3091 = vunpack.c.l.b16 %v2964
    %v3092 = vunpack.c.h.b16 %v2964
    %v3093 = vunpack.c.l.b16 %v2965
    %v3094 = vunpack.c.h.b16 %v2965
    %v3095 = vunpack.c.l.b16 %v2966
    %v3096 = vunpack.c.h.b16 %v2966
    %v3097 = vunpack.c.l.b16 %v2967
    %v3098 = vunpack.c.h.b16 %v2967
    %v3099 = vunpack.c.l.b16 %v2968
    %v3100 = vunpack.c.h.b16 %v2968
    %v3101 = vunpack.c.l.b16 %v2969
    %v3102 = vunpack.c.h.b16 %v2969
    %v3103 = vunpack.c.l.b16 %v2970
    %v3104 = vunpack.c.h.b16 %v2970
    %v3105 = vunpack.c.l.b16 %v2971
    %v3106 = vunpack.c.h.b16 %v2971
    %v3107 = vunpack.c.l.b16 %v2972
    %v3108 = vunpack.c.h.b16 %v2972
    %v3109 = vunpack.c.l.b16 %v2973
    %v3110 = vunpack.c.h.b16 %v2973
    %v3111 = vunpack.c.l.b16 %v2974
    %v3112 = vunpack.c.h.b16 %v2974
    %v3113 = vunpack.c.l.b16 %v2975
    %v3114 = vunpack.c.h.b16 %v2975
    %v3115 = vunpack.c.l.b16 %v2976
    %v3116 = vunpack.c.h.b16 %v2976
    %v3117 = vunpack.c.l.b16 %v2977
    %v3118 = vunpack.c.h.b16 %v2977
    %v3119 = vunpack.c.l.b16 %v2978
    %v3120 = vunpack.c.h.b16 %v2978
    %v3121 = vunpack.c.l.b16 %v2979
    %v3122 = vunpack.c.h.b16 %v2979
    %v3123 = vunpack.c.l.b16 %v2980
    %v3124 = vunpack.c.h.b16 %v2980
    %v3125 = vunpack.c.l.b16 %v2981
    %v3126 = vunpack.c.h.b16 %v2981
    %v3127 = vunpack.c.l.b16 %v2982
    %v3128 = vunpack.c.h.b16 %v2982
    %v3129 = vunpack.c.l.b16 %v2983
    %v3130 = vunpack.c.h.b16 %v2983
    %v3131 = vunpack.c.l.b16 %v2984
    %v3132 = vunpack.c.h.b16 %v2984
    %v3133 = vunpack.c.l.b16 %v2985
    %v3134 = vunpack.c.h.b16 %v2985
    %v3135 = vunpack.c.l.b16 %v2986
    %v3136 = vunpack.c.h.b16 %v2986
    %v3137 = vunpack.c.l.b16 %v2987
    %v3138 = vunpack.c.h.b16 %v2987
    %v3139 = vunpack.c.l.b16 %v2988
    %v3140 = vunpack.c.h.b16 %v2988
    %v3141 = vunpack.c.l.b16 %v2989
    %v3142 = vunpack.c.h.b16 %v2989
    %v3143 = vunpack.c.l.b16 %v2990
    %v3144 = vunpack.c.h.b16 %v2990
    %v3145 = vunpack.c.l.b16 %v2991
    %v3146 = vunpack.c.h.b16 %v2991
    %v3147 = vunpack.c.l.b16 %v2992
    %v3148 = vunpack.c.h.b16 %v2992
    %v3149 = vpack.c.b16 %v3055, %v3053
    %v3150 = vpack.c.b16 %v3056, %v3054
    %v3151 = vpack.c.b16 %v3059, %v3057
    %v3152 = vpack.c.b16 %v3060, %v3058
    %v3153 = vpack.c.b16 %v3063, %v3061
    %v3154 = vpack.c.b16 %v3064, %v3062
    %v3155 = vpack.c.b16 %v3067, %v3065
    %v3156 = vpack.c.b16 %v3068, %v3066
    %v3157 = vpack.c.b16 %v3071, %v3069
    %v3158 = vpack.c.b16 %v3072, %v3070
    %v3159 = vpack.c.b16 %v3075, %v3073
    %v3160 = vpack.c.b16 %v3076, %v3074
    %v3161 = vpack.c.b16 %v3079, %v3077
    %v3162 = vpack.c.b16 %v3080, %v3078
    %v3163 = vpack.c.b16 %v3083, %v3081
    %v3164 = vpack.c.b16 %v3084, %v3082
    %v3165 = vpack.c.b16 %v3087, %v3085
    %v3166 = vpack.c.b16 %v3088, %v3086
    %v3167 = vpack.c.b16 %v3091, %v3089
    %v3168 = vpack.c.b16 %v3092, %v3090
    %v3169 = vpack.c.b16 %v3095, %v3093
    %v3170 = vpack.c.b16 %v3096, %v3094
    %v3171 = vpack.c.b16 %v3099, %v3097
    %v3172 = vpack.c.b16 %v3100, %v3098
    %v3173 = vpack.c.b16 %v3103, %v3101
    %v3174 = vpack.c.b16 %v3104, %v3102
    %v3175 = vpack.c.b16 %v3107, %v3105
    %v3176 = vpack.c.b16 %v3108, %v3106
    %v3177 = vpack.c.b16 %v3111, %v3109
    %v3178 = vpack.c.b16 %v3112, %v3110
    %v3179 = vpack.c.b16 %v3115, %v3113
    %v3180 = vpack.c.b16 %v3116, %v3114
    %v3181 = vpack.c.b16 %v3119, %v3117
    %v3182 = vpack.c.b16 %v3120, %v3118
    %v3183 = vpack.c.b16 %v3123, %v3121
    %v3184 = vpack.c.b16 %v3124, %v3122
    %v3185 = vpack.c.b16 %v3127, %v3125
    %v3186 = vpack.c.b16 %v3128, %v3126
    %v3187 = vpack.c.b16 %v3131, %v3129
    %v3188 = vpack.c.b16 %v3132, %v3130
    %v3189 = vpack.c.b16 %v3135, %v3133
    %v3190 = vpack.c.b16 %v3136, %v3134
    %v3191 = vpack.c.b16 %v3139, %v3137
    %v3192 = vpack.c.b16 %v3140, %v3138
    %v3193 = vpack.c.b16 %v3143, %v3141
    %v3194 = vpack.c.b16 %v3144, %v3142
    %v3195 = vpack.c.b16 %v3147, %v3145
    %v3196 = vpack.c.b16 %v3148, %v3146
    %3245 = vmatprep.subr.bf16.mxu0 %v3164
    %3246 = vmatpush1.bf16.msra.mxu0 %v3163
    %3247 = vmatprep.subr.bf16.mxu0 %v3162
    %3248 = vmatpush1.bf16.msra.mxu0 %v3161
    %3249 = vmatprep.subr.bf16.mxu0 %v3160
    %3250 = vmatpush1.bf16.msra.mxu0 %v3159
    %3251 = vmatprep.subr.bf16.mxu0 %v3158
    %3252 = vmatpush1.bf16.msra.mxu0 %v3157
    %3253 = vmatprep.subr.bf16.mxu0 %v3156
    %3254 = vmatpush1.bf16.msra.mxu0 %v3155
    %3255 = vmatprep.subr.bf16.mxu0 %v3154
    %3256 = vmatpush1.bf16.msra.mxu0 %v3153
    %3257 = vmatprep.subr.bf16.mxu0 %v3152
    %3258 = vmatpush1.bf16.msra.mxu0 %v3151
    %3259 = vmatprep.subr.bf16.mxu0 %v3150
    %3260 = vmatpush1.bf16.msra.mxu0 %v3149
    %3261 = vmatprep.subr.bf16.mxu0 %v3180
    %3262 = vmatpush2.bf16.msra.mxu0 %v3179
    %3263 = vmatprep.subr.bf16.mxu0 %v3178
    %3264 = vmatpush2.bf16.msra.mxu0 %v3177
    %3265 = vmatprep.subr.bf16.mxu0 %v3176
    %3266 = vmatpush2.bf16.msra.mxu0 %v3175
    %3267 = vmatprep.subr.bf16.mxu0 %v3174
    %3268 = vmatpush2.bf16.msra.mxu0 %v3173
    %3269 = vmatprep.subr.bf16.mxu0 %v3172
    %3270 = vmatpush2.bf16.msra.mxu0 %v3171
    %3271 = vmatprep.subr.bf16.mxu0 %v3170
    %3272 = vmatpush2.bf16.msra.mxu0 %v3169
    %3273 = vmatprep.subr.bf16.mxu0 %v3168
    %3274 = vmatpush2.bf16.msra.mxu0 %v3167
    %3275 = vmatprep.subr.bf16.mxu0 %v3166
    %3276 = vmatpush2.bf16.msra.mxu0 %v3165
    %3277 = vmatprep.mubr.bf16.mxu0 %v2943
    %3278 = vmatmul.mubr.bf16.gmra.mxu0 %v2942
    %v3279 = vpop.f32.mrf.mxu0
    %v3280 = vadd.f32 %v2998, %v3279
    %v3281 = vpop.f32.mrf.mxu0
    %v3282 = vadd.f32 %v3002, %v3281
    %v3283 = vpop.f32.mrf.mxu0
    %v3284 = vadd.f32 %v2998, %v3283
    %v3285 = vpop.f32.mrf.mxu0
    %v3286 = vadd.f32 %v3002, %v3285
    %3287 = vdwg.mxu0
    %3288 = vmatprep.subr.bf16.mxu0 %v3196
    %3289 = vmatpush1.bf16.msra.mxu0 %v3195
    %3290 = vmatprep.subr.bf16.mxu0 %v3194
    %3291 = vmatpush1.bf16.msra.mxu0 %v3193
    %3292 = vmatprep.subr.bf16.mxu0 %v3192
    %3293 = vmatpush1.bf16.msra.mxu0 %v3191
    %3294 = vmatprep.subr.bf16.mxu0 %v3190
    %3295 = vmatpush1.bf16.msra.mxu0 %v3189
    %3296 = vmatprep.subr.bf16.mxu0 %v3188
    %3297 = vmatpush1.bf16.msra.mxu0 %v3187
    %3298 = vmatprep.subr.bf16.mxu0 %v3186
    %3299 = vmatpush1.bf16.msra.mxu0 %v3185
    %3300 = vmatprep.subr.bf16.mxu0 %v3184
    %3301 = vmatpush1.bf16.msra.mxu0 %v3183
    %3302 = vmatprep.subr.bf16.mxu0 %v3182
    %3303 = vmatpush1.bf16.msra.mxu0 %v3181
    %3304 = vmatprep.subr.bf16.mxu0 0
    %3305 = vmatpush2.bf16.msra.mxu0 0
    %3306 = vmatprep.subr.bf16.mxu0 0
    %3307 = vmatpush2.bf16.msra.mxu0 0
    %3308 = vmatprep.subr.bf16.mxu0 0
    %3309 = vmatpush2.bf16.msra.mxu0 0
    %3310 = vmatprep.subr.bf16.mxu0 0
    %3311 = vmatpush2.bf16.msra.mxu0 0
    %3312 = vmatprep.subr.bf16.mxu0 0
    %3313 = vmatpush2.bf16.msra.mxu0 0
    %3314 = vmatprep.subr.bf16.mxu0 0
    %3315 = vmatpush2.bf16.msra.mxu0 0
    %3316 = vmatprep.subr.bf16.mxu0 0
    %3317 = vmatpush2.bf16.msra.mxu0 0
    %3318 = vmatprep.subr.bf16.mxu0 0
    %3319 = vmatpush2.bf16.msra.mxu0 0
    %3320 = vmatprep.mubr.bf16.mxu0 0
    %3321 = vmatmul.mubr.bf16.gmra.mxu0 %v2944
    %v3322 = vpop.f32.mrf.mxu0
    %v3323 = vadd.f32 %v3280, %v3322
    %v3324 = vpop.f32.mrf.mxu0
    %v3325 = vadd.f32 %v3282, %v3324
    %v3326 = vpop.f32.mrf.mxu0
    %v3327 = vadd.f32 %v3284, %v3326
    %v3328 = vpop.f32.mrf.mxu0
    %v3329 = vadd.f32 %v3286, %v3328
    %3330 = vdwg.mxu0
    %v3331 = vmax.f32 %v3323, 0.0
    %v3332 = vmax.f32 %v3325, 0.0
    %v3333 = vmax.f32 %v3327, 0.0
    %v3334 = vmax.f32 %v3329, 0.0
    %v3335 = vsub.f32 %v3331, %v2380
    %v3336 = vsub.f32 %v3332, %v2381
    %v3337 = vsub.f32 %v3333, %v2382
    %v3338 = vsub.f32 %v3334, %v2383
    %v3339 = vrot.slane %v3335, 7
    %v3340 = vrot.slane %v3336, 7
    %v3341 = vrot.slane %v3337, 7
    %v3342 = vrot.slane %v3338, 7
    %v3343 = vsel %vm609, %v3339, %v3341
    %v3344 = vsel %vm609, %v3340, %v3342
    %v3345 = vsel %vm609, %v3341, %v3339
    %v3346 = vsel %vm609, %v3342, %v3340
    %v3347 = vmul.f32 %v3345, %v597
    %v3348 = vmul.f32 %v3346, %v597
    %v3349 = vmul.f32 %v3343, %v598
    %v3350 = vmul.f32 %v3344, %v598
    %v3351 = vrot.slane %v3335, 1
    %v3352 = vrot.slane %v3336, 1
    %v3353 = vrot.slane %v3337, 1
    %v3354 = vrot.slane %v3338, 1
    %v3355 = vsel %vm616, %v3351, %v3353
    %v3356 = vsel %vm616, %v3352, %v3354
    %v3357 = vsel %vm616, %v3353, %v3351
    %v3358 = vsel %vm616, %v3354, %v3352
    %v3359 = vmul.f32 %v3355, %v603
    %v3360 = vmul.f32 %v3356, %v603
    %v3361 = vmul.f32 %v3357, %v604
    %v3362 = vmul.f32 %v3358, %v604
    %v3363 = vpack.c.bf16 %v3349, %v3347
    %v3364 = vpack.c.bf16 %v3350, %v3348
    %v3365 = vpack.c.bf16 %v3337, %v3335
    %v3366 = vpack.c.bf16 %v3338, %v3336
    %v3367 = vpack.c.bf16 %v3361, %v3359
    %v3368 = vpack.c.bf16 %v3362, %v3360
    %v3369 = vld [vmem:[#allocation19] sm:$0xf]
    %v3370 = vld [vmem:[#allocation19 + $0x4] sm:$0xf]
    %v3371 = vld [vmem:[#allocation19 + $0x8] sm:$0xf]
    %v3372 = vld [vmem:[#allocation19 + $0xc] sm:$0xf]
    %v3373 = vld [vmem:[#allocation19 + $0x10] sm:$0xf]
    %v3374 = vld [vmem:[#allocation19 + $0x14] sm:$0xf]
    %v3375 = vld [vmem:[#allocation19 + $0x18] sm:$0xf]
    %v3376 = vld [vmem:[#allocation19 + $0x1c] sm:$0xf]
    %v3377 = vld [vmem:[#allocation19 + $0x20] sm:$0xf]
    %v3378 = vld [vmem:[#allocation19 + $0x24] sm:$0xf]
    %v3379 = vld [vmem:[#allocation19 + $0x28] sm:$0xf]
    %v3380 = vld [vmem:[#allocation19 + $0x2c] sm:$0xf]
    %v3381 = vld [vmem:[#allocation19 + $0x30] sm:$0xf]
    %v3382 = vld [vmem:[#allocation19 + $0x34] sm:$0xf]
    %v3383 = vld [vmem:[#allocation19 + $0x38] sm:$0xf]
    %v3384 = vld [vmem:[#allocation19 + $0x3c] sm:$0xf]
    %v3385 = vld [vmem:[#allocation19 + $0x40] sm:$0xf]
    %v3386 = vld [vmem:[#allocation19 + $0x44] sm:$0xf]
    %v3387 = vld [vmem:[#allocation19 + $0x48] sm:$0xf]
    %v3388 = vld [vmem:[#allocation19 + $0x4c] sm:$0xf]
    %v3389 = vld [vmem:[#allocation19 + $0x50] sm:$0xf]
    %v3390 = vld [vmem:[#allocation19 + $0x54] sm:$0xf]
    %v3391 = vld [vmem:[#allocation19 + $0x58] sm:$0xf]
    %v3392 = vld [vmem:[#allocation19 + $0x5c] sm:$0xf]
    %v3393 = vld [vmem:[#allocation19 + $0x60] sm:$0xf]
    %v3394 = vld [vmem:[#allocation19 + $0x64] sm:$0xf]
    %v3395 = vld [vmem:[#allocation19 + $0x68] sm:$0xf]
    %v3396 = vld [vmem:[#allocation19 + $0x6c] sm:$0xf]
    %v3397 = vld [vmem:[#allocation19 + $0x70] sm:$0xf]
    %v3398 = vld [vmem:[#allocation19 + $0x74] sm:$0xf]
    %v3399 = vld [vmem:[#allocation19 + $0x78] sm:$0xf]
    %v3400 = vld [vmem:[#allocation19 + $0x7c] sm:$0xf]
    %v3401 = vld [vmem:[#allocation19 + $0x80] sm:$0xf]
    %v3402 = vld [vmem:[#allocation19 + $0x84] sm:$0xf]
    %v3403 = vld [vmem:[#allocation19 + $0x88] sm:$0xf]
    %v3404 = vld [vmem:[#allocation19 + $0x8c] sm:$0xf]
    %v3405 = vld [vmem:[#allocation19 + $0x90] sm:$0xf]
    %v3406 = vld [vmem:[#allocation19 + $0x94] sm:$0xf]
    %v3407 = vld [vmem:[#allocation19 + $0x98] sm:$0xf]
    %v3408 = vld [vmem:[#allocation19 + $0x9c] sm:$0xf]
    %v3409 = vld [vmem:[#allocation19 + $0xa0] sm:$0xf]
    %v3410 = vld [vmem:[#allocation19 + $0xa4] sm:$0xf]
    %v3411 = vld [vmem:[#allocation19 + $0xa8] sm:$0xf]
    %v3412 = vld [vmem:[#allocation19 + $0xac] sm:$0xf]
    %v3413 = vld [vmem:[#allocation19 + $0xb0] sm:$0xf]
    %v3414 = vld [vmem:[#allocation19 + $0xb4] sm:$0xf]
    %v3415 = vld [vmem:[#allocation19 + $0xb8] sm:$0xf]
    %v3416 = vld [vmem:[#allocation19 + $0xbc] sm:$0xf]
    %v3417 = vld [vmem:[#allocation19 + $0xc0] sm:$0xf]
    %v3418 = vld [vmem:[#allocation19 + $0xc4] sm:$0xf]
    %v3419 = vld [vmem:[#allocation19 + $0xc8] sm:$0xf]
    %v3420 = vld [vmem:[#allocation19 + $0xcc] sm:$0xf]
    %v3421 = vld [vmem:[#allocation19 + $0xd0] sm:$0xf]
    %v3422 = vld [vmem:[#allocation19 + $0xd4] sm:$0xf]
    %v3423 = vld [vmem:[#allocation19 + $0xd8] sm:$0xf]
    %v3424 = vld [vmem:[#allocation19 + $0xdc] sm:$0xf]
    %v3425 = vld [vmem:[#allocation19 + $0xe0] sm:$0xf]
    %v3426 = vld [vmem:[#allocation19 + $0xe4] sm:$0xf]
    %v3427 = vld [vmem:[#allocation19 + $0xe8] sm:$0xf]
    %v3428 = vld [vmem:[#allocation19 + $0xec] sm:$0xf]
    %v3429 = vld [vmem:[#allocation19 + $0xf0] sm:$0xf]
    %v3430 = vld [vmem:[#allocation19 + $0xf4] sm:$0xf]
    %v3431 = vld [vmem:[#allocation19 + $0xf8] sm:$0xf]
    %v3432 = vld [vmem:[#allocation19 + $0xfc] sm:$0xf]
    %v3433 = vld [vmem:[#allocation19 + $0x100] sm:$0xf]
    %v3434 = vld [vmem:[#allocation19 + $0x104] sm:$0xf]
    %v3435 = vld [vmem:[#allocation19 + $0x108] sm:$0xf]
    %v3436 = vld [vmem:[#allocation19 + $0x10c] sm:$0xf]
    %v3437 = vld [vmem:[#allocation19 + $0x110] sm:$0xf]
    %v3438 = vld [vmem:[#allocation19 + $0x114] sm:$0xf]
    %v3439 = vld [vmem:[#allocation19 + $0x118] sm:$0xf]
    %v3440 = vld [vmem:[#allocation19 + $0x11c] sm:$0xf]
    %v3441 = vld [vmem:[#allocation19 + $0x120] sm:$0xf]
    %v3442 = vld [vmem:[#allocation19 + $0x124] sm:$0xf]
    %v3443 = vld [vmem:[#allocation19 + $0x128] sm:$0xf]
    %v3444 = vld [vmem:[#allocation19 + $0x12c] sm:$0xf]
    %v3445 = vld [vmem:[#allocation19 + $0x130] sm:$0xf]
    %v3446 = vld [vmem:[#allocation19 + $0x134] sm:$0xf]
    %v3447 = vld [vmem:[#allocation19 + $0x138] sm:$0xf]
    %v3448 = vld [vmem:[#allocation19 + $0x13c] sm:$0xf]
    %v3449 = vld [vmem:[#allocation19 + $0x140] sm:$0xf]
    %v3450 = vld [vmem:[#allocation19 + $0x144] sm:$0xf]
    %v3451 = vld [vmem:[#allocation19 + $0x148] sm:$0xf]
    %v3452 = vld [vmem:[#allocation19 + $0x14c] sm:$0xf]
    %v3453 = vld [vmem:[#allocation19 + $0x150] sm:$0xf]
    %v3454 = vld [vmem:[#allocation19 + $0x154] sm:$0xf]
    %v3455 = vld [vmem:[#allocation19 + $0x158] sm:$0xf]
    %v3456 = vld [vmem:[#allocation19 + $0x15c] sm:$0xf]
    %v3457 = vld [vmem:[#allocation19 + $0x160] sm:$0xf]
    %v3458 = vld [vmem:[#allocation19 + $0x164] sm:$0xf]
    %v3459 = vld [vmem:[#allocation19 + $0x168] sm:$0xf]
    %v3460 = vld [vmem:[#allocation19 + $0x16c] sm:$0xf]
    %v3461 = vld [vmem:[#allocation19 + $0x170] sm:$0xf]
    %v3462 = vld [vmem:[#allocation19 + $0x174] sm:$0xf]
    %v3463 = vld [vmem:[#allocation19 + $0x178] sm:$0xf]
    %v3464 = vld [vmem:[#allocation19 + $0x17c] sm:$0xf]
    %v3465 = vld [vmem:[#allocation21] sm:$0x1]
    %v3467 = vlaneseq
    %v3468 = vshrl.u32 %v3467, 7
    %v3469 = vsub.s32 0, %v3468
    %v3470 = vrot.slane %v3465, %v3469
    %v3568 = vunpack.c.l.b16 %v3369
    %v3569 = vunpack.c.l.b16 %v3370
    %v3570 = vunpack.c.l.b16 %v3371
    %v3571 = vunpack.c.l.b16 %v3372
    %v3572 = vunpack.c.l.b16 %v3373
    %v3573 = vunpack.c.l.b16 %v3374
    %v3574 = vunpack.c.l.b16 %v3375
    %v3575 = vunpack.c.l.b16 %v3376
    %v3576 = vunpack.c.l.b16 %v3377
    %v3577 = vunpack.c.l.b16 %v3378
    %v3578 = vunpack.c.l.b16 %v3379
    %v3579 = vunpack.c.l.b16 %v3380
    %v3580 = vunpack.c.l.b16 %v3381
    %v3581 = vunpack.c.l.b16 %v3382
    %v3582 = vunpack.c.l.b16 %v3383
    %v3583 = vunpack.c.l.b16 %v3384
    %v3584 = vunpack.c.l.b16 %v3385
    %v3585 = vunpack.c.l.b16 %v3386
    %v3586 = vunpack.c.l.b16 %v3387
    %v3587 = vunpack.c.l.b16 %v3388
    %v3588 = vunpack.c.l.b16 %v3389
    %v3589 = vunpack.c.l.b16 %v3390
    %v3590 = vunpack.c.l.b16 %v3391
    %v3591 = vunpack.c.l.b16 %v3392
    %v3592 = vunpack.c.l.b16 %v3393
    %v3593 = vunpack.c.l.b16 %v3394
    %v3594 = vunpack.c.l.b16 %v3395
    %v3595 = vunpack.c.l.b16 %v3396
    %v3596 = vunpack.c.l.b16 %v3397
    %v3597 = vunpack.c.l.b16 %v3398
    %v3598 = vunpack.c.l.b16 %v3399
    %v3599 = vunpack.c.l.b16 %v3400
    %v3600 = vunpack.c.l.b16 %v3401
    %v3601 = vunpack.c.l.b16 %v3402
    %v3602 = vunpack.c.l.b16 %v3403
    %v3603 = vunpack.c.l.b16 %v3404
    %v3604 = vunpack.c.l.b16 %v3405
    %v3605 = vunpack.c.l.b16 %v3406
    %v3606 = vunpack.c.l.b16 %v3407
    %v3607 = vunpack.c.l.b16 %v3408
    %v3608 = vunpack.c.l.b16 %v3409
    %v3609 = vunpack.c.l.b16 %v3410
    %v3610 = vunpack.c.l.b16 %v3411
    %v3611 = vunpack.c.l.b16 %v3412
    %v3612 = vunpack.c.l.b16 %v3413
    %v3613 = vunpack.c.l.b16 %v3414
    %v3614 = vunpack.c.l.b16 %v3415
    %v3615 = vunpack.c.l.b16 %v3416
    %v3616 = vunpack.c.l.b16 %v3417
    %v3617 = vunpack.c.l.b16 %v3418
    %v3618 = vunpack.c.l.b16 %v3419
    %v3619 = vunpack.c.l.b16 %v3420
    %v3620 = vunpack.c.l.b16 %v3421
    %v3621 = vunpack.c.l.b16 %v3422
    %v3622 = vunpack.c.l.b16 %v3423
    %v3623 = vunpack.c.l.b16 %v3424
    %v3624 = vunpack.c.l.b16 %v3425
    %v3625 = vunpack.c.l.b16 %v3426
    %v3626 = vunpack.c.l.b16 %v3427
    %v3627 = vunpack.c.l.b16 %v3428
    %v3628 = vunpack.c.l.b16 %v3429
    %v3629 = vunpack.c.l.b16 %v3430
    %v3630 = vunpack.c.l.b16 %v3431
    %v3631 = vunpack.c.l.b16 %v3432
    %v3632 = vunpack.c.l.b16 %v3433
    %v3633 = vunpack.c.l.b16 %v3434
    %v3634 = vunpack.c.l.b16 %v3435
    %v3635 = vunpack.c.l.b16 %v3436
    %v3636 = vunpack.c.l.b16 %v3437
    %v3637 = vunpack.c.l.b16 %v3438
    %v3638 = vunpack.c.l.b16 %v3439
    %v3639 = vunpack.c.l.b16 %v3440
    %v3640 = vunpack.c.l.b16 %v3441
    %v3641 = vunpack.c.l.b16 %v3442
    %v3642 = vunpack.c.l.b16 %v3443
    %v3643 = vunpack.c.l.b16 %v3444
    %v3644 = vunpack.c.l.b16 %v3445
    %v3645 = vunpack.c.l.b16 %v3446
    %v3646 = vunpack.c.l.b16 %v3447
    %v3647 = vunpack.c.l.b16 %v3448
    %v3648 = vunpack.c.l.b16 %v3449
    %v3649 = vunpack.c.l.b16 %v3450
    %v3650 = vunpack.c.l.b16 %v3451
    %v3651 = vunpack.c.l.b16 %v3452
    %v3652 = vunpack.c.l.b16 %v3453
    %v3653 = vunpack.c.l.b16 %v3454
    %v3654 = vunpack.c.l.b16 %v3455
    %v3655 = vunpack.c.l.b16 %v3456
    %v3656 = vunpack.c.l.b16 %v3457
    %v3657 = vunpack.c.l.b16 %v3458
    %v3658 = vunpack.c.l.b16 %v3459
    %v3659 = vunpack.c.l.b16 %v3460
    %v3660 = vunpack.c.l.b16 %v3461
    %v3661 = vunpack.c.l.b16 %v3462
    %v3662 = vunpack.c.l.b16 %v3463
    %v3663 = vunpack.c.l.b16 %v3464
    %v3664 = vpack.c.b16 %v3569, %v3568
    %v3665 = vpack.c.b16 %v3571, %v3570
    %v3666 = vpack.c.b16 %v3573, %v3572
    %v3667 = vpack.c.b16 %v3575, %v3574
    %v3668 = vpack.c.b16 %v3577, %v3576
    %v3669 = vpack.c.b16 %v3579, %v3578
    %v3670 = vpack.c.b16 %v3581, %v3580
    %v3671 = vpack.c.b16 %v3583, %v3582
    %v3672 = vpack.c.b16 %v3585, %v3584
    %v3673 = vpack.c.b16 %v3587, %v3586
    %v3674 = vpack.c.b16 %v3589, %v3588
    %v3675 = vpack.c.b16 %v3591, %v3590
    %v3676 = vpack.c.b16 %v3593, %v3592
    %v3677 = vpack.c.b16 %v3595, %v3594
    %v3678 = vpack.c.b16 %v3597, %v3596
    %v3679 = vpack.c.b16 %v3599, %v3598
    %v3680 = vpack.c.b16 %v3601, %v3600
    %v3681 = vpack.c.b16 %v3603, %v3602
    %v3682 = vpack.c.b16 %v3605, %v3604
    %v3683 = vpack.c.b16 %v3607, %v3606
    %v3684 = vpack.c.b16 %v3609, %v3608
    %v3685 = vpack.c.b16 %v3611, %v3610
    %v3686 = vpack.c.b16 %v3613, %v3612
    %v3687 = vpack.c.b16 %v3615, %v3614
    %v3688 = vpack.c.b16 %v3617, %v3616
    %v3689 = vpack.c.b16 %v3619, %v3618
    %v3690 = vpack.c.b16 %v3621, %v3620
    %v3691 = vpack.c.b16 %v3623, %v3622
    %v3692 = vpack.c.b16 %v3625, %v3624
    %v3693 = vpack.c.b16 %v3627, %v3626
    %v3694 = vpack.c.b16 %v3629, %v3628
    %v3695 = vpack.c.b16 %v3631, %v3630
    %v3696 = vpack.c.b16 %v3633, %v3632
    %v3697 = vpack.c.b16 %v3635, %v3634
    %v3698 = vpack.c.b16 %v3637, %v3636
    %v3699 = vpack.c.b16 %v3639, %v3638
    %v3700 = vpack.c.b16 %v3641, %v3640
    %v3701 = vpack.c.b16 %v3643, %v3642
    %v3702 = vpack.c.b16 %v3645, %v3644
    %v3703 = vpack.c.b16 %v3647, %v3646
    %v3704 = vpack.c.b16 %v3649, %v3648
    %v3705 = vpack.c.b16 %v3651, %v3650
    %v3706 = vpack.c.b16 %v3653, %v3652
    %v3707 = vpack.c.b16 %v3655, %v3654
    %v3708 = vpack.c.b16 %v3657, %v3656
    %v3709 = vpack.c.b16 %v3659, %v3658
    %v3710 = vpack.c.b16 %v3661, %v3660
    %v3711 = vpack.c.b16 %v3663, %v3662
    %3760 = vmatprep.subr.bf16.mxu0 0
    %3761 = vmatpush1.bf16.msra.mxu0 %v3671
    %3762 = vmatprep.subr.bf16.mxu0 0
    %3763 = vmatpush1.bf16.msra.mxu0 %v3670
    %3764 = vmatprep.subr.bf16.mxu0 0
    %3765 = vmatpush1.bf16.msra.mxu0 %v3669
    %3766 = vmatprep.subr.bf16.mxu0 0
    %3767 = vmatpush1.bf16.msra.mxu0 %v3668
    %3768 = vmatprep.subr.bf16.mxu0 0
    %3769 = vmatpush1.bf16.msra.mxu0 %v3667
    %3770 = vmatprep.subr.bf16.mxu0 0
    %3771 = vmatpush1.bf16.msra.mxu0 %v3666
    %3772 = vmatprep.subr.bf16.mxu0 0
    %3773 = vmatpush1.bf16.msra.mxu0 %v3665
    %3774 = vmatprep.subr.bf16.mxu0 0
    %3775 = vmatpush1.bf16.msra.mxu0 %v3664
    %3776 = vmatprep.subr.bf16.mxu0 0
    %3777 = vmatpush2.bf16.msra.mxu0 %v3679
    %3778 = vmatprep.subr.bf16.mxu0 0
    %3779 = vmatpush2.bf16.msra.mxu0 %v3678
    %3780 = vmatprep.subr.bf16.mxu0 0
    %3781 = vmatpush2.bf16.msra.mxu0 %v3677
    %3782 = vmatprep.subr.bf16.mxu0 0
    %3783 = vmatpush2.bf16.msra.mxu0 %v3676
    %3784 = vmatprep.subr.bf16.mxu0 0
    %3785 = vmatpush2.bf16.msra.mxu0 %v3675
    %3786 = vmatprep.subr.bf16.mxu0 0
    %3787 = vmatpush2.bf16.msra.mxu0 %v3674
    %3788 = vmatprep.subr.bf16.mxu0 0
    %3789 = vmatpush2.bf16.msra.mxu0 %v3673
    %3790 = vmatprep.subr.bf16.mxu0 0
    %3791 = vmatpush2.bf16.msra.mxu0 %v3672
    %3792 = vmatprep.mubr.bf16.mxu0 %v3364
    %3793 = vmatmul.mubr.bf16.gmra.mxu0 %v3363
    %v3794 = vpop.f32.mrf.mxu0
    %v3795 = vadd.f32 %v3470, %v3794
    %v3796 = vpop.f32.mrf.mxu0
    %v3797 = vpop.f32.mrf.mxu0
    %v3798 = vadd.f32 %v3470, %v3797
    %v3799 = vpop.f32.mrf.mxu0
    %3800 = vdwg.mxu0
    %3801 = vmatprep.subr.bf16.mxu0 0
    %3802 = vmatpush1.bf16.msra.mxu0 %v3687
    %3803 = vmatprep.subr.bf16.mxu0 0
    %3804 = vmatpush1.bf16.msra.mxu0 %v3686
    %3805 = vmatprep.subr.bf16.mxu0 0
    %3806 = vmatpush1.bf16.msra.mxu0 %v3685
    %3807 = vmatprep.subr.bf16.mxu0 0
    %3808 = vmatpush1.bf16.msra.mxu0 %v3684
    %3809 = vmatprep.subr.bf16.mxu0 0
    %3810 = vmatpush1.bf16.msra.mxu0 %v3683
    %3811 = vmatprep.subr.bf16.mxu0 0
    %3812 = vmatpush1.bf16.msra.mxu0 %v3682
    %3813 = vmatprep.subr.bf16.mxu0 0
    %3814 = vmatpush1.bf16.msra.mxu0 %v3681
    %3815 = vmatprep.subr.bf16.mxu0 0
    %3816 = vmatpush1.bf16.msra.mxu0 %v3680
    %3817 = vmatprep.subr.bf16.mxu0 0
    %3818 = vmatpush2.bf16.msra.mxu0 %v3695
    %3819 = vmatprep.subr.bf16.mxu0 0
    %3820 = vmatpush2.bf16.msra.mxu0 %v3694
    %3821 = vmatprep.subr.bf16.mxu0 0
    %3822 = vmatpush2.bf16.msra.mxu0 %v3693
    %3823 = vmatprep.subr.bf16.mxu0 0
    %3824 = vmatpush2.bf16.msra.mxu0 %v3692
    %3825 = vmatprep.subr.bf16.mxu0 0
    %3826 = vmatpush2.bf16.msra.mxu0 %v3691
    %3827 = vmatprep.subr.bf16.mxu0 0
    %3828 = vmatpush2.bf16.msra.mxu0 %v3690
    %3829 = vmatprep.subr.bf16.mxu0 0
    %3830 = vmatpush2.bf16.msra.mxu0 %v3689
    %3831 = vmatprep.subr.bf16.mxu0 0
    %3832 = vmatpush2.bf16.msra.mxu0 %v3688
    %3833 = vmatprep.mubr.bf16.mxu0 %v3366
    %3834 = vmatmul.mubr.bf16.gmra.mxu0 %v3365
    %v3835 = vpop.f32.mrf.mxu0
    %v3836 = vadd.f32 %v3795, %v3835
    %v3837 = vpop.f32.mrf.mxu0
    %v3838 = vpop.f32.mrf.mxu0
    %v3839 = vadd.f32 %v3798, %v3838
    %v3840 = vpop.f32.mrf.mxu0
    %3841 = vdwg.mxu0
    %3842 = vmatprep.subr.bf16.mxu0 0
    %3843 = vmatpush1.bf16.msra.mxu0 %v3703
    %3844 = vmatprep.subr.bf16.mxu0 0
    %3845 = vmatpush1.bf16.msra.mxu0 %v3702
    %3846 = vmatprep.subr.bf16.mxu0 0
    %3847 = vmatpush1.bf16.msra.mxu0 %v3701
    %3848 = vmatprep.subr.bf16.mxu0 0
    %3849 = vmatpush1.bf16.msra.mxu0 %v3700
    %3850 = vmatprep.subr.bf16.mxu0 0
    %3851 = vmatpush1.bf16.msra.mxu0 %v3699
    %3852 = vmatprep.subr.bf16.mxu0 0
    %3853 = vmatpush1.bf16.msra.mxu0 %v3698
    %3854 = vmatprep.subr.bf16.mxu0 0
    %3855 = vmatpush1.bf16.msra.mxu0 %v3697
    %3856 = vmatprep.subr.bf16.mxu0 0
    %3857 = vmatpush1.bf16.msra.mxu0 %v3696
    %3858 = vmatprep.subr.bf16.mxu0 0
    %3859 = vmatpush2.bf16.msra.mxu0 %v3711
    %3860 = vmatprep.subr.bf16.mxu0 0
    %3861 = vmatpush2.bf16.msra.mxu0 %v3710
    %3862 = vmatprep.subr.bf16.mxu0 0
    %3863 = vmatpush2.bf16.msra.mxu0 %v3709
    %3864 = vmatprep.subr.bf16.mxu0 0
    %3865 = vmatpush2.bf16.msra.mxu0 %v3708
    %3866 = vmatprep.subr.bf16.mxu0 0
    %3867 = vmatpush2.bf16.msra.mxu0 %v3707
    %3868 = vmatprep.subr.bf16.mxu0 0
    %3869 = vmatpush2.bf16.msra.mxu0 %v3706
    %3870 = vmatprep.subr.bf16.mxu0 0
    %3871 = vmatpush2.bf16.msra.mxu0 %v3705
    %3872 = vmatprep.subr.bf16.mxu0 0
    %3873 = vmatpush2.bf16.msra.mxu0 %v3704
    %3874 = vmatprep.mubr.bf16.mxu0 %v3368
    %3875 = vmatmul.mubr.bf16.gmra.mxu0 %v3367
    %v3876 = vpop.f32.mrf.mxu0
    %v3877 = vadd.f32 %v3836, %v3876
    %v3878 = vpop.f32.mrf.mxu0
    %v3879 = vpop.f32.mrf.mxu0
    %v3880 = vadd.f32 %v3839, %v3879
    %v3881 = vpop.f32.mrf.mxu0
    %3882 = vdwg.mxu0
    %v3883 = vmax.f32 %v3877, 0.0
    %v3884 = vmax.f32 %v3880, 0.0
    %v3885 = vadd.f32 %v2928, %v3883
    %v3886 = vadd.f32 %v2929, %v3884
    %v3887 = vrot.slane %v3885, 7
    %v3888 = vrot.slane %v3886, 7
    %v3889 = vsel %vm609, %v3887, %v3888
    %v3890 = vsel %vm609, %v3888, %v3887
    %v3891 = vmul.f32 %v3890, %v597
    %v3892 = vmul.f32 %v3889, %v598
    %v3893 = vrot.slane %v3885, 1
    %v3894 = vrot.slane %v3886, 1
    %v3895 = vsel %vm616, %v3893, %v3894
    %v3896 = vsel %vm616, %v3894, %v3893
    %v3897 = vmul.f32 %v3895, %v603
    %v3898 = vmul.f32 %v3896, %v604
    %v3899 = vpack.c.bf16 %v3892, %v3891
    %v3900 = vpack.c.bf16 %v3886, %v3885
    %v3901 = vpack.c.bf16 %v3898, %v3897
    %v3902 = vld [vmem:[#allocation22] sm:$0xff]
    %v3903 = vld [vmem:[#allocation22 + $0x8] sm:$0xff]
    %v3904 = vld [vmem:[#allocation22 + $0x10] sm:$0xff]
    %v3905 = vld [vmem:[#allocation22 + $0x18] sm:$0xff]
    %v3906 = vld [vmem:[#allocation22 + $0x20] sm:$0xff]
    %v3907 = vld [vmem:[#allocation22 + $0x28] sm:$0xff]
    %v3908 = vld [vmem:[#allocation22 + $0x30] sm:$0xff]
    %v3909 = vld [vmem:[#allocation22 + $0x38] sm:$0xff]
    %v3910 = vld [vmem:[#allocation22 + $0x40] sm:$0xff]
    %v3911 = vld [vmem:[#allocation22 + $0x48] sm:$0xff]
    %v3912 = vld [vmem:[#allocation22 + $0x50] sm:$0xff]
    %v3913 = vld [vmem:[#allocation22 + $0x58] sm:$0xff]
    %v3914 = vld [vmem:[#allocation22 + $0x60] sm:$0xff]
    %v3915 = vld [vmem:[#allocation22 + $0x68] sm:$0xff]
    %v3916 = vld [vmem:[#allocation22 + $0x70] sm:$0xff]
    %v3917 = vld [vmem:[#allocation22 + $0x78] sm:$0xff]
    %v3918 = vld [vmem:[#allocation22 + $0x80] sm:$0xff]
    %v3919 = vld [vmem:[#allocation22 + $0x88] sm:$0xff]
    %v3920 = vld [vmem:[#allocation22 + $0x90] sm:$0xff]
    %v3921 = vld [vmem:[#allocation22 + $0x98] sm:$0xff]
    %v3922 = vld [vmem:[#allocation22 + $0xa0] sm:$0xff]
    %v3923 = vld [vmem:[#allocation22 + $0xa8] sm:$0xff]
    %v3924 = vld [vmem:[#allocation22 + $0xb0] sm:$0xff]
    %v3925 = vld [vmem:[#allocation22 + $0xb8] sm:$0xff]
    %v3926 = vld [vmem:[#allocation22 + $0xc0] sm:$0xff]
    %v3927 = vld [vmem:[#allocation22 + $0xc8] sm:$0xff]
    %v3928 = vld [vmem:[#allocation22 + $0xd0] sm:$0xff]
    %v3929 = vld [vmem:[#allocation22 + $0xd8] sm:$0xff]
    %v3930 = vld [vmem:[#allocation22 + $0xe0] sm:$0xff]
    %v3931 = vld [vmem:[#allocation22 + $0xe8] sm:$0xff]
    %v3932 = vld [vmem:[#allocation22 + $0xf0] sm:$0xff]
    %v3933 = vld [vmem:[#allocation22 + $0xf8] sm:$0xff]
    %v3934 = vld [vmem:[#allocation22 + $0x100] sm:$0xff]
    %v3935 = vld [vmem:[#allocation22 + $0x108] sm:$0xff]
    %v3936 = vld [vmem:[#allocation22 + $0x110] sm:$0xff]
    %v3937 = vld [vmem:[#allocation22 + $0x118] sm:$0xff]
    %v3938 = vld [vmem:[#allocation22 + $0x120] sm:$0xff]
    %v3939 = vld [vmem:[#allocation22 + $0x128] sm:$0xff]
    %v3940 = vld [vmem:[#allocation22 + $0x130] sm:$0xff]
    %v3941 = vld [vmem:[#allocation22 + $0x138] sm:$0xff]
    %v3942 = vld [vmem:[#allocation22 + $0x140] sm:$0xff]
    %v3943 = vld [vmem:[#allocation22 + $0x148] sm:$0xff]
    %v3944 = vld [vmem:[#allocation22 + $0x150] sm:$0xff]
    %v3945 = vld [vmem:[#allocation22 + $0x158] sm:$0xff]
    %v3946 = vld [vmem:[#allocation22 + $0x160] sm:$0xff]
    %v3947 = vld [vmem:[#allocation22 + $0x168] sm:$0xff]
    %v3948 = vld [vmem:[#allocation22 + $0x170] sm:$0xff]
    %v3949 = vld [vmem:[#allocation22 + $0x178] sm:$0xff]
    %v3950 = vld [vmem:[%s37] sm:$0x3]
    %v3952 = vlaneseq
    %v3953 = vshrl.u32 %v3952, 7
    %v3954 = vsub.s32 0, %v3953
    %v3955 = vrot.slane %v3950, %v3954
    %v3956 = vlaneseq
    %v3957 = vshrl.u32 %v3956, 7
    %v3958 = vsub.s32 1, %v3957
    %v3959 = vrot.slane %v3950, %v3958
    %v4010 = vunpack.c.l.b16 %v3902
    %v4011 = vunpack.c.h.b16 %v3902
    %v4012 = vunpack.c.l.b16 %v3903
    %v4013 = vunpack.c.h.b16 %v3903
    %v4014 = vunpack.c.l.b16 %v3904
    %v4015 = vunpack.c.h.b16 %v3904
    %v4016 = vunpack.c.l.b16 %v3905
    %v4017 = vunpack.c.h.b16 %v3905
    %v4018 = vunpack.c.l.b16 %v3906
    %v4019 = vunpack.c.h.b16 %v3906
    %v4020 = vunpack.c.l.b16 %v3907
    %v4021 = vunpack.c.h.b16 %v3907
    %v4022 = vunpack.c.l.b16 %v3908
    %v4023 = vunpack.c.h.b16 %v3908
    %v4024 = vunpack.c.l.b16 %v3909
    %v4025 = vunpack.c.h.b16 %v3909
    %v4026 = vunpack.c.l.b16 %v3910
    %v4027 = vunpack.c.h.b16 %v3910
    %v4028 = vunpack.c.l.b16 %v3911
    %v4029 = vunpack.c.h.b16 %v3911
    %v4030 = vunpack.c.l.b16 %v3912
    %v4031 = vunpack.c.h.b16 %v3912
    %v4032 = vunpack.c.l.b16 %v3913
    %v4033 = vunpack.c.h.b16 %v3913
    %v4034 = vunpack.c.l.b16 %v3914
    %v4035 = vunpack.c.h.b16 %v3914
    %v4036 = vunpack.c.l.b16 %v3915
    %v4037 = vunpack.c.h.b16 %v3915
    %v4038 = vunpack.c.l.b16 %v3916
    %v4039 = vunpack.c.h.b16 %v3916
    %v4040 = vunpack.c.l.b16 %v3917
    %v4041 = vunpack.c.h.b16 %v3917
    %v4042 = vunpack.c.l.b16 %v3918
    %v4043 = vunpack.c.h.b16 %v3918
    %v4044 = vunpack.c.l.b16 %v3919
    %v4045 = vunpack.c.h.b16 %v3919
    %v4046 = vunpack.c.l.b16 %v3920
    %v4047 = vunpack.c.h.b16 %v3920
    %v4048 = vunpack.c.l.b16 %v3921
    %v4049 = vunpack.c.h.b16 %v3921
    %v4050 = vunpack.c.l.b16 %v3922
    %v4051 = vunpack.c.h.b16 %v3922
    %v4052 = vunpack.c.l.b16 %v3923
    %v4053 = vunpack.c.h.b16 %v3923
    %v4054 = vunpack.c.l.b16 %v3924
    %v4055 = vunpack.c.h.b16 %v3924
    %v4056 = vunpack.c.l.b16 %v3925
    %v4057 = vunpack.c.h.b16 %v3925
    %v4058 = vunpack.c.l.b16 %v3926
    %v4059 = vunpack.c.h.b16 %v3926
    %v4060 = vunpack.c.l.b16 %v3927
    %v4061 = vunpack.c.h.b16 %v3927
    %v4062 = vunpack.c.l.b16 %v3928
    %v4063 = vunpack.c.h.b16 %v3928
    %v4064 = vunpack.c.l.b16 %v3929
    %v4065 = vunpack.c.h.b16 %v3929
    %v4066 = vunpack.c.l.b16 %v3930
    %v4067 = vunpack.c.h.b16 %v3930
    %v4068 = vunpack.c.l.b16 %v3931
    %v4069 = vunpack.c.h.b16 %v3931
    %v4070 = vunpack.c.l.b16 %v3932
    %v4071 = vunpack.c.h.b16 %v3932
    %v4072 = vunpack.c.l.b16 %v3933
    %v4073 = vunpack.c.h.b16 %v3933
    %v4074 = vunpack.c.l.b16 %v3934
    %v4075 = vunpack.c.h.b16 %v3934
    %v4076 = vunpack.c.l.b16 %v3935
    %v4077 = vunpack.c.h.b16 %v3935
    %v4078 = vunpack.c.l.b16 %v3936
    %v4079 = vunpack.c.h.b16 %v3936
    %v4080 = vunpack.c.l.b16 %v3937
    %v4081 = vunpack.c.h.b16 %v3937
    %v4082 = vunpack.c.l.b16 %v3938
    %v4083 = vunpack.c.h.b16 %v3938
    %v4084 = vunpack.c.l.b16 %v3939
    %v4085 = vunpack.c.h.b16 %v3939
    %v4086 = vunpack.c.l.b16 %v3940
    %v4087 = vunpack.c.h.b16 %v3940
    %v4088 = vunpack.c.l.b16 %v3941
    %v4089 = vunpack.c.h.b16 %v3941
    %v4090 = vunpack.c.l.b16 %v3942
    %v4091 = vunpack.c.h.b16 %v3942
    %v4092 = vunpack.c.l.b16 %v3943
    %v4093 = vunpack.c.h.b16 %v3943
    %v4094 = vunpack.c.l.b16 %v3944
    %v4095 = vunpack.c.h.b16 %v3944
    %v4096 = vunpack.c.l.b16 %v3945
    %v4097 = vunpack.c.h.b16 %v3945
    %v4098 = vunpack.c.l.b16 %v3946
    %v4099 = vunpack.c.h.b16 %v3946
    %v4100 = vunpack.c.l.b16 %v3947
    %v4101 = vunpack.c.h.b16 %v3947
    %v4102 = vunpack.c.l.b16 %v3948
    %v4103 = vunpack.c.h.b16 %v3948
    %v4104 = vunpack.c.l.b16 %v3949
    %v4105 = vunpack.c.h.b16 %v3949
    %v4106 = vpack.c.b16 %v4012, %v4010
    %v4107 = vpack.c.b16 %v4013, %v4011
    %v4108 = vpack.c.b16 %v4016, %v4014
    %v4109 = vpack.c.b16 %v4017, %v4015
    %v4110 = vpack.c.b16 %v4020, %v4018
    %v4111 = vpack.c.b16 %v4021, %v4019
    %v4112 = vpack.c.b16 %v4024, %v4022
    %v4113 = vpack.c.b16 %v4025, %v4023
    %v4114 = vpack.c.b16 %v4028, %v4026
    %v4115 = vpack.c.b16 %v4029, %v4027
    %v4116 = vpack.c.b16 %v4032, %v4030
    %v4117 = vpack.c.b16 %v4033, %v4031
    %v4118 = vpack.c.b16 %v4036, %v4034
    %v4119 = vpack.c.b16 %v4037, %v4035
    %v4120 = vpack.c.b16 %v4040, %v4038
    %v4121 = vpack.c.b16 %v4041, %v4039
    %v4122 = vpack.c.b16 %v4044, %v4042
    %v4123 = vpack.c.b16 %v4045, %v4043
    %v4124 = vpack.c.b16 %v4048, %v4046
    %v4125 = vpack.c.b16 %v4049, %v4047
    %v4126 = vpack.c.b16 %v4052, %v4050
    %v4127 = vpack.c.b16 %v4053, %v4051
    %v4128 = vpack.c.b16 %v4056, %v4054
    %v4129 = vpack.c.b16 %v4057, %v4055
    %v4130 = vpack.c.b16 %v4060, %v4058
    %v4131 = vpack.c.b16 %v4061, %v4059
    %v4132 = vpack.c.b16 %v4064, %v4062
    %v4133 = vpack.c.b16 %v4065, %v4063
    %v4134 = vpack.c.b16 %v4068, %v4066
    %v4135 = vpack.c.b16 %v4069, %v4067
    %v4136 = vpack.c.b16 %v4072, %v4070
    %v4137 = vpack.c.b16 %v4073, %v4071
    %v4138 = vpack.c.b16 %v4076, %v4074
    %v4139 = vpack.c.b16 %v4077, %v4075
    %v4140 = vpack.c.b16 %v4080, %v4078
    %v4141 = vpack.c.b16 %v4081, %v4079
    %v4142 = vpack.c.b16 %v4084, %v4082
    %v4143 = vpack.c.b16 %v4085, %v4083
    %v4144 = vpack.c.b16 %v4088, %v4086
    %v4145 = vpack.c.b16 %v4089, %v4087
    %v4146 = vpack.c.b16 %v4092, %v4090
    %v4147 = vpack.c.b16 %v4093, %v4091
    %v4148 = vpack.c.b16 %v4096, %v4094
    %v4149 = vpack.c.b16 %v4097, %v4095
    %v4150 = vpack.c.b16 %v4100, %v4098
    %v4151 = vpack.c.b16 %v4101, %v4099
    %v4152 = vpack.c.b16 %v4104, %v4102
    %v4153 = vpack.c.b16 %v4105, %v4103
    %4202 = vmatprep.subr.bf16.mxu0 %v4121
    %4203 = vmatpush1.bf16.msra.mxu0 %v4120
    %4204 = vmatprep.subr.bf16.mxu0 %v4119
    %4205 = vmatpush1.bf16.msra.mxu0 %v4118
    %4206 = vmatprep.subr.bf16.mxu0 %v4117
    %4207 = vmatpush1.bf16.msra.mxu0 %v4116
    %4208 = vmatprep.subr.bf16.mxu0 %v4115
    %4209 = vmatpush1.bf16.msra.mxu0 %v4114
    %4210 = vmatprep.subr.bf16.mxu0 %v4113
    %4211 = vmatpush1.bf16.msra.mxu0 %v4112
    %4212 = vmatprep.subr.bf16.mxu0 %v4111
    %4213 = vmatpush1.bf16.msra.mxu0 %v4110
    %4214 = vmatprep.subr.bf16.mxu0 %v4109
    %4215 = vmatpush1.bf16.msra.mxu0 %v4108
    %4216 = vmatprep.subr.bf16.mxu0 %v4107
    %4217 = vmatpush1.bf16.msra.mxu0 %v4106
    %4218 = vmatprep.subr.bf16.mxu0 %v4137
    %4219 = vmatpush2.bf16.msra.mxu0 %v4136
    %4220 = vmatprep.subr.bf16.mxu0 %v4135
    %4221 = vmatpush2.bf16.msra.mxu0 %v4134
    %4222 = vmatprep.subr.bf16.mxu0 %v4133
    %4223 = vmatpush2.bf16.msra.mxu0 %v4132
    %4224 = vmatprep.subr.bf16.mxu0 %v4131
    %4225 = vmatpush2.bf16.msra.mxu0 %v4130
    %4226 = vmatprep.subr.bf16.mxu0 %v4129
    %4227 = vmatpush2.bf16.msra.mxu0 %v4128
    %4228 = vmatprep.subr.bf16.mxu0 %v4127
    %4229 = vmatpush2.bf16.msra.mxu0 %v4126
    %4230 = vmatprep.subr.bf16.mxu0 %v4125
    %4231 = vmatpush2.bf16.msra.mxu0 %v4124
    %4232 = vmatprep.subr.bf16.mxu0 %v4123
    %4233 = vmatpush2.bf16.msra.mxu0 %v4122
    %4234 = vmatprep.mubr.bf16.mxu0 %v3900
    %4235 = vmatmul.mubr.bf16.gmra.mxu0 %v3899
    %v4236 = vpop.f32.mrf.mxu0
    %v4237 = vadd.f32 %v3955, %v4236
    %v4238 = vpop.f32.mrf.mxu0
    %v4239 = vadd.f32 %v3959, %v4238
    %v4240 = vpop.f32.mrf.mxu0
    %v4241 = vadd.f32 %v3955, %v4240
    %v4242 = vpop.f32.mrf.mxu0
    %v4243 = vadd.f32 %v3959, %v4242
    %4244 = vdwg.mxu0
    %4245 = vmatprep.subr.bf16.mxu0 %v4153
    %4246 = vmatpush1.bf16.msra.mxu0 %v4152
    %4247 = vmatprep.subr.bf16.mxu0 %v4151
    %4248 = vmatpush1.bf16.msra.mxu0 %v4150
    %4249 = vmatprep.subr.bf16.mxu0 %v4149
    %4250 = vmatpush1.bf16.msra.mxu0 %v4148
    %4251 = vmatprep.subr.bf16.mxu0 %v4147
    %4252 = vmatpush1.bf16.msra.mxu0 %v4146
    %4253 = vmatprep.subr.bf16.mxu0 %v4145
    %4254 = vmatpush1.bf16.msra.mxu0 %v4144
    %4255 = vmatprep.subr.bf16.mxu0 %v4143
    %4256 = vmatpush1.bf16.msra.mxu0 %v4142
    %4257 = vmatprep.subr.bf16.mxu0 %v4141
    %4258 = vmatpush1.bf16.msra.mxu0 %v4140
    %4259 = vmatprep.subr.bf16.mxu0 %v4139
    %4260 = vmatpush1.bf16.msra.mxu0 %v4138
    %4261 = vmatprep.subr.bf16.mxu0 0
    %4262 = vmatpush2.bf16.msra.mxu0 0
    %4263 = vmatprep.subr.bf16.mxu0 0
    %4264 = vmatpush2.bf16.msra.mxu0 0
    %4265 = vmatprep.subr.bf16.mxu0 0
    %4266 = vmatpush2.bf16.msra.mxu0 0
    %4267 = vmatprep.subr.bf16.mxu0 0
    %4268 = vmatpush2.bf16.msra.mxu0 0
    %4269 = vmatprep.subr.bf16.mxu0 0
    %4270 = vmatpush2.bf16.msra.mxu0 0
    %4271 = vmatprep.subr.bf16.mxu0 0
    %4272 = vmatpush2.bf16.msra.mxu0 0
    %4273 = vmatprep.subr.bf16.mxu0 0
    %4274 = vmatpush2.bf16.msra.mxu0 0
    %4275 = vmatprep.subr.bf16.mxu0 0
    %4276 = vmatpush2.bf16.msra.mxu0 0
    %4277 = vmatprep.mubr.bf16.mxu0 0
    %4278 = vmatmul.mubr.bf16.gmra.mxu0 %v3901
    %v4279 = vpop.f32.mrf.mxu0
    %v4280 = vadd.f32 %v4237, %v4279
    %v4281 = vpop.f32.mrf.mxu0
    %v4282 = vadd.f32 %v4239, %v4281
    %v4283 = vpop.f32.mrf.mxu0
    %v4284 = vadd.f32 %v4241, %v4283
    %v4285 = vpop.f32.mrf.mxu0
    %v4286 = vadd.f32 %v4243, %v4285
    %4287 = vdwg.mxu0
    %v4288 = vmax.f32 %v4280, 0.0
    %v4289 = vmax.f32 %v4282, 0.0
    %v4290 = vmax.f32 %v4284, 0.0
    %v4291 = vmax.f32 %v4286, 0.0
    %v4292 = vrot.slane %v4288, 7
    %v4293 = vrot.slane %v4289, 7
    %v4294 = vrot.slane %v4290, 7
    %v4295 = vrot.slane %v4291, 7
    %v4296 = vsel %vm609, %v4292, %v4294
    %v4297 = vsel %vm609, %v4293, %v4295
    %v4298 = vsel %vm609, %v4294, %v4292
    %v4299 = vsel %vm609, %v4295, %v4293
    %v4300 = vmul.f32 %v4298, %v597
    %v4301 = vmul.f32 %v4299, %v597
    %v4302 = vmul.f32 %v4296, %v598
    %v4303 = vmul.f32 %v4297, %v598
    %v4304 = vrot.slane %v4288, 1
    %v4305 = vrot.slane %v4289, 1
    %v4306 = vrot.slane %v4290, 1
    %v4307 = vrot.slane %v4291, 1
    %v4308 = vsel %vm616, %v4304, %v4306
    %v4309 = vsel %vm616, %v4305, %v4307
    %v4310 = vsel %vm616, %v4306, %v4304
    %v4311 = vsel %vm616, %v4307, %v4305
    %v4312 = vmul.f32 %v4308, %v603
    %v4313 = vmul.f32 %v4309, %v603
    %v4314 = vmul.f32 %v4310, %v604
    %v4315 = vmul.f32 %v4311, %v604
    %v4316 = vpack.c.bf16 %v4302, %v4300
    %v4317 = vpack.c.bf16 %v4303, %v4301
    %v4318 = vpack.c.bf16 %v4290, %v4288
    %v4319 = vpack.c.bf16 %v4291, %v4289
    %v4320 = vpack.c.bf16 %v4314, %v4312
    %v4321 = vpack.c.bf16 %v4315, %v4313
    %v4322 = vld [vmem:[#allocation24] sm:$0xf]
    %v4323 = vld [vmem:[#allocation24 + $0x4] sm:$0xf]
    %v4324 = vld [vmem:[#allocation24 + $0x8] sm:$0xf]
    %v4325 = vld [vmem:[#allocation24 + $0xc] sm:$0xf]
    %v4326 = vld [vmem:[#allocation24 + $0x10] sm:$0xf]
    %v4327 = vld [vmem:[#allocation24 + $0x14] sm:$0xf]
    %v4328 = vld [vmem:[#allocation24 + $0x18] sm:$0xf]
    %v4329 = vld [vmem:[#allocation24 + $0x1c] sm:$0xf]
    %v4330 = vld [vmem:[#allocation24 + $0x20] sm:$0xf]
    %v4331 = vld [vmem:[#allocation24 + $0x24] sm:$0xf]
    %v4332 = vld [vmem:[#allocation24 + $0x28] sm:$0xf]
    %v4333 = vld [vmem:[#allocation24 + $0x2c] sm:$0xf]
    %v4334 = vld [vmem:[#allocation24 + $0x30] sm:$0xf]
    %v4335 = vld [vmem:[#allocation24 + $0x34] sm:$0xf]
    %v4336 = vld [vmem:[#allocation24 + $0x38] sm:$0xf]
    %v4337 = vld [vmem:[#allocation24 + $0x3c] sm:$0xf]
    %v4338 = vld [vmem:[#allocation24 + $0x40] sm:$0xf]
    %v4339 = vld [vmem:[#allocation24 + $0x44] sm:$0xf]
    %v4340 = vld [vmem:[#allocation24 + $0x48] sm:$0xf]
    %v4341 = vld [vmem:[#allocation24 + $0x4c] sm:$0xf]
    %v4342 = vld [vmem:[#allocation24 + $0x50] sm:$0xf]
    %v4343 = vld [vmem:[#allocation24 + $0x54] sm:$0xf]
    %v4344 = vld [vmem:[#allocation24 + $0x58] sm:$0xf]
    %v4345 = vld [vmem:[#allocation24 + $0x5c] sm:$0xf]
    %v4346 = vld [vmem:[#allocation24 + $0x60] sm:$0xf]
    %v4347 = vld [vmem:[#allocation24 + $0x64] sm:$0xf]
    %v4348 = vld [vmem:[#allocation24 + $0x68] sm:$0xf]
    %v4349 = vld [vmem:[#allocation24 + $0x6c] sm:$0xf]
    %v4350 = vld [vmem:[#allocation24 + $0x70] sm:$0xf]
    %v4351 = vld [vmem:[#allocation24 + $0x74] sm:$0xf]
    %v4352 = vld [vmem:[#allocation24 + $0x78] sm:$0xf]
    %v4353 = vld [vmem:[#allocation24 + $0x7c] sm:$0xf]
    %v4354 = vld [vmem:[#allocation24 + $0x80] sm:$0xf]
    %v4355 = vld [vmem:[#allocation24 + $0x84] sm:$0xf]
    %v4356 = vld [vmem:[#allocation24 + $0x88] sm:$0xf]
    %v4357 = vld [vmem:[#allocation24 + $0x8c] sm:$0xf]
    %v4358 = vld [vmem:[#allocation24 + $0x90] sm:$0xf]
    %v4359 = vld [vmem:[#allocation24 + $0x94] sm:$0xf]
    %v4360 = vld [vmem:[#allocation24 + $0x98] sm:$0xf]
    %v4361 = vld [vmem:[#allocation24 + $0x9c] sm:$0xf]
    %v4362 = vld [vmem:[#allocation24 + $0xa0] sm:$0xf]
    %v4363 = vld [vmem:[#allocation24 + $0xa4] sm:$0xf]
    %v4364 = vld [vmem:[#allocation24 + $0xa8] sm:$0xf]
    %v4365 = vld [vmem:[#allocation24 + $0xac] sm:$0xf]
    %v4366 = vld [vmem:[#allocation24 + $0xb0] sm:$0xf]
    %v4367 = vld [vmem:[#allocation24 + $0xb4] sm:$0xf]
    %v4368 = vld [vmem:[#allocation24 + $0xb8] sm:$0xf]
    %v4369 = vld [vmem:[#allocation24 + $0xbc] sm:$0xf]
    %v4370 = vld [vmem:[#allocation24 + $0xc0] sm:$0xf]
    %v4371 = vld [vmem:[#allocation24 + $0xc4] sm:$0xf]
    %v4372 = vld [vmem:[#allocation24 + $0xc8] sm:$0xf]
    %v4373 = vld [vmem:[#allocation24 + $0xcc] sm:$0xf]
    %v4374 = vld [vmem:[#allocation24 + $0xd0] sm:$0xf]
    %v4375 = vld [vmem:[#allocation24 + $0xd4] sm:$0xf]
    %v4376 = vld [vmem:[#allocation24 + $0xd8] sm:$0xf]
    %v4377 = vld [vmem:[#allocation24 + $0xdc] sm:$0xf]
    %v4378 = vld [vmem:[#allocation24 + $0xe0] sm:$0xf]
    %v4379 = vld [vmem:[#allocation24 + $0xe4] sm:$0xf]
    %v4380 = vld [vmem:[#allocation24 + $0xe8] sm:$0xf]
    %v4381 = vld [vmem:[#allocation24 + $0xec] sm:$0xf]
    %v4382 = vld [vmem:[#allocation24 + $0xf0] sm:$0xf]
    %v4383 = vld [vmem:[#allocation24 + $0xf4] sm:$0xf]
    %v4384 = vld [vmem:[#allocation24 + $0xf8] sm:$0xf]
    %v4385 = vld [vmem:[#allocation24 + $0xfc] sm:$0xf]
    %v4386 = vld [vmem:[#allocation24 + $0x100] sm:$0xf]
    %v4387 = vld [vmem:[#allocation24 + $0x104] sm:$0xf]
    %v4388 = vld [vmem:[#allocation24 + $0x108] sm:$0xf]
    %v4389 = vld [vmem:[#allocation24 + $0x10c] sm:$0xf]
    %v4390 = vld [vmem:[#allocation24 + $0x110] sm:$0xf]
    %v4391 = vld [vmem:[#allocation24 + $0x114] sm:$0xf]
    %v4392 = vld [vmem:[#allocation24 + $0x118] sm:$0xf]
    %v4393 = vld [vmem:[#allocation24 + $0x11c] sm:$0xf]
    %v4394 = vld [vmem:[#allocation24 + $0x120] sm:$0xf]
    %v4395 = vld [vmem:[#allocation24 + $0x124] sm:$0xf]
    %v4396 = vld [vmem:[#allocation24 + $0x128] sm:$0xf]
    %v4397 = vld [vmem:[#allocation24 + $0x12c] sm:$0xf]
    %v4398 = vld [vmem:[#allocation24 + $0x130] sm:$0xf]
    %v4399 = vld [vmem:[#allocation24 + $0x134] sm:$0xf]
    %v4400 = vld [vmem:[#allocation24 + $0x138] sm:$0xf]
    %v4401 = vld [vmem:[#allocation24 + $0x13c] sm:$0xf]
    %v4402 = vld [vmem:[#allocation24 + $0x140] sm:$0xf]
    %v4403 = vld [vmem:[#allocation24 + $0x144] sm:$0xf]
    %v4404 = vld [vmem:[#allocation24 + $0x148] sm:$0xf]
    %v4405 = vld [vmem:[#allocation24 + $0x14c] sm:$0xf]
    %v4406 = vld [vmem:[#allocation24 + $0x150] sm:$0xf]
    %v4407 = vld [vmem:[#allocation24 + $0x154] sm:$0xf]
    %v4408 = vld [vmem:[#allocation24 + $0x158] sm:$0xf]
    %v4409 = vld [vmem:[#allocation24 + $0x15c] sm:$0xf]
    %v4410 = vld [vmem:[#allocation24 + $0x160] sm:$0xf]
    %v4411 = vld [vmem:[#allocation24 + $0x164] sm:$0xf]
    %v4412 = vld [vmem:[#allocation24 + $0x168] sm:$0xf]
    %v4413 = vld [vmem:[#allocation24 + $0x16c] sm:$0xf]
    %v4414 = vld [vmem:[#allocation24 + $0x170] sm:$0xf]
    %v4415 = vld [vmem:[#allocation24 + $0x174] sm:$0xf]
    %v4416 = vld [vmem:[#allocation24 + $0x178] sm:$0xf]
    %v4417 = vld [vmem:[#allocation24 + $0x17c] sm:$0xf]
    %v4418 = vld [vmem:[#allocation25] sm:$0x1]
    %v4420 = vlaneseq
    %v4421 = vshrl.u32 %v4420, 7
    %v4422 = vsub.s32 0, %v4421
    %v4423 = vrot.slane %v4418, %v4422
    %v4521 = vunpack.c.l.b16 %v4322
    %v4522 = vunpack.c.l.b16 %v4323
    %v4523 = vunpack.c.l.b16 %v4324
    %v4524 = vunpack.c.l.b16 %v4325
    %v4525 = vunpack.c.l.b16 %v4326
    %v4526 = vunpack.c.l.b16 %v4327
    %v4527 = vunpack.c.l.b16 %v4328
    %v4528 = vunpack.c.l.b16 %v4329
    %v4529 = vunpack.c.l.b16 %v4330
    %v4530 = vunpack.c.l.b16 %v4331
    %v4531 = vunpack.c.l.b16 %v4332
    %v4532 = vunpack.c.l.b16 %v4333
    %v4533 = vunpack.c.l.b16 %v4334
    %v4534 = vunpack.c.l.b16 %v4335
    %v4535 = vunpack.c.l.b16 %v4336
    %v4536 = vunpack.c.l.b16 %v4337
    %v4537 = vunpack.c.l.b16 %v4338
    %v4538 = vunpack.c.l.b16 %v4339
    %v4539 = vunpack.c.l.b16 %v4340
    %v4540 = vunpack.c.l.b16 %v4341
    %v4541 = vunpack.c.l.b16 %v4342
    %v4542 = vunpack.c.l.b16 %v4343
    %v4543 = vunpack.c.l.b16 %v4344
    %v4544 = vunpack.c.l.b16 %v4345
    %v4545 = vunpack.c.l.b16 %v4346
    %v4546 = vunpack.c.l.b16 %v4347
    %v4547 = vunpack.c.l.b16 %v4348
    %v4548 = vunpack.c.l.b16 %v4349
    %v4549 = vunpack.c.l.b16 %v4350
    %v4550 = vunpack.c.l.b16 %v4351
    %v4551 = vunpack.c.l.b16 %v4352
    %v4552 = vunpack.c.l.b16 %v4353
    %v4553 = vunpack.c.l.b16 %v4354
    %v4554 = vunpack.c.l.b16 %v4355
    %v4555 = vunpack.c.l.b16 %v4356
    %v4556 = vunpack.c.l.b16 %v4357
    %v4557 = vunpack.c.l.b16 %v4358
    %v4558 = vunpack.c.l.b16 %v4359
    %v4559 = vunpack.c.l.b16 %v4360
    %v4560 = vunpack.c.l.b16 %v4361
    %v4561 = vunpack.c.l.b16 %v4362
    %v4562 = vunpack.c.l.b16 %v4363
    %v4563 = vunpack.c.l.b16 %v4364
    %v4564 = vunpack.c.l.b16 %v4365
    %v4565 = vunpack.c.l.b16 %v4366
    %v4566 = vunpack.c.l.b16 %v4367
    %v4567 = vunpack.c.l.b16 %v4368
    %v4568 = vunpack.c.l.b16 %v4369
    %v4569 = vunpack.c.l.b16 %v4370
    %v4570 = vunpack.c.l.b16 %v4371
    %v4571 = vunpack.c.l.b16 %v4372
    %v4572 = vunpack.c.l.b16 %v4373
    %v4573 = vunpack.c.l.b16 %v4374
    %v4574 = vunpack.c.l.b16 %v4375
    %v4575 = vunpack.c.l.b16 %v4376
    %v4576 = vunpack.c.l.b16 %v4377
    %v4577 = vunpack.c.l.b16 %v4378
    %v4578 = vunpack.c.l.b16 %v4379
    %v4579 = vunpack.c.l.b16 %v4380
    %v4580 = vunpack.c.l.b16 %v4381
    %v4581 = vunpack.c.l.b16 %v4382
    %v4582 = vunpack.c.l.b16 %v4383
    %v4583 = vunpack.c.l.b16 %v4384
    %v4584 = vunpack.c.l.b16 %v4385
    %v4585 = vunpack.c.l.b16 %v4386
    %v4586 = vunpack.c.l.b16 %v4387
    %v4587 = vunpack.c.l.b16 %v4388
    %v4588 = vunpack.c.l.b16 %v4389
    %v4589 = vunpack.c.l.b16 %v4390
    %v4590 = vunpack.c.l.b16 %v4391
    %v4591 = vunpack.c.l.b16 %v4392
    %v4592 = vunpack.c.l.b16 %v4393
    %v4593 = vunpack.c.l.b16 %v4394
    %v4594 = vunpack.c.l.b16 %v4395
    %v4595 = vunpack.c.l.b16 %v4396
    %v4596 = vunpack.c.l.b16 %v4397
    %v4597 = vunpack.c.l.b16 %v4398
    %v4598 = vunpack.c.l.b16 %v4399
    %v4599 = vunpack.c.l.b16 %v4400
    %v4600 = vunpack.c.l.b16 %v4401
    %v4601 = vunpack.c.l.b16 %v4402
    %v4602 = vunpack.c.l.b16 %v4403
    %v4603 = vunpack.c.l.b16 %v4404
    %v4604 = vunpack.c.l.b16 %v4405
    %v4605 = vunpack.c.l.b16 %v4406
    %v4606 = vunpack.c.l.b16 %v4407
    %v4607 = vunpack.c.l.b16 %v4408
    %v4608 = vunpack.c.l.b16 %v4409
    %v4609 = vunpack.c.l.b16 %v4410
    %v4610 = vunpack.c.l.b16 %v4411
    %v4611 = vunpack.c.l.b16 %v4412
    %v4612 = vunpack.c.l.b16 %v4413
    %v4613 = vunpack.c.l.b16 %v4414
    %v4614 = vunpack.c.l.b16 %v4415
    %v4615 = vunpack.c.l.b16 %v4416
    %v4616 = vunpack.c.l.b16 %v4417
    %v4617 = vpack.c.b16 %v4522, %v4521
    %v4618 = vpack.c.b16 %v4524, %v4523
    %v4619 = vpack.c.b16 %v4526, %v4525
    %v4620 = vpack.c.b16 %v4528, %v4527
    %v4621 = vpack.c.b16 %v4530, %v4529
    %v4622 = vpack.c.b16 %v4532, %v4531
    %v4623 = vpack.c.b16 %v4534, %v4533
    %v4624 = vpack.c.b16 %v4536, %v4535
    %v4625 = vpack.c.b16 %v4538, %v4537
    %v4626 = vpack.c.b16 %v4540, %v4539
    %v4627 = vpack.c.b16 %v4542, %v4541
    %v4628 = vpack.c.b16 %v4544, %v4543
    %v4629 = vpack.c.b16 %v4546, %v4545
    %v4630 = vpack.c.b16 %v4548, %v4547
    %v4631 = vpack.c.b16 %v4550, %v4549
    %v4632 = vpack.c.b16 %v4552, %v4551
    %v4633 = vpack.c.b16 %v4554, %v4553
    %v4634 = vpack.c.b16 %v4556, %v4555
    %v4635 = vpack.c.b16 %v4558, %v4557
    %v4636 = vpack.c.b16 %v4560, %v4559
    %v4637 = vpack.c.b16 %v4562, %v4561
    %v4638 = vpack.c.b16 %v4564, %v4563
    %v4639 = vpack.c.b16 %v4566, %v4565
    %v4640 = vpack.c.b16 %v4568, %v4567
    %v4641 = vpack.c.b16 %v4570, %v4569
    %v4642 = vpack.c.b16 %v4572, %v4571
    %v4643 = vpack.c.b16 %v4574, %v4573
    %v4644 = vpack.c.b16 %v4576, %v4575
    %v4645 = vpack.c.b16 %v4578, %v4577
    %v4646 = vpack.c.b16 %v4580, %v4579
    %v4647 = vpack.c.b16 %v4582, %v4581
    %v4648 = vpack.c.b16 %v4584, %v4583
    %v4649 = vpack.c.b16 %v4586, %v4585
    %v4650 = vpack.c.b16 %v4588, %v4587
    %v4651 = vpack.c.b16 %v4590, %v4589
    %v4652 = vpack.c.b16 %v4592, %v4591
    %v4653 = vpack.c.b16 %v4594, %v4593
    %v4654 = vpack.c.b16 %v4596, %v4595
    %v4655 = vpack.c.b16 %v4598, %v4597
    %v4656 = vpack.c.b16 %v4600, %v4599
    %v4657 = vpack.c.b16 %v4602, %v4601
    %v4658 = vpack.c.b16 %v4604, %v4603
    %v4659 = vpack.c.b16 %v4606, %v4605
    %v4660 = vpack.c.b16 %v4608, %v4607
    %v4661 = vpack.c.b16 %v4610, %v4609
    %v4662 = vpack.c.b16 %v4612, %v4611
    %v4663 = vpack.c.b16 %v4614, %v4613
    %v4664 = vpack.c.b16 %v4616, %v4615
    %4713 = vmatprep.subr.bf16.mxu0 0
    %4714 = vmatpush1.bf16.msra.mxu0 %v4624
    %4715 = vmatprep.subr.bf16.mxu0 0
    %4716 = vmatpush1.bf16.msra.mxu0 %v4623
    %4717 = vmatprep.subr.bf16.mxu0 0
    %4718 = vmatpush1.bf16.msra.mxu0 %v4622
    %4719 = vmatprep.subr.bf16.mxu0 0
    %4720 = vmatpush1.bf16.msra.mxu0 %v4621
    %4721 = vmatprep.subr.bf16.mxu0 0
    %4722 = vmatpush1.bf16.msra.mxu0 %v4620
    %4723 = vmatprep.subr.bf16.mxu0 0
    %4724 = vmatpush1.bf16.msra.mxu0 %v4619
    %4725 = vmatprep.subr.bf16.mxu0 0
    %4726 = vmatpush1.bf16.msra.mxu0 %v4618
    %4727 = vmatprep.subr.bf16.mxu0 0
    %4728 = vmatpush1.bf16.msra.mxu0 %v4617
    %4729 = vmatprep.subr.bf16.mxu0 0
    %4730 = vmatpush2.bf16.msra.mxu0 %v4632
    %4731 = vmatprep.subr.bf16.mxu0 0
    %4732 = vmatpush2.bf16.msra.mxu0 %v4631
    %4733 = vmatprep.subr.bf16.mxu0 0
    %4734 = vmatpush2.bf16.msra.mxu0 %v4630
    %4735 = vmatprep.subr.bf16.mxu0 0
    %4736 = vmatpush2.bf16.msra.mxu0 %v4629
    %4737 = vmatprep.subr.bf16.mxu0 0
    %4738 = vmatpush2.bf16.msra.mxu0 %v4628
    %4739 = vmatprep.subr.bf16.mxu0 0
    %4740 = vmatpush2.bf16.msra.mxu0 %v4627
    %4741 = vmatprep.subr.bf16.mxu0 0
    %4742 = vmatpush2.bf16.msra.mxu0 %v4626
    %4743 = vmatprep.subr.bf16.mxu0 0
    %4744 = vmatpush2.bf16.msra.mxu0 %v4625
    %4745 = vmatprep.mubr.bf16.mxu0 %v4317
    %4746 = vmatmul.mubr.bf16.gmra.mxu0 %v4316
    %v4747 = vpop.f32.mrf.mxu0
    %v4748 = vadd.f32 %v4423, %v4747
    %v4749 = vpop.f32.mrf.mxu0
    %v4750 = vpop.f32.mrf.mxu0
    %v4751 = vadd.f32 %v4423, %v4750
    %v4752 = vpop.f32.mrf.mxu0
    %4753 = vdwg.mxu0
    %4754 = vmatprep.subr.bf16.mxu0 0
    %4755 = vmatpush1.bf16.msra.mxu0 %v4640
    %4756 = vmatprep.subr.bf16.mxu0 0
    %4757 = vmatpush1.bf16.msra.mxu0 %v4639
    %4758 = vmatprep.subr.bf16.mxu0 0
    %4759 = vmatpush1.bf16.msra.mxu0 %v4638
    %4760 = vmatprep.subr.bf16.mxu0 0
    %4761 = vmatpush1.bf16.msra.mxu0 %v4637
    %4762 = vmatprep.subr.bf16.mxu0 0
    %4763 = vmatpush1.bf16.msra.mxu0 %v4636
    %4764 = vmatprep.subr.bf16.mxu0 0
    %4765 = vmatpush1.bf16.msra.mxu0 %v4635
    %4766 = vmatprep.subr.bf16.mxu0 0
    %4767 = vmatpush1.bf16.msra.mxu0 %v4634
    %4768 = vmatprep.subr.bf16.mxu0 0
    %4769 = vmatpush1.bf16.msra.mxu0 %v4633
    %4770 = vmatprep.subr.bf16.mxu0 0
    %4771 = vmatpush2.bf16.msra.mxu0 %v4648
    %4772 = vmatprep.subr.bf16.mxu0 0
    %4773 = vmatpush2.bf16.msra.mxu0 %v4647
    %4774 = vmatprep.subr.bf16.mxu0 0
    %4775 = vmatpush2.bf16.msra.mxu0 %v4646
    %4776 = vmatprep.subr.bf16.mxu0 0
    %4777 = vmatpush2.bf16.msra.mxu0 %v4645
    %4778 = vmatprep.subr.bf16.mxu0 0
    %4779 = vmatpush2.bf16.msra.mxu0 %v4644
    %4780 = vmatprep.subr.bf16.mxu0 0
    %4781 = vmatpush2.bf16.msra.mxu0 %v4643
    %4782 = vmatprep.subr.bf16.mxu0 0
    %4783 = vmatpush2.bf16.msra.mxu0 %v4642
    %4784 = vmatprep.subr.bf16.mxu0 0
    %4785 = vmatpush2.bf16.msra.mxu0 %v4641
    %4786 = vmatprep.mubr.bf16.mxu0 %v4319
    %4787 = vmatmul.mubr.bf16.gmra.mxu0 %v4318
    %v4788 = vpop.f32.mrf.mxu0
    %v4789 = vadd.f32 %v4748, %v4788
    %v4790 = vpop.f32.mrf.mxu0
    %v4791 = vpop.f32.mrf.mxu0
    %v4792 = vadd.f32 %v4751, %v4791
    %v4793 = vpop.f32.mrf.mxu0
    %4794 = vdwg.mxu0
    %4795 = vmatprep.subr.bf16.mxu0 0
    %4796 = vmatpush1.bf16.msra.mxu0 %v4656
    %4797 = vmatprep.subr.bf16.mxu0 0
    %4798 = vmatpush1.bf16.msra.mxu0 %v4655
    %4799 = vmatprep.subr.bf16.mxu0 0
    %4800 = vmatpush1.bf16.msra.mxu0 %v4654
    %4801 = vmatprep.subr.bf16.mxu0 0
    %4802 = vmatpush1.bf16.msra.mxu0 %v4653
    %4803 = vmatprep.subr.bf16.mxu0 0
    %4804 = vmatpush1.bf16.msra.mxu0 %v4652
    %4805 = vmatprep.subr.bf16.mxu0 0
    %4806 = vmatpush1.bf16.msra.mxu0 %v4651
    %4807 = vmatprep.subr.bf16.mxu0 0
    %4808 = vmatpush1.bf16.msra.mxu0 %v4650
    %4809 = vmatprep.subr.bf16.mxu0 0
    %4810 = vmatpush1.bf16.msra.mxu0 %v4649
    %4811 = vmatprep.subr.bf16.mxu0 0
    %4812 = vmatpush2.bf16.msra.mxu0 %v4664
    %4813 = vmatprep.subr.bf16.mxu0 0
    %4814 = vmatpush2.bf16.msra.mxu0 %v4663
    %4815 = vmatprep.subr.bf16.mxu0 0
    %4816 = vmatpush2.bf16.msra.mxu0 %v4662
    %4817 = vmatprep.subr.bf16.mxu0 0
    %4818 = vmatpush2.bf16.msra.mxu0 %v4661
    %4819 = vmatprep.subr.bf16.mxu0 0
    %4820 = vmatpush2.bf16.msra.mxu0 %v4660
    %4821 = vmatprep.subr.bf16.mxu0 0
    %4822 = vmatpush2.bf16.msra.mxu0 %v4659
    %4823 = vmatprep.subr.bf16.mxu0 0
    %4824 = vmatpush2.bf16.msra.mxu0 %v4658
    %4825 = vmatprep.subr.bf16.mxu0 0
    %4826 = vmatpush2.bf16.msra.mxu0 %v4657
    %4827 = vmatprep.mubr.bf16.mxu0 %v4321
    %4828 = vmatmul.mubr.bf16.gmra.mxu0 %v4320
    %v4829 = vpop.f32.mrf.mxu0
    %v4830 = vadd.f32 %v4789, %v4829
    %v4831 = vpop.f32.mrf.mxu0
    %v4832 = vpop.f32.mrf.mxu0
    %v4833 = vadd.f32 %v4792, %v4832
    %v4834 = vpop.f32.mrf.mxu0
    %4835 = vdwg.mxu0
    %v4836 = vmax.f32 %v4830, 0.0
    %v4837 = vmax.f32 %v4833, 0.0
    %v4838 = vsub.f32 %v4836, %v3885
    %v4839 = vsub.f32 %v4837, %v3886
    %v4840 = vrot.slane %v4838, 7
    %v4841 = vrot.slane %v4839, 7
    %v4842 = vsel %vm609, %v4840, %v4841
    %v4843 = vsel %vm609, %v4841, %v4840
    %v4844 = vmul.f32 %v4843, %v597
    %v4845 = vmul.f32 %v4842, %v598
    %v4846 = vrot.slane %v4838, 1
    %v4847 = vrot.slane %v4839, 1
    %v4848 = vsel %vm616, %v4846, %v4847
    %v4849 = vsel %vm616, %v4847, %v4846
    %v4850 = vmul.f32 %v4848, %v603
    %v4851 = vmul.f32 %v4849, %v604
    %v4852 = vpack.c.bf16 %v4845, %v4844
    %v4853 = vpack.c.bf16 %v4839, %v4838
    %v4854 = vpack.c.bf16 %v4851, %v4850
    %v4855 = vld [vmem:[#allocation27] sm:$0xff]
    %v4856 = vld [vmem:[#allocation27 + $0x8] sm:$0xff]
    %v4857 = vld [vmem:[#allocation27 + $0x10] sm:$0xff]
    %v4858 = vld [vmem:[#allocation27 + $0x18] sm:$0xff]
    %v4859 = vld [vmem:[#allocation27 + $0x20] sm:$0xff]
    %v4860 = vld [vmem:[#allocation27 + $0x28] sm:$0xff]
    %v4861 = vld [vmem:[#allocation27 + $0x30] sm:$0xff]
    %v4862 = vld [vmem:[#allocation27 + $0x38] sm:$0xff]
    %v4863 = vld [vmem:[#allocation27 + $0x40] sm:$0xff]
    %v4864 = vld [vmem:[#allocation27 + $0x48] sm:$0xff]
    %v4865 = vld [vmem:[#allocation27 + $0x50] sm:$0xff]
    %v4866 = vld [vmem:[#allocation27 + $0x58] sm:$0xff]
    %v4867 = vld [vmem:[#allocation27 + $0x60] sm:$0xff]
    %v4868 = vld [vmem:[#allocation27 + $0x68] sm:$0xff]
    %v4869 = vld [vmem:[#allocation27 + $0x70] sm:$0xff]
    %v4870 = vld [vmem:[#allocation27 + $0x78] sm:$0xff]
    %v4871 = vld [vmem:[#allocation27 + $0x80] sm:$0xff]
    %v4872 = vld [vmem:[#allocation27 + $0x88] sm:$0xff]
    %v4873 = vld [vmem:[#allocation27 + $0x90] sm:$0xff]
    %v4874 = vld [vmem:[#allocation27 + $0x98] sm:$0xff]
    %v4875 = vld [vmem:[#allocation27 + $0xa0] sm:$0xff]
    %v4876 = vld [vmem:[#allocation27 + $0xa8] sm:$0xff]
    %v4877 = vld [vmem:[#allocation27 + $0xb0] sm:$0xff]
    %v4878 = vld [vmem:[#allocation27 + $0xb8] sm:$0xff]
    %v4879 = vld [vmem:[#allocation27 + $0xc0] sm:$0xff]
    %v4880 = vld [vmem:[#allocation27 + $0xc8] sm:$0xff]
    %v4881 = vld [vmem:[#allocation27 + $0xd0] sm:$0xff]
    %v4882 = vld [vmem:[#allocation27 + $0xd8] sm:$0xff]
    %v4883 = vld [vmem:[#allocation27 + $0xe0] sm:$0xff]
    %v4884 = vld [vmem:[#allocation27 + $0xe8] sm:$0xff]
    %v4885 = vld [vmem:[#allocation27 + $0xf0] sm:$0xff]
    %v4886 = vld [vmem:[#allocation27 + $0xf8] sm:$0xff]
    %v4887 = vld [vmem:[#allocation27 + $0x100] sm:$0xff]
    %v4888 = vld [vmem:[#allocation27 + $0x108] sm:$0xff]
    %v4889 = vld [vmem:[#allocation27 + $0x110] sm:$0xff]
    %v4890 = vld [vmem:[#allocation27 + $0x118] sm:$0xff]
    %v4891 = vld [vmem:[#allocation27 + $0x120] sm:$0xff]
    %v4892 = vld [vmem:[#allocation27 + $0x128] sm:$0xff]
    %v4893 = vld [vmem:[#allocation27 + $0x130] sm:$0xff]
    %v4894 = vld [vmem:[#allocation27 + $0x138] sm:$0xff]
    %v4895 = vld [vmem:[#allocation27 + $0x140] sm:$0xff]
    %v4896 = vld [vmem:[#allocation27 + $0x148] sm:$0xff]
    %v4897 = vld [vmem:[#allocation27 + $0x150] sm:$0xff]
    %v4898 = vld [vmem:[#allocation27 + $0x158] sm:$0xff]
    %v4899 = vld [vmem:[#allocation27 + $0x160] sm:$0xff]
    %v4900 = vld [vmem:[#allocation27 + $0x168] sm:$0xff]
    %v4901 = vld [vmem:[#allocation27 + $0x170] sm:$0xff]
    %v4902 = vld [vmem:[#allocation27 + $0x178] sm:$0xff]
    %v4903 = vld [vmem:[%s45] sm:$0x3]
    %v4905 = vlaneseq
    %v4906 = vshrl.u32 %v4905, 7
    %v4907 = vsub.s32 0, %v4906
    %v4908 = vrot.slane %v4903, %v4907
    %v4909 = vlaneseq
    %v4910 = vshrl.u32 %v4909, 7
    %v4911 = vsub.s32 1, %v4910
    %v4912 = vrot.slane %v4903, %v4911
    %v4963 = vunpack.c.l.b16 %v4855
    %v4964 = vunpack.c.h.b16 %v4855
    %v4965 = vunpack.c.l.b16 %v4856
    %v4966 = vunpack.c.h.b16 %v4856
    %v4967 = vunpack.c.l.b16 %v4857
    %v4968 = vunpack.c.h.b16 %v4857
    %v4969 = vunpack.c.l.b16 %v4858
    %v4970 = vunpack.c.h.b16 %v4858
    %v4971 = vunpack.c.l.b16 %v4859
    %v4972 = vunpack.c.h.b16 %v4859
    %v4973 = vunpack.c.l.b16 %v4860
    %v4974 = vunpack.c.h.b16 %v4860
    %v4975 = vunpack.c.l.b16 %v4861
    %v4976 = vunpack.c.h.b16 %v4861
    %v4977 = vunpack.c.l.b16 %v4862
    %v4978 = vunpack.c.h.b16 %v4862
    %v4979 = vunpack.c.l.b16 %v4863
    %v4980 = vunpack.c.h.b16 %v4863
    %v4981 = vunpack.c.l.b16 %v4864
    %v4982 = vunpack.c.h.b16 %v4864
    %v4983 = vunpack.c.l.b16 %v4865
    %v4984 = vunpack.c.h.b16 %v4865
    %v4985 = vunpack.c.l.b16 %v4866
    %v4986 = vunpack.c.h.b16 %v4866
    %v4987 = vunpack.c.l.b16 %v4867
    %v4988 = vunpack.c.h.b16 %v4867
    %v4989 = vunpack.c.l.b16 %v4868
    %v4990 = vunpack.c.h.b16 %v4868
    %v4991 = vunpack.c.l.b16 %v4869
    %v4992 = vunpack.c.h.b16 %v4869
    %v4993 = vunpack.c.l.b16 %v4870
    %v4994 = vunpack.c.h.b16 %v4870
    %v4995 = vunpack.c.l.b16 %v4871
    %v4996 = vunpack.c.h.b16 %v4871
    %v4997 = vunpack.c.l.b16 %v4872
    %v4998 = vunpack.c.h.b16 %v4872
    %v4999 = vunpack.c.l.b16 %v4873
    %v5000 = vunpack.c.h.b16 %v4873
    %v5001 = vunpack.c.l.b16 %v4874
    %v5002 = vunpack.c.h.b16 %v4874
    %v5003 = vunpack.c.l.b16 %v4875
    %v5004 = vunpack.c.h.b16 %v4875
    %v5005 = vunpack.c.l.b16 %v4876
    %v5006 = vunpack.c.h.b16 %v4876
    %v5007 = vunpack.c.l.b16 %v4877
    %v5008 = vunpack.c.h.b16 %v4877
    %v5009 = vunpack.c.l.b16 %v4878
    %v5010 = vunpack.c.h.b16 %v4878
    %v5011 = vunpack.c.l.b16 %v4879
    %v5012 = vunpack.c.h.b16 %v4879
    %v5013 = vunpack.c.l.b16 %v4880
    %v5014 = vunpack.c.h.b16 %v4880
    %v5015 = vunpack.c.l.b16 %v4881
    %v5016 = vunpack.c.h.b16 %v4881
    %v5017 = vunpack.c.l.b16 %v4882
    %v5018 = vunpack.c.h.b16 %v4882
    %v5019 = vunpack.c.l.b16 %v4883
    %v5020 = vunpack.c.h.b16 %v4883
    %v5021 = vunpack.c.l.b16 %v4884
    %v5022 = vunpack.c.h.b16 %v4884
    %v5023 = vunpack.c.l.b16 %v4885
    %v5024 = vunpack.c.h.b16 %v4885
    %v5025 = vunpack.c.l.b16 %v4886
    %v5026 = vunpack.c.h.b16 %v4886
    %v5027 = vunpack.c.l.b16 %v4887
    %v5028 = vunpack.c.h.b16 %v4887
    %v5029 = vunpack.c.l.b16 %v4888
    %v5030 = vunpack.c.h.b16 %v4888
    %v5031 = vunpack.c.l.b16 %v4889
    %v5032 = vunpack.c.h.b16 %v4889
    %v5033 = vunpack.c.l.b16 %v4890
    %v5034 = vunpack.c.h.b16 %v4890
    %v5035 = vunpack.c.l.b16 %v4891
    %v5036 = vunpack.c.h.b16 %v4891
    %v5037 = vunpack.c.l.b16 %v4892
    %v5038 = vunpack.c.h.b16 %v4892
    %v5039 = vunpack.c.l.b16 %v4893
    %v5040 = vunpack.c.h.b16 %v4893
    %v5041 = vunpack.c.l.b16 %v4894
    %v5042 = vunpack.c.h.b16 %v4894
    %v5043 = vunpack.c.l.b16 %v4895
    %v5044 = vunpack.c.h.b16 %v4895
    %v5045 = vunpack.c.l.b16 %v4896
    %v5046 = vunpack.c.h.b16 %v4896
    %v5047 = vunpack.c.l.b16 %v4897
    %v5048 = vunpack.c.h.b16 %v4897
    %v5049 = vunpack.c.l.b16 %v4898
    %v5050 = vunpack.c.h.b16 %v4898
    %v5051 = vunpack.c.l.b16 %v4899
    %v5052 = vunpack.c.h.b16 %v4899
    %v5053 = vunpack.c.l.b16 %v4900
    %v5054 = vunpack.c.h.b16 %v4900
    %v5055 = vunpack.c.l.b16 %v4901
    %v5056 = vunpack.c.h.b16 %v4901
    %v5057 = vunpack.c.l.b16 %v4902
    %v5058 = vunpack.c.h.b16 %v4902
    %v5059 = vpack.c.b16 %v4965, %v4963
    %v5060 = vpack.c.b16 %v4966, %v4964
    %v5061 = vpack.c.b16 %v4969, %v4967
    %v5062 = vpack.c.b16 %v4970, %v4968
    %v5063 = vpack.c.b16 %v4973, %v4971
    %v5064 = vpack.c.b16 %v4974, %v4972
    %v5065 = vpack.c.b16 %v4977, %v4975
    %v5066 = vpack.c.b16 %v4978, %v4976
    %v5067 = vpack.c.b16 %v4981, %v4979
    %v5068 = vpack.c.b16 %v4982, %v4980
    %v5069 = vpack.c.b16 %v4985, %v4983
    %v5070 = vpack.c.b16 %v4986, %v4984
    %v5071 = vpack.c.b16 %v4989, %v4987
    %v5072 = vpack.c.b16 %v4990, %v4988
    %v5073 = vpack.c.b16 %v4993, %v4991
    %v5074 = vpack.c.b16 %v4994, %v4992
    %v5075 = vpack.c.b16 %v4997, %v4995
    %v5076 = vpack.c.b16 %v4998, %v4996
    %v5077 = vpack.c.b16 %v5001, %v4999
    %v5078 = vpack.c.b16 %v5002, %v5000
    %v5079 = vpack.c.b16 %v5005, %v5003
    %v5080 = vpack.c.b16 %v5006, %v5004
    %v5081 = vpack.c.b16 %v5009, %v5007
    %v5082 = vpack.c.b16 %v5010, %v5008
    %v5083 = vpack.c.b16 %v5013, %v5011
    %v5084 = vpack.c.b16 %v5014, %v5012
    %v5085 = vpack.c.b16 %v5017, %v5015
    %v5086 = vpack.c.b16 %v5018, %v5016
    %v5087 = vpack.c.b16 %v5021, %v5019
    %v5088 = vpack.c.b16 %v5022, %v5020
    %v5089 = vpack.c.b16 %v5025, %v5023
    %v5090 = vpack.c.b16 %v5026, %v5024
    %v5091 = vpack.c.b16 %v5029, %v5027
    %v5092 = vpack.c.b16 %v5030, %v5028
    %v5093 = vpack.c.b16 %v5033, %v5031
    %v5094 = vpack.c.b16 %v5034, %v5032
    %v5095 = vpack.c.b16 %v5037, %v5035
    %v5096 = vpack.c.b16 %v5038, %v5036
    %v5097 = vpack.c.b16 %v5041, %v5039
    %v5098 = vpack.c.b16 %v5042, %v5040
    %v5099 = vpack.c.b16 %v5045, %v5043
    %v5100 = vpack.c.b16 %v5046, %v5044
    %v5101 = vpack.c.b16 %v5049, %v5047
    %v5102 = vpack.c.b16 %v5050, %v5048
    %v5103 = vpack.c.b16 %v5053, %v5051
    %v5104 = vpack.c.b16 %v5054, %v5052
    %v5105 = vpack.c.b16 %v5057, %v5055
    %v5106 = vpack.c.b16 %v5058, %v5056
    %5155 = vmatprep.subr.bf16.mxu0 %v5074
    %5156 = vmatpush1.bf16.msra.mxu0 %v5073
    %5157 = vmatprep.subr.bf16.mxu0 %v5072
    %5158 = vmatpush1.bf16.msra.mxu0 %v5071
    %5159 = vmatprep.subr.bf16.mxu0 %v5070
    %5160 = vmatpush1.bf16.msra.mxu0 %v5069
    %5161 = vmatprep.subr.bf16.mxu0 %v5068
    %5162 = vmatpush1.bf16.msra.mxu0 %v5067
    %5163 = vmatprep.subr.bf16.mxu0 %v5066
    %5164 = vmatpush1.bf16.msra.mxu0 %v5065
    %5165 = vmatprep.subr.bf16.mxu0 %v5064
    %5166 = vmatpush1.bf16.msra.mxu0 %v5063
    %5167 = vmatprep.subr.bf16.mxu0 %v5062
    %5168 = vmatpush1.bf16.msra.mxu0 %v5061
    %5169 = vmatprep.subr.bf16.mxu0 %v5060
    %5170 = vmatpush1.bf16.msra.mxu0 %v5059
    %5171 = vmatprep.subr.bf16.mxu0 %v5090
    %5172 = vmatpush2.bf16.msra.mxu0 %v5089
    %5173 = vmatprep.subr.bf16.mxu0 %v5088
    %5174 = vmatpush2.bf16.msra.mxu0 %v5087
    %5175 = vmatprep.subr.bf16.mxu0 %v5086
    %5176 = vmatpush2.bf16.msra.mxu0 %v5085
    %5177 = vmatprep.subr.bf16.mxu0 %v5084
    %5178 = vmatpush2.bf16.msra.mxu0 %v5083
    %5179 = vmatprep.subr.bf16.mxu0 %v5082
    %5180 = vmatpush2.bf16.msra.mxu0 %v5081
    %5181 = vmatprep.subr.bf16.mxu0 %v5080
    %5182 = vmatpush2.bf16.msra.mxu0 %v5079
    %5183 = vmatprep.subr.bf16.mxu0 %v5078
    %5184 = vmatpush2.bf16.msra.mxu0 %v5077
    %5185 = vmatprep.subr.bf16.mxu0 %v5076
    %5186 = vmatpush2.bf16.msra.mxu0 %v5075
    %5187 = vmatprep.mubr.bf16.mxu0 %v4853
    %5188 = vmatmul.mubr.bf16.gmra.mxu0 %v4852
    %v5189 = vpop.f32.mrf.mxu0
    %v5190 = vadd.f32 %v4908, %v5189
    %v5191 = vpop.f32.mrf.mxu0
    %v5192 = vadd.f32 %v4912, %v5191
    %v5193 = vpop.f32.mrf.mxu0
    %v5194 = vadd.f32 %v4908, %v5193
    %v5195 = vpop.f32.mrf.mxu0
    %v5196 = vadd.f32 %v4912, %v5195
    %5197 = vdwg.mxu0
    %5198 = vmatprep.subr.bf16.mxu0 %v5106
    %5199 = vmatpush1.bf16.msra.mxu0 %v5105
    %5200 = vmatprep.subr.bf16.mxu0 %v5104
    %5201 = vmatpush1.bf16.msra.mxu0 %v5103
    %5202 = vmatprep.subr.bf16.mxu0 %v5102
    %5203 = vmatpush1.bf16.msra.mxu0 %v5101
    %5204 = vmatprep.subr.bf16.mxu0 %v5100
    %5205 = vmatpush1.bf16.msra.mxu0 %v5099
    %5206 = vmatprep.subr.bf16.mxu0 %v5098
    %5207 = vmatpush1.bf16.msra.mxu0 %v5097
    %5208 = vmatprep.subr.bf16.mxu0 %v5096
    %5209 = vmatpush1.bf16.msra.mxu0 %v5095
    %5210 = vmatprep.subr.bf16.mxu0 %v5094
    %5211 = vmatpush1.bf16.msra.mxu0 %v5093
    %5212 = vmatprep.subr.bf16.mxu0 %v5092
    %5213 = vmatpush1.bf16.msra.mxu0 %v5091
    %5214 = vmatprep.subr.bf16.mxu0 0
    %5215 = vmatpush2.bf16.msra.mxu0 0
    %5216 = vmatprep.subr.bf16.mxu0 0
    %5217 = vmatpush2.bf16.msra.mxu0 0
    %5218 = vmatprep.subr.bf16.mxu0 0
    %5219 = vmatpush2.bf16.msra.mxu0 0
    %5220 = vmatprep.subr.bf16.mxu0 0
    %5221 = vmatpush2.bf16.msra.mxu0 0
    %5222 = vmatprep.subr.bf16.mxu0 0
    %5223 = vmatpush2.bf16.msra.mxu0 0
    %5224 = vmatprep.subr.bf16.mxu0 0
    %5225 = vmatpush2.bf16.msra.mxu0 0
    %5226 = vmatprep.subr.bf16.mxu0 0
    %5227 = vmatpush2.bf16.msra.mxu0 0
    %5228 = vmatprep.subr.bf16.mxu0 0
    %5229 = vmatpush2.bf16.msra.mxu0 0
    %5230 = vmatprep.mubr.bf16.mxu0 0
    %5231 = vmatmul.mubr.bf16.gmra.mxu0 %v4854
    %v5232 = vpop.f32.mrf.mxu0
    %v5233 = vadd.f32 %v5190, %v5232
    %v5234 = vpop.f32.mrf.mxu0
    %v5235 = vadd.f32 %v5192, %v5234
    %v5236 = vpop.f32.mrf.mxu0
    %v5237 = vadd.f32 %v5194, %v5236
    %v5238 = vpop.f32.mrf.mxu0
    %v5239 = vadd.f32 %v5196, %v5238
    %5240 = vdwg.mxu0
    %v5241 = vmax.f32 %v5233, 0.0
    %v5242 = vmax.f32 %v5235, 0.0
    %v5243 = vmax.f32 %v5237, 0.0
    %v5244 = vmax.f32 %v5239, 0.0
    %v5245 = vadd.f32 %v4288, %v5241
    %v5246 = vadd.f32 %v4289, %v5242
    %v5247 = vadd.f32 %v4290, %v5243
    %v5248 = vadd.f32 %v4291, %v5244
    %v5249 = vrot.slane %v5245, 7
    %v5250 = vrot.slane %v5246, 7
    %v5251 = vrot.slane %v5247, 7
    %v5252 = vrot.slane %v5248, 7
    %v5253 = vsel %vm609, %v5249, %v5251
    %v5254 = vsel %vm609, %v5250, %v5252
    %v5255 = vsel %vm609, %v5251, %v5249
    %v5256 = vsel %vm609, %v5252, %v5250
    %v5257 = vmul.f32 %v5255, %v597
    %v5258 = vmul.f32 %v5256, %v597
    %v5259 = vmul.f32 %v5253, %v598
    %v5260 = vmul.f32 %v5254, %v598
    %v5261 = vrot.slane %v5245, 1
    %v5262 = vrot.slane %v5246, 1
    %v5263 = vrot.slane %v5247, 1
    %v5264 = vrot.slane %v5248, 1
    %v5265 = vsel %vm616, %v5261, %v5263
    %v5266 = vsel %vm616, %v5262, %v5264
    %v5267 = vsel %vm616, %v5263, %v5261
    %v5268 = vsel %vm616, %v5264, %v5262
    %v5269 = vmul.f32 %v5265, %v603
    %v5270 = vmul.f32 %v5266, %v603
    %v5271 = vmul.f32 %v5267, %v604
    %v5272 = vmul.f32 %v5268, %v604
    %v5273 = vpack.c.bf16 %v5259, %v5257
    %v5274 = vpack.c.bf16 %v5260, %v5258
    %v5275 = vpack.c.bf16 %v5247, %v5245
    %v5276 = vpack.c.bf16 %v5248, %v5246
    %v5277 = vpack.c.bf16 %v5271, %v5269
    %v5278 = vpack.c.bf16 %v5272, %v5270
    %v5279 = vld [vmem:[#allocation28] sm:$0xf]
    %v5280 = vld [vmem:[#allocation28 + $0x4] sm:$0xf]
    %v5281 = vld [vmem:[#allocation28 + $0x8] sm:$0xf]
    %v5282 = vld [vmem:[#allocation28 + $0xc] sm:$0xf]
    %v5283 = vld [vmem:[#allocation28 + $0x10] sm:$0xf]
    %v5284 = vld [vmem:[#allocation28 + $0x14] sm:$0xf]
    %v5285 = vld [vmem:[#allocation28 + $0x18] sm:$0xf]
    %v5286 = vld [vmem:[#allocation28 + $0x1c] sm:$0xf]
    %v5287 = vld [vmem:[#allocation28 + $0x20] sm:$0xf]
    %v5288 = vld [vmem:[#allocation28 + $0x24] sm:$0xf]
    %v5289 = vld [vmem:[#allocation28 + $0x28] sm:$0xf]
    %v5290 = vld [vmem:[#allocation28 + $0x2c] sm:$0xf]
    %v5291 = vld [vmem:[#allocation28 + $0x30] sm:$0xf]
    %v5292 = vld [vmem:[#allocation28 + $0x34] sm:$0xf]
    %v5293 = vld [vmem:[#allocation28 + $0x38] sm:$0xf]
    %v5294 = vld [vmem:[#allocation28 + $0x3c] sm:$0xf]
    %v5295 = vld [vmem:[#allocation28 + $0x40] sm:$0xf]
    %v5296 = vld [vmem:[#allocation28 + $0x44] sm:$0xf]
    %v5297 = vld [vmem:[#allocation28 + $0x48] sm:$0xf]
    %v5298 = vld [vmem:[#allocation28 + $0x4c] sm:$0xf]
    %v5299 = vld [vmem:[#allocation28 + $0x50] sm:$0xf]
    %v5300 = vld [vmem:[#allocation28 + $0x54] sm:$0xf]
    %v5301 = vld [vmem:[#allocation28 + $0x58] sm:$0xf]
    %v5302 = vld [vmem:[#allocation28 + $0x5c] sm:$0xf]
    %v5303 = vld [vmem:[#allocation28 + $0x60] sm:$0xf]
    %v5304 = vld [vmem:[#allocation28 + $0x64] sm:$0xf]
    %v5305 = vld [vmem:[#allocation28 + $0x68] sm:$0xf]
    %v5306 = vld [vmem:[#allocation28 + $0x6c] sm:$0xf]
    %v5307 = vld [vmem:[#allocation28 + $0x70] sm:$0xf]
    %v5308 = vld [vmem:[#allocation28 + $0x74] sm:$0xf]
    %v5309 = vld [vmem:[#allocation28 + $0x78] sm:$0xf]
    %v5310 = vld [vmem:[#allocation28 + $0x7c] sm:$0xf]
    %v5311 = vld [vmem:[#allocation28 + $0x80] sm:$0xf]
    %v5312 = vld [vmem:[#allocation28 + $0x84] sm:$0xf]
    %v5313 = vld [vmem:[#allocation28 + $0x88] sm:$0xf]
    %v5314 = vld [vmem:[#allocation28 + $0x8c] sm:$0xf]
    %v5315 = vld [vmem:[#allocation28 + $0x90] sm:$0xf]
    %v5316 = vld [vmem:[#allocation28 + $0x94] sm:$0xf]
    %v5317 = vld [vmem:[#allocation28 + $0x98] sm:$0xf]
    %v5318 = vld [vmem:[#allocation28 + $0x9c] sm:$0xf]
    %v5319 = vld [vmem:[#allocation28 + $0xa0] sm:$0xf]
    %v5320 = vld [vmem:[#allocation28 + $0xa4] sm:$0xf]
    %v5321 = vld [vmem:[#allocation28 + $0xa8] sm:$0xf]
    %v5322 = vld [vmem:[#allocation28 + $0xac] sm:$0xf]
    %v5323 = vld [vmem:[#allocation28 + $0xb0] sm:$0xf]
    %v5324 = vld [vmem:[#allocation28 + $0xb4] sm:$0xf]
    %v5325 = vld [vmem:[#allocation28 + $0xb8] sm:$0xf]
    %v5326 = vld [vmem:[#allocation28 + $0xbc] sm:$0xf]
    %v5327 = vld [vmem:[#allocation28 + $0xc0] sm:$0xf]
    %v5328 = vld [vmem:[#allocation28 + $0xc4] sm:$0xf]
    %v5329 = vld [vmem:[#allocation28 + $0xc8] sm:$0xf]
    %v5330 = vld [vmem:[#allocation28 + $0xcc] sm:$0xf]
    %v5331 = vld [vmem:[#allocation28 + $0xd0] sm:$0xf]
    %v5332 = vld [vmem:[#allocation28 + $0xd4] sm:$0xf]
    %v5333 = vld [vmem:[#allocation28 + $0xd8] sm:$0xf]
    %v5334 = vld [vmem:[#allocation28 + $0xdc] sm:$0xf]
    %v5335 = vld [vmem:[#allocation28 + $0xe0] sm:$0xf]
    %v5336 = vld [vmem:[#allocation28 + $0xe4] sm:$0xf]
    %v5337 = vld [vmem:[#allocation28 + $0xe8] sm:$0xf]
    %v5338 = vld [vmem:[#allocation28 + $0xec] sm:$0xf]
    %v5339 = vld [vmem:[#allocation28 + $0xf0] sm:$0xf]
    %v5340 = vld [vmem:[#allocation28 + $0xf4] sm:$0xf]
    %v5341 = vld [vmem:[#allocation28 + $0xf8] sm:$0xf]
    %v5342 = vld [vmem:[#allocation28 + $0xfc] sm:$0xf]
    %v5343 = vld [vmem:[#allocation28 + $0x100] sm:$0xf]
    %v5344 = vld [vmem:[#allocation28 + $0x104] sm:$0xf]
    %v5345 = vld [vmem:[#allocation28 + $0x108] sm:$0xf]
    %v5346 = vld [vmem:[#allocation28 + $0x10c] sm:$0xf]
    %v5347 = vld [vmem:[#allocation28 + $0x110] sm:$0xf]
    %v5348 = vld [vmem:[#allocation28 + $0x114] sm:$0xf]
    %v5349 = vld [vmem:[#allocation28 + $0x118] sm:$0xf]
    %v5350 = vld [vmem:[#allocation28 + $0x11c] sm:$0xf]
    %v5351 = vld [vmem:[#allocation28 + $0x120] sm:$0xf]
    %v5352 = vld [vmem:[#allocation28 + $0x124] sm:$0xf]
    %v5353 = vld [vmem:[#allocation28 + $0x128] sm:$0xf]
    %v5354 = vld [vmem:[#allocation28 + $0x12c] sm:$0xf]
    %v5355 = vld [vmem:[#allocation28 + $0x130] sm:$0xf]
    %v5356 = vld [vmem:[#allocation28 + $0x134] sm:$0xf]
    %v5357 = vld [vmem:[#allocation28 + $0x138] sm:$0xf]
    %v5358 = vld [vmem:[#allocation28 + $0x13c] sm:$0xf]
    %v5359 = vld [vmem:[#allocation28 + $0x140] sm:$0xf]
    %v5360 = vld [vmem:[#allocation28 + $0x144] sm:$0xf]
    %v5361 = vld [vmem:[#allocation28 + $0x148] sm:$0xf]
    %v5362 = vld [vmem:[#allocation28 + $0x14c] sm:$0xf]
    %v5363 = vld [vmem:[#allocation28 + $0x150] sm:$0xf]
    %v5364 = vld [vmem:[#allocation28 + $0x154] sm:$0xf]
    %v5365 = vld [vmem:[#allocation28 + $0x158] sm:$0xf]
    %v5366 = vld [vmem:[#allocation28 + $0x15c] sm:$0xf]
    %v5367 = vld [vmem:[#allocation28 + $0x160] sm:$0xf]
    %v5368 = vld [vmem:[#allocation28 + $0x164] sm:$0xf]
    %v5369 = vld [vmem:[#allocation28 + $0x168] sm:$0xf]
    %v5370 = vld [vmem:[#allocation28 + $0x16c] sm:$0xf]
    %v5371 = vld [vmem:[#allocation28 + $0x170] sm:$0xf]
    %v5372 = vld [vmem:[#allocation28 + $0x174] sm:$0xf]
    %v5373 = vld [vmem:[#allocation28 + $0x178] sm:$0xf]
    %v5374 = vld [vmem:[#allocation28 + $0x17c] sm:$0xf]
    %v5375 = vld [vmem:[#allocation30] sm:$0x1]
    %v5377 = vlaneseq
    %v5378 = vshrl.u32 %v5377, 7
    %v5379 = vsub.s32 0, %v5378
    %v5380 = vrot.slane %v5375, %v5379
    %v5478 = vunpack.c.l.b16 %v5279
    %v5479 = vunpack.c.l.b16 %v5280
    %v5480 = vunpack.c.l.b16 %v5281
    %v5481 = vunpack.c.l.b16 %v5282
    %v5482 = vunpack.c.l.b16 %v5283
    %v5483 = vunpack.c.l.b16 %v5284
    %v5484 = vunpack.c.l.b16 %v5285
    %v5485 = vunpack.c.l.b16 %v5286
    %v5486 = vunpack.c.l.b16 %v5287
    %v5487 = vunpack.c.l.b16 %v5288
    %v5488 = vunpack.c.l.b16 %v5289
    %v5489 = vunpack.c.l.b16 %v5290
    %v5490 = vunpack.c.l.b16 %v5291
    %v5491 = vunpack.c.l.b16 %v5292
    %v5492 = vunpack.c.l.b16 %v5293
    %v5493 = vunpack.c.l.b16 %v5294
    %v5494 = vunpack.c.l.b16 %v5295
    %v5495 = vunpack.c.l.b16 %v5296
    %v5496 = vunpack.c.l.b16 %v5297
    %v5497 = vunpack.c.l.b16 %v5298
    %v5498 = vunpack.c.l.b16 %v5299
    %v5499 = vunpack.c.l.b16 %v5300
    %v5500 = vunpack.c.l.b16 %v5301
    %v5501 = vunpack.c.l.b16 %v5302
    %v5502 = vunpack.c.l.b16 %v5303
    %v5503 = vunpack.c.l.b16 %v5304
    %v5504 = vunpack.c.l.b16 %v5305
    %v5505 = vunpack.c.l.b16 %v5306
    %v5506 = vunpack.c.l.b16 %v5307
    %v5507 = vunpack.c.l.b16 %v5308
    %v5508 = vunpack.c.l.b16 %v5309
    %v5509 = vunpack.c.l.b16 %v5310
    %v5510 = vunpack.c.l.b16 %v5311
    %v5511 = vunpack.c.l.b16 %v5312
    %v5512 = vunpack.c.l.b16 %v5313
    %v5513 = vunpack.c.l.b16 %v5314
    %v5514 = vunpack.c.l.b16 %v5315
    %v5515 = vunpack.c.l.b16 %v5316
    %v5516 = vunpack.c.l.b16 %v5317
    %v5517 = vunpack.c.l.b16 %v5318
    %v5518 = vunpack.c.l.b16 %v5319
    %v5519 = vunpack.c.l.b16 %v5320
    %v5520 = vunpack.c.l.b16 %v5321
    %v5521 = vunpack.c.l.b16 %v5322
    %v5522 = vunpack.c.l.b16 %v5323
    %v5523 = vunpack.c.l.b16 %v5324
    %v5524 = vunpack.c.l.b16 %v5325
    %v5525 = vunpack.c.l.b16 %v5326
    %v5526 = vunpack.c.l.b16 %v5327
    %v5527 = vunpack.c.l.b16 %v5328
    %v5528 = vunpack.c.l.b16 %v5329
    %v5529 = vunpack.c.l.b16 %v5330
    %v5530 = vunpack.c.l.b16 %v5331
    %v5531 = vunpack.c.l.b16 %v5332
    %v5532 = vunpack.c.l.b16 %v5333
    %v5533 = vunpack.c.l.b16 %v5334
    %v5534 = vunpack.c.l.b16 %v5335
    %v5535 = vunpack.c.l.b16 %v5336
    %v5536 = vunpack.c.l.b16 %v5337
    %v5537 = vunpack.c.l.b16 %v5338
    %v5538 = vunpack.c.l.b16 %v5339
    %v5539 = vunpack.c.l.b16 %v5340
    %v5540 = vunpack.c.l.b16 %v5341
    %v5541 = vunpack.c.l.b16 %v5342
    %v5542 = vunpack.c.l.b16 %v5343
    %v5543 = vunpack.c.l.b16 %v5344
    %v5544 = vunpack.c.l.b16 %v5345
    %v5545 = vunpack.c.l.b16 %v5346
    %v5546 = vunpack.c.l.b16 %v5347
    %v5547 = vunpack.c.l.b16 %v5348
    %v5548 = vunpack.c.l.b16 %v5349
    %v5549 = vunpack.c.l.b16 %v5350
    %v5550 = vunpack.c.l.b16 %v5351
    %v5551 = vunpack.c.l.b16 %v5352
    %v5552 = vunpack.c.l.b16 %v5353
    %v5553 = vunpack.c.l.b16 %v5354
    %v5554 = vunpack.c.l.b16 %v5355
    %v5555 = vunpack.c.l.b16 %v5356
    %v5556 = vunpack.c.l.b16 %v5357
    %v5557 = vunpack.c.l.b16 %v5358
    %v5558 = vunpack.c.l.b16 %v5359
    %v5559 = vunpack.c.l.b16 %v5360
    %v5560 = vunpack.c.l.b16 %v5361
    %v5561 = vunpack.c.l.b16 %v5362
    %v5562 = vunpack.c.l.b16 %v5363
    %v5563 = vunpack.c.l.b16 %v5364
    %v5564 = vunpack.c.l.b16 %v5365
    %v5565 = vunpack.c.l.b16 %v5366
    %v5566 = vunpack.c.l.b16 %v5367
    %v5567 = vunpack.c.l.b16 %v5368
    %v5568 = vunpack.c.l.b16 %v5369
    %v5569 = vunpack.c.l.b16 %v5370
    %v5570 = vunpack.c.l.b16 %v5371
    %v5571 = vunpack.c.l.b16 %v5372
    %v5572 = vunpack.c.l.b16 %v5373
    %v5573 = vunpack.c.l.b16 %v5374
    %v5574 = vpack.c.b16 %v5479, %v5478
    %v5575 = vpack.c.b16 %v5481, %v5480
    %v5576 = vpack.c.b16 %v5483, %v5482
    %v5577 = vpack.c.b16 %v5485, %v5484
    %v5578 = vpack.c.b16 %v5487, %v5486
    %v5579 = vpack.c.b16 %v5489, %v5488
    %v5580 = vpack.c.b16 %v5491, %v5490
    %v5581 = vpack.c.b16 %v5493, %v5492
    %v5582 = vpack.c.b16 %v5495, %v5494
    %v5583 = vpack.c.b16 %v5497, %v5496
    %v5584 = vpack.c.b16 %v5499, %v5498
    %v5585 = vpack.c.b16 %v5501, %v5500
    %v5586 = vpack.c.b16 %v5503, %v5502
    %v5587 = vpack.c.b16 %v5505, %v5504
    %v5588 = vpack.c.b16 %v5507, %v5506
    %v5589 = vpack.c.b16 %v5509, %v5508
    %v5590 = vpack.c.b16 %v5511, %v5510
    %v5591 = vpack.c.b16 %v5513, %v5512
    %v5592 = vpack.c.b16 %v5515, %v5514
    %v5593 = vpack.c.b16 %v5517, %v5516
    %v5594 = vpack.c.b16 %v5519, %v5518
    %v5595 = vpack.c.b16 %v5521, %v5520
    %v5596 = vpack.c.b16 %v5523, %v5522
    %v5597 = vpack.c.b16 %v5525, %v5524
    %v5598 = vpack.c.b16 %v5527, %v5526
    %v5599 = vpack.c.b16 %v5529, %v5528
    %v5600 = vpack.c.b16 %v5531, %v5530
    %v5601 = vpack.c.b16 %v5533, %v5532
    %v5602 = vpack.c.b16 %v5535, %v5534
    %v5603 = vpack.c.b16 %v5537, %v5536
    %v5604 = vpack.c.b16 %v5539, %v5538
    %v5605 = vpack.c.b16 %v5541, %v5540
    %v5606 = vpack.c.b16 %v5543, %v5542
    %v5607 = vpack.c.b16 %v5545, %v5544
    %v5608 = vpack.c.b16 %v5547, %v5546
    %v5609 = vpack.c.b16 %v5549, %v5548
    %v5610 = vpack.c.b16 %v5551, %v5550
    %v5611 = vpack.c.b16 %v5553, %v5552
    %v5612 = vpack.c.b16 %v5555, %v5554
    %v5613 = vpack.c.b16 %v5557, %v5556
    %v5614 = vpack.c.b16 %v5559, %v5558
    %v5615 = vpack.c.b16 %v5561, %v5560
    %v5616 = vpack.c.b16 %v5563, %v5562
    %v5617 = vpack.c.b16 %v5565, %v5564
    %v5618 = vpack.c.b16 %v5567, %v5566
    %v5619 = vpack.c.b16 %v5569, %v5568
    %v5620 = vpack.c.b16 %v5571, %v5570
    %v5621 = vpack.c.b16 %v5573, %v5572
    %5670 = vmatprep.subr.bf16.mxu0 0
    %5671 = vmatpush1.bf16.msra.mxu0 %v5581
    %5672 = vmatprep.subr.bf16.mxu0 0
    %5673 = vmatpush1.bf16.msra.mxu0 %v5580
    %5674 = vmatprep.subr.bf16.mxu0 0
    %5675 = vmatpush1.bf16.msra.mxu0 %v5579
    %5676 = vmatprep.subr.bf16.mxu0 0
    %5677 = vmatpush1.bf16.msra.mxu0 %v5578
    %5678 = vmatprep.subr.bf16.mxu0 0
    %5679 = vmatpush1.bf16.msra.mxu0 %v5577
    %5680 = vmatprep.subr.bf16.mxu0 0
    %5681 = vmatpush1.bf16.msra.mxu0 %v5576
    %5682 = vmatprep.subr.bf16.mxu0 0
    %5683 = vmatpush1.bf16.msra.mxu0 %v5575
    %5684 = vmatprep.subr.bf16.mxu0 0
    %5685 = vmatpush1.bf16.msra.mxu0 %v5574
    %5686 = vmatprep.subr.bf16.mxu0 0
    %5687 = vmatpush2.bf16.msra.mxu0 %v5589
    %5688 = vmatprep.subr.bf16.mxu0 0
    %5689 = vmatpush2.bf16.msra.mxu0 %v5588
    %5690 = vmatprep.subr.bf16.mxu0 0
    %5691 = vmatpush2.bf16.msra.mxu0 %v5587
    %5692 = vmatprep.subr.bf16.mxu0 0
    %5693 = vmatpush2.bf16.msra.mxu0 %v5586
    %5694 = vmatprep.subr.bf16.mxu0 0
    %5695 = vmatpush2.bf16.msra.mxu0 %v5585
    %5696 = vmatprep.subr.bf16.mxu0 0
    %5697 = vmatpush2.bf16.msra.mxu0 %v5584
    %5698 = vmatprep.subr.bf16.mxu0 0
    %5699 = vmatpush2.bf16.msra.mxu0 %v5583
    %5700 = vmatprep.subr.bf16.mxu0 0
    %5701 = vmatpush2.bf16.msra.mxu0 %v5582
    %5702 = vmatprep.mubr.bf16.mxu0 %v5274
    %5703 = vmatmul.mubr.bf16.gmra.mxu0 %v5273
    %v5704 = vpop.f32.mrf.mxu0
    %v5705 = vadd.f32 %v5380, %v5704
    %v5706 = vpop.f32.mrf.mxu0
    %v5707 = vpop.f32.mrf.mxu0
    %v5708 = vadd.f32 %v5380, %v5707
    %v5709 = vpop.f32.mrf.mxu0
    %5710 = vdwg.mxu0
    %5711 = vmatprep.subr.bf16.mxu0 0
    %5712 = vmatpush1.bf16.msra.mxu0 %v5597
    %5713 = vmatprep.subr.bf16.mxu0 0
    %5714 = vmatpush1.bf16.msra.mxu0 %v5596
    %5715 = vmatprep.subr.bf16.mxu0 0
    %5716 = vmatpush1.bf16.msra.mxu0 %v5595
    %5717 = vmatprep.subr.bf16.mxu0 0
    %5718 = vmatpush1.bf16.msra.mxu0 %v5594
    %5719 = vmatprep.subr.bf16.mxu0 0
    %5720 = vmatpush1.bf16.msra.mxu0 %v5593
    %5721 = vmatprep.subr.bf16.mxu0 0
    %5722 = vmatpush1.bf16.msra.mxu0 %v5592
    %5723 = vmatprep.subr.bf16.mxu0 0
    %5724 = vmatpush1.bf16.msra.mxu0 %v5591
    %5725 = vmatprep.subr.bf16.mxu0 0
    %5726 = vmatpush1.bf16.msra.mxu0 %v5590
    %5727 = vmatprep.subr.bf16.mxu0 0
    %5728 = vmatpush2.bf16.msra.mxu0 %v5605
    %5729 = vmatprep.subr.bf16.mxu0 0
    %5730 = vmatpush2.bf16.msra.mxu0 %v5604
    %5731 = vmatprep.subr.bf16.mxu0 0
    %5732 = vmatpush2.bf16.msra.mxu0 %v5603
    %5733 = vmatprep.subr.bf16.mxu0 0
    %5734 = vmatpush2.bf16.msra.mxu0 %v5602
    %5735 = vmatprep.subr.bf16.mxu0 0
    %5736 = vmatpush2.bf16.msra.mxu0 %v5601
    %5737 = vmatprep.subr.bf16.mxu0 0
    %5738 = vmatpush2.bf16.msra.mxu0 %v5600
    %5739 = vmatprep.subr.bf16.mxu0 0
    %5740 = vmatpush2.bf16.msra.mxu0 %v5599
    %5741 = vmatprep.subr.bf16.mxu0 0
    %5742 = vmatpush2.bf16.msra.mxu0 %v5598
    %5743 = vmatprep.mubr.bf16.mxu0 %v5276
    %5744 = vmatmul.mubr.bf16.gmra.mxu0 %v5275
    %v5745 = vpop.f32.mrf.mxu0
    %v5746 = vadd.f32 %v5705, %v5745
    %v5747 = vpop.f32.mrf.mxu0
    %v5748 = vpop.f32.mrf.mxu0
    %v5749 = vadd.f32 %v5708, %v5748
    %v5750 = vpop.f32.mrf.mxu0
    %5751 = vdwg.mxu0
    %5752 = vmatprep.subr.bf16.mxu0 0
    %5753 = vmatpush1.bf16.msra.mxu0 %v5613
    %5754 = vmatprep.subr.bf16.mxu0 0
    %5755 = vmatpush1.bf16.msra.mxu0 %v5612
    %5756 = vmatprep.subr.bf16.mxu0 0
    %5757 = vmatpush1.bf16.msra.mxu0 %v5611
    %5758 = vmatprep.subr.bf16.mxu0 0
    %5759 = vmatpush1.bf16.msra.mxu0 %v5610
    %5760 = vmatprep.subr.bf16.mxu0 0
    %5761 = vmatpush1.bf16.msra.mxu0 %v5609
    %5762 = vmatprep.subr.bf16.mxu0 0
    %5763 = vmatpush1.bf16.msra.mxu0 %v5608
    %5764 = vmatprep.subr.bf16.mxu0 0
    %5765 = vmatpush1.bf16.msra.mxu0 %v5607
    %5766 = vmatprep.subr.bf16.mxu0 0
    %5767 = vmatpush1.bf16.msra.mxu0 %v5606
    %5768 = vmatprep.subr.bf16.mxu0 0
    %5769 = vmatpush2.bf16.msra.mxu0 %v5621
    %5770 = vmatprep.subr.bf16.mxu0 0
    %5771 = vmatpush2.bf16.msra.mxu0 %v5620
    %5772 = vmatprep.subr.bf16.mxu0 0
    %5773 = vmatpush2.bf16.msra.mxu0 %v5619
    %5774 = vmatprep.subr.bf16.mxu0 0
    %5775 = vmatpush2.bf16.msra.mxu0 %v5618
    %5776 = vmatprep.subr.bf16.mxu0 0
    %5777 = vmatpush2.bf16.msra.mxu0 %v5617
    %5778 = vmatprep.subr.bf16.mxu0 0
    %5779 = vmatpush2.bf16.msra.mxu0 %v5616
    %5780 = vmatprep.subr.bf16.mxu0 0
    %5781 = vmatpush2.bf16.msra.mxu0 %v5615
    %5782 = vmatprep.subr.bf16.mxu0 0
    %5783 = vmatpush2.bf16.msra.mxu0 %v5614
    %5784 = vmatprep.mubr.bf16.mxu0 %v5278
    %5785 = vmatmul.mubr.bf16.gmra.mxu0 %v5277
    %v5786 = vpop.f32.mrf.mxu0
    %v5787 = vadd.f32 %v5746, %v5786
    %v5788 = vpop.f32.mrf.mxu0
    %v5789 = vpop.f32.mrf.mxu0
    %v5790 = vadd.f32 %v5749, %v5789
    %v5791 = vpop.f32.mrf.mxu0
    %5792 = vdwg.mxu0
    %v5793 = vmax.f32 %v5787, 0.0
    %v5794 = vmax.f32 %v5790, 0.0
    %v5795 = vrot.slane %v5793, 7
    %v5796 = vrot.slane %v5794, 7
    %v5797 = vsel %vm609, %v5795, %v5796
    %v5798 = vsel %vm609, %v5796, %v5795
    %v5799 = vmul.f32 %v5798, %v597
    %v5800 = vmul.f32 %v5797, %v598
    %v5801 = vrot.slane %v5793, 1
    %v5802 = vrot.slane %v5794, 1
    %v5803 = vsel %vm616, %v5801, %v5802
    %v5804 = vsel %vm616, %v5802, %v5801
    %v5805 = vmul.f32 %v5803, %v603
    %v5806 = vmul.f32 %v5804, %v604
    %v5807 = vpack.c.bf16 %v5800, %v5799
    %v5808 = vpack.c.bf16 %v5794, %v5793
    %v5809 = vpack.c.bf16 %v5806, %v5805
    %v5810 = vld [vmem:[#allocation31] sm:$0xff]
    %v5811 = vld [vmem:[#allocation31 + $0x8] sm:$0xff]
    %v5812 = vld [vmem:[#allocation31 + $0x10] sm:$0xff]
    %v5813 = vld [vmem:[#allocation31 + $0x18] sm:$0xff]
    %v5814 = vld [vmem:[#allocation31 + $0x20] sm:$0xff]
    %v5815 = vld [vmem:[#allocation31 + $0x28] sm:$0xff]
    %v5816 = vld [vmem:[#allocation31 + $0x30] sm:$0xff]
    %v5817 = vld [vmem:[#allocation31 + $0x38] sm:$0xff]
    %v5818 = vld [vmem:[#allocation31 + $0x40] sm:$0xff]
    %v5819 = vld [vmem:[#allocation31 + $0x48] sm:$0xff]
    %v5820 = vld [vmem:[#allocation31 + $0x50] sm:$0xff]
    %v5821 = vld [vmem:[#allocation31 + $0x58] sm:$0xff]
    %v5822 = vld [vmem:[#allocation31 + $0x60] sm:$0xff]
    %v5823 = vld [vmem:[#allocation31 + $0x68] sm:$0xff]
    %v5824 = vld [vmem:[#allocation31 + $0x70] sm:$0xff]
    %v5825 = vld [vmem:[#allocation31 + $0x78] sm:$0xff]
    %v5826 = vld [vmem:[#allocation31 + $0x80] sm:$0xff]
    %v5827 = vld [vmem:[#allocation31 + $0x88] sm:$0xff]
    %v5828 = vld [vmem:[#allocation31 + $0x90] sm:$0xff]
    %v5829 = vld [vmem:[#allocation31 + $0x98] sm:$0xff]
    %v5830 = vld [vmem:[#allocation31 + $0xa0] sm:$0xff]
    %v5831 = vld [vmem:[#allocation31 + $0xa8] sm:$0xff]
    %v5832 = vld [vmem:[#allocation31 + $0xb0] sm:$0xff]
    %v5833 = vld [vmem:[#allocation31 + $0xb8] sm:$0xff]
    %v5834 = vld [vmem:[#allocation31 + $0xc0] sm:$0xff]
    %v5835 = vld [vmem:[#allocation31 + $0xc8] sm:$0xff]
    %v5836 = vld [vmem:[#allocation31 + $0xd0] sm:$0xff]
    %v5837 = vld [vmem:[#allocation31 + $0xd8] sm:$0xff]
    %v5838 = vld [vmem:[#allocation31 + $0xe0] sm:$0xff]
    %v5839 = vld [vmem:[#allocation31 + $0xe8] sm:$0xff]
    %v5840 = vld [vmem:[#allocation31 + $0xf0] sm:$0xff]
    %v5841 = vld [vmem:[#allocation31 + $0xf8] sm:$0xff]
    %v5842 = vld [vmem:[#allocation31 + $0x100] sm:$0xff]
    %v5843 = vld [vmem:[#allocation31 + $0x108] sm:$0xff]
    %v5844 = vld [vmem:[#allocation31 + $0x110] sm:$0xff]
    %v5845 = vld [vmem:[#allocation31 + $0x118] sm:$0xff]
    %v5846 = vld [vmem:[#allocation31 + $0x120] sm:$0xff]
    %v5847 = vld [vmem:[#allocation31 + $0x128] sm:$0xff]
    %v5848 = vld [vmem:[#allocation31 + $0x130] sm:$0xff]
    %v5849 = vld [vmem:[#allocation31 + $0x138] sm:$0xff]
    %v5850 = vld [vmem:[#allocation31 + $0x140] sm:$0xff]
    %v5851 = vld [vmem:[#allocation31 + $0x148] sm:$0xff]
    %v5852 = vld [vmem:[#allocation31 + $0x150] sm:$0xff]
    %v5853 = vld [vmem:[#allocation31 + $0x158] sm:$0xff]
    %v5854 = vld [vmem:[#allocation31 + $0x160] sm:$0xff]
    %v5855 = vld [vmem:[#allocation31 + $0x168] sm:$0xff]
    %v5856 = vld [vmem:[#allocation31 + $0x170] sm:$0xff]
    %v5857 = vld [vmem:[#allocation31 + $0x178] sm:$0xff]
    %v5858 = vld [vmem:[#allocation33] sm:$0x3]
    %v5860 = vlaneseq
    %v5861 = vshrl.u32 %v5860, 7
    %v5862 = vsub.s32 0, %v5861
    %v5863 = vrot.slane %v5858, %v5862
    %v5864 = vlaneseq
    %v5865 = vshrl.u32 %v5864, 7
    %v5866 = vsub.s32 1, %v5865
    %v5867 = vrot.slane %v5858, %v5866
    %v5918 = vunpack.c.l.b16 %v5810
    %v5919 = vunpack.c.h.b16 %v5810
    %v5920 = vunpack.c.l.b16 %v5811
    %v5921 = vunpack.c.h.b16 %v5811
    %v5922 = vunpack.c.l.b16 %v5812
    %v5923 = vunpack.c.h.b16 %v5812
    %v5924 = vunpack.c.l.b16 %v5813
    %v5925 = vunpack.c.h.b16 %v5813
    %v5926 = vunpack.c.l.b16 %v5814
    %v5927 = vunpack.c.h.b16 %v5814
    %v5928 = vunpack.c.l.b16 %v5815
    %v5929 = vunpack.c.h.b16 %v5815
    %v5930 = vunpack.c.l.b16 %v5816
    %v5931 = vunpack.c.h.b16 %v5816
    %v5932 = vunpack.c.l.b16 %v5817
    %v5933 = vunpack.c.h.b16 %v5817
    %v5934 = vunpack.c.l.b16 %v5818
    %v5935 = vunpack.c.h.b16 %v5818
    %v5936 = vunpack.c.l.b16 %v5819
    %v5937 = vunpack.c.h.b16 %v5819
    %v5938 = vunpack.c.l.b16 %v5820
    %v5939 = vunpack.c.h.b16 %v5820
    %v5940 = vunpack.c.l.b16 %v5821
    %v5941 = vunpack.c.h.b16 %v5821
    %v5942 = vunpack.c.l.b16 %v5822
    %v5943 = vunpack.c.h.b16 %v5822
    %v5944 = vunpack.c.l.b16 %v5823
    %v5945 = vunpack.c.h.b16 %v5823
    %v5946 = vunpack.c.l.b16 %v5824
    %v5947 = vunpack.c.h.b16 %v5824
    %v5948 = vunpack.c.l.b16 %v5825
    %v5949 = vunpack.c.h.b16 %v5825
    %v5950 = vunpack.c.l.b16 %v5826
    %v5951 = vunpack.c.h.b16 %v5826
    %v5952 = vunpack.c.l.b16 %v5827
    %v5953 = vunpack.c.h.b16 %v5827
    %v5954 = vunpack.c.l.b16 %v5828
    %v5955 = vunpack.c.h.b16 %v5828
    %v5956 = vunpack.c.l.b16 %v5829
    %v5957 = vunpack.c.h.b16 %v5829
    %v5958 = vunpack.c.l.b16 %v5830
    %v5959 = vunpack.c.h.b16 %v5830
    %v5960 = vunpack.c.l.b16 %v5831
    %v5961 = vunpack.c.h.b16 %v5831
    %v5962 = vunpack.c.l.b16 %v5832
    %v5963 = vunpack.c.h.b16 %v5832
    %v5964 = vunpack.c.l.b16 %v5833
    %v5965 = vunpack.c.h.b16 %v5833
    %v5966 = vunpack.c.l.b16 %v5834
    %v5967 = vunpack.c.h.b16 %v5834
    %v5968 = vunpack.c.l.b16 %v5835
    %v5969 = vunpack.c.h.b16 %v5835
    %v5970 = vunpack.c.l.b16 %v5836
    %v5971 = vunpack.c.h.b16 %v5836
    %v5972 = vunpack.c.l.b16 %v5837
    %v5973 = vunpack.c.h.b16 %v5837
    %v5974 = vunpack.c.l.b16 %v5838
    %v5975 = vunpack.c.h.b16 %v5838
    %v5976 = vunpack.c.l.b16 %v5839
    %v5977 = vunpack.c.h.b16 %v5839
    %v5978 = vunpack.c.l.b16 %v5840
    %v5979 = vunpack.c.h.b16 %v5840
    %v5980 = vunpack.c.l.b16 %v5841
    %v5981 = vunpack.c.h.b16 %v5841
    %v5982 = vunpack.c.l.b16 %v5842
    %v5983 = vunpack.c.h.b16 %v5842
    %v5984 = vunpack.c.l.b16 %v5843
    %v5985 = vunpack.c.h.b16 %v5843
    %v5986 = vunpack.c.l.b16 %v5844
    %v5987 = vunpack.c.h.b16 %v5844
    %v5988 = vunpack.c.l.b16 %v5845
    %v5989 = vunpack.c.h.b16 %v5845
    %v5990 = vunpack.c.l.b16 %v5846
    %v5991 = vunpack.c.h.b16 %v5846
    %v5992 = vunpack.c.l.b16 %v5847
    %v5993 = vunpack.c.h.b16 %v5847
    %v5994 = vunpack.c.l.b16 %v5848
    %v5995 = vunpack.c.h.b16 %v5848
    %v5996 = vunpack.c.l.b16 %v5849
    %v5997 = vunpack.c.h.b16 %v5849
    %v5998 = vunpack.c.l.b16 %v5850
    %v5999 = vunpack.c.h.b16 %v5850
    %v6000 = vunpack.c.l.b16 %v5851
    %v6001 = vunpack.c.h.b16 %v5851
    %v6002 = vunpack.c.l.b16 %v5852
    %v6003 = vunpack.c.h.b16 %v5852
    %v6004 = vunpack.c.l.b16 %v5853
    %v6005 = vunpack.c.h.b16 %v5853
    %v6006 = vunpack.c.l.b16 %v5854
    %v6007 = vunpack.c.h.b16 %v5854
    %v6008 = vunpack.c.l.b16 %v5855
    %v6009 = vunpack.c.h.b16 %v5855
    %v6010 = vunpack.c.l.b16 %v5856
    %v6011 = vunpack.c.h.b16 %v5856
    %v6012 = vunpack.c.l.b16 %v5857
    %v6013 = vunpack.c.h.b16 %v5857
    %v6014 = vpack.c.b16 %v5920, %v5918
    %v6015 = vpack.c.b16 %v5921, %v5919
    %v6016 = vpack.c.b16 %v5924, %v5922
    %v6017 = vpack.c.b16 %v5925, %v5923
    %v6018 = vpack.c.b16 %v5928, %v5926
    %v6019 = vpack.c.b16 %v5929, %v5927
    %v6020 = vpack.c.b16 %v5932, %v5930
    %v6021 = vpack.c.b16 %v5933, %v5931
    %v6022 = vpack.c.b16 %v5936, %v5934
    %v6023 = vpack.c.b16 %v5937, %v5935
    %v6024 = vpack.c.b16 %v5940, %v5938
    %v6025 = vpack.c.b16 %v5941, %v5939
    %v6026 = vpack.c.b16 %v5944, %v5942
    %v6027 = vpack.c.b16 %v5945, %v5943
    %v6028 = vpack.c.b16 %v5948, %v5946
    %v6029 = vpack.c.b16 %v5949, %v5947
    %v6030 = vpack.c.b16 %v5952, %v5950
    %v6031 = vpack.c.b16 %v5953, %v5951
    %v6032 = vpack.c.b16 %v5956, %v5954
    %v6033 = vpack.c.b16 %v5957, %v5955
    %v6034 = vpack.c.b16 %v5960, %v5958
    %v6035 = vpack.c.b16 %v5961, %v5959
    %v6036 = vpack.c.b16 %v5964, %v5962
    %v6037 = vpack.c.b16 %v5965, %v5963
    %v6038 = vpack.c.b16 %v5968, %v5966
    %v6039 = vpack.c.b16 %v5969, %v5967
    %v6040 = vpack.c.b16 %v5972, %v5970
    %v6041 = vpack.c.b16 %v5973, %v5971
    %v6042 = vpack.c.b16 %v5976, %v5974
    %v6043 = vpack.c.b16 %v5977, %v5975
    %v6044 = vpack.c.b16 %v5980, %v5978
    %v6045 = vpack.c.b16 %v5981, %v5979
    %v6046 = vpack.c.b16 %v5984, %v5982
    %v6047 = vpack.c.b16 %v5985, %v5983
    %v6048 = vpack.c.b16 %v5988, %v5986
    %v6049 = vpack.c.b16 %v5989, %v5987
    %v6050 = vpack.c.b16 %v5992, %v5990
    %v6051 = vpack.c.b16 %v5993, %v5991
    %v6052 = vpack.c.b16 %v5996, %v5994
    %v6053 = vpack.c.b16 %v5997, %v5995
    %v6054 = vpack.c.b16 %v6000, %v5998
    %v6055 = vpack.c.b16 %v6001, %v5999
    %v6056 = vpack.c.b16 %v6004, %v6002
    %v6057 = vpack.c.b16 %v6005, %v6003
    %v6058 = vpack.c.b16 %v6008, %v6006
    %v6059 = vpack.c.b16 %v6009, %v6007
    %v6060 = vpack.c.b16 %v6012, %v6010
    %v6061 = vpack.c.b16 %v6013, %v6011
    %6110 = vmatprep.subr.bf16.mxu0 %v6029
    %6111 = vmatpush1.bf16.msra.mxu0 %v6028
    %6112 = vmatprep.subr.bf16.mxu0 %v6027
    %6113 = vmatpush1.bf16.msra.mxu0 %v6026
    %6114 = vmatprep.subr.bf16.mxu0 %v6025
    %6115 = vmatpush1.bf16.msra.mxu0 %v6024
    %6116 = vmatprep.subr.bf16.mxu0 %v6023
    %6117 = vmatpush1.bf16.msra.mxu0 %v6022
    %6118 = vmatprep.subr.bf16.mxu0 %v6021
    %6119 = vmatpush1.bf16.msra.mxu0 %v6020
    %6120 = vmatprep.subr.bf16.mxu0 %v6019
    %6121 = vmatpush1.bf16.msra.mxu0 %v6018
    %6122 = vmatprep.subr.bf16.mxu0 %v6017
    %6123 = vmatpush1.bf16.msra.mxu0 %v6016
    %6124 = vmatprep.subr.bf16.mxu0 %v6015
    %6125 = vmatpush1.bf16.msra.mxu0 %v6014
    %6126 = vmatprep.subr.bf16.mxu0 %v6045
    %6127 = vmatpush2.bf16.msra.mxu0 %v6044
    %6128 = vmatprep.subr.bf16.mxu0 %v6043
    %6129 = vmatpush2.bf16.msra.mxu0 %v6042
    %6130 = vmatprep.subr.bf16.mxu0 %v6041
    %6131 = vmatpush2.bf16.msra.mxu0 %v6040
    %6132 = vmatprep.subr.bf16.mxu0 %v6039
    %6133 = vmatpush2.bf16.msra.mxu0 %v6038
    %6134 = vmatprep.subr.bf16.mxu0 %v6037
    %6135 = vmatpush2.bf16.msra.mxu0 %v6036
    %6136 = vmatprep.subr.bf16.mxu0 %v6035
    %6137 = vmatpush2.bf16.msra.mxu0 %v6034
    %6138 = vmatprep.subr.bf16.mxu0 %v6033
    %6139 = vmatpush2.bf16.msra.mxu0 %v6032
    %6140 = vmatprep.subr.bf16.mxu0 %v6031
    %6141 = vmatpush2.bf16.msra.mxu0 %v6030
    %6142 = vmatprep.mubr.bf16.mxu0 %v5808
    %6143 = vmatmul.mubr.bf16.gmra.mxu0 %v5807
    %v6144 = vpop.f32.mrf.mxu0
    %v6145 = vadd.f32 %v5863, %v6144
    %v6146 = vpop.f32.mrf.mxu0
    %v6147 = vadd.f32 %v5867, %v6146
    %v6148 = vpop.f32.mrf.mxu0
    %v6149 = vadd.f32 %v5863, %v6148
    %v6150 = vpop.f32.mrf.mxu0
    %v6151 = vadd.f32 %v5867, %v6150
    %6152 = vdwg.mxu0
    %6153 = vmatprep.subr.bf16.mxu0 %v6061
    %6154 = vmatpush1.bf16.msra.mxu0 %v6060
    %6155 = vmatprep.subr.bf16.mxu0 %v6059
    %6156 = vmatpush1.bf16.msra.mxu0 %v6058
    %6157 = vmatprep.subr.bf16.mxu0 %v6057
    %6158 = vmatpush1.bf16.msra.mxu0 %v6056
    %6159 = vmatprep.subr.bf16.mxu0 %v6055
    %6160 = vmatpush1.bf16.msra.mxu0 %v6054
    %6161 = vmatprep.subr.bf16.mxu0 %v6053
    %6162 = vmatpush1.bf16.msra.mxu0 %v6052
    %6163 = vmatprep.subr.bf16.mxu0 %v6051
    %6164 = vmatpush1.bf16.msra.mxu0 %v6050
    %6165 = vmatprep.subr.bf16.mxu0 %v6049
    %6166 = vmatpush1.bf16.msra.mxu0 %v6048
    %6167 = vmatprep.subr.bf16.mxu0 %v6047
    %6168 = vmatpush1.bf16.msra.mxu0 %v6046
    %6169 = vmatprep.subr.bf16.mxu0 0
    %6170 = vmatpush2.bf16.msra.mxu0 0
    %6171 = vmatprep.subr.bf16.mxu0 0
    %6172 = vmatpush2.bf16.msra.mxu0 0
    %6173 = vmatprep.subr.bf16.mxu0 0
    %6174 = vmatpush2.bf16.msra.mxu0 0
    %6175 = vmatprep.subr.bf16.mxu0 0
    %6176 = vmatpush2.bf16.msra.mxu0 0
    %6177 = vmatprep.subr.bf16.mxu0 0
    %6178 = vmatpush2.bf16.msra.mxu0 0
    %6179 = vmatprep.subr.bf16.mxu0 0
    %6180 = vmatpush2.bf16.msra.mxu0 0
    %6181 = vmatprep.subr.bf16.mxu0 0
    %6182 = vmatpush2.bf16.msra.mxu0 0
    %6183 = vmatprep.subr.bf16.mxu0 0
    %6184 = vmatpush2.bf16.msra.mxu0 0
    %6185 = vmatprep.mubr.bf16.mxu0 0
    %6186 = vmatmul.mubr.bf16.gmra.mxu0 %v5809
    %v6187 = vpop.f32.mrf.mxu0
    %v6188 = vadd.f32 %v6145, %v6187
    %v6189 = vpop.f32.mrf.mxu0
    %v6190 = vadd.f32 %v6147, %v6189
    %v6191 = vpop.f32.mrf.mxu0
    %v6192 = vadd.f32 %v6149, %v6191
    %v6193 = vpop.f32.mrf.mxu0
    %v6194 = vadd.f32 %v6151, %v6193
    %6195 = vdwg.mxu0
    %v6196 = vmax.f32 %v6188, 0.0
    %v6197 = vmax.f32 %v6190, 0.0
    %v6198 = vmax.f32 %v6192, 0.0
    %v6199 = vmax.f32 %v6194, 0.0
    %v6200 = vsub.f32 %v6196, %v5245
    %v6201 = vsub.f32 %v6197, %v5246
    %v6202 = vsub.f32 %v6198, %v5247
    %v6203 = vsub.f32 %v6199, %v5248
    %v6204 = vrot.slane %v6200, 7
    %v6205 = vrot.slane %v6201, 7
    %v6206 = vrot.slane %v6202, 7
    %v6207 = vrot.slane %v6203, 7
    %v6208 = vsel %vm609, %v6204, %v6206
    %v6209 = vsel %vm609, %v6205, %v6207
    %v6210 = vsel %vm609, %v6206, %v6204
    %v6211 = vsel %vm609, %v6207, %v6205
    %v6212 = vmul.f32 %v6210, %v597
    %v6213 = vmul.f32 %v6211, %v597
    %v6214 = vmul.f32 %v6208, %v598
    %v6215 = vmul.f32 %v6209, %v598
    %v6216 = vrot.slane %v6200, 1
    %v6217 = vrot.slane %v6201, 1
    %v6218 = vrot.slane %v6202, 1
    %v6219 = vrot.slane %v6203, 1
    %v6220 = vsel %vm616, %v6216, %v6218
    %v6221 = vsel %vm616, %v6217, %v6219
    %v6222 = vsel %vm616, %v6218, %v6216
    %v6223 = vsel %vm616, %v6219, %v6217
    %v6224 = vmul.f32 %v6220, %v603
    %v6225 = vmul.f32 %v6221, %v603
    %v6226 = vmul.f32 %v6222, %v604
    %v6227 = vmul.f32 %v6223, %v604
    %v6228 = vpack.c.bf16 %v6214, %v6212
    %v6229 = vpack.c.bf16 %v6215, %v6213
    %v6230 = vpack.c.bf16 %v6202, %v6200
    %v6231 = vpack.c.bf16 %v6203, %v6201
    %v6232 = vpack.c.bf16 %v6226, %v6224
    %v6233 = vpack.c.bf16 %v6227, %v6225
    %v6234 = vld [vmem:[#allocation34] sm:$0xf]
    %v6235 = vld [vmem:[#allocation34 + $0x4] sm:$0xf]
    %v6236 = vld [vmem:[#allocation34 + $0x8] sm:$0xf]
    %v6237 = vld [vmem:[#allocation34 + $0xc] sm:$0xf]
    %v6238 = vld [vmem:[#allocation34 + $0x10] sm:$0xf]
    %v6239 = vld [vmem:[#allocation34 + $0x14] sm:$0xf]
    %v6240 = vld [vmem:[#allocation34 + $0x18] sm:$0xf]
    %v6241 = vld [vmem:[#allocation34 + $0x1c] sm:$0xf]
    %v6242 = vld [vmem:[#allocation34 + $0x20] sm:$0xf]
    %v6243 = vld [vmem:[#allocation34 + $0x24] sm:$0xf]
    %v6244 = vld [vmem:[#allocation34 + $0x28] sm:$0xf]
    %v6245 = vld [vmem:[#allocation34 + $0x2c] sm:$0xf]
    %v6246 = vld [vmem:[#allocation34 + $0x30] sm:$0xf]
    %v6247 = vld [vmem:[#allocation34 + $0x34] sm:$0xf]
    %v6248 = vld [vmem:[#allocation34 + $0x38] sm:$0xf]
    %v6249 = vld [vmem:[#allocation34 + $0x3c] sm:$0xf]
    %v6250 = vld [vmem:[#allocation34 + $0x40] sm:$0xf]
    %v6251 = vld [vmem:[#allocation34 + $0x44] sm:$0xf]
    %v6252 = vld [vmem:[#allocation34 + $0x48] sm:$0xf]
    %v6253 = vld [vmem:[#allocation34 + $0x4c] sm:$0xf]
    %v6254 = vld [vmem:[#allocation34 + $0x50] sm:$0xf]
    %v6255 = vld [vmem:[#allocation34 + $0x54] sm:$0xf]
    %v6256 = vld [vmem:[#allocation34 + $0x58] sm:$0xf]
    %v6257 = vld [vmem:[#allocation34 + $0x5c] sm:$0xf]
    %v6258 = vld [vmem:[#allocation34 + $0x60] sm:$0xf]
    %v6259 = vld [vmem:[#allocation34 + $0x64] sm:$0xf]
    %v6260 = vld [vmem:[#allocation34 + $0x68] sm:$0xf]
    %v6261 = vld [vmem:[#allocation34 + $0x6c] sm:$0xf]
    %v6262 = vld [vmem:[#allocation34 + $0x70] sm:$0xf]
    %v6263 = vld [vmem:[#allocation34 + $0x74] sm:$0xf]
    %v6264 = vld [vmem:[#allocation34 + $0x78] sm:$0xf]
    %v6265 = vld [vmem:[#allocation34 + $0x7c] sm:$0xf]
    %v6266 = vld [vmem:[#allocation34 + $0x80] sm:$0xf]
    %v6267 = vld [vmem:[#allocation34 + $0x84] sm:$0xf]
    %v6268 = vld [vmem:[#allocation34 + $0x88] sm:$0xf]
    %v6269 = vld [vmem:[#allocation34 + $0x8c] sm:$0xf]
    %v6270 = vld [vmem:[#allocation34 + $0x90] sm:$0xf]
    %v6271 = vld [vmem:[#allocation34 + $0x94] sm:$0xf]
    %v6272 = vld [vmem:[#allocation34 + $0x98] sm:$0xf]
    %v6273 = vld [vmem:[#allocation34 + $0x9c] sm:$0xf]
    %v6274 = vld [vmem:[#allocation34 + $0xa0] sm:$0xf]
    %v6275 = vld [vmem:[#allocation34 + $0xa4] sm:$0xf]
    %v6276 = vld [vmem:[#allocation34 + $0xa8] sm:$0xf]
    %v6277 = vld [vmem:[#allocation34 + $0xac] sm:$0xf]
    %v6278 = vld [vmem:[#allocation34 + $0xb0] sm:$0xf]
    %v6279 = vld [vmem:[#allocation34 + $0xb4] sm:$0xf]
    %v6280 = vld [vmem:[#allocation34 + $0xb8] sm:$0xf]
    %v6281 = vld [vmem:[#allocation34 + $0xbc] sm:$0xf]
    %v6282 = vld [vmem:[#allocation34 + $0xc0] sm:$0xf]
    %v6283 = vld [vmem:[#allocation34 + $0xc4] sm:$0xf]
    %v6284 = vld [vmem:[#allocation34 + $0xc8] sm:$0xf]
    %v6285 = vld [vmem:[#allocation34 + $0xcc] sm:$0xf]
    %v6286 = vld [vmem:[#allocation34 + $0xd0] sm:$0xf]
    %v6287 = vld [vmem:[#allocation34 + $0xd4] sm:$0xf]
    %v6288 = vld [vmem:[#allocation34 + $0xd8] sm:$0xf]
    %v6289 = vld [vmem:[#allocation34 + $0xdc] sm:$0xf]
    %v6290 = vld [vmem:[#allocation34 + $0xe0] sm:$0xf]
    %v6291 = vld [vmem:[#allocation34 + $0xe4] sm:$0xf]
    %v6292 = vld [vmem:[#allocation34 + $0xe8] sm:$0xf]
    %v6293 = vld [vmem:[#allocation34 + $0xec] sm:$0xf]
    %v6294 = vld [vmem:[#allocation34 + $0xf0] sm:$0xf]
    %v6295 = vld [vmem:[#allocation34 + $0xf4] sm:$0xf]
    %v6296 = vld [vmem:[#allocation34 + $0xf8] sm:$0xf]
    %v6297 = vld [vmem:[#allocation34 + $0xfc] sm:$0xf]
    %v6298 = vld [vmem:[#allocation34 + $0x100] sm:$0xf]
    %v6299 = vld [vmem:[#allocation34 + $0x104] sm:$0xf]
    %v6300 = vld [vmem:[#allocation34 + $0x108] sm:$0xf]
    %v6301 = vld [vmem:[#allocation34 + $0x10c] sm:$0xf]
    %v6302 = vld [vmem:[#allocation34 + $0x110] sm:$0xf]
    %v6303 = vld [vmem:[#allocation34 + $0x114] sm:$0xf]
    %v6304 = vld [vmem:[#allocation34 + $0x118] sm:$0xf]
    %v6305 = vld [vmem:[#allocation34 + $0x11c] sm:$0xf]
    %v6306 = vld [vmem:[#allocation34 + $0x120] sm:$0xf]
    %v6307 = vld [vmem:[#allocation34 + $0x124] sm:$0xf]
    %v6308 = vld [vmem:[#allocation34 + $0x128] sm:$0xf]
    %v6309 = vld [vmem:[#allocation34 + $0x12c] sm:$0xf]
    %v6310 = vld [vmem:[#allocation34 + $0x130] sm:$0xf]
    %v6311 = vld [vmem:[#allocation34 + $0x134] sm:$0xf]
    %v6312 = vld [vmem:[#allocation34 + $0x138] sm:$0xf]
    %v6313 = vld [vmem:[#allocation34 + $0x13c] sm:$0xf]
    %v6314 = vld [vmem:[#allocation34 + $0x140] sm:$0xf]
    %v6315 = vld [vmem:[#allocation34 + $0x144] sm:$0xf]
    %v6316 = vld [vmem:[#allocation34 + $0x148] sm:$0xf]
    %v6317 = vld [vmem:[#allocation34 + $0x14c] sm:$0xf]
    %v6318 = vld [vmem:[#allocation34 + $0x150] sm:$0xf]
    %v6319 = vld [vmem:[#allocation34 + $0x154] sm:$0xf]
    %v6320 = vld [vmem:[#allocation34 + $0x158] sm:$0xf]
    %v6321 = vld [vmem:[#allocation34 + $0x15c] sm:$0xf]
    %v6322 = vld [vmem:[#allocation34 + $0x160] sm:$0xf]
    %v6323 = vld [vmem:[#allocation34 + $0x164] sm:$0xf]
    %v6324 = vld [vmem:[#allocation34 + $0x168] sm:$0xf]
    %v6325 = vld [vmem:[#allocation34 + $0x16c] sm:$0xf]
    %v6326 = vld [vmem:[#allocation34 + $0x170] sm:$0xf]
    %v6327 = vld [vmem:[#allocation34 + $0x174] sm:$0xf]
    %v6328 = vld [vmem:[#allocation34 + $0x178] sm:$0xf]
    %v6329 = vld [vmem:[#allocation34 + $0x17c] sm:$0xf]
    %v6330 = vld [vmem:[#allocation36] sm:$0x1]
    %v6332 = vlaneseq
    %v6333 = vshrl.u32 %v6332, 7
    %v6334 = vsub.s32 0, %v6333
    %v6335 = vrot.slane %v6330, %v6334
    %v6433 = vunpack.c.l.b16 %v6234
    %v6434 = vunpack.c.l.b16 %v6235
    %v6435 = vunpack.c.l.b16 %v6236
    %v6436 = vunpack.c.l.b16 %v6237
    %v6437 = vunpack.c.l.b16 %v6238
    %v6438 = vunpack.c.l.b16 %v6239
    %v6439 = vunpack.c.l.b16 %v6240
    %v6440 = vunpack.c.l.b16 %v6241
    %v6441 = vunpack.c.l.b16 %v6242
    %v6442 = vunpack.c.l.b16 %v6243
    %v6443 = vunpack.c.l.b16 %v6244
    %v6444 = vunpack.c.l.b16 %v6245
    %v6445 = vunpack.c.l.b16 %v6246
    %v6446 = vunpack.c.l.b16 %v6247
    %v6447 = vunpack.c.l.b16 %v6248
    %v6448 = vunpack.c.l.b16 %v6249
    %v6449 = vunpack.c.l.b16 %v6250
    %v6450 = vunpack.c.l.b16 %v6251
    %v6451 = vunpack.c.l.b16 %v6252
    %v6452 = vunpack.c.l.b16 %v6253
    %v6453 = vunpack.c.l.b16 %v6254
    %v6454 = vunpack.c.l.b16 %v6255
    %v6455 = vunpack.c.l.b16 %v6256
    %v6456 = vunpack.c.l.b16 %v6257
    %v6457 = vunpack.c.l.b16 %v6258
    %v6458 = vunpack.c.l.b16 %v6259
    %v6459 = vunpack.c.l.b16 %v6260
    %v6460 = vunpack.c.l.b16 %v6261
    %v6461 = vunpack.c.l.b16 %v6262
    %v6462 = vunpack.c.l.b16 %v6263
    %v6463 = vunpack.c.l.b16 %v6264
    %v6464 = vunpack.c.l.b16 %v6265
    %v6465 = vunpack.c.l.b16 %v6266
    %v6466 = vunpack.c.l.b16 %v6267
    %v6467 = vunpack.c.l.b16 %v6268
    %v6468 = vunpack.c.l.b16 %v6269
    %v6469 = vunpack.c.l.b16 %v6270
    %v6470 = vunpack.c.l.b16 %v6271
    %v6471 = vunpack.c.l.b16 %v6272
    %v6472 = vunpack.c.l.b16 %v6273
    %v6473 = vunpack.c.l.b16 %v6274
    %v6474 = vunpack.c.l.b16 %v6275
    %v6475 = vunpack.c.l.b16 %v6276
    %v6476 = vunpack.c.l.b16 %v6277
    %v6477 = vunpack.c.l.b16 %v6278
    %v6478 = vunpack.c.l.b16 %v6279
    %v6479 = vunpack.c.l.b16 %v6280
    %v6480 = vunpack.c.l.b16 %v6281
    %v6481 = vunpack.c.l.b16 %v6282
    %v6482 = vunpack.c.l.b16 %v6283
    %v6483 = vunpack.c.l.b16 %v6284
    %v6484 = vunpack.c.l.b16 %v6285
    %v6485 = vunpack.c.l.b16 %v6286
    %v6486 = vunpack.c.l.b16 %v6287
    %v6487 = vunpack.c.l.b16 %v6288
    %v6488 = vunpack.c.l.b16 %v6289
    %v6489 = vunpack.c.l.b16 %v6290
    %v6490 = vunpack.c.l.b16 %v6291
    %v6491 = vunpack.c.l.b16 %v6292
    %v6492 = vunpack.c.l.b16 %v6293
    %v6493 = vunpack.c.l.b16 %v6294
    %v6494 = vunpack.c.l.b16 %v6295
    %v6495 = vunpack.c.l.b16 %v6296
    %v6496 = vunpack.c.l.b16 %v6297
    %v6497 = vunpack.c.l.b16 %v6298
    %v6498 = vunpack.c.l.b16 %v6299
    %v6499 = vunpack.c.l.b16 %v6300
    %v6500 = vunpack.c.l.b16 %v6301
    %v6501 = vunpack.c.l.b16 %v6302
    %v6502 = vunpack.c.l.b16 %v6303
    %v6503 = vunpack.c.l.b16 %v6304
    %v6504 = vunpack.c.l.b16 %v6305
    %v6505 = vunpack.c.l.b16 %v6306
    %v6506 = vunpack.c.l.b16 %v6307
    %v6507 = vunpack.c.l.b16 %v6308
    %v6508 = vunpack.c.l.b16 %v6309
    %v6509 = vunpack.c.l.b16 %v6310
    %v6510 = vunpack.c.l.b16 %v6311
    %v6511 = vunpack.c.l.b16 %v6312
    %v6512 = vunpack.c.l.b16 %v6313
    %v6513 = vunpack.c.l.b16 %v6314
    %v6514 = vunpack.c.l.b16 %v6315
    %v6515 = vunpack.c.l.b16 %v6316
    %v6516 = vunpack.c.l.b16 %v6317
    %v6517 = vunpack.c.l.b16 %v6318
    %v6518 = vunpack.c.l.b16 %v6319
    %v6519 = vunpack.c.l.b16 %v6320
    %v6520 = vunpack.c.l.b16 %v6321
    %v6521 = vunpack.c.l.b16 %v6322
    %v6522 = vunpack.c.l.b16 %v6323
    %v6523 = vunpack.c.l.b16 %v6324
    %v6524 = vunpack.c.l.b16 %v6325
    %v6525 = vunpack.c.l.b16 %v6326
    %v6526 = vunpack.c.l.b16 %v6327
    %v6527 = vunpack.c.l.b16 %v6328
    %v6528 = vunpack.c.l.b16 %v6329
    %v6529 = vpack.c.b16 %v6434, %v6433
    %v6530 = vpack.c.b16 %v6436, %v6435
    %v6531 = vpack.c.b16 %v6438, %v6437
    %v6532 = vpack.c.b16 %v6440, %v6439
    %v6533 = vpack.c.b16 %v6442, %v6441
    %v6534 = vpack.c.b16 %v6444, %v6443
    %v6535 = vpack.c.b16 %v6446, %v6445
    %v6536 = vpack.c.b16 %v6448, %v6447
    %v6537 = vpack.c.b16 %v6450, %v6449
    %v6538 = vpack.c.b16 %v6452, %v6451
    %v6539 = vpack.c.b16 %v6454, %v6453
    %v6540 = vpack.c.b16 %v6456, %v6455
    %v6541 = vpack.c.b16 %v6458, %v6457
    %v6542 = vpack.c.b16 %v6460, %v6459
    %v6543 = vpack.c.b16 %v6462, %v6461
    %v6544 = vpack.c.b16 %v6464, %v6463
    %v6545 = vpack.c.b16 %v6466, %v6465
    %v6546 = vpack.c.b16 %v6468, %v6467
    %v6547 = vpack.c.b16 %v6470, %v6469
    %v6548 = vpack.c.b16 %v6472, %v6471
    %v6549 = vpack.c.b16 %v6474, %v6473
    %v6550 = vpack.c.b16 %v6476, %v6475
    %v6551 = vpack.c.b16 %v6478, %v6477
    %v6552 = vpack.c.b16 %v6480, %v6479
    %v6553 = vpack.c.b16 %v6482, %v6481
    %v6554 = vpack.c.b16 %v6484, %v6483
    %v6555 = vpack.c.b16 %v6486, %v6485
    %v6556 = vpack.c.b16 %v6488, %v6487
    %v6557 = vpack.c.b16 %v6490, %v6489
    %v6558 = vpack.c.b16 %v6492, %v6491
    %v6559 = vpack.c.b16 %v6494, %v6493
    %v6560 = vpack.c.b16 %v6496, %v6495
    %v6561 = vpack.c.b16 %v6498, %v6497
    %v6562 = vpack.c.b16 %v6500, %v6499
    %v6563 = vpack.c.b16 %v6502, %v6501
    %v6564 = vpack.c.b16 %v6504, %v6503
    %v6565 = vpack.c.b16 %v6506, %v6505
    %v6566 = vpack.c.b16 %v6508, %v6507
    %v6567 = vpack.c.b16 %v6510, %v6509
    %v6568 = vpack.c.b16 %v6512, %v6511
    %v6569 = vpack.c.b16 %v6514, %v6513
    %v6570 = vpack.c.b16 %v6516, %v6515
    %v6571 = vpack.c.b16 %v6518, %v6517
    %v6572 = vpack.c.b16 %v6520, %v6519
    %v6573 = vpack.c.b16 %v6522, %v6521
    %v6574 = vpack.c.b16 %v6524, %v6523
    %v6575 = vpack.c.b16 %v6526, %v6525
    %v6576 = vpack.c.b16 %v6528, %v6527
    %6625 = vmatprep.subr.bf16.mxu0 0
    %6626 = vmatpush1.bf16.msra.mxu0 %v6536
    %6627 = vmatprep.subr.bf16.mxu0 0
    %6628 = vmatpush1.bf16.msra.mxu0 %v6535
    %6629 = vmatprep.subr.bf16.mxu0 0
    %6630 = vmatpush1.bf16.msra.mxu0 %v6534
    %6631 = vmatprep.subr.bf16.mxu0 0
    %6632 = vmatpush1.bf16.msra.mxu0 %v6533
    %6633 = vmatprep.subr.bf16.mxu0 0
    %6634 = vmatpush1.bf16.msra.mxu0 %v6532
    %6635 = vmatprep.subr.bf16.mxu0 0
    %6636 = vmatpush1.bf16.msra.mxu0 %v6531
    %6637 = vmatprep.subr.bf16.mxu0 0
    %6638 = vmatpush1.bf16.msra.mxu0 %v6530
    %6639 = vmatprep.subr.bf16.mxu0 0
    %6640 = vmatpush1.bf16.msra.mxu0 %v6529
    %6641 = vmatprep.subr.bf16.mxu0 0
    %6642 = vmatpush2.bf16.msra.mxu0 %v6544
    %6643 = vmatprep.subr.bf16.mxu0 0
    %6644 = vmatpush2.bf16.msra.mxu0 %v6543
    %6645 = vmatprep.subr.bf16.mxu0 0
    %6646 = vmatpush2.bf16.msra.mxu0 %v6542
    %6647 = vmatprep.subr.bf16.mxu0 0
    %6648 = vmatpush2.bf16.msra.mxu0 %v6541
    %6649 = vmatprep.subr.bf16.mxu0 0
    %6650 = vmatpush2.bf16.msra.mxu0 %v6540
    %6651 = vmatprep.subr.bf16.mxu0 0
    %6652 = vmatpush2.bf16.msra.mxu0 %v6539
    %6653 = vmatprep.subr.bf16.mxu0 0
    %6654 = vmatpush2.bf16.msra.mxu0 %v6538
    %6655 = vmatprep.subr.bf16.mxu0 0
    %6656 = vmatpush2.bf16.msra.mxu0 %v6537
    %6657 = vmatprep.mubr.bf16.mxu0 %v6229
    %6658 = vmatmul.mubr.bf16.gmra.mxu0 %v6228
    %v6659 = vpop.f32.mrf.mxu0
    %v6660 = vadd.f32 %v6335, %v6659
    %v6661 = vpop.f32.mrf.mxu0
    %v6662 = vpop.f32.mrf.mxu0
    %v6663 = vadd.f32 %v6335, %v6662
    %v6664 = vpop.f32.mrf.mxu0
    %6665 = vdwg.mxu0
    %6666 = vmatprep.subr.bf16.mxu0 0
    %6667 = vmatpush1.bf16.msra.mxu0 %v6552
    %6668 = vmatprep.subr.bf16.mxu0 0
    %6669 = vmatpush1.bf16.msra.mxu0 %v6551
    %6670 = vmatprep.subr.bf16.mxu0 0
    %6671 = vmatpush1.bf16.msra.mxu0 %v6550
    %6672 = vmatprep.subr.bf16.mxu0 0
    %6673 = vmatpush1.bf16.msra.mxu0 %v6549
    %6674 = vmatprep.subr.bf16.mxu0 0
    %6675 = vmatpush1.bf16.msra.mxu0 %v6548
    %6676 = vmatprep.subr.bf16.mxu0 0
    %6677 = vmatpush1.bf16.msra.mxu0 %v6547
    %6678 = vmatprep.subr.bf16.mxu0 0
    %6679 = vmatpush1.bf16.msra.mxu0 %v6546
    %6680 = vmatprep.subr.bf16.mxu0 0
    %6681 = vmatpush1.bf16.msra.mxu0 %v6545
    %6682 = vmatprep.subr.bf16.mxu0 0
    %6683 = vmatpush2.bf16.msra.mxu0 %v6560
    %6684 = vmatprep.subr.bf16.mxu0 0
    %6685 = vmatpush2.bf16.msra.mxu0 %v6559
    %6686 = vmatprep.subr.bf16.mxu0 0
    %6687 = vmatpush2.bf16.msra.mxu0 %v6558
    %6688 = vmatprep.subr.bf16.mxu0 0
    %6689 = vmatpush2.bf16.msra.mxu0 %v6557
    %6690 = vmatprep.subr.bf16.mxu0 0
    %6691 = vmatpush2.bf16.msra.mxu0 %v6556
    %6692 = vmatprep.subr.bf16.mxu0 0
    %6693 = vmatpush2.bf16.msra.mxu0 %v6555
    %6694 = vmatprep.subr.bf16.mxu0 0
    %6695 = vmatpush2.bf16.msra.mxu0 %v6554
    %6696 = vmatprep.subr.bf16.mxu0 0
    %6697 = vmatpush2.bf16.msra.mxu0 %v6553
    %6698 = vmatprep.mubr.bf16.mxu0 %v6231
    %6699 = vmatmul.mubr.bf16.gmra.mxu0 %v6230
    %v6700 = vpop.f32.mrf.mxu0
    %v6701 = vadd.f32 %v6660, %v6700
    %v6702 = vpop.f32.mrf.mxu0
    %v6703 = vpop.f32.mrf.mxu0
    %v6704 = vadd.f32 %v6663, %v6703
    %v6705 = vpop.f32.mrf.mxu0
    %6706 = vdwg.mxu0
    %6707 = vmatprep.subr.bf16.mxu0 0
    %6708 = vmatpush1.bf16.msra.mxu0 %v6568
    %6709 = vmatprep.subr.bf16.mxu0 0
    %6710 = vmatpush1.bf16.msra.mxu0 %v6567
    %6711 = vmatprep.subr.bf16.mxu0 0
    %6712 = vmatpush1.bf16.msra.mxu0 %v6566
    %6713 = vmatprep.subr.bf16.mxu0 0
    %6714 = vmatpush1.bf16.msra.mxu0 %v6565
    %6715 = vmatprep.subr.bf16.mxu0 0
    %6716 = vmatpush1.bf16.msra.mxu0 %v6564
    %6717 = vmatprep.subr.bf16.mxu0 0
    %6718 = vmatpush1.bf16.msra.mxu0 %v6563
    %6719 = vmatprep.subr.bf16.mxu0 0
    %6720 = vmatpush1.bf16.msra.mxu0 %v6562
    %6721 = vmatprep.subr.bf16.mxu0 0
    %6722 = vmatpush1.bf16.msra.mxu0 %v6561
    %6723 = vmatprep.subr.bf16.mxu0 0
    %6724 = vmatpush2.bf16.msra.mxu0 %v6576
    %6725 = vmatprep.subr.bf16.mxu0 0
    %6726 = vmatpush2.bf16.msra.mxu0 %v6575
    %6727 = vmatprep.subr.bf16.mxu0 0
    %6728 = vmatpush2.bf16.msra.mxu0 %v6574
    %6729 = vmatprep.subr.bf16.mxu0 0
    %6730 = vmatpush2.bf16.msra.mxu0 %v6573
    %6731 = vmatprep.subr.bf16.mxu0 0
    %6732 = vmatpush2.bf16.msra.mxu0 %v6572
    %6733 = vmatprep.subr.bf16.mxu0 0
    %6734 = vmatpush2.bf16.msra.mxu0 %v6571
    %6735 = vmatprep.subr.bf16.mxu0 0
    %6736 = vmatpush2.bf16.msra.mxu0 %v6570
    %6737 = vmatprep.subr.bf16.mxu0 0
    %6738 = vmatpush2.bf16.msra.mxu0 %v6569
    %6739 = vmatprep.mubr.bf16.mxu0 %v6233
    %6740 = vmatmul.mubr.bf16.gmra.mxu0 %v6232
    %v6741 = vpop.f32.mrf.mxu0
    %v6742 = vadd.f32 %v6701, %v6741
    %v6743 = vpop.f32.mrf.mxu0
    %v6744 = vpop.f32.mrf.mxu0
    %v6745 = vadd.f32 %v6704, %v6744
    %v6746 = vpop.f32.mrf.mxu0
    %6747 = vdwg.mxu0
    %v6748 = vmax.f32 %v6742, 0.0
    %v6749 = vmax.f32 %v6745, 0.0
    %v6750 = vadd.f32 %v5793, %v6748
    %v6751 = vadd.f32 %v5794, %v6749
    %v6752 = vpack.c.bf16 %v6751, %v6750
    %v6753 = vld [vmem:[%s59] sm:$0xf]
    %v6754 = vld [vmem:[%s59 + $0x4] sm:$0xf]
    %v6755 = vld [vmem:[%s59 + $0x8] sm:$0xf]
    %v6756 = vld [vmem:[%s59 + $0xc] sm:$0xf]
    %v6757 = vld [vmem:[%s59 + $0x10] sm:$0xf]
    %v6758 = vld [vmem:[%s59 + $0x14] sm:$0xf]
    %v6759 = vld [vmem:[%s59 + $0x18] sm:$0xf]
    %v6760 = vld [vmem:[%s59 + $0x1c] sm:$0xf]
    %v6761 = vld [vmem:[%s59 + $0x20] sm:$0xf]
    %v6762 = vld [vmem:[%s59 + $0x24] sm:$0xf]
    %v6763 = vld [vmem:[%s59 + $0x28] sm:$0xf]
    %v6764 = vld [vmem:[%s59 + $0x2c] sm:$0xf]
    %v6765 = vld [vmem:[%s59 + $0x30] sm:$0xf]
    %v6766 = vld [vmem:[%s59 + $0x34] sm:$0xf]
    %v6767 = vld [vmem:[%s59 + $0x38] sm:$0xf]
    %v6768 = vld [vmem:[%s59 + $0x3c] sm:$0xf]
    %v6769 = vld [vmem:[#allocation37] sm:$0x1]
    %v6771 = vlaneseq
    %v6772 = vshrl.u32 %v6771, 7
    %v6773 = vsub.s32 0, %v6772
    %v6774 = vrot.slane %v6769, %v6773
    %v6792 = vunpack.c.l.b16 %v6753
    %v6793 = vunpack.c.l.b16 %v6754
    %v6794 = vunpack.c.l.b16 %v6755
    %v6795 = vunpack.c.l.b16 %v6756
    %v6796 = vunpack.c.l.b16 %v6757
    %v6797 = vunpack.c.l.b16 %v6758
    %v6798 = vunpack.c.l.b16 %v6759
    %v6799 = vunpack.c.l.b16 %v6760
    %v6800 = vunpack.c.l.b16 %v6761
    %v6801 = vunpack.c.l.b16 %v6762
    %v6802 = vunpack.c.l.b16 %v6763
    %v6803 = vunpack.c.l.b16 %v6764
    %v6804 = vunpack.c.l.b16 %v6765
    %v6805 = vunpack.c.l.b16 %v6766
    %v6806 = vunpack.c.l.b16 %v6767
    %v6807 = vunpack.c.l.b16 %v6768
    %v6808 = vpack.c.b16 %v6793, %v6792
    %v6809 = vpack.c.b16 %v6795, %v6794
    %v6810 = vpack.c.b16 %v6797, %v6796
    %v6811 = vpack.c.b16 %v6799, %v6798
    %v6812 = vpack.c.b16 %v6801, %v6800
    %v6813 = vpack.c.b16 %v6803, %v6802
    %v6814 = vpack.c.b16 %v6805, %v6804
    %v6815 = vpack.c.b16 %v6807, %v6806
    %6824 = vmatprep.subr.bf16.mxu0 0
    %6825 = vmatpush1.bf16.msra.mxu0 %v6815
    %6826 = vmatprep.subr.bf16.mxu0 0
    %6827 = vmatpush1.bf16.msra.mxu0 %v6814
    %6828 = vmatprep.subr.bf16.mxu0 0
    %6829 = vmatpush1.bf16.msra.mxu0 %v6813
    %6830 = vmatprep.subr.bf16.mxu0 0
    %6831 = vmatpush1.bf16.msra.mxu0 %v6812
    %6832 = vmatprep.subr.bf16.mxu0 0
    %6833 = vmatpush1.bf16.msra.mxu0 %v6811
    %6834 = vmatprep.subr.bf16.mxu0 0
    %6835 = vmatpush1.bf16.msra.mxu0 %v6810
    %6836 = vmatprep.subr.bf16.mxu0 0
    %6837 = vmatpush1.bf16.msra.mxu0 %v6809
    %6838 = vmatprep.subr.bf16.mxu0 0
    %6839 = vmatpush1.bf16.msra.mxu0 %v6808
    %6840 = vmatprep.subr.bf16.mxu0 0
    %6841 = vmatpush2.bf16.msra.mxu0 0
    %6842 = vmatprep.subr.bf16.mxu0 0
    %6843 = vmatpush2.bf16.msra.mxu0 0
    %6844 = vmatprep.subr.bf16.mxu0 0
    %6845 = vmatpush2.bf16.msra.mxu0 0
    %6846 = vmatprep.subr.bf16.mxu0 0
    %6847 = vmatpush2.bf16.msra.mxu0 0
    %6848 = vmatprep.subr.bf16.mxu0 0
    %6849 = vmatpush2.bf16.msra.mxu0 0
    %6850 = vmatprep.subr.bf16.mxu0 0
    %6851 = vmatpush2.bf16.msra.mxu0 0
    %6852 = vmatprep.subr.bf16.mxu0 0
    %6853 = vmatpush2.bf16.msra.mxu0 0
    %6854 = vmatprep.subr.bf16.mxu0 0
    %6855 = vmatpush2.bf16.msra.mxu0 0
    %6856 = vmatprep.mubr.bf16.mxu0 0
    %6857 = vmatmul.mubr.bf16.gmra.mxu0 %v6752
    %v6858 = vpop.f32.mrf.mxu0
    %v6859 = vadd.f32 %v6774, %v6858
    %v6860 = vpop.f32.mrf.mxu0
    %v6861 = vpop.f32.mrf.mxu0
    %v6862 = vadd.f32 %v6774, %v6861
    %v6863 = vpop.f32.mrf.mxu0
    %6864 = vdwg.mxu0
    %v6865 = vmax.f32 %v6859, 0.0
    %v6866 = vmax.f32 %v6862, 0.0
    %v6867 = vrot.slane %v6865, 7
    %v6868 = vrot.slane %v6866, 7
    %v6869 = vsel %vm609, %v6867, %v6868
    %v6870 = vsel %vm609, %v6868, %v6867
    %v6871 = vmul.f32 %v6870, %v597
    %v6872 = vmul.f32 %v6869, %v598
    %v6873 = vrot.slane %v6865, 1
    %v6874 = vrot.slane %v6866, 1
    %v6875 = vsel %vm616, %v6873, %v6874
    %v6876 = vsel %vm616, %v6874, %v6873
    %v6877 = vmul.f32 %v6875, %v603
    %v6878 = vmul.f32 %v6876, %v604
    %v6879 = vpack.c.bf16 %v6872, %v6871
    %v6880 = vpack.c.bf16 %v6866, %v6865
    %v6881 = vpack.c.bf16 %v6878, %v6877
    %v6882 = vld [vmem:[#allocation39] sm:$0xff]
    %v6883 = vld [vmem:[#allocation39 + $0x8] sm:$0xff]
    %v6884 = vld [vmem:[#allocation39 + $0x10] sm:$0xff]
    %v6885 = vld [vmem:[#allocation39 + $0x18] sm:$0xff]
    %v6886 = vld [vmem:[#allocation39 + $0x20] sm:$0xff]
    %v6887 = vld [vmem:[#allocation39 + $0x28] sm:$0xff]
    %v6888 = vld [vmem:[#allocation39 + $0x30] sm:$0xff]
    %v6889 = vld [vmem:[#allocation39 + $0x38] sm:$0xff]
    %v6890 = vld [vmem:[#allocation39 + $0x40] sm:$0xff]
    %v6891 = vld [vmem:[#allocation39 + $0x48] sm:$0xff]
    %v6892 = vld [vmem:[#allocation39 + $0x50] sm:$0xff]
    %v6893 = vld [vmem:[#allocation39 + $0x58] sm:$0xff]
    %v6894 = vld [vmem:[#allocation39 + $0x60] sm:$0xff]
    %v6895 = vld [vmem:[#allocation39 + $0x68] sm:$0xff]
    %v6896 = vld [vmem:[#allocation39 + $0x70] sm:$0xff]
    %v6897 = vld [vmem:[#allocation39 + $0x78] sm:$0xff]
    %v6898 = vld [vmem:[#allocation39 + $0x80] sm:$0xff]
    %v6899 = vld [vmem:[#allocation39 + $0x88] sm:$0xff]
    %v6900 = vld [vmem:[#allocation39 + $0x90] sm:$0xff]
    %v6901 = vld [vmem:[#allocation39 + $0x98] sm:$0xff]
    %v6902 = vld [vmem:[#allocation39 + $0xa0] sm:$0xff]
    %v6903 = vld [vmem:[#allocation39 + $0xa8] sm:$0xff]
    %v6904 = vld [vmem:[#allocation39 + $0xb0] sm:$0xff]
    %v6905 = vld [vmem:[#allocation39 + $0xb8] sm:$0xff]
    %v6906 = vld [vmem:[#allocation39 + $0xc0] sm:$0xff]
    %v6907 = vld [vmem:[#allocation39 + $0xc8] sm:$0xff]
    %v6908 = vld [vmem:[#allocation39 + $0xd0] sm:$0xff]
    %v6909 = vld [vmem:[#allocation39 + $0xd8] sm:$0xff]
    %v6910 = vld [vmem:[#allocation39 + $0xe0] sm:$0xff]
    %v6911 = vld [vmem:[#allocation39 + $0xe8] sm:$0xff]
    %v6912 = vld [vmem:[#allocation39 + $0xf0] sm:$0xff]
    %v6913 = vld [vmem:[#allocation39 + $0xf8] sm:$0xff]
    %v6914 = vld [vmem:[#allocation39 + $0x100] sm:$0xff]
    %v6915 = vld [vmem:[#allocation39 + $0x108] sm:$0xff]
    %v6916 = vld [vmem:[#allocation39 + $0x110] sm:$0xff]
    %v6917 = vld [vmem:[#allocation39 + $0x118] sm:$0xff]
    %v6918 = vld [vmem:[#allocation39 + $0x120] sm:$0xff]
    %v6919 = vld [vmem:[#allocation39 + $0x128] sm:$0xff]
    %v6920 = vld [vmem:[#allocation39 + $0x130] sm:$0xff]
    %v6921 = vld [vmem:[#allocation39 + $0x138] sm:$0xff]
    %v6922 = vld [vmem:[#allocation39 + $0x140] sm:$0xff]
    %v6923 = vld [vmem:[#allocation39 + $0x148] sm:$0xff]
    %v6924 = vld [vmem:[#allocation39 + $0x150] sm:$0xff]
    %v6925 = vld [vmem:[#allocation39 + $0x158] sm:$0xff]
    %v6926 = vld [vmem:[#allocation39 + $0x160] sm:$0xff]
    %v6927 = vld [vmem:[#allocation39 + $0x168] sm:$0xff]
    %v6928 = vld [vmem:[#allocation39 + $0x170] sm:$0xff]
    %v6929 = vld [vmem:[#allocation39 + $0x178] sm:$0xff]
    %v6930 = vld [vmem:[#allocation40] sm:$0x3]
    %v6932 = vlaneseq
    %v6933 = vshrl.u32 %v6932, 7
    %v6934 = vsub.s32 0, %v6933
    %v6935 = vrot.slane %v6930, %v6934
    %v6936 = vlaneseq
    %v6937 = vshrl.u32 %v6936, 7
    %v6938 = vsub.s32 1, %v6937
    %v6939 = vrot.slane %v6930, %v6938
    %v6990 = vunpack.c.l.b16 %v6882
    %v6991 = vunpack.c.h.b16 %v6882
    %v6992 = vunpack.c.l.b16 %v6883
    %v6993 = vunpack.c.h.b16 %v6883
    %v6994 = vunpack.c.l.b16 %v6884
    %v6995 = vunpack.c.h.b16 %v6884
    %v6996 = vunpack.c.l.b16 %v6885
    %v6997 = vunpack.c.h.b16 %v6885
    %v6998 = vunpack.c.l.b16 %v6886
    %v6999 = vunpack.c.h.b16 %v6886
    %v7000 = vunpack.c.l.b16 %v6887
    %v7001 = vunpack.c.h.b16 %v6887
    %v7002 = vunpack.c.l.b16 %v6888
    %v7003 = vunpack.c.h.b16 %v6888
    %v7004 = vunpack.c.l.b16 %v6889
    %v7005 = vunpack.c.h.b16 %v6889
    %v7006 = vunpack.c.l.b16 %v6890
    %v7007 = vunpack.c.h.b16 %v6890
    %v7008 = vunpack.c.l.b16 %v6891
    %v7009 = vunpack.c.h.b16 %v6891
    %v7010 = vunpack.c.l.b16 %v6892
    %v7011 = vunpack.c.h.b16 %v6892
    %v7012 = vunpack.c.l.b16 %v6893
    %v7013 = vunpack.c.h.b16 %v6893
    %v7014 = vunpack.c.l.b16 %v6894
    %v7015 = vunpack.c.h.b16 %v6894
    %v7016 = vunpack.c.l.b16 %v6895
    %v7017 = vunpack.c.h.b16 %v6895
    %v7018 = vunpack.c.l.b16 %v6896
    %v7019 = vunpack.c.h.b16 %v6896
    %v7020 = vunpack.c.l.b16 %v6897
    %v7021 = vunpack.c.h.b16 %v6897
    %v7022 = vunpack.c.l.b16 %v6898
    %v7023 = vunpack.c.h.b16 %v6898
    %v7024 = vunpack.c.l.b16 %v6899
    %v7025 = vunpack.c.h.b16 %v6899
    %v7026 = vunpack.c.l.b16 %v6900
    %v7027 = vunpack.c.h.b16 %v6900
    %v7028 = vunpack.c.l.b16 %v6901
    %v7029 = vunpack.c.h.b16 %v6901
    %v7030 = vunpack.c.l.b16 %v6902
    %v7031 = vunpack.c.h.b16 %v6902
    %v7032 = vunpack.c.l.b16 %v6903
    %v7033 = vunpack.c.h.b16 %v6903
    %v7034 = vunpack.c.l.b16 %v6904
    %v7035 = vunpack.c.h.b16 %v6904
    %v7036 = vunpack.c.l.b16 %v6905
    %v7037 = vunpack.c.h.b16 %v6905
    %v7038 = vunpack.c.l.b16 %v6906
    %v7039 = vunpack.c.h.b16 %v6906
    %v7040 = vunpack.c.l.b16 %v6907
    %v7041 = vunpack.c.h.b16 %v6907
    %v7042 = vunpack.c.l.b16 %v6908
    %v7043 = vunpack.c.h.b16 %v6908
    %v7044 = vunpack.c.l.b16 %v6909
    %v7045 = vunpack.c.h.b16 %v6909
    %v7046 = vunpack.c.l.b16 %v6910
    %v7047 = vunpack.c.h.b16 %v6910
    %v7048 = vunpack.c.l.b16 %v6911
    %v7049 = vunpack.c.h.b16 %v6911
    %v7050 = vunpack.c.l.b16 %v6912
    %v7051 = vunpack.c.h.b16 %v6912
    %v7052 = vunpack.c.l.b16 %v6913
    %v7053 = vunpack.c.h.b16 %v6913
    %v7054 = vunpack.c.l.b16 %v6914
    %v7055 = vunpack.c.h.b16 %v6914
    %v7056 = vunpack.c.l.b16 %v6915
    %v7057 = vunpack.c.h.b16 %v6915
    %v7058 = vunpack.c.l.b16 %v6916
    %v7059 = vunpack.c.h.b16 %v6916
    %v7060 = vunpack.c.l.b16 %v6917
    %v7061 = vunpack.c.h.b16 %v6917
    %v7062 = vunpack.c.l.b16 %v6918
    %v7063 = vunpack.c.h.b16 %v6918
    %v7064 = vunpack.c.l.b16 %v6919
    %v7065 = vunpack.c.h.b16 %v6919
    %v7066 = vunpack.c.l.b16 %v6920
    %v7067 = vunpack.c.h.b16 %v6920
    %v7068 = vunpack.c.l.b16 %v6921
    %v7069 = vunpack.c.h.b16 %v6921
    %v7070 = vunpack.c.l.b16 %v6922
    %v7071 = vunpack.c.h.b16 %v6922
    %v7072 = vunpack.c.l.b16 %v6923
    %v7073 = vunpack.c.h.b16 %v6923
    %v7074 = vunpack.c.l.b16 %v6924
    %v7075 = vunpack.c.h.b16 %v6924
    %v7076 = vunpack.c.l.b16 %v6925
    %v7077 = vunpack.c.h.b16 %v6925
    %v7078 = vunpack.c.l.b16 %v6926
    %v7079 = vunpack.c.h.b16 %v6926
    %v7080 = vunpack.c.l.b16 %v6927
    %v7081 = vunpack.c.h.b16 %v6927
    %v7082 = vunpack.c.l.b16 %v6928
    %v7083 = vunpack.c.h.b16 %v6928
    %v7084 = vunpack.c.l.b16 %v6929
    %v7085 = vunpack.c.h.b16 %v6929
    %v7086 = vpack.c.b16 %v6992, %v6990
    %v7087 = vpack.c.b16 %v6993, %v6991
    %v7088 = vpack.c.b16 %v6996, %v6994
    %v7089 = vpack.c.b16 %v6997, %v6995
    %v7090 = vpack.c.b16 %v7000, %v6998
    %v7091 = vpack.c.b16 %v7001, %v6999
    %v7092 = vpack.c.b16 %v7004, %v7002
    %v7093 = vpack.c.b16 %v7005, %v7003
    %v7094 = vpack.c.b16 %v7008, %v7006
    %v7095 = vpack.c.b16 %v7009, %v7007
    %v7096 = vpack.c.b16 %v7012, %v7010
    %v7097 = vpack.c.b16 %v7013, %v7011
    %v7098 = vpack.c.b16 %v7016, %v7014
    %v7099 = vpack.c.b16 %v7017, %v7015
    %v7100 = vpack.c.b16 %v7020, %v7018
    %v7101 = vpack.c.b16 %v7021, %v7019
    %v7102 = vpack.c.b16 %v7024, %v7022
    %v7103 = vpack.c.b16 %v7025, %v7023
    %v7104 = vpack.c.b16 %v7028, %v7026
    %v7105 = vpack.c.b16 %v7029, %v7027
    %v7106 = vpack.c.b16 %v7032, %v7030
    %v7107 = vpack.c.b16 %v7033, %v7031
    %v7108 = vpack.c.b16 %v7036, %v7034
    %v7109 = vpack.c.b16 %v7037, %v7035
    %v7110 = vpack.c.b16 %v7040, %v7038
    %v7111 = vpack.c.b16 %v7041, %v7039
    %v7112 = vpack.c.b16 %v7044, %v7042
    %v7113 = vpack.c.b16 %v7045, %v7043
    %v7114 = vpack.c.b16 %v7048, %v7046
    %v7115 = vpack.c.b16 %v7049, %v7047
    %v7116 = vpack.c.b16 %v7052, %v7050
    %v7117 = vpack.c.b16 %v7053, %v7051
    %v7118 = vpack.c.b16 %v7056, %v7054
    %v7119 = vpack.c.b16 %v7057, %v7055
    %v7120 = vpack.c.b16 %v7060, %v7058
    %v7121 = vpack.c.b16 %v7061, %v7059
    %v7122 = vpack.c.b16 %v7064, %v7062
    %v7123 = vpack.c.b16 %v7065, %v7063
    %v7124 = vpack.c.b16 %v7068, %v7066
    %v7125 = vpack.c.b16 %v7069, %v7067
    %v7126 = vpack.c.b16 %v7072, %v7070
    %v7127 = vpack.c.b16 %v7073, %v7071
    %v7128 = vpack.c.b16 %v7076, %v7074
    %v7129 = vpack.c.b16 %v7077, %v7075
    %v7130 = vpack.c.b16 %v7080, %v7078
    %v7131 = vpack.c.b16 %v7081, %v7079
    %v7132 = vpack.c.b16 %v7084, %v7082
    %v7133 = vpack.c.b16 %v7085, %v7083
    %7182 = vmatprep.subr.bf16.mxu0 %v7101
    %7183 = vmatpush1.bf16.msra.mxu0 %v7100
    %7184 = vmatprep.subr.bf16.mxu0 %v7099
    %7185 = vmatpush1.bf16.msra.mxu0 %v7098
    %7186 = vmatprep.subr.bf16.mxu0 %v7097
    %7187 = vmatpush1.bf16.msra.mxu0 %v7096
    %7188 = vmatprep.subr.bf16.mxu0 %v7095
    %7189 = vmatpush1.bf16.msra.mxu0 %v7094
    %7190 = vmatprep.subr.bf16.mxu0 %v7093
    %7191 = vmatpush1.bf16.msra.mxu0 %v7092
    %7192 = vmatprep.subr.bf16.mxu0 %v7091
    %7193 = vmatpush1.bf16.msra.mxu0 %v7090
    %7194 = vmatprep.subr.bf16.mxu0 %v7089
    %7195 = vmatpush1.bf16.msra.mxu0 %v7088
    %7196 = vmatprep.subr.bf16.mxu0 %v7087
    %7197 = vmatpush1.bf16.msra.mxu0 %v7086
    %7198 = vmatprep.subr.bf16.mxu0 %v7117
    %7199 = vmatpush2.bf16.msra.mxu0 %v7116
    %7200 = vmatprep.subr.bf16.mxu0 %v7115
    %7201 = vmatpush2.bf16.msra.mxu0 %v7114
    %7202 = vmatprep.subr.bf16.mxu0 %v7113
    %7203 = vmatpush2.bf16.msra.mxu0 %v7112
    %7204 = vmatprep.subr.bf16.mxu0 %v7111
    %7205 = vmatpush2.bf16.msra.mxu0 %v7110
    %7206 = vmatprep.subr.bf16.mxu0 %v7109
    %7207 = vmatpush2.bf16.msra.mxu0 %v7108
    %7208 = vmatprep.subr.bf16.mxu0 %v7107
    %7209 = vmatpush2.bf16.msra.mxu0 %v7106
    %7210 = vmatprep.subr.bf16.mxu0 %v7105
    %7211 = vmatpush2.bf16.msra.mxu0 %v7104
    %7212 = vmatprep.subr.bf16.mxu0 %v7103
    %7213 = vmatpush2.bf16.msra.mxu0 %v7102
    %7214 = vmatprep.mubr.bf16.mxu0 %v6880
    %7215 = vmatmul.mubr.bf16.gmra.mxu0 %v6879
    %v7216 = vpop.f32.mrf.mxu0
    %v7217 = vadd.f32 %v6935, %v7216
    %v7218 = vpop.f32.mrf.mxu0
    %v7219 = vadd.f32 %v6939, %v7218
    %v7220 = vpop.f32.mrf.mxu0
    %v7221 = vadd.f32 %v6935, %v7220
    %v7222 = vpop.f32.mrf.mxu0
    %v7223 = vadd.f32 %v6939, %v7222
    %7224 = vdwg.mxu0
    %7225 = vmatprep.subr.bf16.mxu0 %v7133
    %7226 = vmatpush1.bf16.msra.mxu0 %v7132
    %7227 = vmatprep.subr.bf16.mxu0 %v7131
    %7228 = vmatpush1.bf16.msra.mxu0 %v7130
    %7229 = vmatprep.subr.bf16.mxu0 %v7129
    %7230 = vmatpush1.bf16.msra.mxu0 %v7128
    %7231 = vmatprep.subr.bf16.mxu0 %v7127
    %7232 = vmatpush1.bf16.msra.mxu0 %v7126
    %7233 = vmatprep.subr.bf16.mxu0 %v7125
    %7234 = vmatpush1.bf16.msra.mxu0 %v7124
    %7235 = vmatprep.subr.bf16.mxu0 %v7123
    %7236 = vmatpush1.bf16.msra.mxu0 %v7122
    %7237 = vmatprep.subr.bf16.mxu0 %v7121
    %7238 = vmatpush1.bf16.msra.mxu0 %v7120
    %7239 = vmatprep.subr.bf16.mxu0 %v7119
    %7240 = vmatpush1.bf16.msra.mxu0 %v7118
    %7241 = vmatprep.subr.bf16.mxu0 0
    %7242 = vmatpush2.bf16.msra.mxu0 0
    %7243 = vmatprep.subr.bf16.mxu0 0
    %7244 = vmatpush2.bf16.msra.mxu0 0
    %7245 = vmatprep.subr.bf16.mxu0 0
    %7246 = vmatpush2.bf16.msra.mxu0 0
    %7247 = vmatprep.subr.bf16.mxu0 0
    %7248 = vmatpush2.bf16.msra.mxu0 0
    %7249 = vmatprep.subr.bf16.mxu0 0
    %7250 = vmatpush2.bf16.msra.mxu0 0
    %7251 = vmatprep.subr.bf16.mxu0 0
    %7252 = vmatpush2.bf16.msra.mxu0 0
    %7253 = vmatprep.subr.bf16.mxu0 0
    %7254 = vmatpush2.bf16.msra.mxu0 0
    %7255 = vmatprep.subr.bf16.mxu0 0
    %7256 = vmatpush2.bf16.msra.mxu0 0
    %7257 = vmatprep.mubr.bf16.mxu0 0
    %7258 = vmatmul.mubr.bf16.gmra.mxu0 %v6881
    %v7259 = vpop.f32.mrf.mxu0
    %v7260 = vadd.f32 %v7217, %v7259
    %v7261 = vpop.f32.mrf.mxu0
    %v7262 = vadd.f32 %v7219, %v7261
    %v7263 = vpop.f32.mrf.mxu0
    %v7264 = vadd.f32 %v7221, %v7263
    %v7265 = vpop.f32.mrf.mxu0
    %v7266 = vadd.f32 %v7223, %v7265
    %7267 = vdwg.mxu0
    %v7268 = vmax.f32 %v7260, 0.0
    %v7269 = vmax.f32 %v7262, 0.0
    %v7270 = vmax.f32 %v7264, 0.0
    %v7271 = vmax.f32 %v7266, 0.0
    %v7272 = vrot.slane %v7268, 7
    %v7273 = vrot.slane %v7269, 7
    %v7274 = vrot.slane %v7270, 7
    %v7275 = vrot.slane %v7271, 7
    %v7276 = vsel %vm609, %v7272, %v7274
    %v7277 = vsel %vm609, %v7273, %v7275
    %v7278 = vsel %vm609, %v7274, %v7272
    %v7279 = vsel %vm609, %v7275, %v7273
    %v7280 = vmul.f32 %v7278, %v597
    %v7281 = vmul.f32 %v7279, %v597
    %v7282 = vmul.f32 %v7276, %v598
    %v7283 = vmul.f32 %v7277, %v598
    %v7284 = vrot.slane %v7268, 1
    %v7285 = vrot.slane %v7269, 1
    %v7286 = vrot.slane %v7270, 1
    %v7287 = vrot.slane %v7271, 1
    %v7288 = vsel %vm616, %v7284, %v7286
    %v7289 = vsel %vm616, %v7285, %v7287
    %v7290 = vsel %vm616, %v7286, %v7284
    %v7291 = vsel %vm616, %v7287, %v7285
    %v7292 = vmul.f32 %v7288, %v603
    %v7293 = vmul.f32 %v7289, %v603
    %v7294 = vmul.f32 %v7290, %v604
    %v7295 = vmul.f32 %v7291, %v604
    %v7296 = vpack.c.bf16 %v7282, %v7280
    %v7297 = vpack.c.bf16 %v7283, %v7281
    %v7298 = vpack.c.bf16 %v7270, %v7268
    %v7299 = vpack.c.bf16 %v7271, %v7269
    %v7300 = vpack.c.bf16 %v7294, %v7292
    %v7301 = vpack.c.bf16 %v7295, %v7293
    %v7302 = vld [vmem:[#allocation42] sm:$0xf]
    %v7303 = vld [vmem:[#allocation42 + $0x4] sm:$0xf]
    %v7304 = vld [vmem:[#allocation42 + $0x8] sm:$0xf]
    %v7305 = vld [vmem:[#allocation42 + $0xc] sm:$0xf]
    %v7306 = vld [vmem:[#allocation42 + $0x10] sm:$0xf]
    %v7307 = vld [vmem:[#allocation42 + $0x14] sm:$0xf]
    %v7308 = vld [vmem:[#allocation42 + $0x18] sm:$0xf]
    %v7309 = vld [vmem:[#allocation42 + $0x1c] sm:$0xf]
    %v7310 = vld [vmem:[#allocation42 + $0x20] sm:$0xf]
    %v7311 = vld [vmem:[#allocation42 + $0x24] sm:$0xf]
    %v7312 = vld [vmem:[#allocation42 + $0x28] sm:$0xf]
    %v7313 = vld [vmem:[#allocation42 + $0x2c] sm:$0xf]
    %v7314 = vld [vmem:[#allocation42 + $0x30] sm:$0xf]
    %v7315 = vld [vmem:[#allocation42 + $0x34] sm:$0xf]
    %v7316 = vld [vmem:[#allocation42 + $0x38] sm:$0xf]
    %v7317 = vld [vmem:[#allocation42 + $0x3c] sm:$0xf]
    %v7318 = vld [vmem:[#allocation42 + $0x40] sm:$0xf]
    %v7319 = vld [vmem:[#allocation42 + $0x44] sm:$0xf]
    %v7320 = vld [vmem:[#allocation42 + $0x48] sm:$0xf]
    %v7321 = vld [vmem:[#allocation42 + $0x4c] sm:$0xf]
    %v7322 = vld [vmem:[#allocation42 + $0x50] sm:$0xf]
    %v7323 = vld [vmem:[#allocation42 + $0x54] sm:$0xf]
    %v7324 = vld [vmem:[#allocation42 + $0x58] sm:$0xf]
    %v7325 = vld [vmem:[#allocation42 + $0x5c] sm:$0xf]
    %v7326 = vld [vmem:[#allocation42 + $0x60] sm:$0xf]
    %v7327 = vld [vmem:[#allocation42 + $0x64] sm:$0xf]
    %v7328 = vld [vmem:[#allocation42 + $0x68] sm:$0xf]
    %v7329 = vld [vmem:[#allocation42 + $0x6c] sm:$0xf]
    %v7330 = vld [vmem:[#allocation42 + $0x70] sm:$0xf]
    %v7331 = vld [vmem:[#allocation42 + $0x74] sm:$0xf]
    %v7332 = vld [vmem:[#allocation42 + $0x78] sm:$0xf]
    %v7333 = vld [vmem:[#allocation42 + $0x7c] sm:$0xf]
    %v7334 = vld [vmem:[#allocation42 + $0x80] sm:$0xf]
    %v7335 = vld [vmem:[#allocation42 + $0x84] sm:$0xf]
    %v7336 = vld [vmem:[#allocation42 + $0x88] sm:$0xf]
    %v7337 = vld [vmem:[#allocation42 + $0x8c] sm:$0xf]
    %v7338 = vld [vmem:[#allocation42 + $0x90] sm:$0xf]
    %v7339 = vld [vmem:[#allocation42 + $0x94] sm:$0xf]
    %v7340 = vld [vmem:[#allocation42 + $0x98] sm:$0xf]
    %v7341 = vld [vmem:[#allocation42 + $0x9c] sm:$0xf]
    %v7342 = vld [vmem:[#allocation42 + $0xa0] sm:$0xf]
    %v7343 = vld [vmem:[#allocation42 + $0xa4] sm:$0xf]
    %v7344 = vld [vmem:[#allocation42 + $0xa8] sm:$0xf]
    %v7345 = vld [vmem:[#allocation42 + $0xac] sm:$0xf]
    %v7346 = vld [vmem:[#allocation42 + $0xb0] sm:$0xf]
    %v7347 = vld [vmem:[#allocation42 + $0xb4] sm:$0xf]
    %v7348 = vld [vmem:[#allocation42 + $0xb8] sm:$0xf]
    %v7349 = vld [vmem:[#allocation42 + $0xbc] sm:$0xf]
    %v7350 = vld [vmem:[#allocation42 + $0xc0] sm:$0xf]
    %v7351 = vld [vmem:[#allocation42 + $0xc4] sm:$0xf]
    %v7352 = vld [vmem:[#allocation42 + $0xc8] sm:$0xf]
    %v7353 = vld [vmem:[#allocation42 + $0xcc] sm:$0xf]
    %v7354 = vld [vmem:[#allocation42 + $0xd0] sm:$0xf]
    %v7355 = vld [vmem:[#allocation42 + $0xd4] sm:$0xf]
    %v7356 = vld [vmem:[#allocation42 + $0xd8] sm:$0xf]
    %v7357 = vld [vmem:[#allocation42 + $0xdc] sm:$0xf]
    %v7358 = vld [vmem:[#allocation42 + $0xe0] sm:$0xf]
    %v7359 = vld [vmem:[#allocation42 + $0xe4] sm:$0xf]
    %v7360 = vld [vmem:[#allocation42 + $0xe8] sm:$0xf]
    %v7361 = vld [vmem:[#allocation42 + $0xec] sm:$0xf]
    %v7362 = vld [vmem:[#allocation42 + $0xf0] sm:$0xf]
    %v7363 = vld [vmem:[#allocation42 + $0xf4] sm:$0xf]
    %v7364 = vld [vmem:[#allocation42 + $0xf8] sm:$0xf]
    %v7365 = vld [vmem:[#allocation42 + $0xfc] sm:$0xf]
    %v7366 = vld [vmem:[#allocation42 + $0x100] sm:$0xf]
    %v7367 = vld [vmem:[#allocation42 + $0x104] sm:$0xf]
    %v7368 = vld [vmem:[#allocation42 + $0x108] sm:$0xf]
    %v7369 = vld [vmem:[#allocation42 + $0x10c] sm:$0xf]
    %v7370 = vld [vmem:[#allocation42 + $0x110] sm:$0xf]
    %v7371 = vld [vmem:[#allocation42 + $0x114] sm:$0xf]
    %v7372 = vld [vmem:[#allocation42 + $0x118] sm:$0xf]
    %v7373 = vld [vmem:[#allocation42 + $0x11c] sm:$0xf]
    %v7374 = vld [vmem:[#allocation42 + $0x120] sm:$0xf]
    %v7375 = vld [vmem:[#allocation42 + $0x124] sm:$0xf]
    %v7376 = vld [vmem:[#allocation42 + $0x128] sm:$0xf]
    %v7377 = vld [vmem:[#allocation42 + $0x12c] sm:$0xf]
    %v7378 = vld [vmem:[#allocation42 + $0x130] sm:$0xf]
    %v7379 = vld [vmem:[#allocation42 + $0x134] sm:$0xf]
    %v7380 = vld [vmem:[#allocation42 + $0x138] sm:$0xf]
    %v7381 = vld [vmem:[#allocation42 + $0x13c] sm:$0xf]
    %v7382 = vld [vmem:[#allocation42 + $0x140] sm:$0xf]
    %v7383 = vld [vmem:[#allocation42 + $0x144] sm:$0xf]
    %v7384 = vld [vmem:[#allocation42 + $0x148] sm:$0xf]
    %v7385 = vld [vmem:[#allocation42 + $0x14c] sm:$0xf]
    %v7386 = vld [vmem:[#allocation42 + $0x150] sm:$0xf]
    %v7387 = vld [vmem:[#allocation42 + $0x154] sm:$0xf]
    %v7388 = vld [vmem:[#allocation42 + $0x158] sm:$0xf]
    %v7389 = vld [vmem:[#allocation42 + $0x15c] sm:$0xf]
    %v7390 = vld [vmem:[#allocation42 + $0x160] sm:$0xf]
    %v7391 = vld [vmem:[#allocation42 + $0x164] sm:$0xf]
    %v7392 = vld [vmem:[#allocation42 + $0x168] sm:$0xf]
    %v7393 = vld [vmem:[#allocation42 + $0x16c] sm:$0xf]
    %v7394 = vld [vmem:[#allocation42 + $0x170] sm:$0xf]
    %v7395 = vld [vmem:[#allocation42 + $0x174] sm:$0xf]
    %v7396 = vld [vmem:[#allocation42 + $0x178] sm:$0xf]
    %v7397 = vld [vmem:[#allocation42 + $0x17c] sm:$0xf]
    %v7398 = vld [vmem:[#allocation43] sm:$0x1]
    %v7400 = vlaneseq
    %v7401 = vshrl.u32 %v7400, 7
    %v7402 = vsub.s32 0, %v7401
    %v7403 = vrot.slane %v7398, %v7402
    %v7501 = vunpack.c.l.b16 %v7302
    %v7502 = vunpack.c.l.b16 %v7303
    %v7503 = vunpack.c.l.b16 %v7304
    %v7504 = vunpack.c.l.b16 %v7305
    %v7505 = vunpack.c.l.b16 %v7306
    %v7506 = vunpack.c.l.b16 %v7307
    %v7507 = vunpack.c.l.b16 %v7308
    %v7508 = vunpack.c.l.b16 %v7309
    %v7509 = vunpack.c.l.b16 %v7310
    %v7510 = vunpack.c.l.b16 %v7311
    %v7511 = vunpack.c.l.b16 %v7312
    %v7512 = vunpack.c.l.b16 %v7313
    %v7513 = vunpack.c.l.b16 %v7314
    %v7514 = vunpack.c.l.b16 %v7315
    %v7515 = vunpack.c.l.b16 %v7316
    %v7516 = vunpack.c.l.b16 %v7317
    %v7517 = vunpack.c.l.b16 %v7318
    %v7518 = vunpack.c.l.b16 %v7319
    %v7519 = vunpack.c.l.b16 %v7320
    %v7520 = vunpack.c.l.b16 %v7321
    %v7521 = vunpack.c.l.b16 %v7322
    %v7522 = vunpack.c.l.b16 %v7323
    %v7523 = vunpack.c.l.b16 %v7324
    %v7524 = vunpack.c.l.b16 %v7325
    %v7525 = vunpack.c.l.b16 %v7326
    %v7526 = vunpack.c.l.b16 %v7327
    %v7527 = vunpack.c.l.b16 %v7328
    %v7528 = vunpack.c.l.b16 %v7329
    %v7529 = vunpack.c.l.b16 %v7330
    %v7530 = vunpack.c.l.b16 %v7331
    %v7531 = vunpack.c.l.b16 %v7332
    %v7532 = vunpack.c.l.b16 %v7333
    %v7533 = vunpack.c.l.b16 %v7334
    %v7534 = vunpack.c.l.b16 %v7335
    %v7535 = vunpack.c.l.b16 %v7336
    %v7536 = vunpack.c.l.b16 %v7337
    %v7537 = vunpack.c.l.b16 %v7338
    %v7538 = vunpack.c.l.b16 %v7339
    %v7539 = vunpack.c.l.b16 %v7340
    %v7540 = vunpack.c.l.b16 %v7341
    %v7541 = vunpack.c.l.b16 %v7342
    %v7542 = vunpack.c.l.b16 %v7343
    %v7543 = vunpack.c.l.b16 %v7344
    %v7544 = vunpack.c.l.b16 %v7345
    %v7545 = vunpack.c.l.b16 %v7346
    %v7546 = vunpack.c.l.b16 %v7347
    %v7547 = vunpack.c.l.b16 %v7348
    %v7548 = vunpack.c.l.b16 %v7349
    %v7549 = vunpack.c.l.b16 %v7350
    %v7550 = vunpack.c.l.b16 %v7351
    %v7551 = vunpack.c.l.b16 %v7352
    %v7552 = vunpack.c.l.b16 %v7353
    %v7553 = vunpack.c.l.b16 %v7354
    %v7554 = vunpack.c.l.b16 %v7355
    %v7555 = vunpack.c.l.b16 %v7356
    %v7556 = vunpack.c.l.b16 %v7357
    %v7557 = vunpack.c.l.b16 %v7358
    %v7558 = vunpack.c.l.b16 %v7359
    %v7559 = vunpack.c.l.b16 %v7360
    %v7560 = vunpack.c.l.b16 %v7361
    %v7561 = vunpack.c.l.b16 %v7362
    %v7562 = vunpack.c.l.b16 %v7363
    %v7563 = vunpack.c.l.b16 %v7364
    %v7564 = vunpack.c.l.b16 %v7365
    %v7565 = vunpack.c.l.b16 %v7366
    %v7566 = vunpack.c.l.b16 %v7367
    %v7567 = vunpack.c.l.b16 %v7368
    %v7568 = vunpack.c.l.b16 %v7369
    %v7569 = vunpack.c.l.b16 %v7370
    %v7570 = vunpack.c.l.b16 %v7371
    %v7571 = vunpack.c.l.b16 %v7372
    %v7572 = vunpack.c.l.b16 %v7373
    %v7573 = vunpack.c.l.b16 %v7374
    %v7574 = vunpack.c.l.b16 %v7375
    %v7575 = vunpack.c.l.b16 %v7376
    %v7576 = vunpack.c.l.b16 %v7377
    %v7577 = vunpack.c.l.b16 %v7378
    %v7578 = vunpack.c.l.b16 %v7379
    %v7579 = vunpack.c.l.b16 %v7380
    %v7580 = vunpack.c.l.b16 %v7381
    %v7581 = vunpack.c.l.b16 %v7382
    %v7582 = vunpack.c.l.b16 %v7383
    %v7583 = vunpack.c.l.b16 %v7384
    %v7584 = vunpack.c.l.b16 %v7385
    %v7585 = vunpack.c.l.b16 %v7386
    %v7586 = vunpack.c.l.b16 %v7387
    %v7587 = vunpack.c.l.b16 %v7388
    %v7588 = vunpack.c.l.b16 %v7389
    %v7589 = vunpack.c.l.b16 %v7390
    %v7590 = vunpack.c.l.b16 %v7391
    %v7591 = vunpack.c.l.b16 %v7392
    %v7592 = vunpack.c.l.b16 %v7393
    %v7593 = vunpack.c.l.b16 %v7394
    %v7594 = vunpack.c.l.b16 %v7395
    %v7595 = vunpack.c.l.b16 %v7396
    %v7596 = vunpack.c.l.b16 %v7397
    %v7597 = vpack.c.b16 %v7502, %v7501
    %v7598 = vpack.c.b16 %v7504, %v7503
    %v7599 = vpack.c.b16 %v7506, %v7505
    %v7600 = vpack.c.b16 %v7508, %v7507
    %v7601 = vpack.c.b16 %v7510, %v7509
    %v7602 = vpack.c.b16 %v7512, %v7511
    %v7603 = vpack.c.b16 %v7514, %v7513
    %v7604 = vpack.c.b16 %v7516, %v7515
    %v7605 = vpack.c.b16 %v7518, %v7517
    %v7606 = vpack.c.b16 %v7520, %v7519
    %v7607 = vpack.c.b16 %v7522, %v7521
    %v7608 = vpack.c.b16 %v7524, %v7523
    %v7609 = vpack.c.b16 %v7526, %v7525
    %v7610 = vpack.c.b16 %v7528, %v7527
    %v7611 = vpack.c.b16 %v7530, %v7529
    %v7612 = vpack.c.b16 %v7532, %v7531
    %v7613 = vpack.c.b16 %v7534, %v7533
    %v7614 = vpack.c.b16 %v7536, %v7535
    %v7615 = vpack.c.b16 %v7538, %v7537
    %v7616 = vpack.c.b16 %v7540, %v7539
    %v7617 = vpack.c.b16 %v7542, %v7541
    %v7618 = vpack.c.b16 %v7544, %v7543
    %v7619 = vpack.c.b16 %v7546, %v7545
    %v7620 = vpack.c.b16 %v7548, %v7547
    %v7621 = vpack.c.b16 %v7550, %v7549
    %v7622 = vpack.c.b16 %v7552, %v7551
    %v7623 = vpack.c.b16 %v7554, %v7553
    %v7624 = vpack.c.b16 %v7556, %v7555
    %v7625 = vpack.c.b16 %v7558, %v7557
    %v7626 = vpack.c.b16 %v7560, %v7559
    %v7627 = vpack.c.b16 %v7562, %v7561
    %v7628 = vpack.c.b16 %v7564, %v7563
    %v7629 = vpack.c.b16 %v7566, %v7565
    %v7630 = vpack.c.b16 %v7568, %v7567
    %v7631 = vpack.c.b16 %v7570, %v7569
    %v7632 = vpack.c.b16 %v7572, %v7571
    %v7633 = vpack.c.b16 %v7574, %v7573
    %v7634 = vpack.c.b16 %v7576, %v7575
    %v7635 = vpack.c.b16 %v7578, %v7577
    %v7636 = vpack.c.b16 %v7580, %v7579
    %v7637 = vpack.c.b16 %v7582, %v7581
    %v7638 = vpack.c.b16 %v7584, %v7583
    %v7639 = vpack.c.b16 %v7586, %v7585
    %v7640 = vpack.c.b16 %v7588, %v7587
    %v7641 = vpack.c.b16 %v7590, %v7589
    %v7642 = vpack.c.b16 %v7592, %v7591
    %v7643 = vpack.c.b16 %v7594, %v7593
    %v7644 = vpack.c.b16 %v7596, %v7595
    %7693 = vmatprep.subr.bf16.mxu0 0
    %7694 = vmatpush1.bf16.msra.mxu0 %v7604
    %7695 = vmatprep.subr.bf16.mxu0 0
    %7696 = vmatpush1.bf16.msra.mxu0 %v7603
    %7697 = vmatprep.subr.bf16.mxu0 0
    %7698 = vmatpush1.bf16.msra.mxu0 %v7602
    %7699 = vmatprep.subr.bf16.mxu0 0
    %7700 = vmatpush1.bf16.msra.mxu0 %v7601
    %7701 = vmatprep.subr.bf16.mxu0 0
    %7702 = vmatpush1.bf16.msra.mxu0 %v7600
    %7703 = vmatprep.subr.bf16.mxu0 0
    %7704 = vmatpush1.bf16.msra.mxu0 %v7599
    %7705 = vmatprep.subr.bf16.mxu0 0
    %7706 = vmatpush1.bf16.msra.mxu0 %v7598
    %7707 = vmatprep.subr.bf16.mxu0 0
    %7708 = vmatpush1.bf16.msra.mxu0 %v7597
    %7709 = vmatprep.subr.bf16.mxu0 0
    %7710 = vmatpush2.bf16.msra.mxu0 %v7612
    %7711 = vmatprep.subr.bf16.mxu0 0
    %7712 = vmatpush2.bf16.msra.mxu0 %v7611
    %7713 = vmatprep.subr.bf16.mxu0 0
    %7714 = vmatpush2.bf16.msra.mxu0 %v7610
    %7715 = vmatprep.subr.bf16.mxu0 0
    %7716 = vmatpush2.bf16.msra.mxu0 %v7609
    %7717 = vmatprep.subr.bf16.mxu0 0
    %7718 = vmatpush2.bf16.msra.mxu0 %v7608
    %7719 = vmatprep.subr.bf16.mxu0 0
    %7720 = vmatpush2.bf16.msra.mxu0 %v7607
    %7721 = vmatprep.subr.bf16.mxu0 0
    %7722 = vmatpush2.bf16.msra.mxu0 %v7606
    %7723 = vmatprep.subr.bf16.mxu0 0
    %7724 = vmatpush2.bf16.msra.mxu0 %v7605
    %7725 = vmatprep.mubr.bf16.mxu0 %v7297
    %7726 = vmatmul.mubr.bf16.gmra.mxu0 %v7296
    %v7727 = vpop.f32.mrf.mxu0
    %v7728 = vadd.f32 %v7403, %v7727
    %v7729 = vpop.f32.mrf.mxu0
    %v7730 = vpop.f32.mrf.mxu0
    %v7731 = vadd.f32 %v7403, %v7730
    %v7732 = vpop.f32.mrf.mxu0
    %7733 = vdwg.mxu0
    %7734 = vmatprep.subr.bf16.mxu0 0
    %7735 = vmatpush1.bf16.msra.mxu0 %v7620
    %7736 = vmatprep.subr.bf16.mxu0 0
    %7737 = vmatpush1.bf16.msra.mxu0 %v7619
    %7738 = vmatprep.subr.bf16.mxu0 0
    %7739 = vmatpush1.bf16.msra.mxu0 %v7618
    %7740 = vmatprep.subr.bf16.mxu0 0
    %7741 = vmatpush1.bf16.msra.mxu0 %v7617
    %7742 = vmatprep.subr.bf16.mxu0 0
    %7743 = vmatpush1.bf16.msra.mxu0 %v7616
    %7744 = vmatprep.subr.bf16.mxu0 0
    %7745 = vmatpush1.bf16.msra.mxu0 %v7615
    %7746 = vmatprep.subr.bf16.mxu0 0
    %7747 = vmatpush1.bf16.msra.mxu0 %v7614
    %7748 = vmatprep.subr.bf16.mxu0 0
    %7749 = vmatpush1.bf16.msra.mxu0 %v7613
    %7750 = vmatprep.subr.bf16.mxu0 0
    %7751 = vmatpush2.bf16.msra.mxu0 %v7628
    %7752 = vmatprep.subr.bf16.mxu0 0
    %7753 = vmatpush2.bf16.msra.mxu0 %v7627
    %7754 = vmatprep.subr.bf16.mxu0 0
    %7755 = vmatpush2.bf16.msra.mxu0 %v7626
    %7756 = vmatprep.subr.bf16.mxu0 0
    %7757 = vmatpush2.bf16.msra.mxu0 %v7625
    %7758 = vmatprep.subr.bf16.mxu0 0
    %7759 = vmatpush2.bf16.msra.mxu0 %v7624
    %7760 = vmatprep.subr.bf16.mxu0 0
    %7761 = vmatpush2.bf16.msra.mxu0 %v7623
    %7762 = vmatprep.subr.bf16.mxu0 0
    %7763 = vmatpush2.bf16.msra.mxu0 %v7622
    %7764 = vmatprep.subr.bf16.mxu0 0
    %7765 = vmatpush2.bf16.msra.mxu0 %v7621
    %7766 = vmatprep.mubr.bf16.mxu0 %v7299
    %7767 = vmatmul.mubr.bf16.gmra.mxu0 %v7298
    %v7768 = vpop.f32.mrf.mxu0
    %v7769 = vadd.f32 %v7728, %v7768
    %v7770 = vpop.f32.mrf.mxu0
    %v7771 = vpop.f32.mrf.mxu0
    %v7772 = vadd.f32 %v7731, %v7771
    %v7773 = vpop.f32.mrf.mxu0
    %7774 = vdwg.mxu0
    %7775 = vmatprep.subr.bf16.mxu0 0
    %7776 = vmatpush1.bf16.msra.mxu0 %v7636
    %7777 = vmatprep.subr.bf16.mxu0 0
    %7778 = vmatpush1.bf16.msra.mxu0 %v7635
    %7779 = vmatprep.subr.bf16.mxu0 0
    %7780 = vmatpush1.bf16.msra.mxu0 %v7634
    %7781 = vmatprep.subr.bf16.mxu0 0
    %7782 = vmatpush1.bf16.msra.mxu0 %v7633
    %7783 = vmatprep.subr.bf16.mxu0 0
    %7784 = vmatpush1.bf16.msra.mxu0 %v7632
    %7785 = vmatprep.subr.bf16.mxu0 0
    %7786 = vmatpush1.bf16.msra.mxu0 %v7631
    %7787 = vmatprep.subr.bf16.mxu0 0
    %7788 = vmatpush1.bf16.msra.mxu0 %v7630
    %7789 = vmatprep.subr.bf16.mxu0 0
    %7790 = vmatpush1.bf16.msra.mxu0 %v7629
    %7791 = vmatprep.subr.bf16.mxu0 0
    %7792 = vmatpush2.bf16.msra.mxu0 %v7644
    %7793 = vmatprep.subr.bf16.mxu0 0
    %7794 = vmatpush2.bf16.msra.mxu0 %v7643
    %7795 = vmatprep.subr.bf16.mxu0 0
    %7796 = vmatpush2.bf16.msra.mxu0 %v7642
    %7797 = vmatprep.subr.bf16.mxu0 0
    %7798 = vmatpush2.bf16.msra.mxu0 %v7641
    %7799 = vmatprep.subr.bf16.mxu0 0
    %7800 = vmatpush2.bf16.msra.mxu0 %v7640
    %7801 = vmatprep.subr.bf16.mxu0 0
    %7802 = vmatpush2.bf16.msra.mxu0 %v7639
    %7803 = vmatprep.subr.bf16.mxu0 0
    %7804 = vmatpush2.bf16.msra.mxu0 %v7638
    %7805 = vmatprep.subr.bf16.mxu0 0
    %7806 = vmatpush2.bf16.msra.mxu0 %v7637
    %7807 = vmatprep.mubr.bf16.mxu0 %v7301
    %7808 = vmatmul.mubr.bf16.gmra.mxu0 %v7300
    %v7809 = vpop.f32.mrf.mxu0
    %v7810 = vadd.f32 %v7769, %v7809
    %v7811 = vpop.f32.mrf.mxu0
    %v7812 = vpop.f32.mrf.mxu0
    %v7813 = vadd.f32 %v7772, %v7812
    %v7814 = vpop.f32.mrf.mxu0
    %7815 = vdwg.mxu0
    %v7816 = vmax.f32 %v7810, 0.0
    %v7817 = vmax.f32 %v7813, 0.0
    %v7818 = vsub.f32 %v7816, %v6865
    %v7819 = vsub.f32 %v7817, %v6866
    %v7820 = vrot.slane %v7818, 7
    %v7821 = vrot.slane %v7819, 7
    %v7822 = vsel %vm609, %v7820, %v7821
    %v7823 = vsel %vm609, %v7821, %v7820
    %v7824 = vmul.f32 %v7823, %v597
    %v7825 = vmul.f32 %v7822, %v598
    %v7826 = vrot.slane %v7818, 1
    %v7827 = vrot.slane %v7819, 1
    %v7828 = vsel %vm616, %v7826, %v7827
    %v7829 = vsel %vm616, %v7827, %v7826
    %v7830 = vmul.f32 %v7828, %v603
    %v7831 = vmul.f32 %v7829, %v604
    %v7832 = vpack.c.bf16 %v7825, %v7824
    %v7833 = vpack.c.bf16 %v7819, %v7818
    %v7834 = vpack.c.bf16 %v7831, %v7830
    %v7835 = vld [vmem:[#allocation45] sm:$0xff]
    %v7836 = vld [vmem:[#allocation45 + $0x8] sm:$0xff]
    %v7837 = vld [vmem:[#allocation45 + $0x10] sm:$0xff]
    %v7838 = vld [vmem:[#allocation45 + $0x18] sm:$0xff]
    %v7839 = vld [vmem:[#allocation45 + $0x20] sm:$0xff]
    %v7840 = vld [vmem:[#allocation45 + $0x28] sm:$0xff]
    %v7841 = vld [vmem:[#allocation45 + $0x30] sm:$0xff]
    %v7842 = vld [vmem:[#allocation45 + $0x38] sm:$0xff]
    %v7843 = vld [vmem:[#allocation45 + $0x40] sm:$0xff]
    %v7844 = vld [vmem:[#allocation45 + $0x48] sm:$0xff]
    %v7845 = vld [vmem:[#allocation45 + $0x50] sm:$0xff]
    %v7846 = vld [vmem:[#allocation45 + $0x58] sm:$0xff]
    %v7847 = vld [vmem:[#allocation45 + $0x60] sm:$0xff]
    %v7848 = vld [vmem:[#allocation45 + $0x68] sm:$0xff]
    %v7849 = vld [vmem:[#allocation45 + $0x70] sm:$0xff]
    %v7850 = vld [vmem:[#allocation45 + $0x78] sm:$0xff]
    %v7851 = vld [vmem:[#allocation45 + $0x80] sm:$0xff]
    %v7852 = vld [vmem:[#allocation45 + $0x88] sm:$0xff]
    %v7853 = vld [vmem:[#allocation45 + $0x90] sm:$0xff]
    %v7854 = vld [vmem:[#allocation45 + $0x98] sm:$0xff]
    %v7855 = vld [vmem:[#allocation45 + $0xa0] sm:$0xff]
    %v7856 = vld [vmem:[#allocation45 + $0xa8] sm:$0xff]
    %v7857 = vld [vmem:[#allocation45 + $0xb0] sm:$0xff]
    %v7858 = vld [vmem:[#allocation45 + $0xb8] sm:$0xff]
    %v7859 = vld [vmem:[#allocation45 + $0xc0] sm:$0xff]
    %v7860 = vld [vmem:[#allocation45 + $0xc8] sm:$0xff]
    %v7861 = vld [vmem:[#allocation45 + $0xd0] sm:$0xff]
    %v7862 = vld [vmem:[#allocation45 + $0xd8] sm:$0xff]
    %v7863 = vld [vmem:[#allocation45 + $0xe0] sm:$0xff]
    %v7864 = vld [vmem:[#allocation45 + $0xe8] sm:$0xff]
    %v7865 = vld [vmem:[#allocation45 + $0xf0] sm:$0xff]
    %v7866 = vld [vmem:[#allocation45 + $0xf8] sm:$0xff]
    %v7867 = vld [vmem:[#allocation45 + $0x100] sm:$0xff]
    %v7868 = vld [vmem:[#allocation45 + $0x108] sm:$0xff]
    %v7869 = vld [vmem:[#allocation45 + $0x110] sm:$0xff]
    %v7870 = vld [vmem:[#allocation45 + $0x118] sm:$0xff]
    %v7871 = vld [vmem:[#allocation45 + $0x120] sm:$0xff]
    %v7872 = vld [vmem:[#allocation45 + $0x128] sm:$0xff]
    %v7873 = vld [vmem:[#allocation45 + $0x130] sm:$0xff]
    %v7874 = vld [vmem:[#allocation45 + $0x138] sm:$0xff]
    %v7875 = vld [vmem:[#allocation45 + $0x140] sm:$0xff]
    %v7876 = vld [vmem:[#allocation45 + $0x148] sm:$0xff]
    %v7877 = vld [vmem:[#allocation45 + $0x150] sm:$0xff]
    %v7878 = vld [vmem:[#allocation45 + $0x158] sm:$0xff]
    %v7879 = vld [vmem:[#allocation45 + $0x160] sm:$0xff]
    %v7880 = vld [vmem:[#allocation45 + $0x168] sm:$0xff]
    %v7881 = vld [vmem:[#allocation45 + $0x170] sm:$0xff]
    %v7882 = vld [vmem:[#allocation45 + $0x178] sm:$0xff]
    %v7883 = vld [vmem:[#allocation46] sm:$0x3]
    %v7885 = vlaneseq
    %v7886 = vshrl.u32 %v7885, 7
    %v7887 = vsub.s32 0, %v7886
    %v7888 = vrot.slane %v7883, %v7887
    %v7889 = vlaneseq
    %v7890 = vshrl.u32 %v7889, 7
    %v7891 = vsub.s32 1, %v7890
    %v7892 = vrot.slane %v7883, %v7891
    %v7943 = vunpack.c.l.b16 %v7835
    %v7944 = vunpack.c.h.b16 %v7835
    %v7945 = vunpack.c.l.b16 %v7836
    %v7946 = vunpack.c.h.b16 %v7836
    %v7947 = vunpack.c.l.b16 %v7837
    %v7948 = vunpack.c.h.b16 %v7837
    %v7949 = vunpack.c.l.b16 %v7838
    %v7950 = vunpack.c.h.b16 %v7838
    %v7951 = vunpack.c.l.b16 %v7839
    %v7952 = vunpack.c.h.b16 %v7839
    %v7953 = vunpack.c.l.b16 %v7840
    %v7954 = vunpack.c.h.b16 %v7840
    %v7955 = vunpack.c.l.b16 %v7841
    %v7956 = vunpack.c.h.b16 %v7841
    %v7957 = vunpack.c.l.b16 %v7842
    %v7958 = vunpack.c.h.b16 %v7842
    %v7959 = vunpack.c.l.b16 %v7843
    %v7960 = vunpack.c.h.b16 %v7843
    %v7961 = vunpack.c.l.b16 %v7844
    %v7962 = vunpack.c.h.b16 %v7844
    %v7963 = vunpack.c.l.b16 %v7845
    %v7964 = vunpack.c.h.b16 %v7845
    %v7965 = vunpack.c.l.b16 %v7846
    %v7966 = vunpack.c.h.b16 %v7846
    %v7967 = vunpack.c.l.b16 %v7847
    %v7968 = vunpack.c.h.b16 %v7847
    %v7969 = vunpack.c.l.b16 %v7848
    %v7970 = vunpack.c.h.b16 %v7848
    %v7971 = vunpack.c.l.b16 %v7849
    %v7972 = vunpack.c.h.b16 %v7849
    %v7973 = vunpack.c.l.b16 %v7850
    %v7974 = vunpack.c.h.b16 %v7850
    %v7975 = vunpack.c.l.b16 %v7851
    %v7976 = vunpack.c.h.b16 %v7851
    %v7977 = vunpack.c.l.b16 %v7852
    %v7978 = vunpack.c.h.b16 %v7852
    %v7979 = vunpack.c.l.b16 %v7853
    %v7980 = vunpack.c.h.b16 %v7853
    %v7981 = vunpack.c.l.b16 %v7854
    %v7982 = vunpack.c.h.b16 %v7854
    %v7983 = vunpack.c.l.b16 %v7855
    %v7984 = vunpack.c.h.b16 %v7855
    %v7985 = vunpack.c.l.b16 %v7856
    %v7986 = vunpack.c.h.b16 %v7856
    %v7987 = vunpack.c.l.b16 %v7857
    %v7988 = vunpack.c.h.b16 %v7857
    %v7989 = vunpack.c.l.b16 %v7858
    %v7990 = vunpack.c.h.b16 %v7858
    %v7991 = vunpack.c.l.b16 %v7859
    %v7992 = vunpack.c.h.b16 %v7859
    %v7993 = vunpack.c.l.b16 %v7860
    %v7994 = vunpack.c.h.b16 %v7860
    %v7995 = vunpack.c.l.b16 %v7861
    %v7996 = vunpack.c.h.b16 %v7861
    %v7997 = vunpack.c.l.b16 %v7862
    %v7998 = vunpack.c.h.b16 %v7862
    %v7999 = vunpack.c.l.b16 %v7863
    %v8000 = vunpack.c.h.b16 %v7863
    %v8001 = vunpack.c.l.b16 %v7864
    %v8002 = vunpack.c.h.b16 %v7864
    %v8003 = vunpack.c.l.b16 %v7865
    %v8004 = vunpack.c.h.b16 %v7865
    %v8005 = vunpack.c.l.b16 %v7866
    %v8006 = vunpack.c.h.b16 %v7866
    %v8007 = vunpack.c.l.b16 %v7867
    %v8008 = vunpack.c.h.b16 %v7867
    %v8009 = vunpack.c.l.b16 %v7868
    %v8010 = vunpack.c.h.b16 %v7868
    %v8011 = vunpack.c.l.b16 %v7869
    %v8012 = vunpack.c.h.b16 %v7869
    %v8013 = vunpack.c.l.b16 %v7870
    %v8014 = vunpack.c.h.b16 %v7870
    %v8015 = vunpack.c.l.b16 %v7871
    %v8016 = vunpack.c.h.b16 %v7871
    %v8017 = vunpack.c.l.b16 %v7872
    %v8018 = vunpack.c.h.b16 %v7872
    %v8019 = vunpack.c.l.b16 %v7873
    %v8020 = vunpack.c.h.b16 %v7873
    %v8021 = vunpack.c.l.b16 %v7874
    %v8022 = vunpack.c.h.b16 %v7874
    %v8023 = vunpack.c.l.b16 %v7875
    %v8024 = vunpack.c.h.b16 %v7875
    %v8025 = vunpack.c.l.b16 %v7876
    %v8026 = vunpack.c.h.b16 %v7876
    %v8027 = vunpack.c.l.b16 %v7877
    %v8028 = vunpack.c.h.b16 %v7877
    %v8029 = vunpack.c.l.b16 %v7878
    %v8030 = vunpack.c.h.b16 %v7878
    %v8031 = vunpack.c.l.b16 %v7879
    %v8032 = vunpack.c.h.b16 %v7879
    %v8033 = vunpack.c.l.b16 %v7880
    %v8034 = vunpack.c.h.b16 %v7880
    %v8035 = vunpack.c.l.b16 %v7881
    %v8036 = vunpack.c.h.b16 %v7881
    %v8037 = vunpack.c.l.b16 %v7882
    %v8038 = vunpack.c.h.b16 %v7882
    %v8039 = vpack.c.b16 %v7945, %v7943
    %v8040 = vpack.c.b16 %v7946, %v7944
    %v8041 = vpack.c.b16 %v7949, %v7947
    %v8042 = vpack.c.b16 %v7950, %v7948
    %v8043 = vpack.c.b16 %v7953, %v7951
    %v8044 = vpack.c.b16 %v7954, %v7952
    %v8045 = vpack.c.b16 %v7957, %v7955
    %v8046 = vpack.c.b16 %v7958, %v7956
    %v8047 = vpack.c.b16 %v7961, %v7959
    %v8048 = vpack.c.b16 %v7962, %v7960
    %v8049 = vpack.c.b16 %v7965, %v7963
    %v8050 = vpack.c.b16 %v7966, %v7964
    %v8051 = vpack.c.b16 %v7969, %v7967
    %v8052 = vpack.c.b16 %v7970, %v7968
    %v8053 = vpack.c.b16 %v7973, %v7971
    %v8054 = vpack.c.b16 %v7974, %v7972
    %v8055 = vpack.c.b16 %v7977, %v7975
    %v8056 = vpack.c.b16 %v7978, %v7976
    %v8057 = vpack.c.b16 %v7981, %v7979
    %v8058 = vpack.c.b16 %v7982, %v7980
    %v8059 = vpack.c.b16 %v7985, %v7983
    %v8060 = vpack.c.b16 %v7986, %v7984
    %v8061 = vpack.c.b16 %v7989, %v7987
    %v8062 = vpack.c.b16 %v7990, %v7988
    %v8063 = vpack.c.b16 %v7993, %v7991
    %v8064 = vpack.c.b16 %v7994, %v7992
    %v8065 = vpack.c.b16 %v7997, %v7995
    %v8066 = vpack.c.b16 %v7998, %v7996
    %v8067 = vpack.c.b16 %v8001, %v7999
    %v8068 = vpack.c.b16 %v8002, %v8000
    %v8069 = vpack.c.b16 %v8005, %v8003
    %v8070 = vpack.c.b16 %v8006, %v8004
    %v8071 = vpack.c.b16 %v8009, %v8007
    %v8072 = vpack.c.b16 %v8010, %v8008
    %v8073 = vpack.c.b16 %v8013, %v8011
    %v8074 = vpack.c.b16 %v8014, %v8012
    %v8075 = vpack.c.b16 %v8017, %v8015
    %v8076 = vpack.c.b16 %v8018, %v8016
    %v8077 = vpack.c.b16 %v8021, %v8019
    %v8078 = vpack.c.b16 %v8022, %v8020
    %v8079 = vpack.c.b16 %v8025, %v8023
    %v8080 = vpack.c.b16 %v8026, %v8024
    %v8081 = vpack.c.b16 %v8029, %v8027
    %v8082 = vpack.c.b16 %v8030, %v8028
    %v8083 = vpack.c.b16 %v8033, %v8031
    %v8084 = vpack.c.b16 %v8034, %v8032
    %v8085 = vpack.c.b16 %v8037, %v8035
    %v8086 = vpack.c.b16 %v8038, %v8036
    %8135 = vmatprep.subr.bf16.mxu0 %v8054
    %8136 = vmatpush1.bf16.msra.mxu0 %v8053
    %8137 = vmatprep.subr.bf16.mxu0 %v8052
    %8138 = vmatpush1.bf16.msra.mxu0 %v8051
    %8139 = vmatprep.subr.bf16.mxu0 %v8050
    %8140 = vmatpush1.bf16.msra.mxu0 %v8049
    %8141 = vmatprep.subr.bf16.mxu0 %v8048
    %8142 = vmatpush1.bf16.msra.mxu0 %v8047
    %8143 = vmatprep.subr.bf16.mxu0 %v8046
    %8144 = vmatpush1.bf16.msra.mxu0 %v8045
    %8145 = vmatprep.subr.bf16.mxu0 %v8044
    %8146 = vmatpush1.bf16.msra.mxu0 %v8043
    %8147 = vmatprep.subr.bf16.mxu0 %v8042
    %8148 = vmatpush1.bf16.msra.mxu0 %v8041
    %8149 = vmatprep.subr.bf16.mxu0 %v8040
    %8150 = vmatpush1.bf16.msra.mxu0 %v8039
    %8151 = vmatprep.subr.bf16.mxu0 %v8070
    %8152 = vmatpush2.bf16.msra.mxu0 %v8069
    %8153 = vmatprep.subr.bf16.mxu0 %v8068
    %8154 = vmatpush2.bf16.msra.mxu0 %v8067
    %8155 = vmatprep.subr.bf16.mxu0 %v8066
    %8156 = vmatpush2.bf16.msra.mxu0 %v8065
    %8157 = vmatprep.subr.bf16.mxu0 %v8064
    %8158 = vmatpush2.bf16.msra.mxu0 %v8063
    %8159 = vmatprep.subr.bf16.mxu0 %v8062
    %8160 = vmatpush2.bf16.msra.mxu0 %v8061
    %8161 = vmatprep.subr.bf16.mxu0 %v8060
    %8162 = vmatpush2.bf16.msra.mxu0 %v8059
    %8163 = vmatprep.subr.bf16.mxu0 %v8058
    %8164 = vmatpush2.bf16.msra.mxu0 %v8057
    %8165 = vmatprep.subr.bf16.mxu0 %v8056
    %8166 = vmatpush2.bf16.msra.mxu0 %v8055
    %8167 = vmatprep.mubr.bf16.mxu0 %v7833
    %8168 = vmatmul.mubr.bf16.gmra.mxu0 %v7832
    %v8169 = vpop.f32.mrf.mxu0
    %v8170 = vadd.f32 %v7888, %v8169
    %v8171 = vpop.f32.mrf.mxu0
    %v8172 = vadd.f32 %v7892, %v8171
    %v8173 = vpop.f32.mrf.mxu0
    %v8174 = vadd.f32 %v7888, %v8173
    %v8175 = vpop.f32.mrf.mxu0
    %v8176 = vadd.f32 %v7892, %v8175
    %8177 = vdwg.mxu0
    %8178 = vmatprep.subr.bf16.mxu0 %v8086
    %8179 = vmatpush1.bf16.msra.mxu0 %v8085
    %8180 = vmatprep.subr.bf16.mxu0 %v8084
    %8181 = vmatpush1.bf16.msra.mxu0 %v8083
    %8182 = vmatprep.subr.bf16.mxu0 %v8082
    %8183 = vmatpush1.bf16.msra.mxu0 %v8081
    %8184 = vmatprep.subr.bf16.mxu0 %v8080
    %8185 = vmatpush1.bf16.msra.mxu0 %v8079
    %8186 = vmatprep.subr.bf16.mxu0 %v8078
    %8187 = vmatpush1.bf16.msra.mxu0 %v8077
    %8188 = vmatprep.subr.bf16.mxu0 %v8076
    %8189 = vmatpush1.bf16.msra.mxu0 %v8075
    %8190 = vmatprep.subr.bf16.mxu0 %v8074
    %8191 = vmatpush1.bf16.msra.mxu0 %v8073
    %8192 = vmatprep.subr.bf16.mxu0 %v8072
    %8193 = vmatpush1.bf16.msra.mxu0 %v8071
    %8194 = vmatprep.subr.bf16.mxu0 0
    %8195 = vmatpush2.bf16.msra.mxu0 0
    %8196 = vmatprep.subr.bf16.mxu0 0
    %8197 = vmatpush2.bf16.msra.mxu0 0
    %8198 = vmatprep.subr.bf16.mxu0 0
    %8199 = vmatpush2.bf16.msra.mxu0 0
    %8200 = vmatprep.subr.bf16.mxu0 0
    %8201 = vmatpush2.bf16.msra.mxu0 0
    %8202 = vmatprep.subr.bf16.mxu0 0
    %8203 = vmatpush2.bf16.msra.mxu0 0
    %8204 = vmatprep.subr.bf16.mxu0 0
    %8205 = vmatpush2.bf16.msra.mxu0 0
    %8206 = vmatprep.subr.bf16.mxu0 0
    %8207 = vmatpush2.bf16.msra.mxu0 0
    %8208 = vmatprep.subr.bf16.mxu0 0
    %8209 = vmatpush2.bf16.msra.mxu0 0
    %8210 = vmatprep.mubr.bf16.mxu0 0
    %8211 = vmatmul.mubr.bf16.gmra.mxu0 %v7834
    %v8212 = vpop.f32.mrf.mxu0
    %v8213 = vadd.f32 %v8170, %v8212
    %v8214 = vpop.f32.mrf.mxu0
    %v8215 = vadd.f32 %v8172, %v8214
    %v8216 = vpop.f32.mrf.mxu0
    %v8217 = vadd.f32 %v8174, %v8216
    %v8218 = vpop.f32.mrf.mxu0
    %v8219 = vadd.f32 %v8176, %v8218
    %8220 = vdwg.mxu0
    %v8221 = vmax.f32 %v8213, 0.0
    %v8222 = vmax.f32 %v8215, 0.0
    %v8223 = vmax.f32 %v8217, 0.0
    %v8224 = vmax.f32 %v8219, 0.0
    %v8225 = vadd.f32 %v7268, %v8221
    %v8226 = vadd.f32 %v7269, %v8222
    %v8227 = vadd.f32 %v7270, %v8223
    %v8228 = vadd.f32 %v7271, %v8224
    %v8229 = vrot.slane %v8225, 7
    %v8230 = vrot.slane %v8226, 7
    %v8231 = vrot.slane %v8227, 7
    %v8232 = vrot.slane %v8228, 7
    %v8233 = vsel %vm609, %v8229, %v8231
    %v8234 = vsel %vm609, %v8230, %v8232
    %v8235 = vsel %vm609, %v8231, %v8229
    %v8236 = vsel %vm609, %v8232, %v8230
    %v8237 = vmul.f32 %v8235, %v597
    %v8238 = vmul.f32 %v8236, %v597
    %v8239 = vmul.f32 %v8233, %v598
    %v8240 = vmul.f32 %v8234, %v598
    %v8241 = vrot.slane %v8225, 1
    %v8242 = vrot.slane %v8226, 1
    %v8243 = vrot.slane %v8227, 1
    %v8244 = vrot.slane %v8228, 1
    %v8245 = vsel %vm616, %v8241, %v8243
    %v8246 = vsel %vm616, %v8242, %v8244
    %v8247 = vsel %vm616, %v8243, %v8241
    %v8248 = vsel %vm616, %v8244, %v8242
    %v8249 = vmul.f32 %v8245, %v603
    %v8250 = vmul.f32 %v8246, %v603
    %v8251 = vmul.f32 %v8247, %v604
    %v8252 = vmul.f32 %v8248, %v604
    %v8253 = vpack.c.bf16 %v8239, %v8237
    %v8254 = vpack.c.bf16 %v8240, %v8238
    %v8255 = vpack.c.bf16 %v8227, %v8225
    %v8256 = vpack.c.bf16 %v8228, %v8226
    %v8257 = vpack.c.bf16 %v8251, %v8249
    %v8258 = vpack.c.bf16 %v8252, %v8250
    %v8259 = vld [vmem:[#allocation48] sm:$0xf]
    %v8260 = vld [vmem:[#allocation48 + $0x4] sm:$0xf]
    %v8261 = vld [vmem:[#allocation48 + $0x8] sm:$0xf]
    %v8262 = vld [vmem:[#allocation48 + $0xc] sm:$0xf]
    %v8263 = vld [vmem:[#allocation48 + $0x10] sm:$0xf]
    %v8264 = vld [vmem:[#allocation48 + $0x14] sm:$0xf]
    %v8265 = vld [vmem:[#allocation48 + $0x18] sm:$0xf]
    %v8266 = vld [vmem:[#allocation48 + $0x1c] sm:$0xf]
    %v8267 = vld [vmem:[#allocation48 + $0x20] sm:$0xf]
    %v8268 = vld [vmem:[#allocation48 + $0x24] sm:$0xf]
    %v8269 = vld [vmem:[#allocation48 + $0x28] sm:$0xf]
    %v8270 = vld [vmem:[#allocation48 + $0x2c] sm:$0xf]
    %v8271 = vld [vmem:[#allocation48 + $0x30] sm:$0xf]
    %v8272 = vld [vmem:[#allocation48 + $0x34] sm:$0xf]
    %v8273 = vld [vmem:[#allocation48 + $0x38] sm:$0xf]
    %v8274 = vld [vmem:[#allocation48 + $0x3c] sm:$0xf]
    %v8275 = vld [vmem:[#allocation48 + $0x40] sm:$0xf]
    %v8276 = vld [vmem:[#allocation48 + $0x44] sm:$0xf]
    %v8277 = vld [vmem:[#allocation48 + $0x48] sm:$0xf]
    %v8278 = vld [vmem:[#allocation48 + $0x4c] sm:$0xf]
    %v8279 = vld [vmem:[#allocation48 + $0x50] sm:$0xf]
    %v8280 = vld [vmem:[#allocation48 + $0x54] sm:$0xf]
    %v8281 = vld [vmem:[#allocation48 + $0x58] sm:$0xf]
    %v8282 = vld [vmem:[#allocation48 + $0x5c] sm:$0xf]
    %v8283 = vld [vmem:[#allocation48 + $0x60] sm:$0xf]
    %v8284 = vld [vmem:[#allocation48 + $0x64] sm:$0xf]
    %v8285 = vld [vmem:[#allocation48 + $0x68] sm:$0xf]
    %v8286 = vld [vmem:[#allocation48 + $0x6c] sm:$0xf]
    %v8287 = vld [vmem:[#allocation48 + $0x70] sm:$0xf]
    %v8288 = vld [vmem:[#allocation48 + $0x74] sm:$0xf]
    %v8289 = vld [vmem:[#allocation48 + $0x78] sm:$0xf]
    %v8290 = vld [vmem:[#allocation48 + $0x7c] sm:$0xf]
    %v8291 = vld [vmem:[#allocation48 + $0x80] sm:$0xf]
    %v8292 = vld [vmem:[#allocation48 + $0x84] sm:$0xf]
    %v8293 = vld [vmem:[#allocation48 + $0x88] sm:$0xf]
    %v8294 = vld [vmem:[#allocation48 + $0x8c] sm:$0xf]
    %v8295 = vld [vmem:[#allocation48 + $0x90] sm:$0xf]
    %v8296 = vld [vmem:[#allocation48 + $0x94] sm:$0xf]
    %v8297 = vld [vmem:[#allocation48 + $0x98] sm:$0xf]
    %v8298 = vld [vmem:[#allocation48 + $0x9c] sm:$0xf]
    %v8299 = vld [vmem:[#allocation48 + $0xa0] sm:$0xf]
    %v8300 = vld [vmem:[#allocation48 + $0xa4] sm:$0xf]
    %v8301 = vld [vmem:[#allocation48 + $0xa8] sm:$0xf]
    %v8302 = vld [vmem:[#allocation48 + $0xac] sm:$0xf]
    %v8303 = vld [vmem:[#allocation48 + $0xb0] sm:$0xf]
    %v8304 = vld [vmem:[#allocation48 + $0xb4] sm:$0xf]
    %v8305 = vld [vmem:[#allocation48 + $0xb8] sm:$0xf]
    %v8306 = vld [vmem:[#allocation48 + $0xbc] sm:$0xf]
    %v8307 = vld [vmem:[#allocation48 + $0xc0] sm:$0xf]
    %v8308 = vld [vmem:[#allocation48 + $0xc4] sm:$0xf]
    %v8309 = vld [vmem:[#allocation48 + $0xc8] sm:$0xf]
    %v8310 = vld [vmem:[#allocation48 + $0xcc] sm:$0xf]
    %v8311 = vld [vmem:[#allocation48 + $0xd0] sm:$0xf]
    %v8312 = vld [vmem:[#allocation48 + $0xd4] sm:$0xf]
    %v8313 = vld [vmem:[#allocation48 + $0xd8] sm:$0xf]
    %v8314 = vld [vmem:[#allocation48 + $0xdc] sm:$0xf]
    %v8315 = vld [vmem:[#allocation48 + $0xe0] sm:$0xf]
    %v8316 = vld [vmem:[#allocation48 + $0xe4] sm:$0xf]
    %v8317 = vld [vmem:[#allocation48 + $0xe8] sm:$0xf]
    %v8318 = vld [vmem:[#allocation48 + $0xec] sm:$0xf]
    %v8319 = vld [vmem:[#allocation48 + $0xf0] sm:$0xf]
    %v8320 = vld [vmem:[#allocation48 + $0xf4] sm:$0xf]
    %v8321 = vld [vmem:[#allocation48 + $0xf8] sm:$0xf]
    %v8322 = vld [vmem:[#allocation48 + $0xfc] sm:$0xf]
    %v8323 = vld [vmem:[#allocation48 + $0x100] sm:$0xf]
    %v8324 = vld [vmem:[#allocation48 + $0x104] sm:$0xf]
    %v8325 = vld [vmem:[#allocation48 + $0x108] sm:$0xf]
    %v8326 = vld [vmem:[#allocation48 + $0x10c] sm:$0xf]
    %v8327 = vld [vmem:[#allocation48 + $0x110] sm:$0xf]
    %v8328 = vld [vmem:[#allocation48 + $0x114] sm:$0xf]
    %v8329 = vld [vmem:[#allocation48 + $0x118] sm:$0xf]
    %v8330 = vld [vmem:[#allocation48 + $0x11c] sm:$0xf]
    %v8331 = vld [vmem:[#allocation48 + $0x120] sm:$0xf]
    %v8332 = vld [vmem:[#allocation48 + $0x124] sm:$0xf]
    %v8333 = vld [vmem:[#allocation48 + $0x128] sm:$0xf]
    %v8334 = vld [vmem:[#allocation48 + $0x12c] sm:$0xf]
    %v8335 = vld [vmem:[#allocation48 + $0x130] sm:$0xf]
    %v8336 = vld [vmem:[#allocation48 + $0x134] sm:$0xf]
    %v8337 = vld [vmem:[#allocation48 + $0x138] sm:$0xf]
    %v8338 = vld [vmem:[#allocation48 + $0x13c] sm:$0xf]
    %v8339 = vld [vmem:[#allocation48 + $0x140] sm:$0xf]
    %v8340 = vld [vmem:[#allocation48 + $0x144] sm:$0xf]
    %v8341 = vld [vmem:[#allocation48 + $0x148] sm:$0xf]
    %v8342 = vld [vmem:[#allocation48 + $0x14c] sm:$0xf]
    %v8343 = vld [vmem:[#allocation48 + $0x150] sm:$0xf]
    %v8344 = vld [vmem:[#allocation48 + $0x154] sm:$0xf]
    %v8345 = vld [vmem:[#allocation48 + $0x158] sm:$0xf]
    %v8346 = vld [vmem:[#allocation48 + $0x15c] sm:$0xf]
    %v8347 = vld [vmem:[#allocation48 + $0x160] sm:$0xf]
    %v8348 = vld [vmem:[#allocation48 + $0x164] sm:$0xf]
    %v8349 = vld [vmem:[#allocation48 + $0x168] sm:$0xf]
    %v8350 = vld [vmem:[#allocation48 + $0x16c] sm:$0xf]
    %v8351 = vld [vmem:[#allocation48 + $0x170] sm:$0xf]
    %v8352 = vld [vmem:[#allocation48 + $0x174] sm:$0xf]
    %v8353 = vld [vmem:[#allocation48 + $0x178] sm:$0xf]
    %v8354 = vld [vmem:[#allocation48 + $0x17c] sm:$0xf]
    %v8355 = vld [vmem:[#allocation48 + $0x180] sm:$0xf]
    %v8356 = vld [vmem:[#allocation48 + $0x184] sm:$0xf]
    %v8357 = vld [vmem:[#allocation48 + $0x188] sm:$0xf]
    %v8358 = vld [vmem:[#allocation48 + $0x18c] sm:$0xf]
    %v8359 = vld [vmem:[#allocation48 + $0x190] sm:$0xf]
    %v8360 = vld [vmem:[#allocation48 + $0x194] sm:$0xf]
    %v8361 = vld [vmem:[#allocation48 + $0x198] sm:$0xf]
    %v8362 = vld [vmem:[#allocation48 + $0x19c] sm:$0xf]
    %v8363 = vld [vmem:[#allocation48 + $0x1a0] sm:$0xf]
    %v8364 = vld [vmem:[#allocation48 + $0x1a4] sm:$0xf]
    %v8365 = vld [vmem:[#allocation48 + $0x1a8] sm:$0xf]
    %v8366 = vld [vmem:[#allocation48 + $0x1ac] sm:$0xf]
    %v8367 = vld [vmem:[#allocation48 + $0x1b0] sm:$0xf]
    %v8368 = vld [vmem:[#allocation48 + $0x1b4] sm:$0xf]
    %v8369 = vld [vmem:[#allocation48 + $0x1b8] sm:$0xf]
    %v8370 = vld [vmem:[#allocation48 + $0x1bc] sm:$0xf]
    %v8371 = vld [vmem:[#allocation48 + $0x1c0] sm:$0xf]
    %v8372 = vld [vmem:[#allocation48 + $0x1c4] sm:$0xf]
    %v8373 = vld [vmem:[#allocation48 + $0x1c8] sm:$0xf]
    %v8374 = vld [vmem:[#allocation48 + $0x1cc] sm:$0xf]
    %v8375 = vld [vmem:[#allocation48 + $0x1d0] sm:$0xf]
    %v8376 = vld [vmem:[#allocation48 + $0x1d4] sm:$0xf]
    %v8377 = vld [vmem:[#allocation48 + $0x1d8] sm:$0xf]
    %v8378 = vld [vmem:[#allocation48 + $0x1dc] sm:$0xf]
    %v8379 = vld [vmem:[#allocation48 + $0x1e0] sm:$0xf]
    %v8380 = vld [vmem:[#allocation48 + $0x1e4] sm:$0xf]
    %v8381 = vld [vmem:[#allocation48 + $0x1e8] sm:$0xf]
    %v8382 = vld [vmem:[#allocation48 + $0x1ec] sm:$0xf]
    %v8383 = vld [vmem:[#allocation48 + $0x1f0] sm:$0xf]
    %v8384 = vld [vmem:[#allocation48 + $0x1f4] sm:$0xf]
    %v8385 = vld [vmem:[#allocation48 + $0x1f8] sm:$0xf]
    %v8386 = vld [vmem:[#allocation48 + $0x1fc] sm:$0xf]
    %v8387 = vld [vmem:[#allocation48 + $0x200] sm:$0xf]
    %v8388 = vld [vmem:[#allocation48 + $0x204] sm:$0xf]
    %v8389 = vld [vmem:[#allocation48 + $0x208] sm:$0xf]
    %v8390 = vld [vmem:[#allocation48 + $0x20c] sm:$0xf]
    %v8391 = vld [vmem:[#allocation48 + $0x210] sm:$0xf]
    %v8392 = vld [vmem:[#allocation48 + $0x214] sm:$0xf]
    %v8393 = vld [vmem:[#allocation48 + $0x218] sm:$0xf]
    %v8394 = vld [vmem:[#allocation48 + $0x21c] sm:$0xf]
    %v8395 = vld [vmem:[#allocation48 + $0x220] sm:$0xf]
    %v8396 = vld [vmem:[#allocation48 + $0x224] sm:$0xf]
    %v8397 = vld [vmem:[#allocation48 + $0x228] sm:$0xf]
    %v8398 = vld [vmem:[#allocation48 + $0x22c] sm:$0xf]
    %v8399 = vld [vmem:[#allocation48 + $0x230] sm:$0xf]
    %v8400 = vld [vmem:[#allocation48 + $0x234] sm:$0xf]
    %v8401 = vld [vmem:[#allocation48 + $0x238] sm:$0xf]
    %v8402 = vld [vmem:[#allocation48 + $0x23c] sm:$0xf]
    %v8403 = vld [vmem:[#allocation48 + $0x240] sm:$0xf]
    %v8404 = vld [vmem:[#allocation48 + $0x244] sm:$0xf]
    %v8405 = vld [vmem:[#allocation48 + $0x248] sm:$0xf]
    %v8406 = vld [vmem:[#allocation48 + $0x24c] sm:$0xf]
    %v8407 = vld [vmem:[#allocation48 + $0x250] sm:$0xf]
    %v8408 = vld [vmem:[#allocation48 + $0x254] sm:$0xf]
    %v8409 = vld [vmem:[#allocation48 + $0x258] sm:$0xf]
    %v8410 = vld [vmem:[#allocation48 + $0x25c] sm:$0xf]
    %v8411 = vld [vmem:[#allocation48 + $0x260] sm:$0xf]
    %v8412 = vld [vmem:[#allocation48 + $0x264] sm:$0xf]
    %v8413 = vld [vmem:[#allocation48 + $0x268] sm:$0xf]
    %v8414 = vld [vmem:[#allocation48 + $0x26c] sm:$0xf]
    %v8415 = vld [vmem:[#allocation48 + $0x270] sm:$0xf]
    %v8416 = vld [vmem:[#allocation48 + $0x274] sm:$0xf]
    %v8417 = vld [vmem:[#allocation48 + $0x278] sm:$0xf]
    %v8418 = vld [vmem:[#allocation48 + $0x27c] sm:$0xf]
    %v8419 = vld [vmem:[#allocation48 + $0x280] sm:$0xf]
    %v8420 = vld [vmem:[#allocation48 + $0x284] sm:$0xf]
    %v8421 = vld [vmem:[#allocation48 + $0x288] sm:$0xf]
    %v8422 = vld [vmem:[#allocation48 + $0x28c] sm:$0xf]
    %v8423 = vld [vmem:[#allocation48 + $0x290] sm:$0xf]
    %v8424 = vld [vmem:[#allocation48 + $0x294] sm:$0xf]
    %v8425 = vld [vmem:[#allocation48 + $0x298] sm:$0xf]
    %v8426 = vld [vmem:[#allocation48 + $0x29c] sm:$0xf]
    %v8427 = vld [vmem:[#allocation48 + $0x2a0] sm:$0xf]
    %v8428 = vld [vmem:[#allocation48 + $0x2a4] sm:$0xf]
    %v8429 = vld [vmem:[#allocation48 + $0x2a8] sm:$0xf]
    %v8430 = vld [vmem:[#allocation48 + $0x2ac] sm:$0xf]
    %v8431 = vld [vmem:[#allocation48 + $0x2b0] sm:$0xf]
    %v8432 = vld [vmem:[#allocation48 + $0x2b4] sm:$0xf]
    %v8433 = vld [vmem:[#allocation48 + $0x2b8] sm:$0xf]
    %v8434 = vld [vmem:[#allocation48 + $0x2bc] sm:$0xf]
    %v8435 = vld [vmem:[#allocation48 + $0x2c0] sm:$0xf]
    %v8436 = vld [vmem:[#allocation48 + $0x2c4] sm:$0xf]
    %v8437 = vld [vmem:[#allocation48 + $0x2c8] sm:$0xf]
    %v8438 = vld [vmem:[#allocation48 + $0x2cc] sm:$0xf]
    %v8439 = vld [vmem:[#allocation48 + $0x2d0] sm:$0xf]
    %v8440 = vld [vmem:[#allocation48 + $0x2d4] sm:$0xf]
    %v8441 = vld [vmem:[#allocation48 + $0x2d8] sm:$0xf]
    %v8442 = vld [vmem:[#allocation48 + $0x2dc] sm:$0xf]
    %v8443 = vld [vmem:[#allocation48 + $0x2e0] sm:$0xf]
    %v8444 = vld [vmem:[#allocation48 + $0x2e4] sm:$0xf]
    %v8445 = vld [vmem:[#allocation48 + $0x2e8] sm:$0xf]
    %v8446 = vld [vmem:[#allocation48 + $0x2ec] sm:$0xf]
    %v8447 = vld [vmem:[#allocation48 + $0x2f0] sm:$0xf]
    %v8448 = vld [vmem:[#allocation48 + $0x2f4] sm:$0xf]
    %v8449 = vld [vmem:[#allocation48 + $0x2f8] sm:$0xf]
    %v8450 = vld [vmem:[#allocation48 + $0x2fc] sm:$0xf]
    %v8451 = vld [vmem:[#allocation48 + $0x300] sm:$0xf]
    %v8452 = vld [vmem:[#allocation48 + $0x304] sm:$0xf]
    %v8453 = vld [vmem:[#allocation48 + $0x308] sm:$0xf]
    %v8454 = vld [vmem:[#allocation48 + $0x30c] sm:$0xf]
    %v8455 = vld [vmem:[#allocation48 + $0x310] sm:$0xf]
    %v8456 = vld [vmem:[#allocation48 + $0x314] sm:$0xf]
    %v8457 = vld [vmem:[#allocation48 + $0x318] sm:$0xf]
    %v8458 = vld [vmem:[#allocation48 + $0x31c] sm:$0xf]
    %v8459 = vld [vmem:[#allocation48 + $0x320] sm:$0xf]
    %v8460 = vld [vmem:[#allocation48 + $0x324] sm:$0xf]
    %v8461 = vld [vmem:[#allocation48 + $0x328] sm:$0xf]
    %v8462 = vld [vmem:[#allocation48 + $0x32c] sm:$0xf]
    %v8463 = vld [vmem:[#allocation48 + $0x330] sm:$0xf]
    %v8464 = vld [vmem:[#allocation48 + $0x334] sm:$0xf]
    %v8465 = vld [vmem:[#allocation48 + $0x338] sm:$0xf]
    %v8466 = vld [vmem:[#allocation48 + $0x33c] sm:$0xf]
    %v8467 = vld [vmem:[#allocation48 + $0x340] sm:$0xf]
    %v8468 = vld [vmem:[#allocation48 + $0x344] sm:$0xf]
    %v8469 = vld [vmem:[#allocation48 + $0x348] sm:$0xf]
    %v8470 = vld [vmem:[#allocation48 + $0x34c] sm:$0xf]
    %v8471 = vld [vmem:[#allocation48 + $0x350] sm:$0xf]
    %v8472 = vld [vmem:[#allocation48 + $0x354] sm:$0xf]
    %v8473 = vld [vmem:[#allocation48 + $0x358] sm:$0xf]
    %v8474 = vld [vmem:[#allocation48 + $0x35c] sm:$0xf]
    %v8475 = vld [vmem:[#allocation48 + $0x360] sm:$0xf]
    %v8476 = vld [vmem:[#allocation48 + $0x364] sm:$0xf]
    %v8477 = vld [vmem:[#allocation48 + $0x368] sm:$0xf]
    %v8478 = vld [vmem:[#allocation48 + $0x36c] sm:$0xf]
    %v8479 = vld [vmem:[#allocation48 + $0x370] sm:$0xf]
    %v8480 = vld [vmem:[#allocation48 + $0x374] sm:$0xf]
    %v8481 = vld [vmem:[#allocation48 + $0x378] sm:$0xf]
    %v8482 = vld [vmem:[#allocation48 + $0x37c] sm:$0xf]
    %v8483 = vld [vmem:[#allocation48 + $0x380] sm:$0xf]
    %v8484 = vld [vmem:[#allocation48 + $0x384] sm:$0xf]
    %v8485 = vld [vmem:[#allocation48 + $0x388] sm:$0xf]
    %v8486 = vld [vmem:[#allocation48 + $0x38c] sm:$0xf]
    %v8487 = vld [vmem:[#allocation48 + $0x390] sm:$0xf]
    %v8488 = vld [vmem:[#allocation48 + $0x394] sm:$0xf]
    %v8489 = vld [vmem:[#allocation48 + $0x398] sm:$0xf]
    %v8490 = vld [vmem:[#allocation48 + $0x39c] sm:$0xf]
    %v8491 = vld [vmem:[#allocation48 + $0x3a0] sm:$0xf]
    %v8492 = vld [vmem:[#allocation48 + $0x3a4] sm:$0xf]
    %v8493 = vld [vmem:[#allocation48 + $0x3a8] sm:$0xf]
    %v8494 = vld [vmem:[#allocation48 + $0x3ac] sm:$0xf]
    %v8495 = vld [vmem:[#allocation48 + $0x3b0] sm:$0xf]
    %v8496 = vld [vmem:[#allocation48 + $0x3b4] sm:$0xf]
    %v8497 = vld [vmem:[#allocation48 + $0x3b8] sm:$0xf]
    %v8498 = vld [vmem:[#allocation48 + $0x3bc] sm:$0xf]
    %v8499 = vld [vmem:[#allocation48 + $0x3c0] sm:$0xf]
    %v8500 = vld [vmem:[#allocation48 + $0x3c4] sm:$0xf]
    %v8501 = vld [vmem:[#allocation48 + $0x3c8] sm:$0xf]
    %v8502 = vld [vmem:[#allocation48 + $0x3cc] sm:$0xf]
    %v8503 = vld [vmem:[#allocation48 + $0x3d0] sm:$0xf]
    %v8504 = vld [vmem:[#allocation48 + $0x3d4] sm:$0xf]
    %v8505 = vld [vmem:[#allocation48 + $0x3d8] sm:$0xf]
    %v8506 = vld [vmem:[#allocation48 + $0x3dc] sm:$0xf]
    %v8507 = vld [vmem:[#allocation48 + $0x3e0] sm:$0xf]
    %v8508 = vld [vmem:[#allocation48 + $0x3e4] sm:$0xf]
    %v8509 = vld [vmem:[#allocation48 + $0x3e8] sm:$0xf]
    %v8510 = vld [vmem:[#allocation48 + $0x3ec] sm:$0xf]
    %v8511 = vld [vmem:[#allocation48 + $0x3f0] sm:$0xf]
    %v8512 = vld [vmem:[#allocation48 + $0x3f4] sm:$0xf]
    %v8513 = vld [vmem:[#allocation48 + $0x3f8] sm:$0xf]
    %v8514 = vld [vmem:[#allocation48 + $0x3fc] sm:$0xf]
    %v8515 = vld [vmem:[#allocation48 + $0x400] sm:$0xf]
    %v8516 = vld [vmem:[#allocation48 + $0x404] sm:$0xf]
    %v8517 = vld [vmem:[#allocation48 + $0x408] sm:$0xf]
    %v8518 = vld [vmem:[#allocation48 + $0x40c] sm:$0xf]
    %v8519 = vld [vmem:[#allocation48 + $0x410] sm:$0xf]
    %v8520 = vld [vmem:[#allocation48 + $0x414] sm:$0xf]
    %v8521 = vld [vmem:[#allocation48 + $0x418] sm:$0xf]
    %v8522 = vld [vmem:[#allocation48 + $0x41c] sm:$0xf]
    %v8523 = vld [vmem:[#allocation48 + $0x420] sm:$0xf]
    %v8524 = vld [vmem:[#allocation48 + $0x424] sm:$0xf]
    %v8525 = vld [vmem:[#allocation48 + $0x428] sm:$0xf]
    %v8526 = vld [vmem:[#allocation48 + $0x42c] sm:$0xf]
    %v8527 = vld [vmem:[#allocation48 + $0x430] sm:$0xf]
    %v8528 = vld [vmem:[#allocation48 + $0x434] sm:$0xf]
    %v8529 = vld [vmem:[#allocation48 + $0x438] sm:$0xf]
    %v8530 = vld [vmem:[#allocation48 + $0x43c] sm:$0xf]
    %v8531 = vld [vmem:[#allocation48 + $0x440] sm:$0xf]
    %v8532 = vld [vmem:[#allocation48 + $0x444] sm:$0xf]
    %v8533 = vld [vmem:[#allocation48 + $0x448] sm:$0xf]
    %v8534 = vld [vmem:[#allocation48 + $0x44c] sm:$0xf]
    %v8535 = vld [vmem:[#allocation48 + $0x450] sm:$0xf]
    %v8536 = vld [vmem:[#allocation48 + $0x454] sm:$0xf]
    %v8537 = vld [vmem:[#allocation48 + $0x458] sm:$0xf]
    %v8538 = vld [vmem:[#allocation48 + $0x45c] sm:$0xf]
    %v8539 = vld [vmem:[#allocation48 + $0x460] sm:$0xf]
    %v8540 = vld [vmem:[#allocation48 + $0x464] sm:$0xf]
    %v8541 = vld [vmem:[#allocation48 + $0x468] sm:$0xf]
    %v8542 = vld [vmem:[#allocation48 + $0x46c] sm:$0xf]
    %v8543 = vld [vmem:[#allocation48 + $0x470] sm:$0xf]
    %v8544 = vld [vmem:[#allocation48 + $0x474] sm:$0xf]
    %v8545 = vld [vmem:[#allocation48 + $0x478] sm:$0xf]
    %v8546 = vld [vmem:[#allocation48 + $0x47c] sm:$0xf]
    %v8547 = vld [vmem:[#allocation49] sm:$0x1]
    %v8549 = vlaneseq
    %v8550 = vshrl.u32 %v8549, 7
    %v8551 = vsub.s32 0, %v8550
    %v8552 = vrot.slane %v8547, %v8551
    %v8842 = vunpack.c.l.b16 %v8259
    %v8843 = vunpack.c.l.b16 %v8260
    %v8844 = vunpack.c.l.b16 %v8261
    %v8845 = vunpack.c.l.b16 %v8262
    %v8846 = vunpack.c.l.b16 %v8263
    %v8847 = vunpack.c.l.b16 %v8264
    %v8848 = vunpack.c.l.b16 %v8265
    %v8849 = vunpack.c.l.b16 %v8266
    %v8850 = vunpack.c.l.b16 %v8267
    %v8851 = vunpack.c.l.b16 %v8268
    %v8852 = vunpack.c.l.b16 %v8269
    %v8853 = vunpack.c.l.b16 %v8270
    %v8854 = vunpack.c.l.b16 %v8271
    %v8855 = vunpack.c.l.b16 %v8272
    %v8856 = vunpack.c.l.b16 %v8273
    %v8857 = vunpack.c.l.b16 %v8274
    %v8858 = vunpack.c.l.b16 %v8275
    %v8859 = vunpack.c.l.b16 %v8276
    %v8860 = vunpack.c.l.b16 %v8277
    %v8861 = vunpack.c.l.b16 %v8278
    %v8862 = vunpack.c.l.b16 %v8279
    %v8863 = vunpack.c.l.b16 %v8280
    %v8864 = vunpack.c.l.b16 %v8281
    %v8865 = vunpack.c.l.b16 %v8282
    %v8866 = vunpack.c.l.b16 %v8283
    %v8867 = vunpack.c.l.b16 %v8284
    %v8868 = vunpack.c.l.b16 %v8285
    %v8869 = vunpack.c.l.b16 %v8286
    %v8870 = vunpack.c.l.b16 %v8287
    %v8871 = vunpack.c.l.b16 %v8288
    %v8872 = vunpack.c.l.b16 %v8289
    %v8873 = vunpack.c.l.b16 %v8290
    %v8874 = vunpack.c.l.b16 %v8291
    %v8875 = vunpack.c.l.b16 %v8292
    %v8876 = vunpack.c.l.b16 %v8293
    %v8877 = vunpack.c.l.b16 %v8294
    %v8878 = vunpack.c.l.b16 %v8295
    %v8879 = vunpack.c.l.b16 %v8296
    %v8880 = vunpack.c.l.b16 %v8297
    %v8881 = vunpack.c.l.b16 %v8298
    %v8882 = vunpack.c.l.b16 %v8299
    %v8883 = vunpack.c.l.b16 %v8300
    %v8884 = vunpack.c.l.b16 %v8301
    %v8885 = vunpack.c.l.b16 %v8302
    %v8886 = vunpack.c.l.b16 %v8303
    %v8887 = vunpack.c.l.b16 %v8304
    %v8888 = vunpack.c.l.b16 %v8305
    %v8889 = vunpack.c.l.b16 %v8306
    %v8890 = vunpack.c.l.b16 %v8307
    %v8891 = vunpack.c.l.b16 %v8308
    %v8892 = vunpack.c.l.b16 %v8309
    %v8893 = vunpack.c.l.b16 %v8310
    %v8894 = vunpack.c.l.b16 %v8311
    %v8895 = vunpack.c.l.b16 %v8312
    %v8896 = vunpack.c.l.b16 %v8313
    %v8897 = vunpack.c.l.b16 %v8314
    %v8898 = vunpack.c.l.b16 %v8315
    %v8899 = vunpack.c.l.b16 %v8316
    %v8900 = vunpack.c.l.b16 %v8317
    %v8901 = vunpack.c.l.b16 %v8318
    %v8902 = vunpack.c.l.b16 %v8319
    %v8903 = vunpack.c.l.b16 %v8320
    %v8904 = vunpack.c.l.b16 %v8321
    %v8905 = vunpack.c.l.b16 %v8322
    %v8906 = vunpack.c.l.b16 %v8323
    %v8907 = vunpack.c.l.b16 %v8324
    %v8908 = vunpack.c.l.b16 %v8325
    %v8909 = vunpack.c.l.b16 %v8326
    %v8910 = vunpack.c.l.b16 %v8327
    %v8911 = vunpack.c.l.b16 %v8328
    %v8912 = vunpack.c.l.b16 %v8329
    %v8913 = vunpack.c.l.b16 %v8330
    %v8914 = vunpack.c.l.b16 %v8331
    %v8915 = vunpack.c.l.b16 %v8332
    %v8916 = vunpack.c.l.b16 %v8333
    %v8917 = vunpack.c.l.b16 %v8334
    %v8918 = vunpack.c.l.b16 %v8335
    %v8919 = vunpack.c.l.b16 %v8336
    %v8920 = vunpack.c.l.b16 %v8337
    %v8921 = vunpack.c.l.b16 %v8338
    %v8922 = vunpack.c.l.b16 %v8339
    %v8923 = vunpack.c.l.b16 %v8340
    %v8924 = vunpack.c.l.b16 %v8341
    %v8925 = vunpack.c.l.b16 %v8342
    %v8926 = vunpack.c.l.b16 %v8343
    %v8927 = vunpack.c.l.b16 %v8344
    %v8928 = vunpack.c.l.b16 %v8345
    %v8929 = vunpack.c.l.b16 %v8346
    %v8930 = vunpack.c.l.b16 %v8347
    %v8931 = vunpack.c.l.b16 %v8348
    %v8932 = vunpack.c.l.b16 %v8349
    %v8933 = vunpack.c.l.b16 %v8350
    %v8934 = vunpack.c.l.b16 %v8351
    %v8935 = vunpack.c.l.b16 %v8352
    %v8936 = vunpack.c.l.b16 %v8353
    %v8937 = vunpack.c.l.b16 %v8354
    %v8938 = vunpack.c.l.b16 %v8355
    %v8939 = vunpack.c.l.b16 %v8356
    %v8940 = vunpack.c.l.b16 %v8357
    %v8941 = vunpack.c.l.b16 %v8358
    %v8942 = vunpack.c.l.b16 %v8359
    %v8943 = vunpack.c.l.b16 %v8360
    %v8944 = vunpack.c.l.b16 %v8361
    %v8945 = vunpack.c.l.b16 %v8362
    %v8946 = vunpack.c.l.b16 %v8363
    %v8947 = vunpack.c.l.b16 %v8364
    %v8948 = vunpack.c.l.b16 %v8365
    %v8949 = vunpack.c.l.b16 %v8366
    %v8950 = vunpack.c.l.b16 %v8367
    %v8951 = vunpack.c.l.b16 %v8368
    %v8952 = vunpack.c.l.b16 %v8369
    %v8953 = vunpack.c.l.b16 %v8370
    %v8954 = vunpack.c.l.b16 %v8371
    %v8955 = vunpack.c.l.b16 %v8372
    %v8956 = vunpack.c.l.b16 %v8373
    %v8957 = vunpack.c.l.b16 %v8374
    %v8958 = vunpack.c.l.b16 %v8375
    %v8959 = vunpack.c.l.b16 %v8376
    %v8960 = vunpack.c.l.b16 %v8377
    %v8961 = vunpack.c.l.b16 %v8378
    %v8962 = vunpack.c.l.b16 %v8379
    %v8963 = vunpack.c.l.b16 %v8380
    %v8964 = vunpack.c.l.b16 %v8381
    %v8965 = vunpack.c.l.b16 %v8382
    %v8966 = vunpack.c.l.b16 %v8383
    %v8967 = vunpack.c.l.b16 %v8384
    %v8968 = vunpack.c.l.b16 %v8385
    %v8969 = vunpack.c.l.b16 %v8386
    %v8970 = vunpack.c.l.b16 %v8387
    %v8971 = vunpack.c.l.b16 %v8388
    %v8972 = vunpack.c.l.b16 %v8389
    %v8973 = vunpack.c.l.b16 %v8390
    %v8974 = vunpack.c.l.b16 %v8391
    %v8975 = vunpack.c.l.b16 %v8392
    %v8976 = vunpack.c.l.b16 %v8393
    %v8977 = vunpack.c.l.b16 %v8394
    %v8978 = vunpack.c.l.b16 %v8395
    %v8979 = vunpack.c.l.b16 %v8396
    %v8980 = vunpack.c.l.b16 %v8397
    %v8981 = vunpack.c.l.b16 %v8398
    %v8982 = vunpack.c.l.b16 %v8399
    %v8983 = vunpack.c.l.b16 %v8400
    %v8984 = vunpack.c.l.b16 %v8401
    %v8985 = vunpack.c.l.b16 %v8402
    %v8986 = vunpack.c.l.b16 %v8403
    %v8987 = vunpack.c.l.b16 %v8404
    %v8988 = vunpack.c.l.b16 %v8405
    %v8989 = vunpack.c.l.b16 %v8406
    %v8990 = vunpack.c.l.b16 %v8407
    %v8991 = vunpack.c.l.b16 %v8408
    %v8992 = vunpack.c.l.b16 %v8409
    %v8993 = vunpack.c.l.b16 %v8410
    %v8994 = vunpack.c.l.b16 %v8411
    %v8995 = vunpack.c.l.b16 %v8412
    %v8996 = vunpack.c.l.b16 %v8413
    %v8997 = vunpack.c.l.b16 %v8414
    %v8998 = vunpack.c.l.b16 %v8415
    %v8999 = vunpack.c.l.b16 %v8416
    %v9000 = vunpack.c.l.b16 %v8417
    %v9001 = vunpack.c.l.b16 %v8418
    %v9002 = vunpack.c.l.b16 %v8419
    %v9003 = vunpack.c.l.b16 %v8420
    %v9004 = vunpack.c.l.b16 %v8421
    %v9005 = vunpack.c.l.b16 %v8422
    %v9006 = vunpack.c.l.b16 %v8423
    %v9007 = vunpack.c.l.b16 %v8424
    %v9008 = vunpack.c.l.b16 %v8425
    %v9009 = vunpack.c.l.b16 %v8426
    %v9010 = vunpack.c.l.b16 %v8427
    %v9011 = vunpack.c.l.b16 %v8428
    %v9012 = vunpack.c.l.b16 %v8429
    %v9013 = vunpack.c.l.b16 %v8430
    %v9014 = vunpack.c.l.b16 %v8431
    %v9015 = vunpack.c.l.b16 %v8432
    %v9016 = vunpack.c.l.b16 %v8433
    %v9017 = vunpack.c.l.b16 %v8434
    %v9018 = vunpack.c.l.b16 %v8435
    %v9019 = vunpack.c.l.b16 %v8436
    %v9020 = vunpack.c.l.b16 %v8437
    %v9021 = vunpack.c.l.b16 %v8438
    %v9022 = vunpack.c.l.b16 %v8439
    %v9023 = vunpack.c.l.b16 %v8440
    %v9024 = vunpack.c.l.b16 %v8441
    %v9025 = vunpack.c.l.b16 %v8442
    %v9026 = vunpack.c.l.b16 %v8443
    %v9027 = vunpack.c.l.b16 %v8444
    %v9028 = vunpack.c.l.b16 %v8445
    %v9029 = vunpack.c.l.b16 %v8446
    %v9030 = vunpack.c.l.b16 %v8447
    %v9031 = vunpack.c.l.b16 %v8448
    %v9032 = vunpack.c.l.b16 %v8449
    %v9033 = vunpack.c.l.b16 %v8450
    %v9034 = vunpack.c.l.b16 %v8451
    %v9035 = vunpack.c.l.b16 %v8452
    %v9036 = vunpack.c.l.b16 %v8453
    %v9037 = vunpack.c.l.b16 %v8454
    %v9038 = vunpack.c.l.b16 %v8455
    %v9039 = vunpack.c.l.b16 %v8456
    %v9040 = vunpack.c.l.b16 %v8457
    %v9041 = vunpack.c.l.b16 %v8458
    %v9042 = vunpack.c.l.b16 %v8459
    %v9043 = vunpack.c.l.b16 %v8460
    %v9044 = vunpack.c.l.b16 %v8461
    %v9045 = vunpack.c.l.b16 %v8462
    %v9046 = vunpack.c.l.b16 %v8463
    %v9047 = vunpack.c.l.b16 %v8464
    %v9048 = vunpack.c.l.b16 %v8465
    %v9049 = vunpack.c.l.b16 %v8466
    %v9050 = vunpack.c.l.b16 %v8467
    %v9051 = vunpack.c.l.b16 %v8468
    %v9052 = vunpack.c.l.b16 %v8469
    %v9053 = vunpack.c.l.b16 %v8470
    %v9054 = vunpack.c.l.b16 %v8471
    %v9055 = vunpack.c.l.b16 %v8472
    %v9056 = vunpack.c.l.b16 %v8473
    %v9057 = vunpack.c.l.b16 %v8474
    %v9058 = vunpack.c.l.b16 %v8475
    %v9059 = vunpack.c.l.b16 %v8476
    %v9060 = vunpack.c.l.b16 %v8477
    %v9061 = vunpack.c.l.b16 %v8478
    %v9062 = vunpack.c.l.b16 %v8479
    %v9063 = vunpack.c.l.b16 %v8480
    %v9064 = vunpack.c.l.b16 %v8481
    %v9065 = vunpack.c.l.b16 %v8482
    %v9066 = vunpack.c.l.b16 %v8483
    %v9067 = vunpack.c.l.b16 %v8484
    %v9068 = vunpack.c.l.b16 %v8485
    %v9069 = vunpack.c.l.b16 %v8486
    %v9070 = vunpack.c.l.b16 %v8487
    %v9071 = vunpack.c.l.b16 %v8488
    %v9072 = vunpack.c.l.b16 %v8489
    %v9073 = vunpack.c.l.b16 %v8490
    %v9074 = vunpack.c.l.b16 %v8491
    %v9075 = vunpack.c.l.b16 %v8492
    %v9076 = vunpack.c.l.b16 %v8493
    %v9077 = vunpack.c.l.b16 %v8494
    %v9078 = vunpack.c.l.b16 %v8495
    %v9079 = vunpack.c.l.b16 %v8496
    %v9080 = vunpack.c.l.b16 %v8497
    %v9081 = vunpack.c.l.b16 %v8498
    %v9082 = vunpack.c.l.b16 %v8499
    %v9083 = vunpack.c.l.b16 %v8500
    %v9084 = vunpack.c.l.b16 %v8501
    %v9085 = vunpack.c.l.b16 %v8502
    %v9086 = vunpack.c.l.b16 %v8503
    %v9087 = vunpack.c.l.b16 %v8504
    %v9088 = vunpack.c.l.b16 %v8505
    %v9089 = vunpack.c.l.b16 %v8506
    %v9090 = vunpack.c.l.b16 %v8507
    %v9091 = vunpack.c.l.b16 %v8508
    %v9092 = vunpack.c.l.b16 %v8509
    %v9093 = vunpack.c.l.b16 %v8510
    %v9094 = vunpack.c.l.b16 %v8511
    %v9095 = vunpack.c.l.b16 %v8512
    %v9096 = vunpack.c.l.b16 %v8513
    %v9097 = vunpack.c.l.b16 %v8514
    %v9098 = vunpack.c.l.b16 %v8515
    %v9099 = vunpack.c.l.b16 %v8516
    %v9100 = vunpack.c.l.b16 %v8517
    %v9101 = vunpack.c.l.b16 %v8518
    %v9102 = vunpack.c.l.b16 %v8519
    %v9103 = vunpack.c.l.b16 %v8520
    %v9104 = vunpack.c.l.b16 %v8521
    %v9105 = vunpack.c.l.b16 %v8522
    %v9106 = vunpack.c.l.b16 %v8523
    %v9107 = vunpack.c.l.b16 %v8524
    %v9108 = vunpack.c.l.b16 %v8525
    %v9109 = vunpack.c.l.b16 %v8526
    %v9110 = vunpack.c.l.b16 %v8527
    %v9111 = vunpack.c.l.b16 %v8528
    %v9112 = vunpack.c.l.b16 %v8529
    %v9113 = vunpack.c.l.b16 %v8530
    %v9114 = vunpack.c.l.b16 %v8531
    %v9115 = vunpack.c.l.b16 %v8532
    %v9116 = vunpack.c.l.b16 %v8533
    %v9117 = vunpack.c.l.b16 %v8534
    %v9118 = vunpack.c.l.b16 %v8535
    %v9119 = vunpack.c.l.b16 %v8536
    %v9120 = vunpack.c.l.b16 %v8537
    %v9121 = vunpack.c.l.b16 %v8538
    %v9122 = vunpack.c.l.b16 %v8539
    %v9123 = vunpack.c.l.b16 %v8540
    %v9124 = vunpack.c.l.b16 %v8541
    %v9125 = vunpack.c.l.b16 %v8542
    %v9126 = vunpack.c.l.b16 %v8543
    %v9127 = vunpack.c.l.b16 %v8544
    %v9128 = vunpack.c.l.b16 %v8545
    %v9129 = vunpack.c.l.b16 %v8546
    %v9130 = vpack.c.b16 %v8843, %v8842
    %v9131 = vpack.c.b16 %v8845, %v8844
    %v9132 = vpack.c.b16 %v8847, %v8846
    %v9133 = vpack.c.b16 %v8849, %v8848
    %v9134 = vpack.c.b16 %v8851, %v8850
    %v9135 = vpack.c.b16 %v8853, %v8852
    %v9136 = vpack.c.b16 %v8855, %v8854
    %v9137 = vpack.c.b16 %v8857, %v8856
    %v9138 = vpack.c.b16 %v8859, %v8858
    %v9139 = vpack.c.b16 %v8861, %v8860
    %v9140 = vpack.c.b16 %v8863, %v8862
    %v9141 = vpack.c.b16 %v8865, %v8864
    %v9142 = vpack.c.b16 %v8867, %v8866
    %v9143 = vpack.c.b16 %v8869, %v8868
    %v9144 = vpack.c.b16 %v8871, %v8870
    %v9145 = vpack.c.b16 %v8873, %v8872
    %v9146 = vpack.c.b16 %v8875, %v8874
    %v9147 = vpack.c.b16 %v8877, %v8876
    %v9148 = vpack.c.b16 %v8879, %v8878
    %v9149 = vpack.c.b16 %v8881, %v8880
    %v9150 = vpack.c.b16 %v8883, %v8882
    %v9151 = vpack.c.b16 %v8885, %v8884
    %v9152 = vpack.c.b16 %v8887, %v8886
    %v9153 = vpack.c.b16 %v8889, %v8888
    %v9154 = vpack.c.b16 %v8891, %v8890
    %v9155 = vpack.c.b16 %v8893, %v8892
    %v9156 = vpack.c.b16 %v8895, %v8894
    %v9157 = vpack.c.b16 %v8897, %v8896
    %v9158 = vpack.c.b16 %v8899, %v8898
    %v9159 = vpack.c.b16 %v8901, %v8900
    %v9160 = vpack.c.b16 %v8903, %v8902
    %v9161 = vpack.c.b16 %v8905, %v8904
    %v9162 = vpack.c.b16 %v8907, %v8906
    %v9163 = vpack.c.b16 %v8909, %v8908
    %v9164 = vpack.c.b16 %v8911, %v8910
    %v9165 = vpack.c.b16 %v8913, %v8912
    %v9166 = vpack.c.b16 %v8915, %v8914
    %v9167 = vpack.c.b16 %v8917, %v8916
    %v9168 = vpack.c.b16 %v8919, %v8918
    %v9169 = vpack.c.b16 %v8921, %v8920
    %v9170 = vpack.c.b16 %v8923, %v8922
    %v9171 = vpack.c.b16 %v8925, %v8924
    %v9172 = vpack.c.b16 %v8927, %v8926
    %v9173 = vpack.c.b16 %v8929, %v8928
    %v9174 = vpack.c.b16 %v8931, %v8930
    %v9175 = vpack.c.b16 %v8933, %v8932
    %v9176 = vpack.c.b16 %v8935, %v8934
    %v9177 = vpack.c.b16 %v8937, %v8936
    %v9178 = vpack.c.b16 %v8939, %v8938
    %v9179 = vpack.c.b16 %v8941, %v8940
    %v9180 = vpack.c.b16 %v8943, %v8942
    %v9181 = vpack.c.b16 %v8945, %v8944
    %v9182 = vpack.c.b16 %v8947, %v8946
    %v9183 = vpack.c.b16 %v8949, %v8948
    %v9184 = vpack.c.b16 %v8951, %v8950
    %v9185 = vpack.c.b16 %v8953, %v8952
    %v9186 = vpack.c.b16 %v8955, %v8954
    %v9187 = vpack.c.b16 %v8957, %v8956
    %v9188 = vpack.c.b16 %v8959, %v8958
    %v9189 = vpack.c.b16 %v8961, %v8960
    %v9190 = vpack.c.b16 %v8963, %v8962
    %v9191 = vpack.c.b16 %v8965, %v8964
    %v9192 = vpack.c.b16 %v8967, %v8966
    %v9193 = vpack.c.b16 %v8969, %v8968
    %v9194 = vpack.c.b16 %v8971, %v8970
    %v9195 = vpack.c.b16 %v8973, %v8972
    %v9196 = vpack.c.b16 %v8975, %v8974
    %v9197 = vpack.c.b16 %v8977, %v8976
    %v9198 = vpack.c.b16 %v8979, %v8978
    %v9199 = vpack.c.b16 %v8981, %v8980
    %v9200 = vpack.c.b16 %v8983, %v8982
    %v9201 = vpack.c.b16 %v8985, %v8984
    %v9202 = vpack.c.b16 %v8987, %v8986
    %v9203 = vpack.c.b16 %v8989, %v8988
    %v9204 = vpack.c.b16 %v8991, %v8990
    %v9205 = vpack.c.b16 %v8993, %v8992
    %v9206 = vpack.c.b16 %v8995, %v8994
    %v9207 = vpack.c.b16 %v8997, %v8996
    %v9208 = vpack.c.b16 %v8999, %v8998
    %v9209 = vpack.c.b16 %v9001, %v9000
    %v9210 = vpack.c.b16 %v9003, %v9002
    %v9211 = vpack.c.b16 %v9005, %v9004
    %v9212 = vpack.c.b16 %v9007, %v9006
    %v9213 = vpack.c.b16 %v9009, %v9008
    %v9214 = vpack.c.b16 %v9011, %v9010
    %v9215 = vpack.c.b16 %v9013, %v9012
    %v9216 = vpack.c.b16 %v9015, %v9014
    %v9217 = vpack.c.b16 %v9017, %v9016
    %v9218 = vpack.c.b16 %v9019, %v9018
    %v9219 = vpack.c.b16 %v9021, %v9020
    %v9220 = vpack.c.b16 %v9023, %v9022
    %v9221 = vpack.c.b16 %v9025, %v9024
    %v9222 = vpack.c.b16 %v9027, %v9026
    %v9223 = vpack.c.b16 %v9029, %v9028
    %v9224 = vpack.c.b16 %v9031, %v9030
    %v9225 = vpack.c.b16 %v9033, %v9032
    %v9226 = vpack.c.b16 %v9035, %v9034
    %v9227 = vpack.c.b16 %v9037, %v9036
    %v9228 = vpack.c.b16 %v9039, %v9038
    %v9229 = vpack.c.b16 %v9041, %v9040
    %v9230 = vpack.c.b16 %v9043, %v9042
    %v9231 = vpack.c.b16 %v9045, %v9044
    %v9232 = vpack.c.b16 %v9047, %v9046
    %v9233 = vpack.c.b16 %v9049, %v9048
    %v9234 = vpack.c.b16 %v9051, %v9050
    %v9235 = vpack.c.b16 %v9053, %v9052
    %v9236 = vpack.c.b16 %v9055, %v9054
    %v9237 = vpack.c.b16 %v9057, %v9056
    %v9238 = vpack.c.b16 %v9059, %v9058
    %v9239 = vpack.c.b16 %v9061, %v9060
    %v9240 = vpack.c.b16 %v9063, %v9062
    %v9241 = vpack.c.b16 %v9065, %v9064
    %v9242 = vpack.c.b16 %v9067, %v9066
    %v9243 = vpack.c.b16 %v9069, %v9068
    %v9244 = vpack.c.b16 %v9071, %v9070
    %v9245 = vpack.c.b16 %v9073, %v9072
    %v9246 = vpack.c.b16 %v9075, %v9074
    %v9247 = vpack.c.b16 %v9077, %v9076
    %v9248 = vpack.c.b16 %v9079, %v9078
    %v9249 = vpack.c.b16 %v9081, %v9080
    %v9250 = vpack.c.b16 %v9083, %v9082
    %v9251 = vpack.c.b16 %v9085, %v9084
    %v9252 = vpack.c.b16 %v9087, %v9086
    %v9253 = vpack.c.b16 %v9089, %v9088
    %v9254 = vpack.c.b16 %v9091, %v9090
    %v9255 = vpack.c.b16 %v9093, %v9092
    %v9256 = vpack.c.b16 %v9095, %v9094
    %v9257 = vpack.c.b16 %v9097, %v9096
    %v9258 = vpack.c.b16 %v9099, %v9098
    %v9259 = vpack.c.b16 %v9101, %v9100
    %v9260 = vpack.c.b16 %v9103, %v9102
    %v9261 = vpack.c.b16 %v9105, %v9104
    %v9262 = vpack.c.b16 %v9107, %v9106
    %v9263 = vpack.c.b16 %v9109, %v9108
    %v9264 = vpack.c.b16 %v9111, %v9110
    %v9265 = vpack.c.b16 %v9113, %v9112
    %v9266 = vpack.c.b16 %v9115, %v9114
    %v9267 = vpack.c.b16 %v9117, %v9116
    %v9268 = vpack.c.b16 %v9119, %v9118
    %v9269 = vpack.c.b16 %v9121, %v9120
    %v9270 = vpack.c.b16 %v9123, %v9122
    %v9271 = vpack.c.b16 %v9125, %v9124
    %v9272 = vpack.c.b16 %v9127, %v9126
    %v9273 = vpack.c.b16 %v9129, %v9128
    %9418 = vmatprep.subr.bf16.mxu0 0
    %9419 = vmatpush1.bf16.msra.mxu0 %v9137
    %9420 = vmatprep.subr.bf16.mxu0 0
    %9421 = vmatpush1.bf16.msra.mxu0 %v9136
    %9422 = vmatprep.subr.bf16.mxu0 0
    %9423 = vmatpush1.bf16.msra.mxu0 %v9135
    %9424 = vmatprep.subr.bf16.mxu0 0
    %9425 = vmatpush1.bf16.msra.mxu0 %v9134
    %9426 = vmatprep.subr.bf16.mxu0 0
    %9427 = vmatpush1.bf16.msra.mxu0 %v9133
    %9428 = vmatprep.subr.bf16.mxu0 0
    %9429 = vmatpush1.bf16.msra.mxu0 %v9132
    %9430 = vmatprep.subr.bf16.mxu0 0
    %9431 = vmatpush1.bf16.msra.mxu0 %v9131
    %9432 = vmatprep.subr.bf16.mxu0 0
    %9433 = vmatpush1.bf16.msra.mxu0 %v9130
    %9434 = vmatprep.subr.bf16.mxu0 0
    %9435 = vmatpush2.bf16.msra.mxu0 %v9145
    %9436 = vmatprep.subr.bf16.mxu0 0
    %9437 = vmatpush2.bf16.msra.mxu0 %v9144
    %9438 = vmatprep.subr.bf16.mxu0 0
    %9439 = vmatpush2.bf16.msra.mxu0 %v9143
    %9440 = vmatprep.subr.bf16.mxu0 0
    %9441 = vmatpush2.bf16.msra.mxu0 %v9142
    %9442 = vmatprep.subr.bf16.mxu0 0
    %9443 = vmatpush2.bf16.msra.mxu0 %v9141
    %9444 = vmatprep.subr.bf16.mxu0 0
    %9445 = vmatpush2.bf16.msra.mxu0 %v9140
    %9446 = vmatprep.subr.bf16.mxu0 0
    %9447 = vmatpush2.bf16.msra.mxu0 %v9139
    %9448 = vmatprep.subr.bf16.mxu0 0
    %9449 = vmatpush2.bf16.msra.mxu0 %v9138
    %9450 = vmatprep.mubr.bf16.mxu0 %v2409
    %9451 = vmatmul.mubr.bf16.gmra.mxu0 %v2408
    %v9452 = vpop.f32.mrf.mxu0
    %v9453 = vadd.f32 %v8552, %v9452
    %v9454 = vpop.f32.mrf.mxu0
    %v9455 = vpop.f32.mrf.mxu0
    %v9456 = vadd.f32 %v8552, %v9455
    %v9457 = vpop.f32.mrf.mxu0
    %9458 = vdwg.mxu0
    %9459 = vmatprep.subr.bf16.mxu0 0
    %9460 = vmatpush1.bf16.msra.mxu0 %v9153
    %9461 = vmatprep.subr.bf16.mxu0 0
    %9462 = vmatpush1.bf16.msra.mxu0 %v9152
    %9463 = vmatprep.subr.bf16.mxu0 0
    %9464 = vmatpush1.bf16.msra.mxu0 %v9151
    %9465 = vmatprep.subr.bf16.mxu0 0
    %9466 = vmatpush1.bf16.msra.mxu0 %v9150
    %9467 = vmatprep.subr.bf16.mxu0 0
    %9468 = vmatpush1.bf16.msra.mxu0 %v9149
    %9469 = vmatprep.subr.bf16.mxu0 0
    %9470 = vmatpush1.bf16.msra.mxu0 %v9148
    %9471 = vmatprep.subr.bf16.mxu0 0
    %9472 = vmatpush1.bf16.msra.mxu0 %v9147
    %9473 = vmatprep.subr.bf16.mxu0 0
    %9474 = vmatpush1.bf16.msra.mxu0 %v9146
    %9475 = vmatprep.subr.bf16.mxu0 0
    %9476 = vmatpush2.bf16.msra.mxu0 %v9161
    %9477 = vmatprep.subr.bf16.mxu0 0
    %9478 = vmatpush2.bf16.msra.mxu0 %v9160
    %9479 = vmatprep.subr.bf16.mxu0 0
    %9480 = vmatpush2.bf16.msra.mxu0 %v9159
    %9481 = vmatprep.subr.bf16.mxu0 0
    %9482 = vmatpush2.bf16.msra.mxu0 %v9158
    %9483 = vmatprep.subr.bf16.mxu0 0
    %9484 = vmatpush2.bf16.msra.mxu0 %v9157
    %9485 = vmatprep.subr.bf16.mxu0 0
    %9486 = vmatpush2.bf16.msra.mxu0 %v9156
    %9487 = vmatprep.subr.bf16.mxu0 0
    %9488 = vmatpush2.bf16.msra.mxu0 %v9155
    %9489 = vmatprep.subr.bf16.mxu0 0
    %9490 = vmatpush2.bf16.msra.mxu0 %v9154
    %9491 = vmatprep.mubr.bf16.mxu0 %v5274
    %9492 = vmatmul.mubr.bf16.gmra.mxu0 %v5273
    %v9493 = vpop.f32.mrf.mxu0
    %v9494 = vadd.f32 %v9453, %v9493
    %v9495 = vpop.f32.mrf.mxu0
    %v9496 = vpop.f32.mrf.mxu0
    %v9497 = vadd.f32 %v9456, %v9496
    %v9498 = vpop.f32.mrf.mxu0
    %9499 = vdwg.mxu0
    %9500 = vmatprep.subr.bf16.mxu0 0
    %9501 = vmatpush1.bf16.msra.mxu0 %v9169
    %9502 = vmatprep.subr.bf16.mxu0 0
    %9503 = vmatpush1.bf16.msra.mxu0 %v9168
    %9504 = vmatprep.subr.bf16.mxu0 0
    %9505 = vmatpush1.bf16.msra.mxu0 %v9167
    %9506 = vmatprep.subr.bf16.mxu0 0
    %9507 = vmatpush1.bf16.msra.mxu0 %v9166
    %9508 = vmatprep.subr.bf16.mxu0 0
    %9509 = vmatpush1.bf16.msra.mxu0 %v9165
    %9510 = vmatprep.subr.bf16.mxu0 0
    %9511 = vmatpush1.bf16.msra.mxu0 %v9164
    %9512 = vmatprep.subr.bf16.mxu0 0
    %9513 = vmatpush1.bf16.msra.mxu0 %v9163
    %9514 = vmatprep.subr.bf16.mxu0 0
    %9515 = vmatpush1.bf16.msra.mxu0 %v9162
    %9516 = vmatprep.subr.bf16.mxu0 0
    %9517 = vmatpush2.bf16.msra.mxu0 %v9177
    %9518 = vmatprep.subr.bf16.mxu0 0
    %9519 = vmatpush2.bf16.msra.mxu0 %v9176
    %9520 = vmatprep.subr.bf16.mxu0 0
    %9521 = vmatpush2.bf16.msra.mxu0 %v9175
    %9522 = vmatprep.subr.bf16.mxu0 0
    %9523 = vmatpush2.bf16.msra.mxu0 %v9174
    %9524 = vmatprep.subr.bf16.mxu0 0
    %9525 = vmatpush2.bf16.msra.mxu0 %v9173
    %9526 = vmatprep.subr.bf16.mxu0 0
    %9527 = vmatpush2.bf16.msra.mxu0 %v9172
    %9528 = vmatprep.subr.bf16.mxu0 0
    %9529 = vmatpush2.bf16.msra.mxu0 %v9171
    %9530 = vmatprep.subr.bf16.mxu0 0
    %9531 = vmatpush2.bf16.msra.mxu0 %v9170
    %9532 = vmatprep.mubr.bf16.mxu0 %v8254
    %9533 = vmatmul.mubr.bf16.gmra.mxu0 %v8253
    %v9534 = vpop.f32.mrf.mxu0
    %v9535 = vadd.f32 %v9494, %v9534
    %v9536 = vpop.f32.mrf.mxu0
    %v9537 = vpop.f32.mrf.mxu0
    %v9538 = vadd.f32 %v9497, %v9537
    %v9539 = vpop.f32.mrf.mxu0
    %9540 = vdwg.mxu0
    %9541 = vmatprep.subr.bf16.mxu0 0
    %9542 = vmatpush1.bf16.msra.mxu0 %v9185
    %9543 = vmatprep.subr.bf16.mxu0 0
    %9544 = vmatpush1.bf16.msra.mxu0 %v9184
    %9545 = vmatprep.subr.bf16.mxu0 0
    %9546 = vmatpush1.bf16.msra.mxu0 %v9183
    %9547 = vmatprep.subr.bf16.mxu0 0
    %9548 = vmatpush1.bf16.msra.mxu0 %v9182
    %9549 = vmatprep.subr.bf16.mxu0 0
    %9550 = vmatpush1.bf16.msra.mxu0 %v9181
    %9551 = vmatprep.subr.bf16.mxu0 0
    %9552 = vmatpush1.bf16.msra.mxu0 %v9180
    %9553 = vmatprep.subr.bf16.mxu0 0
    %9554 = vmatpush1.bf16.msra.mxu0 %v9179
    %9555 = vmatprep.subr.bf16.mxu0 0
    %9556 = vmatpush1.bf16.msra.mxu0 %v9178
    %9557 = vmatprep.subr.bf16.mxu0 0
    %9558 = vmatpush2.bf16.msra.mxu0 %v9193
    %9559 = vmatprep.subr.bf16.mxu0 0
    %9560 = vmatpush2.bf16.msra.mxu0 %v9192
    %9561 = vmatprep.subr.bf16.mxu0 0
    %9562 = vmatpush2.bf16.msra.mxu0 %v9191
    %9563 = vmatprep.subr.bf16.mxu0 0
    %9564 = vmatpush2.bf16.msra.mxu0 %v9190
    %9565 = vmatprep.subr.bf16.mxu0 0
    %9566 = vmatpush2.bf16.msra.mxu0 %v9189
    %9567 = vmatprep.subr.bf16.mxu0 0
    %9568 = vmatpush2.bf16.msra.mxu0 %v9188
    %9569 = vmatprep.subr.bf16.mxu0 0
    %9570 = vmatpush2.bf16.msra.mxu0 %v9187
    %9571 = vmatprep.subr.bf16.mxu0 0
    %9572 = vmatpush2.bf16.msra.mxu0 %v9186
    %9573 = vmatprep.mubr.bf16.mxu0 %v2411
    %9574 = vmatmul.mubr.bf16.gmra.mxu0 %v2410
    %v9575 = vpop.f32.mrf.mxu0
    %v9576 = vadd.f32 %v9535, %v9575
    %v9577 = vpop.f32.mrf.mxu0
    %v9578 = vpop.f32.mrf.mxu0
    %v9579 = vadd.f32 %v9538, %v9578
    %v9580 = vpop.f32.mrf.mxu0
    %9581 = vdwg.mxu0
    %9582 = vmatprep.subr.bf16.mxu0 0
    %9583 = vmatpush1.bf16.msra.mxu0 %v9201
    %9584 = vmatprep.subr.bf16.mxu0 0
    %9585 = vmatpush1.bf16.msra.mxu0 %v9200
    %9586 = vmatprep.subr.bf16.mxu0 0
    %9587 = vmatpush1.bf16.msra.mxu0 %v9199
    %9588 = vmatprep.subr.bf16.mxu0 0
    %9589 = vmatpush1.bf16.msra.mxu0 %v9198
    %9590 = vmatprep.subr.bf16.mxu0 0
    %9591 = vmatpush1.bf16.msra.mxu0 %v9197
    %9592 = vmatprep.subr.bf16.mxu0 0
    %9593 = vmatpush1.bf16.msra.mxu0 %v9196
    %9594 = vmatprep.subr.bf16.mxu0 0
    %9595 = vmatpush1.bf16.msra.mxu0 %v9195
    %9596 = vmatprep.subr.bf16.mxu0 0
    %9597 = vmatpush1.bf16.msra.mxu0 %v9194
    %9598 = vmatprep.subr.bf16.mxu0 0
    %9599 = vmatpush2.bf16.msra.mxu0 %v9209
    %9600 = vmatprep.subr.bf16.mxu0 0
    %9601 = vmatpush2.bf16.msra.mxu0 %v9208
    %9602 = vmatprep.subr.bf16.mxu0 0
    %9603 = vmatpush2.bf16.msra.mxu0 %v9207
    %9604 = vmatprep.subr.bf16.mxu0 0
    %9605 = vmatpush2.bf16.msra.mxu0 %v9206
    %9606 = vmatprep.subr.bf16.mxu0 0
    %9607 = vmatpush2.bf16.msra.mxu0 %v9205
    %9608 = vmatprep.subr.bf16.mxu0 0
    %9609 = vmatpush2.bf16.msra.mxu0 %v9204
    %9610 = vmatprep.subr.bf16.mxu0 0
    %9611 = vmatpush2.bf16.msra.mxu0 %v9203
    %9612 = vmatprep.subr.bf16.mxu0 0
    %9613 = vmatpush2.bf16.msra.mxu0 %v9202
    %9614 = vmatprep.mubr.bf16.mxu0 %v5276
    %9615 = vmatmul.mubr.bf16.gmra.mxu0 %v5275
    %v9616 = vpop.f32.mrf.mxu0
    %v9617 = vadd.f32 %v9576, %v9616
    %v9618 = vpop.f32.mrf.mxu0
    %v9619 = vpop.f32.mrf.mxu0
    %v9620 = vadd.f32 %v9579, %v9619
    %v9621 = vpop.f32.mrf.mxu0
    %9622 = vdwg.mxu0
    %9623 = vmatprep.subr.bf16.mxu0 0
    %9624 = vmatpush1.bf16.msra.mxu0 %v9217
    %9625 = vmatprep.subr.bf16.mxu0 0
    %9626 = vmatpush1.bf16.msra.mxu0 %v9216
    %9627 = vmatprep.subr.bf16.mxu0 0
    %9628 = vmatpush1.bf16.msra.mxu0 %v9215
    %9629 = vmatprep.subr.bf16.mxu0 0
    %9630 = vmatpush1.bf16.msra.mxu0 %v9214
    %9631 = vmatprep.subr.bf16.mxu0 0
    %9632 = vmatpush1.bf16.msra.mxu0 %v9213
    %9633 = vmatprep.subr.bf16.mxu0 0
    %9634 = vmatpush1.bf16.msra.mxu0 %v9212
    %9635 = vmatprep.subr.bf16.mxu0 0
    %9636 = vmatpush1.bf16.msra.mxu0 %v9211
    %9637 = vmatprep.subr.bf16.mxu0 0
    %9638 = vmatpush1.bf16.msra.mxu0 %v9210
    %9639 = vmatprep.subr.bf16.mxu0 0
    %9640 = vmatpush2.bf16.msra.mxu0 %v9225
    %9641 = vmatprep.subr.bf16.mxu0 0
    %9642 = vmatpush2.bf16.msra.mxu0 %v9224
    %9643 = vmatprep.subr.bf16.mxu0 0
    %9644 = vmatpush2.bf16.msra.mxu0 %v9223
    %9645 = vmatprep.subr.bf16.mxu0 0
    %9646 = vmatpush2.bf16.msra.mxu0 %v9222
    %9647 = vmatprep.subr.bf16.mxu0 0
    %9648 = vmatpush2.bf16.msra.mxu0 %v9221
    %9649 = vmatprep.subr.bf16.mxu0 0
    %9650 = vmatpush2.bf16.msra.mxu0 %v9220
    %9651 = vmatprep.subr.bf16.mxu0 0
    %9652 = vmatpush2.bf16.msra.mxu0 %v9219
    %9653 = vmatprep.subr.bf16.mxu0 0
    %9654 = vmatpush2.bf16.msra.mxu0 %v9218
    %9655 = vmatprep.mubr.bf16.mxu0 %v8256
    %9656 = vmatmul.mubr.bf16.gmra.mxu0 %v8255
    %v9657 = vpop.f32.mrf.mxu0
    %v9658 = vadd.f32 %v9617, %v9657
    %v9659 = vpop.f32.mrf.mxu0
    %v9660 = vpop.f32.mrf.mxu0
    %v9661 = vadd.f32 %v9620, %v9660
    %v9662 = vpop.f32.mrf.mxu0
    %9663 = vdwg.mxu0
    %9664 = vmatprep.subr.bf16.mxu0 0
    %9665 = vmatpush1.bf16.msra.mxu0 %v9233
    %9666 = vmatprep.subr.bf16.mxu0 0
    %9667 = vmatpush1.bf16.msra.mxu0 %v9232
    %9668 = vmatprep.subr.bf16.mxu0 0
    %9669 = vmatpush1.bf16.msra.mxu0 %v9231
    %9670 = vmatprep.subr.bf16.mxu0 0
    %9671 = vmatpush1.bf16.msra.mxu0 %v9230
    %9672 = vmatprep.subr.bf16.mxu0 0
    %9673 = vmatpush1.bf16.msra.mxu0 %v9229
    %9674 = vmatprep.subr.bf16.mxu0 0
    %9675 = vmatpush1.bf16.msra.mxu0 %v9228
    %9676 = vmatprep.subr.bf16.mxu0 0
    %9677 = vmatpush1.bf16.msra.mxu0 %v9227
    %9678 = vmatprep.subr.bf16.mxu0 0
    %9679 = vmatpush1.bf16.msra.mxu0 %v9226
    %9680 = vmatprep.subr.bf16.mxu0 0
    %9681 = vmatpush2.bf16.msra.mxu0 %v9241
    %9682 = vmatprep.subr.bf16.mxu0 0
    %9683 = vmatpush2.bf16.msra.mxu0 %v9240
    %9684 = vmatprep.subr.bf16.mxu0 0
    %9685 = vmatpush2.bf16.msra.mxu0 %v9239
    %9686 = vmatprep.subr.bf16.mxu0 0
    %9687 = vmatpush2.bf16.msra.mxu0 %v9238
    %9688 = vmatprep.subr.bf16.mxu0 0
    %9689 = vmatpush2.bf16.msra.mxu0 %v9237
    %9690 = vmatprep.subr.bf16.mxu0 0
    %9691 = vmatpush2.bf16.msra.mxu0 %v9236
    %9692 = vmatprep.subr.bf16.mxu0 0
    %9693 = vmatpush2.bf16.msra.mxu0 %v9235
    %9694 = vmatprep.subr.bf16.mxu0 0
    %9695 = vmatpush2.bf16.msra.mxu0 %v9234
    %9696 = vmatprep.mubr.bf16.mxu0 %v2413
    %9697 = vmatmul.mubr.bf16.gmra.mxu0 %v2412
    %v9698 = vpop.f32.mrf.mxu0
    %v9699 = vadd.f32 %v9658, %v9698
    %v9700 = vpop.f32.mrf.mxu0
    %v9701 = vpop.f32.mrf.mxu0
    %v9702 = vadd.f32 %v9661, %v9701
    %v9703 = vpop.f32.mrf.mxu0
    %9704 = vdwg.mxu0
    %9705 = vmatprep.subr.bf16.mxu0 0
    %9706 = vmatpush1.bf16.msra.mxu0 %v9249
    %9707 = vmatprep.subr.bf16.mxu0 0
    %9708 = vmatpush1.bf16.msra.mxu0 %v9248
    %9709 = vmatprep.subr.bf16.mxu0 0
    %9710 = vmatpush1.bf16.msra.mxu0 %v9247
    %9711 = vmatprep.subr.bf16.mxu0 0
    %9712 = vmatpush1.bf16.msra.mxu0 %v9246
    %9713 = vmatprep.subr.bf16.mxu0 0
    %9714 = vmatpush1.bf16.msra.mxu0 %v9245
    %9715 = vmatprep.subr.bf16.mxu0 0
    %9716 = vmatpush1.bf16.msra.mxu0 %v9244
    %9717 = vmatprep.subr.bf16.mxu0 0
    %9718 = vmatpush1.bf16.msra.mxu0 %v9243
    %9719 = vmatprep.subr.bf16.mxu0 0
    %9720 = vmatpush1.bf16.msra.mxu0 %v9242
    %9721 = vmatprep.subr.bf16.mxu0 0
    %9722 = vmatpush2.bf16.msra.mxu0 %v9257
    %9723 = vmatprep.subr.bf16.mxu0 0
    %9724 = vmatpush2.bf16.msra.mxu0 %v9256
    %9725 = vmatprep.subr.bf16.mxu0 0
    %9726 = vmatpush2.bf16.msra.mxu0 %v9255
    %9727 = vmatprep.subr.bf16.mxu0 0
    %9728 = vmatpush2.bf16.msra.mxu0 %v9254
    %9729 = vmatprep.subr.bf16.mxu0 0
    %9730 = vmatpush2.bf16.msra.mxu0 %v9253
    %9731 = vmatprep.subr.bf16.mxu0 0
    %9732 = vmatpush2.bf16.msra.mxu0 %v9252
    %9733 = vmatprep.subr.bf16.mxu0 0
    %9734 = vmatpush2.bf16.msra.mxu0 %v9251
    %9735 = vmatprep.subr.bf16.mxu0 0
    %9736 = vmatpush2.bf16.msra.mxu0 %v9250
    %9737 = vmatprep.mubr.bf16.mxu0 %v5278
    %9738 = vmatmul.mubr.bf16.gmra.mxu0 %v5277
    %v9739 = vpop.f32.mrf.mxu0
    %v9740 = vadd.f32 %v9699, %v9739
    %v9741 = vpop.f32.mrf.mxu0
    %v9742 = vpop.f32.mrf.mxu0
    %v9743 = vadd.f32 %v9702, %v9742
    %v9744 = vpop.f32.mrf.mxu0
    %9745 = vdwg.mxu0
    %9746 = vmatprep.subr.bf16.mxu0 0
    %9747 = vmatpush1.bf16.msra.mxu0 %v9265
    %9748 = vmatprep.subr.bf16.mxu0 0
    %9749 = vmatpush1.bf16.msra.mxu0 %v9264
    %9750 = vmatprep.subr.bf16.mxu0 0
    %9751 = vmatpush1.bf16.msra.mxu0 %v9263
    %9752 = vmatprep.subr.bf16.mxu0 0
    %9753 = vmatpush1.bf16.msra.mxu0 %v9262
    %9754 = vmatprep.subr.bf16.mxu0 0
    %9755 = vmatpush1.bf16.msra.mxu0 %v9261
    %9756 = vmatprep.subr.bf16.mxu0 0
    %9757 = vmatpush1.bf16.msra.mxu0 %v9260
    %9758 = vmatprep.subr.bf16.mxu0 0
    %9759 = vmatpush1.bf16.msra.mxu0 %v9259
    %9760 = vmatprep.subr.bf16.mxu0 0
    %9761 = vmatpush1.bf16.msra.mxu0 %v9258
    %9762 = vmatprep.subr.bf16.mxu0 0
    %9763 = vmatpush2.bf16.msra.mxu0 %v9273
    %9764 = vmatprep.subr.bf16.mxu0 0
    %9765 = vmatpush2.bf16.msra.mxu0 %v9272
    %9766 = vmatprep.subr.bf16.mxu0 0
    %9767 = vmatpush2.bf16.msra.mxu0 %v9271
    %9768 = vmatprep.subr.bf16.mxu0 0
    %9769 = vmatpush2.bf16.msra.mxu0 %v9270
    %9770 = vmatprep.subr.bf16.mxu0 0
    %9771 = vmatpush2.bf16.msra.mxu0 %v9269
    %9772 = vmatprep.subr.bf16.mxu0 0
    %9773 = vmatpush2.bf16.msra.mxu0 %v9268
    %9774 = vmatprep.subr.bf16.mxu0 0
    %9775 = vmatpush2.bf16.msra.mxu0 %v9267
    %9776 = vmatprep.subr.bf16.mxu0 0
    %9777 = vmatpush2.bf16.msra.mxu0 %v9266
    %9778 = vmatprep.mubr.bf16.mxu0 %v8258
    %9779 = vmatmul.mubr.bf16.gmra.mxu0 %v8257
    %v9780 = vpop.f32.mrf.mxu0
    %v9781 = vadd.f32 %v9740, %v9780
    %v9782 = vpop.f32.mrf.mxu0
    %v9783 = vpop.f32.mrf.mxu0
    %v9784 = vadd.f32 %v9743, %v9783
    %v9785 = vpop.f32.mrf.mxu0
    %9786 = vdwg.mxu0
    %9787 = vst [vmem:[%s79] sm:$0xff] %v9781
    %9788 = vst [vmem:[%s79 + $0x8] sm:$0xff] %v9784
    // Predicated region
    $region286: #{_dbpn_stage.1} parent=1 // pred_check
      _
    $region287: #{_dbpn_stage.1} parent=1 // pred_check_branch
      %9790 = sbr.rel (0) target = $region289
    $region288: #{_dbpn_stage.1} parent=1 // pred_region
      _
    $region289: #{_dbpn_stage.1} parent=1 // pred_fallthru
      _
    // Predicated region
    $region290: #{_dbpn_stage.1} parent=1 // pred_check
      _
    $region291: #{_dbpn_stage.1} parent=1 // pred_check_branch
      %9792 = sbr.rel (0) target = $region293
    $region292: #{_dbpn_stage.1} parent=1 // pred_region
      _
    $region293: #{_dbpn_stage.1} parent=1 // pred_fallthru
      _
    %9793 = vsyncpa [#allocation3], 1
    %9794 = vsyncpa [#allocation5], 1
    %9795 = vsyncpa [#allocation8], 1
    %9796 = vsyncpa [#allocation11], 1
    %9797 = vsyncpa [#allocation14], 1
    %9798 = vsyncpa [#allocation17], 1
    %9799 = vsyncpa [#allocation20], 1
    %9800 = vsyncpa [#allocation23], 1
    %9801 = vsyncpa [#allocation26], 1
    %9802 = vsyncpa [#allocation29], 1
    %9803 = vsyncpa [#allocation32], 1
    %9804 = vsyncpa [#allocation35], 1
    %9805 = vsyncpa [#allocation38], 1
    %9806 = vsyncpa [#allocation41], 1
    %9807 = vsyncpa [#allocation44], 1
    %9808 = vsyncpa [#allocation47], 1
    %9809 = vsyncpa [#allocation50], 1

</llo_original>
